<compile_context>
chip_gen: v6e
topology: v6e:2x2x1
jax: 0.10.0
libtpu: 0.0.40
codegen_flags: <defaults>
</compile_context>

<pallas_src>
import functools

import jax
import jax.numpy as jnp
from jax.experimental import pallas as pl
from jax.experimental.pallas import tpu as pltpu

NEG_BIG = -1e9  # additive mask constant (robust when combined with rel-pos bias)

CFG = dict(vocab=128, d_model=32, H=4, d_kv=8, d_ff=64,
           num_buckets=32, max_distance=128, ln_eps=1e-6)


# --------------------------- in-kernel helpers ------------------------------

def _mxu(a, b):
    """bf16-input / f32-accumulate MXU matmul."""
    return jnp.dot(a.astype(jnp.bfloat16), b.astype(jnp.bfloat16),
                   preferred_element_type=jnp.float32)


def _rms(x, w, eps):
    """T5LayerNorm (RMSNorm, no mean subtraction, no bias). w is (1, D)."""
    var = jnp.mean(x * x, axis=-1, keepdims=True)
    return x * jax.lax.rsqrt(var + eps) * w


def _gelu_new(h):
    c = 0.7978845608028654  # sqrt(2/pi)
    return 0.5 * h * (1.0 + jnp.tanh(c * (h + 0.044715 * h * h * h)))


def _ffn(x, wi0, wi1, wo):
    """T5DenseGatedActDense: wo(gelu_new(x@wi0) * (x@wi1))."""
    h0 = _mxu(x, wi0)
    h1 = _mxu(x, wi1)
    return _mxu(_gelu_new(h0) * h1, wo)


def _head_attention(q, k, v, bias, mask, H, Dk):
    """All-head attention for ONE batch element, heads batched in one dot_general.

    q:(Sq,H*Dk)  k,v:(Sk,H*Dk)  bias:(H,Sq,Sk)|None  mask:(1,Sk)|None
    Returns (Sq, H*Dk) head-concatenated context; the caller does ONE fused
    output projection. T5 semantics: no 1/sqrt(d_kv) score scaling.
    """
    Sq = q.shape[0]
    Sk = k.shape[0]
    # Head-major (H, S, Dk); contraction on the last axis of both operands so
    # no explicit k.T transpose is needed.
    qh = jnp.swapaxes(q.reshape(Sq, H, Dk), 0, 1).astype(jnp.bfloat16)
    kh = jnp.swapaxes(k.reshape(Sk, H, Dk), 0, 1).astype(jnp.bfloat16)
    vh = jnp.swapaxes(v.reshape(Sk, H, Dk), 0, 1).astype(jnp.bfloat16)

    s = jnp.einsum('hqd,hkd->hqk', qh, kh,
                   preferred_element_type=jnp.float32)        # (H, Sq, Sk)
    if bias is not None:
        s = s + bias
    if mask is not None:
        s = s + mask                                          # (1,Sk) broadcasts
    s = s - jnp.max(s, axis=-1, keepdims=True)
    e = jnp.exp(s)
    p = e * pl.reciprocal(jnp.sum(e, axis=-1, keepdims=True), approx=True)
    ctx = jnp.einsum('hqk,hkd->hqd', p.astype(jnp.bfloat16), vh,
                     preferred_element_type=jnp.float32)      # (H, Sq, Dk)
    return jnp.swapaxes(ctx, 0, 1).reshape(Sq, H * Dk)


def _batched_attention(q, k, v, bias, mask, Bb, Sq, Sk, H, Dk):
    """Attention for batch-stacked activations; tiny static loop over batch."""
    outs = []
    for b in range(Bb):
        mb = None if mask is None else mask[b]
        outs.append(_head_attention(q[b * Sq:(b + 1) * Sq],
                                    k[b * Sk:(b + 1) * Sk],
                                    v[b * Sk:(b + 1) * Sk],
                                    bias, mb, H, Dk))
    return outs[0] if Bb == 1 else jnp.concatenate(outs, axis=0)


# ----------------------------- fused model kernel ----------------------------

def _flan_t5_kernel(
        x_ref, y_ref, mask_ref, enc_bias_ref, dec_bias_ref,
        e_ln_sa, e_wq, e_wk, e_wv, e_wo,
        e_ln_ff, e_wi0, e_wi1, e_wo_ff, e_ln_final,
        d_ln_sa, d_wq, d_wk, d_wv, d_wo,
        d_ln_ca, d_cq, d_ck, d_cv, d_co,
        d_ln_ff, d_wi0, d_wi1, d_wo_ff, d_ln_final,
        lm_head, logits_ref, *, H, Dk, eps):
    Bb, Se, D = x_ref.shape
    Sd = y_ref.shape[1]
    V = lm_head.shape[1]

    mask = mask_ref[...]                      # (Bb, 1, Se) additive padding mask
    enc_bias = enc_bias_ref[...]              # (H, Se, Se) rel-pos bias (batch-invariant)
    dec_bias = dec_bias_ref[...]              # (H, Sd, Sd) rel-pos bias + causal mask

    # ------------------------------- encoder ---------------------------------
    x = x_ref[...].reshape(Bb * Se, D)        # stack batch into the MXU M dim

    h = _rms(x, e_ln_sa[...], eps)
    q = _mxu(h, e_wq[...])
    k = _mxu(h, e_wk[...])
    v = _mxu(h, e_wv[...])
    ctx = _batched_attention(q, k, v, enc_bias, mask, Bb, Se, Se, H, Dk)
    x = x + _mxu(ctx, e_wo[...])              # single fused output projection

    h = _rms(x, e_ln_ff[...], eps)
    x = x + _ffn(h, e_wi0[...], e_wi1[...], e_wo_ff[...])

    enc = _rms(x, e_ln_final[...], eps)       # (Bb*Se, D) — stays in VMEM/vregs

    # ------------------------------- decoder ---------------------------------
    y = y_ref[...].reshape(Bb * Sd, D)

    # causal self-attention (causal mask folded into dec_bias)
    h = _rms(y, d_ln_sa[...], eps)
    q = _mxu(h, d_wq[...])
    k = _mxu(h, d_wk[...])
    v = _mxu(h, d_wv[...])
    ctx = _batched_attention(q, k, v, dec_bias, None, Bb, Sd, Sd, H, Dk)
    y = y + _mxu(ctx, d_wo[...])

    # cross-attention over the VMEM-resident encoder output (T5: zero pos bias)
    h = _rms(y, d_ln_ca[...], eps)
    q = _mxu(h, d_cq[...])
    k = _mxu(enc, d_ck[...])
    v = _mxu(enc, d_cv[...])
    ctx = _batched_attention(q, k, v, None, mask, Bb, Sd, Se, H, Dk)
    y = y + _mxu(ctx, d_co[...])

    # gated-GELU FFN
    h = _rms(y, d_ln_ff[...], eps)
    y = y + _ffn(h, d_wi0[...], d_wi1[...], d_wo_ff[...])

    # final norm + untied lm_head (flan-t5: tie_word_embeddings=False, no rescale)
    dec_h = _rms(y, d_ln_final[...], eps)
    logits_ref[...] = _mxu(dec_h, lm_head[...]).reshape(Bb, Sd, V)  # lane-dense V=128


# ----------------------------- pallas_call wrapper ---------------------------

def _full_spec(shape):
    n = len(shape)
    return pl.BlockSpec(shape, lambda g, _n=n: (0,) * _n)


def _pick_batch_grid(B):
    # v7x has 2 TensorCores/chip -> keep a 2-wide parallel batch axis.
    # v5e/v6e are single-TC -> a batch grid is just a serial loop, collapse it.
    try:
        kind = jax.devices()[0].device_kind.lower()
    except Exception:
        kind = ""
    if "v7" in kind and B >= 2 and B % 2 == 0:
        return 2
    return 1


def flan_t5_fused(x_emb, y_emb, enc_add_mask, enc_bias, dec_self_bias,
                  enc_p, dec_p, lm_head, cfg=CFG, grid_b=None):
    B, Se, D = x_emb.shape
    Sd = y_emb.shape[1]
    H, Dk, d_ff, V = cfg['H'], cfg['d_kv'], cfg['d_ff'], cfg['vocab']
    inner = H * Dk

    G = _pick_batch_grid(B) if grid_b is None else grid_b
    if B % G != 0:
        G = 1
    Bb = B // G

    kernel = functools.partial(_flan_t5_kernel, H=H, Dk=Dk, eps=cfg['ln_eps'])
    per_b = lambda g: (g, 0, 0)

    in_specs = [
        pl.BlockSpec((Bb, Se, D), per_b),            # encoder embeddings
        pl.BlockSpec((Bb, Sd, D), per_b),            # decoder embeddings
        pl.BlockSpec((Bb, 1, Se), per_b),            # additive padding mask
        _full_spec((H, Se, Se)),                     # encoder rel-pos bias
        _full_spec((H, Sd, Sd)),                     # decoder rel-pos bias + causal
        # encoder weights
        _full_spec((1, D)),
        _full_spec((D, inner)), _full_spec((D, inner)), _full_spec((D, inner)),
        _full_spec((inner, D)),
        _full_spec((1, D)),
        _full_spec((D, d_ff)), _full_spec((D, d_ff)), _full_spec((d_ff, D)),
        _full_spec((1, D)),
        # decoder self-attention weights
        _full_spec((1, D)),
        _full_spec((D, inner)), _full_spec((D, inner)), _full_spec((D, inner)),
        _full_spec((inner, D)),
        # decoder cross-attention weights
        _full_spec((1, D)),
        _full_spec((D, inner)), _full_spec((D, inner)), _full_spec((D, inner)),
        _full_spec((inner, D)),
        # decoder FFN + final norm + lm_head
        _full_spec((1, D)),
        _full_spec((D, d_ff)), _full_spec((D, d_ff)), _full_spec((d_ff, D)),
        _full_spec((1, D)),
        # TODO(synk): tile lm_head over V (and the FFN over d_ff) with an extra
        # grid axis before scaling to real flan-t5 sizes (VMEM residency).
        _full_spec((D, V)),
    ]

    return pl.pallas_call(
        kernel,
        out_shape=jax.ShapeDtypeStruct((B, Sd, V), jnp.float32),
        grid=(G,),
        in_specs=in_specs,
        out_specs=pl.BlockSpec((Bb, Sd, V), per_b),
        compiler_params=pltpu.CompilerParams(dimension_semantics=("parallel",)),
    )(x_emb, y_emb, enc_add_mask, enc_bias, dec_self_bias,
      enc_p['ln_sa'], enc_p['sa']['q'], enc_p['sa']['k'], enc_p['sa']['v'],
      enc_p['sa']['o'],
      enc_p['ln_ff'], enc_p['ff']['wi0'], enc_p['ff']['wi1'], enc_p['ff']['wo'],
      enc_p['ln_final'],
      dec_p['ln_sa'], dec_p['sa']['q'], dec_p['sa']['k'], dec_p['sa']['v'],
      dec_p['sa']['o'],
      dec_p['ln_ca'], dec_p['ca']['q'], dec_p['ca']['k'], dec_p['ca']['v'],
      dec_p['ca']['o'],
      dec_p['ln_ff'], dec_p['ff']['wi0'], dec_p['ff']['wi1'], dec_p['ff']['wo'],
      dec_p['ln_final'],
      lm_head)


# ----------------------------- JAX glue (T5 details) --------------------------

def _relative_position_bucket(rel_pos, bidirectional, num_buckets, max_distance):
    buckets = jnp.zeros_like(rel_pos)
    if bidirectional:
        num_buckets //= 2
        buckets = buckets + (rel_pos > 0).astype(jnp.int32) * num_buckets
        rel_pos = jnp.abs(rel_pos)
    else:
        rel_pos = -jnp.minimum(rel_pos, 0)
    max_exact = num_buckets // 2
    is_small = rel_pos < max_exact
    safe = jnp.maximum(rel_pos, 1).astype(jnp.float32)
    if_large = max_exact + (
        jnp.log(safe / max_exact) / jnp.log(max_distance / max_exact)
        * (num_buckets - max_exact)).astype(jnp.int32)
    if_large = jnp.minimum(if_large, num_buckets - 1)
    return buckets + jnp.where(is_small, rel_pos, if_large)


def compute_position_bias(table, q_len, k_len, bidirectional, cfg):
    # TODO(synk): integer bucket math + table gather kept as plain-JAX glue
    # (data-dependent gather); it runs once at setup, not per forward call.
    ctx = jnp.arange(q_len, dtype=jnp.int32)[:, None]
    mem = jnp.arange(k_len, dtype=jnp.int32)[None, :]
    rp_bucket = _relative_position_bucket(
        mem - ctx, bidirectional, cfg['num_buckets'], cfg['max_distance'])
    values = table[rp_bucket]                  # (q, k, H)
    return jnp.transpose(values, (2, 0, 1))    # (H, q, k), batch-invariant


def precompute_biases(params, Se, Sd, cfg=CFG):
    """Batch-invariant rel-pos biases (+ causal mask) — compute ONCE at setup."""
    enc_bias = compute_position_bias(params['enc_rel_bias'], Se, Se, True, cfg)
    causal = jnp.tril(jnp.ones((Sd, Sd), jnp.float32))
    dec_self_bias = (compute_position_bias(params['dec_rel_bias'], Sd, Sd, False, cfg)
                     + (1.0 - causal)[None] * NEG_BIG)
    return enc_bias, dec_self_bias


def flan_t5_forward(params, input_ids, attention_mask, decoder_input_ids,
                    enc_bias=None, dec_self_bias=None, cfg=CFG):
    # Same reshape semantics as the PyTorch FlanT5 wrapper (view(B, -1) for 3-D).
    if input_ids.ndim == 3:
        input_ids = input_ids.reshape(input_ids.shape[0], -1)
    if attention_mask.ndim == 3:
        attention_mask = attention_mask.reshape(attention_mask.shape[0], -1)

    B, Se = input_ids.shape
    Sd = decoder_input_ids.shape[1]

    if enc_bias is None or dec_self_bias is None:  # fallback (not on the fast path)
        enc_bias, dec_self_bias = precompute_biases(params, Se, Sd, cfg)

    # TODO(synk): embedding gathers kept in plain JAX (data-dependent gather);
    # could be moved in-kernel via PrefetchScalarGridSpec-prefetched token ids.
    x = params['shared'][input_ids]                               # (B, Se, D)
    y = params['shared'][decoder_input_ids]                       # (B, Sd, D)

    # per-batch additive padding mask, tiny (B, 1, Se) — added in-kernel
    enc_add_mask = ((1.0 - attention_mask.astype(jnp.float32)) * NEG_BIG
                    ).reshape(B, 1, Se)

    return flan_t5_fused(x, y, enc_add_mask, enc_bias, dec_self_bias,
                         params['encoder'], params['decoder'],
                         params['lm_head'], cfg)                  # (B, Sd, V)


# ----------------------------- Parameter init ---------------------------------

def init_params(key, cfg=CFG):
    keys = iter(jax.random.split(key, 40))
    D, H, Dk, d_ff, V = cfg['d_model'], cfg['H'], cfg['d_kv'], cfg['d_ff'], cfg['vocab']
    inner = H * Dk

    def w(shape, scale=0.05, dtype=jnp.bfloat16):
        return (scale * jax.random.normal(next(keys), shape, dtype=jnp.float32)
                ).astype(dtype)

    ones = jnp.ones((1, D), jnp.float32)

    def attn():   # separate Q/K/V weight refs (lane-aligned, no fused-slice split)
        return {'q': w((D, inner)), 'k': w((D, inner)), 'v': w((D, inner)),
                'o': w((inner, D))}

    def ff():
        return {'wi0': w((D, d_ff)), 'wi1': w((D, d_ff)), 'wo': w((d_ff, D))}

    return {
        'shared': w((V, D), 1.0, jnp.float32),
        'enc_rel_bias': w((cfg['num_buckets'], H), 0.05, jnp.float32),
        'dec_rel_bias': w((cfg['num_buckets'], H), 0.05, jnp.float32),
        'encoder': {'sa': attn(), 'ff': ff(),
                    'ln_sa': ones, 'ln_ff': ones, 'ln_final': ones},
        'decoder': {'sa': attn(), 'ca': attn(), 'ff': ff(),
                    'ln_sa': ones, 'ln_ca': ones, 'ln_ff': ones, 'ln_final': ones},
        'lm_head': w((D, V)),
    }


# ----------------------------- Main --------------------------------------------

if __name__ == "__main__":
    key = jax.random.PRNGKey(0)
    k_param, k_ids, k_dec = jax.random.split(key, 3)

    params = init_params(k_param)

    B, chunks, chunk_len, Sd = 2, 2, 4, 8
    Se = chunks * chunk_len
    # 3-D input_ids / attention_mask to exercise the wrapper's view(B, -1) path
    input_ids = jax.random.randint(k_ids, (B, chunks, chunk_len), 0, CFG['vocab'],
                                   dtype=jnp.int32)
    attention_mask = jnp.ones((B, chunks, chunk_len), dtype=jnp.int32)
    attention_mask = attention_mask.at[1, 1, 3].set(0)   # exercise padding mask
    decoder_input_ids = jax.random.randint(k_dec, (B, Sd), 0, CFG['vocab'],
                                           dtype=jnp.int32)

    # batch-invariant rel-pos biases + causal mask: computed once, outside the
    # per-call path, and passed as constants.
    enc_bias, dec_self_bias = precompute_biases(params, Se, Sd)
    enc_bias = jax.block_until_ready(enc_bias)
    dec_self_bias = jax.block_until_ready(dec_self_bias)

    fwd = jax.jit(flan_t5_forward)
    logits = fwd(params, input_ids, attention_mask, decoder_input_ids,
                 enc_bias, dec_self_bias)
    logits = jax.block_until_ready(logits)

    assert logits.shape == (B, Sd, CFG['vocab'])
    assert bool(jnp.all(jnp.isfinite(logits)))
    print("KERNEL_OK")
</pallas_src>

<mosaic_0001>
module attributes {stable_mosaic.version = 11 : i64} {
  func.func @_flan_t5_kernel(%arg0: i32, %arg1: memref<2x8x32xf32, #tpu.memory_space<vmem>>, %arg2: memref<2x8x32xf32, #tpu.memory_space<vmem>>, %arg3: memref<2x1x8xf32, #tpu.memory_space<vmem>>, %arg4: memref<4x8x8xf32, #tpu.memory_space<vmem>>, %arg5: memref<4x8x8xf32, #tpu.memory_space<vmem>>, %arg6: memref<1x32xf32, #tpu.memory_space<vmem>>, %arg7: memref<32x32xbf16, #tpu.memory_space<vmem>>, %arg8: memref<32x32xbf16, #tpu.memory_space<vmem>>, %arg9: memref<32x32xbf16, #tpu.memory_space<vmem>>, %arg10: memref<32x32xbf16, #tpu.memory_space<vmem>>, %arg11: memref<1x32xf32, #tpu.memory_space<vmem>>, %arg12: memref<32x64xbf16, #tpu.memory_space<vmem>>, %arg13: memref<32x64xbf16, #tpu.memory_space<vmem>>, %arg14: memref<64x32xbf16, #tpu.memory_space<vmem>>, %arg15: memref<1x32xf32, #tpu.memory_space<vmem>>, %arg16: memref<1x32xf32, #tpu.memory_space<vmem>>, %arg17: memref<32x32xbf16, #tpu.memory_space<vmem>>, %arg18: memref<32x32xbf16, #tpu.memory_space<vmem>>, %arg19: memref<32x32xbf16, #tpu.memory_space<vmem>>, %arg20: memref<32x32xbf16, #tpu.memory_space<vmem>>, %arg21: memref<1x32xf32, #tpu.memory_space<vmem>>, %arg22: memref<32x32xbf16, #tpu.memory_space<vmem>>, %arg23: memref<32x32xbf16, #tpu.memory_space<vmem>>, %arg24: memref<32x32xbf16, #tpu.memory_space<vmem>>, %arg25: memref<32x32xbf16, #tpu.memory_space<vmem>>, %arg26: memref<1x32xf32, #tpu.memory_space<vmem>>, %arg27: memref<32x64xbf16, #tpu.memory_space<vmem>>, %arg28: memref<32x64xbf16, #tpu.memory_space<vmem>>, %arg29: memref<64x32xbf16, #tpu.memory_space<vmem>>, %arg30: memref<1x32xf32, #tpu.memory_space<vmem>>, %arg31: memref<32x128xbf16, #tpu.memory_space<vmem>>, %arg32: memref<2x8x128xf32, #tpu.memory_space<vmem>>) attributes {dimension_semantics = [#tpu.dimension_semantics<parallel>], iteration_bounds = array<i64: 1>, scalar_prefetch = 0 : i64, scratch_operands = 0 : i64, tpu.core_type = #tpu.core_type<tc>, window_params = [{transform_indices = @transform_0, window_bounds = array<i64: 2, 8, 32>}, {transform_indices = @transform_1, window_bounds = array<i64: 2, 8, 32>}, {transform_indices = @transform_2, window_bounds = array<i64: 2, 1, 8>}, {pipeline_mode = #tpu.pipeline_mode<synchronous>, transform_indices = @transform_3, window_bounds = array<i64: 4, 8, 8>}, {pipeline_mode = #tpu.pipeline_mode<synchronous>, transform_indices = @transform_4, window_bounds = array<i64: 4, 8, 8>}, {pipeline_mode = #tpu.pipeline_mode<synchronous>, transform_indices = @transform_5, window_bounds = array<i64: 1, 32>}, {pipeline_mode = #tpu.pipeline_mode<synchronous>, transform_indices = @transform_6, window_bounds = array<i64: 32, 32>}, {pipeline_mode = #tpu.pipeline_mode<synchronous>, transform_indices = @transform_7, window_bounds = array<i64: 32, 32>}, {pipeline_mode = #tpu.pipeline_mode<synchronous>, transform_indices = @transform_8, window_bounds = array<i64: 32, 32>}, {pipeline_mode = #tpu.pipeline_mode<synchronous>, transform_indices = @transform_9, window_bounds = array<i64: 32, 32>}, {pipeline_mode = #tpu.pipeline_mode<synchronous>, transform_indices = @transform_10, window_bounds = array<i64: 1, 32>}, {pipeline_mode = #tpu.pipeline_mode<synchronous>, transform_indices = @transform_11, window_bounds = array<i64: 32, 64>}, {pipeline_mode = #tpu.pipeline_mode<synchronous>, transform_indices = @transform_12, window_bounds = array<i64: 32, 64>}, {pipeline_mode = #tpu.pipeline_mode<synchronous>, transform_indices = @transform_13, window_bounds = array<i64: 64, 32>}, {pipeline_mode = #tpu.pipeline_mode<synchronous>, transform_indices = @transform_14, window_bounds = array<i64: 1, 32>}, {pipeline_mode = #tpu.pipeline_mode<synchronous>, transform_indices = @transform_15, window_bounds = array<i64: 1, 32>}, {pipeline_mode = #tpu.pipeline_mode<synchronous>, transform_indices = @transform_16, window_bounds = array<i64: 32, 32>}, {pipeline_mode = #tpu.pipeline_mode<synchronous>, transform_indices = @transform_17, window_bounds = array<i64: 32, 32>}, {pipeline_mode = #tpu.pipeline_mode<synchronous>, transform_indices = @transform_18, window_bounds = array<i64: 32, 32>}, {pipeline_mode = #tpu.pipeline_mode<synchronous>, transform_indices = @transform_19, window_bounds = array<i64: 32, 32>}, {pipeline_mode = #tpu.pipeline_mode<synchronous>, transform_indices = @transform_20, window_bounds = array<i64: 1, 32>}, {pipeline_mode = #tpu.pipeline_mode<synchronous>, transform_indices = @transform_21, window_bounds = array<i64: 32, 32>}, {pipeline_mode = #tpu.pipeline_mode<synchronous>, transform_indices = @transform_22, window_bounds = array<i64: 32, 32>}, {pipeline_mode = #tpu.pipeline_mode<synchronous>, transform_indices = @transform_23, window_bounds = array<i64: 32, 32>}, {pipeline_mode = #tpu.pipeline_mode<synchronous>, transform_indices = @transform_24, window_bounds = array<i64: 32, 32>}, {pipeline_mode = #tpu.pipeline_mode<synchronous>, transform_indices = @transform_25, window_bounds = array<i64: 1, 32>}, {pipeline_mode = #tpu.pipeline_mode<synchronous>, transform_indices = @transform_26, window_bounds = array<i64: 32, 64>}, {pipeline_mode = #tpu.pipeline_mode<synchronous>, transform_indices = @transform_27, window_bounds = array<i64: 32, 64>}, {pipeline_mode = #tpu.pipeline_mode<synchronous>, transform_indices = @transform_28, window_bounds = array<i64: 64, 32>}, {pipeline_mode = #tpu.pipeline_mode<synchronous>, transform_indices = @transform_29, window_bounds = array<i64: 1, 32>}, {pipeline_mode = #tpu.pipeline_mode<synchronous>, transform_indices = @transform_30, window_bounds = array<i64: 32, 128>}, {transform_indices = @transform_31, window_bounds = array<i64: 2, 8, 128>}]} {
    %c0 = arith.constant 0 : index
    %c0_0 = arith.constant 0 : index
    %c0_1 = arith.constant 0 : index
    %0 = vector.load %arg3[%c0, %c0_0, %c0_1] : memref<2x1x8xf32, #tpu.memory_space<vmem>>, vector<2x1x8xf32>
    %c0_2 = arith.constant 0 : index
    %c0_3 = arith.constant 0 : index
    %c0_4 = arith.constant 0 : index
    %1 = vector.load %arg4[%c0_2, %c0_3, %c0_4] : memref<4x8x8xf32, #tpu.memory_space<vmem>>, vector<4x8x8xf32>
    %c0_5 = arith.constant 0 : index
    %c0_6 = arith.constant 0 : index
    %c0_7 = arith.constant 0 : index
    %2 = vector.load %arg5[%c0_5, %c0_6, %c0_7] : memref<4x8x8xf32, #tpu.memory_space<vmem>>, vector<4x8x8xf32>
    %c0_8 = arith.constant 0 : index
    %c0_9 = arith.constant 0 : index
    %c0_10 = arith.constant 0 : index
    %3 = vector.load %arg1[%c0_8, %c0_9, %c0_10] : memref<2x8x32xf32, #tpu.memory_space<vmem>>, vector<2x8x32xf32>
    %4 = vector.shape_cast %3 : vector<2x8x32xf32> to vector<16x32xf32>
    %c0_11 = arith.constant 0 : index
    %c0_12 = arith.constant 0 : index
    %5 = vector.load %arg6[%c0_11, %c0_12] : memref<1x32xf32, #tpu.memory_space<vmem>>, vector<1x32xf32>
    %6 = arith.mulf %4, %4 : vector<16x32xf32>
    %cst = arith.constant dense<0.000000e+00> : vector<16xf32>
    %7 = vector.multi_reduction <add>, %6, %cst [1] : vector<16x32xf32> to vector<16xf32>
    %8 = vector.shape_cast %7 : vector<16xf32> to vector<16x1xf32>
    %cst_13 = arith.constant 3.200000e+01 : f32
    %9 = vector.broadcast %cst_13 : f32 to vector<16x1xf32>
    %10 = arith.divf %8, %9 : vector<16x1xf32>
    %cst_14 = arith.constant 9.99999997E-7 : f32
    %11 = vector.broadcast %cst_14 : f32 to vector<16x1xf32>
    %12 = arith.addf %10, %11 : vector<16x1xf32>
    %13 = math.rsqrt %12 : vector<16x1xf32>
    %14 = vector.broadcast %13 : vector<16x1xf32> to vector<16x32xf32>
    %15 = arith.mulf %4, %14 : vector<16x32xf32>
    %16 = vector.broadcast %5 : vector<1x32xf32> to vector<16x32xf32>
    %17 = arith.mulf %15, %16 : vector<16x32xf32>
    %c0_15 = arith.constant 0 : index
    %c0_16 = arith.constant 0 : index
    %18 = vector.load %arg7[%c0_15, %c0_16] : memref<32x32xbf16, #tpu.memory_space<vmem>>, vector<32x32xbf16>
    %19 = arith.truncf %17 : vector<16x32xf32> to vector<16x32xbf16>
    %cst_17 = arith.constant dense<0.000000e+00> : vector<16x32xf32>
    %20 = tpu.matmul %19, %18, %cst_17 {dimension_numbers = #tpu.dot_dimension_numbers<[1], [0], [0], [1], [0, 0, 1, 1], [], []>} : vector<16x32xbf16>, vector<32x32xbf16>, vector<16x32xf32> -> vector<16x32xf32>
    %c0_18 = arith.constant 0 : index
    %c0_19 = arith.constant 0 : index
    %21 = vector.load %arg8[%c0_18, %c0_19] : memref<32x32xbf16, #tpu.memory_space<vmem>>, vector<32x32xbf16>
    %22 = arith.truncf %17 : vector<16x32xf32> to vector<16x32xbf16>
    %cst_20 = arith.constant dense<0.000000e+00> : vector<16x32xf32>
    %23 = tpu.matmul %22, %21, %cst_20 {dimension_numbers = #tpu.dot_dimension_numbers<[1], [0], [0], [1], [0, 0, 1, 1], [], []>} : vector<16x32xbf16>, vector<32x32xbf16>, vector<16x32xf32> -> vector<16x32xf32>
    %c0_21 = arith.constant 0 : index
    %c0_22 = arith.constant 0 : index
    %24 = vector.load %arg9[%c0_21, %c0_22] : memref<32x32xbf16, #tpu.memory_space<vmem>>, vector<32x32xbf16>
    %25 = arith.truncf %17 : vector<16x32xf32> to vector<16x32xbf16>
    %cst_23 = arith.constant dense<0.000000e+00> : vector<16x32xf32>
    %26 = tpu.matmul %25, %24, %cst_23 {dimension_numbers = #tpu.dot_dimension_numbers<[1], [0], [0], [1], [0, 0, 1, 1], [], []>} : vector<16x32xbf16>, vector<32x32xbf16>, vector<16x32xf32> -> vector<16x32xf32>
    %27 = vector.extract_strided_slice %0 {offsets = [0, 0, 0], sizes = [1, 1, 8], strides = [1, 1, 1]} : vector<2x1x8xf32> to vector<1x1x8xf32>
    %28 = vector.shape_cast %27 : vector<1x1x8xf32> to vector<1x8xf32>
    %29 = vector.extract_strided_slice %20 {offsets = [0, 0], sizes = [8, 32], strides = [1, 1]} : vector<16x32xf32> to vector<8x32xf32>
    %30 = vector.extract_strided_slice %23 {offsets = [0, 0], sizes = [8, 32], strides = [1, 1]} : vector<16x32xf32> to vector<8x32xf32>
    %31 = vector.extract_strided_slice %26 {offsets = [0, 0], sizes = [8, 32], strides = [1, 1]} : vector<16x32xf32> to vector<8x32xf32>
    %32 = vector.shape_cast %29 : vector<8x32xf32> to vector<8x4x8xf32>
    %33 = tpu.transpose %32, [1, 0, 2] : vector<8x4x8xf32> -> vector<4x8x8xf32>
    %34 = arith.truncf %33 : vector<4x8x8xf32> to vector<4x8x8xbf16>
    %35 = vector.shape_cast %30 : vector<8x32xf32> to vector<8x4x8xf32>
    %36 = tpu.transpose %35, [1, 0, 2] : vector<8x4x8xf32> -> vector<4x8x8xf32>
    %37 = arith.truncf %36 : vector<4x8x8xf32> to vector<4x8x8xbf16>
    %38 = vector.shape_cast %31 : vector<8x32xf32> to vector<8x4x8xf32>
    %39 = tpu.transpose %38, [1, 0, 2] : vector<8x4x8xf32> -> vector<4x8x8xf32>
    %40 = arith.truncf %39 : vector<4x8x8xf32> to vector<4x8x8xbf16>
    "tpu.trace_start"() <{level = 10 : i32, message = "hqd,hkd->hqk"}> : () -> ()
    %cst_24 = arith.constant dense<0.000000e+00> : vector<4x8x8xf32>
    %41 = tpu.matmul %34, %37, %cst_24 {dimension_numbers = #tpu.dot_dimension_numbers<[2], [2], [1], [1], [0, 0, 0, 1, 1, 1], [0], [0]>} : vector<4x8x8xbf16>, vector<4x8x8xbf16>, vector<4x8x8xf32> -> vector<4x8x8xf32>
    "tpu.trace_stop"() : () -> ()
    %42 = arith.addf %41, %1 : vector<4x8x8xf32>
    %43 = vector.shape_cast %28 : vector<1x8xf32> to vector<1x1x8xf32>
    %44 = vector.broadcast %43 : vector<1x1x8xf32> to vector<4x8x8xf32>
    %45 = arith.addf %42, %44 : vector<4x8x8xf32>
    %cst_25 = arith.constant dense<0xFF800000> : vector<4x8xf32>
    %46 = vector.multi_reduction <maximumf>, %45, %cst_25 [2] : vector<4x8x8xf32> to vector<4x8xf32>
    %47 = vector.shape_cast %46 : vector<4x8xf32> to vector<4x8x1xf32>
    %48 = vector.broadcast %47 : vector<4x8x1xf32> to vector<4x8x8xf32>
    %49 = arith.subf %45, %48 : vector<4x8x8xf32>
    %50 = math.exp %49 : vector<4x8x8xf32>
    %cst_26 = arith.constant dense<0.000000e+00> : vector<4x8xf32>
    %51 = vector.multi_reduction <add>, %50, %cst_26 [2] : vector<4x8x8xf32> to vector<4x8xf32>
    %52 = vector.shape_cast %51 : vector<4x8xf32> to vector<4x8x1xf32>
    %53 = tpu.reciprocal %52 {approx = true} : vector<4x8x1xf32> -> vector<4x8x1xf32>
    %54 = vector.broadcast %53 : vector<4x8x1xf32> to vector<4x8x8xf32>
    %55 = arith.mulf %50, %54 : vector<4x8x8xf32>
    %56 = arith.truncf %55 : vector<4x8x8xf32> to vector<4x8x8xbf16>
    "tpu.trace_start"() <{level = 10 : i32, message = "hqk,hkd->hqd"}> : () -> ()
    %cst_27 = arith.constant dense<0.000000e+00> : vector<4x8x8xf32>
    %57 = tpu.matmul %56, %40, %cst_27 {dimension_numbers = #tpu.dot_dimension_numbers<[2], [1], [1], [2], [0, 0, 0, 1, 1, 2], [0], [0]>} : vector<4x8x8xbf16>, vector<4x8x8xbf16>, vector<4x8x8xf32> -> vector<4x8x8xf32>
    "tpu.trace_stop"() : () -> ()
    %58 = tpu.transpose %57, [1, 0, 2] : vector<4x8x8xf32> -> vector<8x4x8xf32>
    %59 = vector.shape_cast %58 : vector<8x4x8xf32> to vector<8x32xf32>
    %60 = vector.extract_strided_slice %0 {offsets = [1, 0, 0], sizes = [1, 1, 8], strides = [1, 1, 1]} : vector<2x1x8xf32> to vector<1x1x8xf32>
    %61 = vector.shape_cast %60 : vector<1x1x8xf32> to vector<1x8xf32>
    %62 = vector.extract_strided_slice %20 {offsets = [8, 0], sizes = [8, 32], strides = [1, 1]} : vector<16x32xf32> to vector<8x32xf32>
    %63 = vector.extract_strided_slice %23 {offsets = [8, 0], sizes = [8, 32], strides = [1, 1]} : vector<16x32xf32> to vector<8x32xf32>
    %64 = vector.extract_strided_slice %26 {offsets = [8, 0], sizes = [8, 32], strides = [1, 1]} : vector<16x32xf32> to vector<8x32xf32>
    %65 = vector.shape_cast %62 : vector<8x32xf32> to vector<8x4x8xf32>
    %66 = tpu.transpose %65, [1, 0, 2] : vector<8x4x8xf32> -> vector<4x8x8xf32>
    %67 = arith.truncf %66 : vector<4x8x8xf32> to vector<4x8x8xbf16>
    %68 = vector.shape_cast %63 : vector<8x32xf32> to vector<8x4x8xf32>
    %69 = tpu.transpose %68, [1, 0, 2] : vector<8x4x8xf32> -> vector<4x8x8xf32>
    %70 = arith.truncf %69 : vector<4x8x8xf32> to vector<4x8x8xbf16>
    %71 = vector.shape_cast %64 : vector<8x32xf32> to vector<8x4x8xf32>
    %72 = tpu.transpose %71, [1, 0, 2] : vector<8x4x8xf32> -> vector<4x8x8xf32>
    %73 = arith.truncf %72 : vector<4x8x8xf32> to vector<4x8x8xbf16>
    "tpu.trace_start"() <{level = 10 : i32, message = "hqd,hkd->hqk"}> : () -> ()
    %cst_28 = arith.constant dense<0.000000e+00> : vector<4x8x8xf32>
    %74 = tpu.matmul %67, %70, %cst_28 {dimension_numbers = #tpu.dot_dimension_numbers<[2], [2], [1], [1], [0, 0, 0, 1, 1, 1], [0], [0]>} : vector<4x8x8xbf16>, vector<4x8x8xbf16>, vector<4x8x8xf32> -> vector<4x8x8xf32>
    "tpu.trace_stop"() : () -> ()
    %75 = arith.addf %74, %1 : vector<4x8x8xf32>
    %76 = vector.shape_cast %61 : vector<1x8xf32> to vector<1x1x8xf32>
    %77 = vector.broadcast %76 : vector<1x1x8xf32> to vector<4x8x8xf32>
    %78 = arith.addf %75, %77 : vector<4x8x8xf32>
    %cst_29 = arith.constant dense<0xFF800000> : vector<4x8xf32>
    %79 = vector.multi_reduction <maximumf>, %78, %cst_29 [2] : vector<4x8x8xf32> to vector<4x8xf32>
    %80 = vector.shape_cast %79 : vector<4x8xf32> to vector<4x8x1xf32>
    %81 = vector.broadcast %80 : vector<4x8x1xf32> to vector<4x8x8xf32>
    %82 = arith.subf %78, %81 : vector<4x8x8xf32>
    %83 = math.exp %82 : vector<4x8x8xf32>
    %cst_30 = arith.constant dense<0.000000e+00> : vector<4x8xf32>
    %84 = vector.multi_reduction <add>, %83, %cst_30 [2] : vector<4x8x8xf32> to vector<4x8xf32>
    %85 = vector.shape_cast %84 : vector<4x8xf32> to vector<4x8x1xf32>
    %86 = tpu.reciprocal %85 {approx = true} : vector<4x8x1xf32> -> vector<4x8x1xf32>
    %87 = vector.broadcast %86 : vector<4x8x1xf32> to vector<4x8x8xf32>
    %88 = arith.mulf %83, %87 : vector<4x8x8xf32>
    %89 = arith.truncf %88 : vector<4x8x8xf32> to vector<4x8x8xbf16>
    "tpu.trace_start"() <{level = 10 : i32, message = "hqk,hkd->hqd"}> : () -> ()
    %cst_31 = arith.constant dense<0.000000e+00> : vector<4x8x8xf32>
    %90 = tpu.matmul %89, %73, %cst_31 {dimension_numbers = #tpu.dot_dimension_numbers<[2], [1], [1], [2], [0, 0, 0, 1, 1, 2], [0], [0]>} : vector<4x8x8xbf16>, vector<4x8x8xbf16>, vector<4x8x8xf32> -> vector<4x8x8xf32>
    "tpu.trace_stop"() : () -> ()
    %91 = tpu.transpose %90, [1, 0, 2] : vector<4x8x8xf32> -> vector<8x4x8xf32>
    %92 = vector.shape_cast %91 : vector<8x4x8xf32> to vector<8x32xf32>
    %93 = tpu.concatenate %59, %92 in 0 : vector<8x32xf32>, vector<8x32xf32> -> vector<16x32xf32>
    %c0_32 = arith.constant 0 : index
    %c0_33 = arith.constant 0 : index
    %94 = vector.load %arg10[%c0_32, %c0_33] : memref<32x32xbf16, #tpu.memory_space<vmem>>, vector<32x32xbf16>
    %95 = arith.truncf %93 : vector<16x32xf32> to vector<16x32xbf16>
    %cst_34 = arith.constant dense<0.000000e+00> : vector<16x32xf32>
    %96 = tpu.matmul %95, %94, %cst_34 {dimension_numbers = #tpu.dot_dimension_numbers<[1], [0], [0], [1], [0, 0, 1, 1], [], []>} : vector<16x32xbf16>, vector<32x32xbf16>, vector<16x32xf32> -> vector<16x32xf32>
    %97 = arith.addf %4, %96 : vector<16x32xf32>
    %c0_35 = arith.constant 0 : index
    %c0_36 = arith.constant 0 : index
    %98 = vector.load %arg11[%c0_35, %c0_36] : memref<1x32xf32, #tpu.memory_space<vmem>>, vector<1x32xf32>
    %99 = arith.mulf %97, %97 : vector<16x32xf32>
    %cst_37 = arith.constant dense<0.000000e+00> : vector<16xf32>
    %100 = vector.multi_reduction <add>, %99, %cst_37 [1] : vector<16x32xf32> to vector<16xf32>
    %101 = vector.shape_cast %100 : vector<16xf32> to vector<16x1xf32>
    %cst_38 = arith.constant 3.200000e+01 : f32
    %102 = vector.broadcast %cst_38 : f32 to vector<16x1xf32>
    %103 = arith.divf %101, %102 : vector<16x1xf32>
    %cst_39 = arith.constant 9.99999997E-7 : f32
    %104 = vector.broadcast %cst_39 : f32 to vector<16x1xf32>
    %105 = arith.addf %103, %104 : vector<16x1xf32>
    %106 = math.rsqrt %105 : vector<16x1xf32>
    %107 = vector.broadcast %106 : vector<16x1xf32> to vector<16x32xf32>
    %108 = arith.mulf %97, %107 : vector<16x32xf32>
    %109 = vector.broadcast %98 : vector<1x32xf32> to vector<16x32xf32>
    %110 = arith.mulf %108, %109 : vector<16x32xf32>
    %c0_40 = arith.constant 0 : index
    %c0_41 = arith.constant 0 : index
    %111 = vector.load %arg12[%c0_40, %c0_41] : memref<32x64xbf16, #tpu.memory_space<vmem>>, vector<32x64xbf16>
    %c0_42 = arith.constant 0 : index
    %c0_43 = arith.constant 0 : index
    %112 = vector.load %arg13[%c0_42, %c0_43] : memref<32x64xbf16, #tpu.memory_space<vmem>>, vector<32x64xbf16>
    %c0_44 = arith.constant 0 : index
    %c0_45 = arith.constant 0 : index
    %113 = vector.load %arg14[%c0_44, %c0_45] : memref<64x32xbf16, #tpu.memory_space<vmem>>, vector<64x32xbf16>
    %114 = arith.truncf %110 : vector<16x32xf32> to vector<16x32xbf16>
    %cst_46 = arith.constant dense<0.000000e+00> : vector<16x64xf32>
    %115 = tpu.matmul %114, %111, %cst_46 {dimension_numbers = #tpu.dot_dimension_numbers<[1], [0], [0], [1], [0, 0, 1, 1], [], []>} : vector<16x32xbf16>, vector<32x64xbf16>, vector<16x64xf32> -> vector<16x64xf32>
    %116 = arith.truncf %110 : vector<16x32xf32> to vector<16x32xbf16>
    %cst_47 = arith.constant dense<0.000000e+00> : vector<16x64xf32>
    %117 = tpu.matmul %116, %112, %cst_47 {dimension_numbers = #tpu.dot_dimension_numbers<[1], [0], [0], [1], [0, 0, 1, 1], [], []>} : vector<16x32xbf16>, vector<32x64xbf16>, vector<16x64xf32> -> vector<16x64xf32>
    %cst_48 = arith.constant 5.000000e-01 : f32
    %118 = vector.broadcast %cst_48 : f32 to vector<16x64xf32>
    %119 = arith.mulf %118, %115 : vector<16x64xf32>
    %cst_49 = arith.constant 4.471500e-02 : f32
    %120 = vector.broadcast %cst_49 : f32 to vector<16x64xf32>
    %121 = arith.mulf %120, %115 : vector<16x64xf32>
    %122 = arith.mulf %121, %115 : vector<16x64xf32>
    %123 = arith.mulf %122, %115 : vector<16x64xf32>
    %124 = arith.addf %115, %123 : vector<16x64xf32>
    %cst_50 = arith.constant 0.797884583 : f32
    %125 = vector.broadcast %cst_50 : f32 to vector<16x64xf32>
    %126 = arith.mulf %125, %124 : vector<16x64xf32>
    %127 = math.tanh %126 : vector<16x64xf32>
    %cst_51 = arith.constant 1.000000e+00 : f32
    %128 = vector.broadcast %cst_51 : f32 to vector<16x64xf32>
    %129 = arith.addf %128, %127 : vector<16x64xf32>
    %130 = arith.mulf %119, %129 : vector<16x64xf32>
    %131 = arith.mulf %130, %117 : vector<16x64xf32>
    %132 = arith.truncf %131 : vector<16x64xf32> to vector<16x64xbf16>
    %cst_52 = arith.constant dense<0.000000e+00> : vector<16x32xf32>
    %133 = tpu.matmul %132, %113, %cst_52 {dimension_numbers = #tpu.dot_dimension_numbers<[1], [0], [0], [1], [0, 0, 1, 1], [], []>} : vector<16x64xbf16>, vector<64x32xbf16>, vector<16x32xf32> -> vector<16x32xf32>
    %134 = arith.addf %97, %133 : vector<16x32xf32>
    %c0_53 = arith.constant 0 : index
    %c0_54 = arith.constant 0 : index
    %135 = vector.load %arg15[%c0_53, %c0_54] : memref<1x32xf32, #tpu.memory_space<vmem>>, vector<1x32xf32>
    %136 = arith.mulf %134, %134 : vector<16x32xf32>
    %cst_55 = arith.constant dense<0.000000e+00> : vector<16xf32>
    %137 = vector.multi_reduction <add>, %136, %cst_55 [1] : vector<16x32xf32> to vector<16xf32>
    %138 = vector.shape_cast %137 : vector<16xf32> to vector<16x1xf32>
    %cst_56 = arith.constant 3.200000e+01 : f32
    %139 = vector.broadcast %cst_56 : f32 to vector<16x1xf32>
    %140 = arith.divf %138, %139 : vector<16x1xf32>
    %cst_57 = arith.constant 9.99999997E-7 : f32
    %141 = vector.broadcast %cst_57 : f32 to vector<16x1xf32>
    %142 = arith.addf %140, %141 : vector<16x1xf32>
    %143 = math.rsqrt %142 : vector<16x1xf32>
    %144 = vector.broadcast %143 : vector<16x1xf32> to vector<16x32xf32>
    %145 = arith.mulf %134, %144 : vector<16x32xf32>
    %146 = vector.broadcast %135 : vector<1x32xf32> to vector<16x32xf32>
    %147 = arith.mulf %145, %146 : vector<16x32xf32>
    %c0_58 = arith.constant 0 : index
    %c0_59 = arith.constant 0 : index
    %c0_60 = arith.constant 0 : index
    %148 = vector.load %arg2[%c0_58, %c0_59, %c0_60] : memref<2x8x32xf32, #tpu.memory_space<vmem>>, vector<2x8x32xf32>
    %149 = vector.shape_cast %148 : vector<2x8x32xf32> to vector<16x32xf32>
    %c0_61 = arith.constant 0 : index
    %c0_62 = arith.constant 0 : index
    %150 = vector.load %arg16[%c0_61, %c0_62] : memref<1x32xf32, #tpu.memory_space<vmem>>, vector<1x32xf32>
    %151 = arith.mulf %149, %149 : vector<16x32xf32>
    %cst_63 = arith.constant dense<0.000000e+00> : vector<16xf32>
    %152 = vector.multi_reduction <add>, %151, %cst_63 [1] : vector<16x32xf32> to vector<16xf32>
    %153 = vector.shape_cast %152 : vector<16xf32> to vector<16x1xf32>
    %cst_64 = arith.constant 3.200000e+01 : f32
    %154 = vector.broadcast %cst_64 : f32 to vector<16x1xf32>
    %155 = arith.divf %153, %154 : vector<16x1xf32>
    %cst_65 = arith.constant 9.99999997E-7 : f32
    %156 = vector.broadcast %cst_65 : f32 to vector<16x1xf32>
    %157 = arith.addf %155, %156 : vector<16x1xf32>
    %158 = math.rsqrt %157 : vector<16x1xf32>
    %159 = vector.broadcast %158 : vector<16x1xf32> to vector<16x32xf32>
    %160 = arith.mulf %149, %159 : vector<16x32xf32>
    %161 = vector.broadcast %150 : vector<1x32xf32> to vector<16x32xf32>
    %162 = arith.mulf %160, %161 : vector<16x32xf32>
    %c0_66 = arith.constant 0 : index
    %c0_67 = arith.constant 0 : index
    %163 = vector.load %arg17[%c0_66, %c0_67] : memref<32x32xbf16, #tpu.memory_space<vmem>>, vector<32x32xbf16>
    %164 = arith.truncf %162 : vector<16x32xf32> to vector<16x32xbf16>
    %cst_68 = arith.constant dense<0.000000e+00> : vector<16x32xf32>
    %165 = tpu.matmul %164, %163, %cst_68 {dimension_numbers = #tpu.dot_dimension_numbers<[1], [0], [0], [1], [0, 0, 1, 1], [], []>} : vector<16x32xbf16>, vector<32x32xbf16>, vector<16x32xf32> -> vector<16x32xf32>
    %c0_69 = arith.constant 0 : index
    %c0_70 = arith.constant 0 : index
    %166 = vector.load %arg18[%c0_69, %c0_70] : memref<32x32xbf16, #tpu.memory_space<vmem>>, vector<32x32xbf16>
    %167 = arith.truncf %162 : vector<16x32xf32> to vector<16x32xbf16>
    %cst_71 = arith.constant dense<0.000000e+00> : vector<16x32xf32>
    %168 = tpu.matmul %167, %166, %cst_71 {dimension_numbers = #tpu.dot_dimension_numbers<[1], [0], [0], [1], [0, 0, 1, 1], [], []>} : vector<16x32xbf16>, vector<32x32xbf16>, vector<16x32xf32> -> vector<16x32xf32>
    %c0_72 = arith.constant 0 : index
    %c0_73 = arith.constant 0 : index
    %169 = vector.load %arg19[%c0_72, %c0_73] : memref<32x32xbf16, #tpu.memory_space<vmem>>, vector<32x32xbf16>
    %170 = arith.truncf %162 : vector<16x32xf32> to vector<16x32xbf16>
    %cst_74 = arith.constant dense<0.000000e+00> : vector<16x32xf32>
    %171 = tpu.matmul %170, %169, %cst_74 {dimension_numbers = #tpu.dot_dimension_numbers<[1], [0], [0], [1], [0, 0, 1, 1], [], []>} : vector<16x32xbf16>, vector<32x32xbf16>, vector<16x32xf32> -> vector<16x32xf32>
    %172 = vector.extract_strided_slice %165 {offsets = [0, 0], sizes = [8, 32], strides = [1, 1]} : vector<16x32xf32> to vector<8x32xf32>
    %173 = vector.extract_strided_slice %168 {offsets = [0, 0], sizes = [8, 32], strides = [1, 1]} : vector<16x32xf32> to vector<8x32xf32>
    %174 = vector.extract_strided_slice %171 {offsets = [0, 0], sizes = [8, 32], strides = [1, 1]} : vector<16x32xf32> to vector<8x32xf32>
    %175 = vector.shape_cast %172 : vector<8x32xf32> to vector<8x4x8xf32>
    %176 = tpu.transpose %175, [1, 0, 2] : vector<8x4x8xf32> -> vector<4x8x8xf32>
    %177 = arith.truncf %176 : vector<4x8x8xf32> to vector<4x8x8xbf16>
    %178 = vector.shape_cast %173 : vector<8x32xf32> to vector<8x4x8xf32>
    %179 = tpu.transpose %178, [1, 0, 2] : vector<8x4x8xf32> -> vector<4x8x8xf32>
    %180 = arith.truncf %179 : vector<4x8x8xf32> to vector<4x8x8xbf16>
    %181 = vector.shape_cast %174 : vector<8x32xf32> to vector<8x4x8xf32>
    %182 = tpu.transpose %181, [1, 0, 2] : vector<8x4x8xf32> -> vector<4x8x8xf32>
    %183 = arith.truncf %182 : vector<4x8x8xf32> to vector<4x8x8xbf16>
    "tpu.trace_start"() <{level = 10 : i32, message = "hqd,hkd->hqk"}> : () -> ()
    %cst_75 = arith.constant dense<0.000000e+00> : vector<4x8x8xf32>
    %184 = tpu.matmul %177, %180, %cst_75 {dimension_numbers = #tpu.dot_dimension_numbers<[2], [2], [1], [1], [0, 0, 0, 1, 1, 1], [0], [0]>} : vector<4x8x8xbf16>, vector<4x8x8xbf16>, vector<4x8x8xf32> -> vector<4x8x8xf32>
    "tpu.trace_stop"() : () -> ()
    %185 = arith.addf %184, %2 : vector<4x8x8xf32>
    %cst_76 = arith.constant dense<0xFF800000> : vector<4x8xf32>
    %186 = vector.multi_reduction <maximumf>, %185, %cst_76 [2] : vector<4x8x8xf32> to vector<4x8xf32>
    %187 = vector.shape_cast %186 : vector<4x8xf32> to vector<4x8x1xf32>
    %188 = vector.broadcast %187 : vector<4x8x1xf32> to vector<4x8x8xf32>
    %189 = arith.subf %185, %188 : vector<4x8x8xf32>
    %190 = math.exp %189 : vector<4x8x8xf32>
    %cst_77 = arith.constant dense<0.000000e+00> : vector<4x8xf32>
    %191 = vector.multi_reduction <add>, %190, %cst_77 [2] : vector<4x8x8xf32> to vector<4x8xf32>
    %192 = vector.shape_cast %191 : vector<4x8xf32> to vector<4x8x1xf32>
    %193 = tpu.reciprocal %192 {approx = true} : vector<4x8x1xf32> -> vector<4x8x1xf32>
    %194 = vector.broadcast %193 : vector<4x8x1xf32> to vector<4x8x8xf32>
    %195 = arith.mulf %190, %194 : vector<4x8x8xf32>
    %196 = arith.truncf %195 : vector<4x8x8xf32> to vector<4x8x8xbf16>
    "tpu.trace_start"() <{level = 10 : i32, message = "hqk,hkd->hqd"}> : () -> ()
    %cst_78 = arith.constant dense<0.000000e+00> : vector<4x8x8xf32>
    %197 = tpu.matmul %196, %183, %cst_78 {dimension_numbers = #tpu.dot_dimension_numbers<[2], [1], [1], [2], [0, 0, 0, 1, 1, 2], [0], [0]>} : vector<4x8x8xbf16>, vector<4x8x8xbf16>, vector<4x8x8xf32> -> vector<4x8x8xf32>
    "tpu.trace_stop"() : () -> ()
    %198 = tpu.transpose %197, [1, 0, 2] : vector<4x8x8xf32> -> vector<8x4x8xf32>
    %199 = vector.shape_cast %198 : vector<8x4x8xf32> to vector<8x32xf32>
    %200 = vector.extract_strided_slice %165 {offsets = [8, 0], sizes = [8, 32], strides = [1, 1]} : vector<16x32xf32> to vector<8x32xf32>
    %201 = vector.extract_strided_slice %168 {offsets = [8, 0], sizes = [8, 32], strides = [1, 1]} : vector<16x32xf32> to vector<8x32xf32>
    %202 = vector.extract_strided_slice %171 {offsets = [8, 0], sizes = [8, 32], strides = [1, 1]} : vector<16x32xf32> to vector<8x32xf32>
    %203 = vector.shape_cast %200 : vector<8x32xf32> to vector<8x4x8xf32>
    %204 = tpu.transpose %203, [1, 0, 2] : vector<8x4x8xf32> -> vector<4x8x8xf32>
    %205 = arith.truncf %204 : vector<4x8x8xf32> to vector<4x8x8xbf16>
    %206 = vector.shape_cast %201 : vector<8x32xf32> to vector<8x4x8xf32>
    %207 = tpu.transpose %206, [1, 0, 2] : vector<8x4x8xf32> -> vector<4x8x8xf32>
    %208 = arith.truncf %207 : vector<4x8x8xf32> to vector<4x8x8xbf16>
    %209 = vector.shape_cast %202 : vector<8x32xf32> to vector<8x4x8xf32>
    %210 = tpu.transpose %209, [1, 0, 2] : vector<8x4x8xf32> -> vector<4x8x8xf32>
    %211 = arith.truncf %210 : vector<4x8x8xf32> to vector<4x8x8xbf16>
    "tpu.trace_start"() <{level = 10 : i32, message = "hqd,hkd->hqk"}> : () -> ()
    %cst_79 = arith.constant dense<0.000000e+00> : vector<4x8x8xf32>
    %212 = tpu.matmul %205, %208, %cst_79 {dimension_numbers = #tpu.dot_dimension_numbers<[2], [2], [1], [1], [0, 0, 0, 1, 1, 1], [0], [0]>} : vector<4x8x8xbf16>, vector<4x8x8xbf16>, vector<4x8x8xf32> -> vector<4x8x8xf32>
    "tpu.trace_stop"() : () -> ()
    %213 = arith.addf %212, %2 : vector<4x8x8xf32>
    %cst_80 = arith.constant dense<0xFF800000> : vector<4x8xf32>
    %214 = vector.multi_reduction <maximumf>, %213, %cst_80 [2] : vector<4x8x8xf32> to vector<4x8xf32>
    %215 = vector.shape_cast %214 : vector<4x8xf32> to vector<4x8x1xf32>
    %216 = vector.broadcast %215 : vector<4x8x1xf32> to vector<4x8x8xf32>
    %217 = arith.subf %213, %216 : vector<4x8x8xf32>
    %218 = math.exp %217 : vector<4x8x8xf32>
    %cst_81 = arith.constant dense<0.000000e+00> : vector<4x8xf32>
    %219 = vector.multi_reduction <add>, %218, %cst_81 [2] : vector<4x8x8xf32> to vector<4x8xf32>
    %220 = vector.shape_cast %219 : vector<4x8xf32> to vector<4x8x1xf32>
    %221 = tpu.reciprocal %220 {approx = true} : vector<4x8x1xf32> -> vector<4x8x1xf32>
    %222 = vector.broadcast %221 : vector<4x8x1xf32> to vector<4x8x8xf32>
    %223 = arith.mulf %218, %222 : vector<4x8x8xf32>
    %224 = arith.truncf %223 : vector<4x8x8xf32> to vector<4x8x8xbf16>
    "tpu.trace_start"() <{level = 10 : i32, message = "hqk,hkd->hqd"}> : () -> ()
    %cst_82 = arith.constant dense<0.000000e+00> : vector<4x8x8xf32>
    %225 = tpu.matmul %224, %211, %cst_82 {dimension_numbers = #tpu.dot_dimension_numbers<[2], [1], [1], [2], [0, 0, 0, 1, 1, 2], [0], [0]>} : vector<4x8x8xbf16>, vector<4x8x8xbf16>, vector<4x8x8xf32> -> vector<4x8x8xf32>
    "tpu.trace_stop"() : () -> ()
    %226 = tpu.transpose %225, [1, 0, 2] : vector<4x8x8xf32> -> vector<8x4x8xf32>
    %227 = vector.shape_cast %226 : vector<8x4x8xf32> to vector<8x32xf32>
    %228 = tpu.concatenate %199, %227 in 0 : vector<8x32xf32>, vector<8x32xf32> -> vector<16x32xf32>
    %c0_83 = arith.constant 0 : index
    %c0_84 = arith.constant 0 : index
    %229 = vector.load %arg20[%c0_83, %c0_84] : memref<32x32xbf16, #tpu.memory_space<vmem>>, vector<32x32xbf16>
    %230 = arith.truncf %228 : vector<16x32xf32> to vector<16x32xbf16>
    %cst_85 = arith.constant dense<0.000000e+00> : vector<16x32xf32>
    %231 = tpu.matmul %230, %229, %cst_85 {dimension_numbers = #tpu.dot_dimension_numbers<[1], [0], [0], [1], [0, 0, 1, 1], [], []>} : vector<16x32xbf16>, vector<32x32xbf16>, vector<16x32xf32> -> vector<16x32xf32>
    %232 = arith.addf %149, %231 : vector<16x32xf32>
    %c0_86 = arith.constant 0 : index
    %c0_87 = arith.constant 0 : index
    %233 = vector.load %arg21[%c0_86, %c0_87] : memref<1x32xf32, #tpu.memory_space<vmem>>, vector<1x32xf32>
    %234 = arith.mulf %232, %232 : vector<16x32xf32>
    %cst_88 = arith.constant dense<0.000000e+00> : vector<16xf32>
    %235 = vector.multi_reduction <add>, %234, %cst_88 [1] : vector<16x32xf32> to vector<16xf32>
    %236 = vector.shape_cast %235 : vector<16xf32> to vector<16x1xf32>
    %cst_89 = arith.constant 3.200000e+01 : f32
    %237 = vector.broadcast %cst_89 : f32 to vector<16x1xf32>
    %238 = arith.divf %236, %237 : vector<16x1xf32>
    %cst_90 = arith.constant 9.99999997E-7 : f32
    %239 = vector.broadcast %cst_90 : f32 to vector<16x1xf32>
    %240 = arith.addf %238, %239 : vector<16x1xf32>
    %241 = math.rsqrt %240 : vector<16x1xf32>
    %242 = vector.broadcast %241 : vector<16x1xf32> to vector<16x32xf32>
    %243 = arith.mulf %232, %242 : vector<16x32xf32>
    %244 = vector.broadcast %233 : vector<1x32xf32> to vector<16x32xf32>
    %245 = arith.mulf %243, %244 : vector<16x32xf32>
    %c0_91 = arith.constant 0 : index
    %c0_92 = arith.constant 0 : index
    %246 = vector.load %arg22[%c0_91, %c0_92] : memref<32x32xbf16, #tpu.memory_space<vmem>>, vector<32x32xbf16>
    %247 = arith.truncf %245 : vector<16x32xf32> to vector<16x32xbf16>
    %cst_93 = arith.constant dense<0.000000e+00> : vector<16x32xf32>
    %248 = tpu.matmul %247, %246, %cst_93 {dimension_numbers = #tpu.dot_dimension_numbers<[1], [0], [0], [1], [0, 0, 1, 1], [], []>} : vector<16x32xbf16>, vector<32x32xbf16>, vector<16x32xf32> -> vector<16x32xf32>
    %c0_94 = arith.constant 0 : index
    %c0_95 = arith.constant 0 : index
    %249 = vector.load %arg23[%c0_94, %c0_95] : memref<32x32xbf16, #tpu.memory_space<vmem>>, vector<32x32xbf16>
    %250 = arith.truncf %147 : vector<16x32xf32> to vector<16x32xbf16>
    %cst_96 = arith.constant dense<0.000000e+00> : vector<16x32xf32>
    %251 = tpu.matmul %250, %249, %cst_96 {dimension_numbers = #tpu.dot_dimension_numbers<[1], [0], [0], [1], [0, 0, 1, 1], [], []>} : vector<16x32xbf16>, vector<32x32xbf16>, vector<16x32xf32> -> vector<16x32xf32>
    %c0_97 = arith.constant 0 : index
    %c0_98 = arith.constant 0 : index
    %252 = vector.load %arg24[%c0_97, %c0_98] : memref<32x32xbf16, #tpu.memory_space<vmem>>, vector<32x32xbf16>
    %253 = arith.truncf %147 : vector<16x32xf32> to vector<16x32xbf16>
    %cst_99 = arith.constant dense<0.000000e+00> : vector<16x32xf32>
    %254 = tpu.matmul %253, %252, %cst_99 {dimension_numbers = #tpu.dot_dimension_numbers<[1], [0], [0], [1], [0, 0, 1, 1], [], []>} : vector<16x32xbf16>, vector<32x32xbf16>, vector<16x32xf32> -> vector<16x32xf32>
    %255 = vector.extract_strided_slice %0 {offsets = [0, 0, 0], sizes = [1, 1, 8], strides = [1, 1, 1]} : vector<2x1x8xf32> to vector<1x1x8xf32>
    %256 = vector.shape_cast %255 : vector<1x1x8xf32> to vector<1x8xf32>
    %257 = vector.extract_strided_slice %248 {offsets = [0, 0], sizes = [8, 32], strides = [1, 1]} : vector<16x32xf32> to vector<8x32xf32>
    %258 = vector.extract_strided_slice %251 {offsets = [0, 0], sizes = [8, 32], strides = [1, 1]} : vector<16x32xf32> to vector<8x32xf32>
    %259 = vector.extract_strided_slice %254 {offsets = [0, 0], sizes = [8, 32], strides = [1, 1]} : vector<16x32xf32> to vector<8x32xf32>
    %260 = vector.shape_cast %257 : vector<8x32xf32> to vector<8x4x8xf32>
    %261 = tpu.transpose %260, [1, 0, 2] : vector<8x4x8xf32> -> vector<4x8x8xf32>
    %262 = arith.truncf %261 : vector<4x8x8xf32> to vector<4x8x8xbf16>
    %263 = vector.shape_cast %258 : vector<8x32xf32> to vector<8x4x8xf32>
    %264 = tpu.transpose %263, [1, 0, 2] : vector<8x4x8xf32> -> vector<4x8x8xf32>
    %265 = arith.truncf %264 : vector<4x8x8xf32> to vector<4x8x8xbf16>
    %266 = vector.shape_cast %259 : vector<8x32xf32> to vector<8x4x8xf32>
    %267 = tpu.transpose %266, [1, 0, 2] : vector<8x4x8xf32> -> vector<4x8x8xf32>
    %268 = arith.truncf %267 : vector<4x8x8xf32> to vector<4x8x8xbf16>
    "tpu.trace_start"() <{level = 10 : i32, message = "hqd,hkd->hqk"}> : () -> ()
    %cst_100 = arith.constant dense<0.000000e+00> : vector<4x8x8xf32>
    %269 = tpu.matmul %262, %265, %cst_100 {dimension_numbers = #tpu.dot_dimension_numbers<[2], [2], [1], [1], [0, 0, 0, 1, 1, 1], [0], [0]>} : vector<4x8x8xbf16>, vector<4x8x8xbf16>, vector<4x8x8xf32> -> vector<4x8x8xf32>
    "tpu.trace_stop"() : () -> ()
    %270 = vector.shape_cast %256 : vector<1x8xf32> to vector<1x1x8xf32>
    %271 = vector.broadcast %270 : vector<1x1x8xf32> to vector<4x8x8xf32>
    %272 = arith.addf %269, %271 : vector<4x8x8xf32>
    %cst_101 = arith.constant dense<0xFF800000> : vector<4x8xf32>
    %273 = vector.multi_reduction <maximumf>, %272, %cst_101 [2] : vector<4x8x8xf32> to vector<4x8xf32>
    %274 = vector.shape_cast %273 : vector<4x8xf32> to vector<4x8x1xf32>
    %275 = vector.broadcast %274 : vector<4x8x1xf32> to vector<4x8x8xf32>
    %276 = arith.subf %272, %275 : vector<4x8x8xf32>
    %277 = math.exp %276 : vector<4x8x8xf32>
    %cst_102 = arith.constant dense<0.000000e+00> : vector<4x8xf32>
    %278 = vector.multi_reduction <add>, %277, %cst_102 [2] : vector<4x8x8xf32> to vector<4x8xf32>
    %279 = vector.shape_cast %278 : vector<4x8xf32> to vector<4x8x1xf32>
    %280 = tpu.reciprocal %279 {approx = true} : vector<4x8x1xf32> -> vector<4x8x1xf32>
    %281 = vector.broadcast %280 : vector<4x8x1xf32> to vector<4x8x8xf32>
    %282 = arith.mulf %277, %281 : vector<4x8x8xf32>
    %283 = arith.truncf %282 : vector<4x8x8xf32> to vector<4x8x8xbf16>
    "tpu.trace_start"() <{level = 10 : i32, message = "hqk,hkd->hqd"}> : () -> ()
    %cst_103 = arith.constant dense<0.000000e+00> : vector<4x8x8xf32>
    %284 = tpu.matmul %283, %268, %cst_103 {dimension_numbers = #tpu.dot_dimension_numbers<[2], [1], [1], [2], [0, 0, 0, 1, 1, 2], [0], [0]>} : vector<4x8x8xbf16>, vector<4x8x8xbf16>, vector<4x8x8xf32> -> vector<4x8x8xf32>
    "tpu.trace_stop"() : () -> ()
    %285 = tpu.transpose %284, [1, 0, 2] : vector<4x8x8xf32> -> vector<8x4x8xf32>
    %286 = vector.shape_cast %285 : vector<8x4x8xf32> to vector<8x32xf32>
    %287 = vector.extract_strided_slice %0 {offsets = [1, 0, 0], sizes = [1, 1, 8], strides = [1, 1, 1]} : vector<2x1x8xf32> to vector<1x1x8xf32>
    %288 = vector.shape_cast %287 : vector<1x1x8xf32> to vector<1x8xf32>
    %289 = vector.extract_strided_slice %248 {offsets = [8, 0], sizes = [8, 32], strides = [1, 1]} : vector<16x32xf32> to vector<8x32xf32>
    %290 = vector.extract_strided_slice %251 {offsets = [8, 0], sizes = [8, 32], strides = [1, 1]} : vector<16x32xf32> to vector<8x32xf32>
    %291 = vector.extract_strided_slice %254 {offsets = [8, 0], sizes = [8, 32], strides = [1, 1]} : vector<16x32xf32> to vector<8x32xf32>
    %292 = vector.shape_cast %289 : vector<8x32xf32> to vector<8x4x8xf32>
    %293 = tpu.transpose %292, [1, 0, 2] : vector<8x4x8xf32> -> vector<4x8x8xf32>
    %294 = arith.truncf %293 : vector<4x8x8xf32> to vector<4x8x8xbf16>
    %295 = vector.shape_cast %290 : vector<8x32xf32> to vector<8x4x8xf32>
    %296 = tpu.transpose %295, [1, 0, 2] : vector<8x4x8xf32> -> vector<4x8x8xf32>
    %297 = arith.truncf %296 : vector<4x8x8xf32> to vector<4x8x8xbf16>
    %298 = vector.shape_cast %291 : vector<8x32xf32> to vector<8x4x8xf32>
    %299 = tpu.transpose %298, [1, 0, 2] : vector<8x4x8xf32> -> vector<4x8x8xf32>
    %300 = arith.truncf %299 : vector<4x8x8xf32> to vector<4x8x8xbf16>
    "tpu.trace_start"() <{level = 10 : i32, message = "hqd,hkd->hqk"}> : () -> ()
    %cst_104 = arith.constant dense<0.000000e+00> : vector<4x8x8xf32>
    %301 = tpu.matmul %294, %297, %cst_104 {dimension_numbers = #tpu.dot_dimension_numbers<[2], [2], [1], [1], [0, 0, 0, 1, 1, 1], [0], [0]>} : vector<4x8x8xbf16>, vector<4x8x8xbf16>, vector<4x8x8xf32> -> vector<4x8x8xf32>
    "tpu.trace_stop"() : () -> ()
    %302 = vector.shape_cast %288 : vector<1x8xf32> to vector<1x1x8xf32>
    %303 = vector.broadcast %302 : vector<1x1x8xf32> to vector<4x8x8xf32>
    %304 = arith.addf %301, %303 : vector<4x8x8xf32>
    %cst_105 = arith.constant dense<0xFF800000> : vector<4x8xf32>
    %305 = vector.multi_reduction <maximumf>, %304, %cst_105 [2] : vector<4x8x8xf32> to vector<4x8xf32>
    %306 = vector.shape_cast %305 : vector<4x8xf32> to vector<4x8x1xf32>
    %307 = vector.broadcast %306 : vector<4x8x1xf32> to vector<4x8x8xf32>
    %308 = arith.subf %304, %307 : vector<4x8x8xf32>
    %309 = math.exp %308 : vector<4x8x8xf32>
    %cst_106 = arith.constant dense<0.000000e+00> : vector<4x8xf32>
    %310 = vector.multi_reduction <add>, %309, %cst_106 [2] : vector<4x8x8xf32> to vector<4x8xf32>
    %311 = vector.shape_cast %310 : vector<4x8xf32> to vector<4x8x1xf32>
    %312 = tpu.reciprocal %311 {approx = true} : vector<4x8x1xf32> -> vector<4x8x1xf32>
    %313 = vector.broadcast %312 : vector<4x8x1xf32> to vector<4x8x8xf32>
    %314 = arith.mulf %309, %313 : vector<4x8x8xf32>
    %315 = arith.truncf %314 : vector<4x8x8xf32> to vector<4x8x8xbf16>
    "tpu.trace_start"() <{level = 10 : i32, message = "hqk,hkd->hqd"}> : () -> ()
    %cst_107 = arith.constant dense<0.000000e+00> : vector<4x8x8xf32>
    %316 = tpu.matmul %315, %300, %cst_107 {dimension_numbers = #tpu.dot_dimension_numbers<[2], [1], [1], [2], [0, 0, 0, 1, 1, 2], [0], [0]>} : vector<4x8x8xbf16>, vector<4x8x8xbf16>, vector<4x8x8xf32> -> vector<4x8x8xf32>
    "tpu.trace_stop"() : () -> ()
    %317 = tpu.transpose %316, [1, 0, 2] : vector<4x8x8xf32> -> vector<8x4x8xf32>
    %318 = vector.shape_cast %317 : vector<8x4x8xf32> to vector<8x32xf32>
    %319 = tpu.concatenate %286, %318 in 0 : vector<8x32xf32>, vector<8x32xf32> -> vector<16x32xf32>
    %c0_108 = arith.constant 0 : index
    %c0_109 = arith.constant 0 : index
    %320 = vector.load %arg25[%c0_108, %c0_109] : memref<32x32xbf16, #tpu.memory_space<vmem>>, vector<32x32xbf16>
    %321 = arith.truncf %319 : vector<16x32xf32> to vector<16x32xbf16>
    %cst_110 = arith.constant dense<0.000000e+00> : vector<16x32xf32>
    %322 = tpu.matmul %321, %320, %cst_110 {dimension_numbers = #tpu.dot_dimension_numbers<[1], [0], [0], [1], [0, 0, 1, 1], [], []>} : vector<16x32xbf16>, vector<32x32xbf16>, vector<16x32xf32> -> vector<16x32xf32>
    %323 = arith.addf %232, %322 : vector<16x32xf32>
    %c0_111 = arith.constant 0 : index
    %c0_112 = arith.constant 0 : index
    %324 = vector.load %arg26[%c0_111, %c0_112] : memref<1x32xf32, #tpu.memory_space<vmem>>, vector<1x32xf32>
    %325 = arith.mulf %323, %323 : vector<16x32xf32>
    %cst_113 = arith.constant dense<0.000000e+00> : vector<16xf32>
    %326 = vector.multi_reduction <add>, %325, %cst_113 [1] : vector<16x32xf32> to vector<16xf32>
    %327 = vector.shape_cast %326 : vector<16xf32> to vector<16x1xf32>
    %cst_114 = arith.constant 3.200000e+01 : f32
    %328 = vector.broadcast %cst_114 : f32 to vector<16x1xf32>
    %329 = arith.divf %327, %328 : vector<16x1xf32>
    %cst_115 = arith.constant 9.99999997E-7 : f32
    %330 = vector.broadcast %cst_115 : f32 to vector<16x1xf32>
    %331 = arith.addf %329, %330 : vector<16x1xf32>
    %332 = math.rsqrt %331 : vector<16x1xf32>
    %333 = vector.broadcast %332 : vector<16x1xf32> to vector<16x32xf32>
    %334 = arith.mulf %323, %333 : vector<16x32xf32>
    %335 = vector.broadcast %324 : vector<1x32xf32> to vector<16x32xf32>
    %336 = arith.mulf %334, %335 : vector<16x32xf32>
    %c0_116 = arith.constant 0 : index
    %c0_117 = arith.constant 0 : index
    %337 = vector.load %arg27[%c0_116, %c0_117] : memref<32x64xbf16, #tpu.memory_space<vmem>>, vector<32x64xbf16>
    %c0_118 = arith.constant 0 : index
    %c0_119 = arith.constant 0 : index
    %338 = vector.load %arg28[%c0_118, %c0_119] : memref<32x64xbf16, #tpu.memory_space<vmem>>, vector<32x64xbf16>
    %c0_120 = arith.constant 0 : index
    %c0_121 = arith.constant 0 : index
    %339 = vector.load %arg29[%c0_120, %c0_121] : memref<64x32xbf16, #tpu.memory_space<vmem>>, vector<64x32xbf16>
    %340 = arith.truncf %336 : vector<16x32xf32> to vector<16x32xbf16>
    %cst_122 = arith.constant dense<0.000000e+00> : vector<16x64xf32>
    %341 = tpu.matmul %340, %337, %cst_122 {dimension_numbers = #tpu.dot_dimension_numbers<[1], [0], [0], [1], [0, 0, 1, 1], [], []>} : vector<16x32xbf16>, vector<32x64xbf16>, vector<16x64xf32> -> vector<16x64xf32>
    %342 = arith.truncf %336 : vector<16x32xf32> to vector<16x32xbf16>
    %cst_123 = arith.constant dense<0.000000e+00> : vector<16x64xf32>
    %343 = tpu.matmul %342, %338, %cst_123 {dimension_numbers = #tpu.dot_dimension_numbers<[1], [0], [0], [1], [0, 0, 1, 1], [], []>} : vector<16x32xbf16>, vector<32x64xbf16>, vector<16x64xf32> -> vector<16x64xf32>
    %cst_124 = arith.constant 5.000000e-01 : f32
    %344 = vector.broadcast %cst_124 : f32 to vector<16x64xf32>
    %345 = arith.mulf %344, %341 : vector<16x64xf32>
    %cst_125 = arith.constant 4.471500e-02 : f32
    %346 = vector.broadcast %cst_125 : f32 to vector<16x64xf32>
    %347 = arith.mulf %346, %341 : vector<16x64xf32>
    %348 = arith.mulf %347, %341 : vector<16x64xf32>
    %349 = arith.mulf %348, %341 : vector<16x64xf32>
    %350 = arith.addf %341, %349 : vector<16x64xf32>
    %cst_126 = arith.constant 0.797884583 : f32
    %351 = vector.broadcast %cst_126 : f32 to vector<16x64xf32>
    %352 = arith.mulf %351, %350 : vector<16x64xf32>
    %353 = math.tanh %352 : vector<16x64xf32>
    %cst_127 = arith.constant 1.000000e+00 : f32
    %354 = vector.broadcast %cst_127 : f32 to vector<16x64xf32>
    %355 = arith.addf %354, %353 : vector<16x64xf32>
    %356 = arith.mulf %345, %355 : vector<16x64xf32>
    %357 = arith.mulf %356, %343 : vector<16x64xf32>
    %358 = arith.truncf %357 : vector<16x64xf32> to vector<16x64xbf16>
    %cst_128 = arith.constant dense<0.000000e+00> : vector<16x32xf32>
    %359 = tpu.matmul %358, %339, %cst_128 {dimension_numbers = #tpu.dot_dimension_numbers<[1], [0], [0], [1], [0, 0, 1, 1], [], []>} : vector<16x64xbf16>, vector<64x32xbf16>, vector<16x32xf32> -> vector<16x32xf32>
    %360 = arith.addf %323, %359 : vector<16x32xf32>
    %c0_129 = arith.constant 0 : index
    %c0_130 = arith.constant 0 : index
    %361 = vector.load %arg30[%c0_129, %c0_130] : memref<1x32xf32, #tpu.memory_space<vmem>>, vector<1x32xf32>
    %362 = arith.mulf %360, %360 : vector<16x32xf32>
    %cst_131 = arith.constant dense<0.000000e+00> : vector<16xf32>
    %363 = vector.multi_reduction <add>, %362, %cst_131 [1] : vector<16x32xf32> to vector<16xf32>
    %364 = vector.shape_cast %363 : vector<16xf32> to vector<16x1xf32>
    %cst_132 = arith.constant 3.200000e+01 : f32
    %365 = vector.broadcast %cst_132 : f32 to vector<16x1xf32>
    %366 = arith.divf %364, %365 : vector<16x1xf32>
    %cst_133 = arith.constant 9.99999997E-7 : f32
    %367 = vector.broadcast %cst_133 : f32 to vector<16x1xf32>
    %368 = arith.addf %366, %367 : vector<16x1xf32>
    %369 = math.rsqrt %368 : vector<16x1xf32>
    %370 = vector.broadcast %369 : vector<16x1xf32> to vector<16x32xf32>
    %371 = arith.mulf %360, %370 : vector<16x32xf32>
    %372 = vector.broadcast %361 : vector<1x32xf32> to vector<16x32xf32>
    %373 = arith.mulf %371, %372 : vector<16x32xf32>
    %c0_134 = arith.constant 0 : index
    %c0_135 = arith.constant 0 : index
    %374 = vector.load %arg31[%c0_134, %c0_135] : memref<32x128xbf16, #tpu.memory_space<vmem>>, vector<32x128xbf16>
    %375 = arith.truncf %373 : vector<16x32xf32> to vector<16x32xbf16>
    %cst_136 = arith.constant dense<0.000000e+00> : vector<16x128xf32>
    %376 = tpu.matmul %375, %374, %cst_136 {dimension_numbers = #tpu.dot_dimension_numbers<[1], [0], [0], [1], [0, 0, 1, 1], [], []>} : vector<16x32xbf16>, vector<32x128xbf16>, vector<16x128xf32> -> vector<16x128xf32>
    %377 = vector.shape_cast %376 : vector<16x128xf32> to vector<2x8x128xf32>
    %c0_137 = arith.constant 0 : index
    %c0_138 = arith.constant 0 : index
    %c0_139 = arith.constant 0 : index
    %378 = vector.load %arg32[%c0_137, %c0_138, %c0_139] : memref<2x8x128xf32, #tpu.memory_space<vmem>>, vector<2x8x128xf32>
    tpu.vector_store %arg32[%c0_137, %c0_138, %c0_139], %377 {strides = array<i32>} : memref<2x8x128xf32, #tpu.memory_space<vmem>>, vector<2x8x128xf32>,
    return
  }
  func.func @transform_0(%arg0: i32) -> (i32, i32, i32) {
    %c0_i32 = arith.constant 0 : i32
    %c0_i32_0 = arith.constant 0 : i32
    %c0_i32_1 = arith.constant 0 : i32
    return %arg0, %c0_i32, %c0_i32_0 : i32, i32, i32
  }
  func.func @transform_1(%arg0: i32) -> (i32, i32, i32) {
    %c0_i32 = arith.constant 0 : i32
    %c0_i32_0 = arith.constant 0 : i32
    %c0_i32_1 = arith.constant 0 : i32
    return %arg0, %c0_i32, %c0_i32_0 : i32, i32, i32
  }
  func.func @transform_2(%arg0: i32) -> (i32, i32, i32) {
    %c0_i32 = arith.constant 0 : i32
    %c0_i32_0 = arith.constant 0 : i32
    %c0_i32_1 = arith.constant 0 : i32
    return %arg0, %c0_i32, %c0_i32_0 : i32, i32, i32
  }
  func.func @transform_3(%arg0: i32) -> (i32, i32, i32) {
    %c0_i32 = arith.constant 0 : i32
    %c0_i32_0 = arith.constant 0 : i32
    %c0_i32_1 = arith.constant 0 : i32
    %c0_i32_2 = arith.constant 0 : i32
    return %c0_i32, %c0_i32_0, %c0_i32_1 : i32, i32, i32
  }
  func.func @transform_4(%arg0: i32) -> (i32, i32, i32) {
    %c0_i32 = arith.constant 0 : i32
    %c0_i32_0 = arith.constant 0 : i32
    %c0_i32_1 = arith.constant 0 : i32
    %c0_i32_2 = arith.constant 0 : i32
    return %c0_i32, %c0_i32_0, %c0_i32_1 : i32, i32, i32
  }
  func.func @transform_5(%arg0: i32) -> (i32, i32) {
    %c0_i32 = arith.constant 0 : i32
    %c0_i32_0 = arith.constant 0 : i32
    %c0_i32_1 = arith.constant 0 : i32
    return %c0_i32, %c0_i32_0 : i32, i32
  }
  func.func @transform_6(%arg0: i32) -> (i32, i32) {
    %c0_i32 = arith.constant 0 : i32
    %c0_i32_0 = arith.constant 0 : i32
    %c0_i32_1 = arith.constant 0 : i32
    return %c0_i32, %c0_i32_0 : i32, i32
  }
  func.func @transform_7(%arg0: i32) -> (i32, i32) {
    %c0_i32 = arith.constant 0 : i32
    %c0_i32_0 = arith.constant 0 : i32
    %c0_i32_1 = arith.constant 0 : i32
    return %c0_i32, %c0_i32_0 : i32, i32
  }
  func.func @transform_8(%arg0: i32) -> (i32, i32) {
    %c0_i32 = arith.constant 0 : i32
    %c0_i32_0 = arith.constant 0 : i32
    %c0_i32_1 = arith.constant 0 : i32
    return %c0_i32, %c0_i32_0 : i32, i32
  }
  func.func @transform_9(%arg0: i32) -> (i32, i32) {
    %c0_i32 = arith.constant 0 : i32
    %c0_i32_0 = arith.constant 0 : i32
    %c0_i32_1 = arith.constant 0 : i32
    return %c0_i32, %c0_i32_0 : i32, i32
  }
  func.func @transform_10(%arg0: i32) -> (i32, i32) {
    %c0_i32 = arith.constant 0 : i32
    %c0_i32_0 = arith.constant 0 : i32
    %c0_i32_1 = arith.constant 0 : i32
    return %c0_i32, %c0_i32_0 : i32, i32
  }
  func.func @transform_11(%arg0: i32) -> (i32, i32) {
    %c0_i32 = arith.constant 0 : i32
    %c0_i32_0 = arith.constant 0 : i32
    %c0_i32_1 = arith.constant 0 : i32
    return %c0_i32, %c0_i32_0 : i32, i32
  }
  func.func @transform_12(%arg0: i32) -> (i32, i32) {
    %c0_i32 = arith.constant 0 : i32
    %c0_i32_0 = arith.constant 0 : i32
    %c0_i32_1 = arith.constant 0 : i32
    return %c0_i32, %c0_i32_0 : i32, i32
  }
  func.func @transform_13(%arg0: i32) -> (i32, i32) {
    %c0_i32 = arith.constant 0 : i32
    %c0_i32_0 = arith.constant 0 : i32
    %c0_i32_1 = arith.constant 0 : i32
    return %c0_i32, %c0_i32_0 : i32, i32
  }
  func.func @transform_14(%arg0: i32) -> (i32, i32) {
    %c0_i32 = arith.constant 0 : i32
    %c0_i32_0 = arith.constant 0 : i32
    %c0_i32_1 = arith.constant 0 : i32
    return %c0_i32, %c0_i32_0 : i32, i32
  }
  func.func @transform_15(%arg0: i32) -> (i32, i32) {
    %c0_i32 = arith.constant 0 : i32
    %c0_i32_0 = arith.constant 0 : i32
    %c0_i32_1 = arith.constant 0 : i32
    return %c0_i32, %c0_i32_0 : i32, i32
  }
  func.func @transform_16(%arg0: i32) -> (i32, i32) {
    %c0_i32 = arith.constant 0 : i32
    %c0_i32_0 = arith.constant 0 : i32
    %c0_i32_1 = arith.constant 0 : i32
    return %c0_i32, %c0_i32_0 : i32, i32
  }
  func.func @transform_17(%arg0: i32) -> (i32, i32) {
    %c0_i32 = arith.constant 0 : i32
    %c0_i32_0 = arith.constant 0 : i32
    %c0_i32_1 = arith.constant 0 : i32
    return %c0_i32, %c0_i32_0 : i32, i32
  }
  func.func @transform_18(%arg0: i32) -> (i32, i32) {
    %c0_i32 = arith.constant 0 : i32
    %c0_i32_0 = arith.constant 0 : i32
    %c0_i32_1 = arith.constant 0 : i32
    return %c0_i32, %c0_i32_0 : i32, i32
  }
  func.func @transform_19(%arg0: i32) -> (i32, i32) {
    %c0_i32 = arith.constant 0 : i32
    %c0_i32_0 = arith.constant 0 : i32
    %c0_i32_1 = arith.constant 0 : i32
    return %c0_i32, %c0_i32_0 : i32, i32
  }
  func.func @transform_20(%arg0: i32) -> (i32, i32) {
    %c0_i32 = arith.constant 0 : i32
    %c0_i32_0 = arith.constant 0 : i32
    %c0_i32_1 = arith.constant 0 : i32
    return %c0_i32, %c0_i32_0 : i32, i32
  }
  func.func @transform_21(%arg0: i32) -> (i32, i32) {
    %c0_i32 = arith.constant 0 : i32
    %c0_i32_0 = arith.constant 0 : i32
    %c0_i32_1 = arith.constant 0 : i32
    return %c0_i32, %c0_i32_0 : i32, i32
  }
  func.func @transform_22(%arg0: i32) -> (i32, i32) {
    %c0_i32 = arith.constant 0 : i32
    %c0_i32_0 = arith.constant 0 : i32
    %c0_i32_1 = arith.constant 0 : i32
    return %c0_i32, %c0_i32_0 : i32, i32
  }
  func.func @transform_23(%arg0: i32) -> (i32, i32) {
    %c0_i32 = arith.constant 0 : i32
    %c0_i32_0 = arith.constant 0 : i32
    %c0_i32_1 = arith.constant 0 : i32
    return %c0_i32, %c0_i32_0 : i32, i32
  }
  func.func @transform_24(%arg0: i32) -> (i32, i32) {
    %c0_i32 = arith.constant 0 : i32
    %c0_i32_0 = arith.constant 0 : i32
    %c0_i32_1 = arith.constant 0 : i32
    return %c0_i32, %c0_i32_0 : i32, i32
  }
  func.func @transform_25(%arg0: i32) -> (i32, i32) {
    %c0_i32 = arith.constant 0 : i32
    %c0_i32_0 = arith.constant 0 : i32
    %c0_i32_1 = arith.constant 0 : i32
    return %c0_i32, %c0_i32_0 : i32, i32
  }
  func.func @transform_26(%arg0: i32) -> (i32, i32) {
    %c0_i32 = arith.constant 0 : i32
    %c0_i32_0 = arith.constant 0 : i32
    %c0_i32_1 = arith.constant 0 : i32
    return %c0_i32, %c0_i32_0 : i32, i32
  }
  func.func @transform_27(%arg0: i32) -> (i32, i32) {
    %c0_i32 = arith.constant 0 : i32
    %c0_i32_0 = arith.constant 0 : i32
    %c0_i32_1 = arith.constant 0 : i32
    return %c0_i32, %c0_i32_0 : i32, i32
  }
  func.func @transform_28(%arg0: i32) -> (i32, i32) {
    %c0_i32 = arith.constant 0 : i32
    %c0_i32_0 = arith.constant 0 : i32
    %c0_i32_1 = arith.constant 0 : i32
    return %c0_i32, %c0_i32_0 : i32, i32
  }
  func.func @transform_29(%arg0: i32) -> (i32, i32) {
    %c0_i32 = arith.constant 0 : i32
    %c0_i32_0 = arith.constant 0 : i32
    %c0_i32_1 = arith.constant 0 : i32
    return %c0_i32, %c0_i32_0 : i32, i32
  }
  func.func @transform_30(%arg0: i32) -> (i32, i32) {
    %c0_i32 = arith.constant 0 : i32
    %c0_i32_0 = arith.constant 0 : i32
    %c0_i32_1 = arith.constant 0 : i32
    return %c0_i32, %c0_i32_0 : i32, i32
  }
  func.func @transform_31(%arg0: i32) -> (i32, i32, i32) {
    %c0_i32 = arith.constant 0 : i32
    %c0_i32_0 = arith.constant 0 : i32
    %c0_i32_1 = arith.constant 0 : i32
    return %arg0, %c0_i32, %c0_i32_0 : i32, i32, i32
  }
}

</mosaic_0001>

<llo_original>
// kernel: flan_t5_forward.1
$region0: #{flan_t5_forward.1}
  #allocation0 [shape = 'u32[]', space=smem, size = 0x4, offset = 0x4, fixed_abs, tag = 'smem constant byte address 0x4 - core index']
  #allocation1 [shape = 'u32[144,128]{1,0:T(1,128)}', space=vmem, size = 0x12000, scoped, tag = 'internal scratch']
  %s0 = inlined_call_operand.smem [shape: u32[32], index: -1, kind: input, shape index: {}]
  %s1 = sld [smem:[%s0]]
  %s2 = scalar_lea.smem %s0, 1
  %s3 = sld [smem:[%s2]]
  %s4 = scalar_lea.smem %s0, 2
  %s5 = sld [smem:[%s4]]
  %s6 = scalar_lea.smem %s0, 3
  %s7 = sld [smem:[%s6]]
  %s8 = scalar_lea.smem %s0, 4
  %s9 = sld [smem:[%s8]]
  %s10 = scalar_lea.smem %s0, 5
  %s11 = sld [smem:[%s10]]
  %s12 = scalar_lea.smem %s0, 6
  %s13 = sld [smem:[%s12]]
  %s14 = scalar_lea.smem %s0, 7
  %s15 = sld [smem:[%s14]]
  %s16 = scalar_lea.smem %s0, 8
  %s17 = sld [smem:[%s16]]
  %s18 = scalar_lea.smem %s0, 9
  %s19 = sld [smem:[%s18]]
  %s20 = scalar_lea.smem %s0, 10
  %s21 = sld [smem:[%s20]]
  %s22 = scalar_lea.smem %s0, 11
  %s23 = sld [smem:[%s22]]
  %s24 = scalar_lea.smem %s0, 12
  %s25 = sld [smem:[%s24]]
  %s26 = scalar_lea.smem %s0, 13
  %s27 = sld [smem:[%s26]]
  %s28 = scalar_lea.smem %s0, 14
  %s29 = sld [smem:[%s28]]
  %s30 = scalar_lea.smem %s0, 15
  %s31 = sld [smem:[%s30]]
  %s32 = scalar_lea.smem %s0, 16
  %s33 = sld [smem:[%s32]]
  %s34 = scalar_lea.smem %s0, 17
  %s35 = sld [smem:[%s34]]
  %s36 = scalar_lea.smem %s0, 18
  %s37 = sld [smem:[%s36]]
  %s38 = scalar_lea.smem %s0, 19
  %s39 = sld [smem:[%s38]]
  %s40 = scalar_lea.smem %s0, 20
  %s41 = sld [smem:[%s40]]
  %s42 = scalar_lea.smem %s0, 21
  %s43 = sld [smem:[%s42]]
  %s44 = scalar_lea.smem %s0, 22
  %s45 = sld [smem:[%s44]]
  %s46 = scalar_lea.smem %s0, 23
  %s47 = sld [smem:[%s46]]
  %s48 = scalar_lea.smem %s0, 24
  %s49 = sld [smem:[%s48]]
  %s50 = scalar_lea.smem %s0, 25
  %s51 = sld [smem:[%s50]]
  %s52 = scalar_lea.smem %s0, 26
  %s53 = sld [smem:[%s52]]
  %s54 = scalar_lea.smem %s0, 27
  %s55 = sld [smem:[%s54]]
  %s56 = scalar_lea.smem %s0, 28
  %s57 = sld [smem:[%s56]]
  %s58 = scalar_lea.smem %s0, 29
  %s59 = sld [smem:[%s58]]
  %s60 = scalar_lea.smem %s0, 30
  %s61 = sld [smem:[%s60]]
  %s62 = scalar_lea.smem %s0, 31
  %s63 = sld [smem:[%s62]]
  %s64 = sld [smem:[#allocation0]]
  $region134: #{flan_t5_forward.1} parent=0
    _
  %s66 = ssub.s32 1, %s64
  %s67 = scalar_select 0, %s66, %s64
  $region1: #{flan_t5_forward.1} parent=0
    #allocation2 [shape = 'u8[8192]{0}', space=vmem, size = 0x2000, scoped, tag = 'output window, operand 0, single buffered']
    #allocation3 [shape = 's32[1]{0}', space=sflag, size = 0x4, scoped, tag = 'scoped memory for flan_t5_forward.1']
    %68 = vsyncpa [#allocation3], 0
    // Predicated region
    $region2: #{flan_t5_forward.1} parent=1 // pred_check
      _
    $region3: #{flan_t5_forward.1} parent=1 // pred_check_branch
      %70 = sbr.rel (0) target = $region5
    $region4: #{flan_t5_forward.1} parent=1 // pred_region
      _
    $region5: #{flan_t5_forward.1} parent=1 // pred_fallthru
      _
    // Predicated region
    $region6: #{flan_t5_forward.1} parent=1 // pred_check
      _
    $region7: #{flan_t5_forward.1} parent=1 // pred_check_branch
      %72 = sbr.rel (0) target = $region9
    $region8: #{flan_t5_forward.1} parent=1 // pred_region
      _
    $region9: #{flan_t5_forward.1} parent=1 // pred_fallthru
      _
    // Predicated region
    $region10: #{flan_t5_forward.1} parent=1 // pred_check
      _
    $region11: #{flan_t5_forward.1} parent=1 // pred_check_branch
      %74 = sbr.rel (0) target = $region13
    $region12: #{flan_t5_forward.1} parent=1 // pred_region
      _
    $region13: #{flan_t5_forward.1} parent=1 // pred_fallthru
      _
    // Predicated region
    $region14: #{flan_t5_forward.1} parent=1 // pred_check
      _
    $region15: #{flan_t5_forward.1} parent=1 // pred_check_branch
      %76 = sbr.rel (0) target = $region17
    $region16: #{flan_t5_forward.1} parent=1 // pred_region
      _
    $region17: #{flan_t5_forward.1} parent=1 // pred_fallthru
      _
    // Predicated region
    $region18: #{flan_t5_forward.1} parent=1 // pred_check
      _
    $region19: #{flan_t5_forward.1} parent=1 // pred_check_branch
      %78 = sbr.rel (0) target = $region21
    $region20: #{flan_t5_forward.1} parent=1 // pred_region
      _
    $region21: #{flan_t5_forward.1} parent=1 // pred_fallthru
      _
    // Predicated region
    $region22: #{flan_t5_forward.1} parent=1 // pred_check
      _
    $region23: #{flan_t5_forward.1} parent=1 // pred_check_branch
      %80 = sbr.rel (0) target = $region25
    $region24: #{flan_t5_forward.1} parent=1 // pred_region
      _
    $region25: #{flan_t5_forward.1} parent=1 // pred_fallthru
      _
    // Predicated region
    $region26: #{flan_t5_forward.1} parent=1 // pred_check
      _
    $region27: #{flan_t5_forward.1} parent=1 // pred_check_branch
      %82 = sbr.rel (0) target = $region29
    $region28: #{flan_t5_forward.1} parent=1 // pred_region
      _
    $region29: #{flan_t5_forward.1} parent=1 // pred_fallthru
      _
    // Predicated region
    $region30: #{flan_t5_forward.1} parent=1 // pred_check
      _
    $region31: #{flan_t5_forward.1} parent=1 // pred_check_branch
      %84 = sbr.rel (0) target = $region33
    $region32: #{flan_t5_forward.1} parent=1 // pred_region
      _
    $region33: #{flan_t5_forward.1} parent=1 // pred_fallthru
      _
    // Predicated region
    $region34: #{flan_t5_forward.1} parent=1 // pred_check
      _
    $region35: #{flan_t5_forward.1} parent=1 // pred_check_branch
      %86 = sbr.rel (0) target = $region37
    $region36: #{flan_t5_forward.1} parent=1 // pred_region
      _
    $region37: #{flan_t5_forward.1} parent=1 // pred_fallthru
      _
    // Predicated region
    $region38: #{flan_t5_forward.1} parent=1 // pred_check
      _
    $region39: #{flan_t5_forward.1} parent=1 // pred_check_branch
      %88 = sbr.rel (0) target = $region41
    $region40: #{flan_t5_forward.1} parent=1 // pred_region
      _
    $region41: #{flan_t5_forward.1} parent=1 // pred_fallthru
      _
    // Predicated region
    $region42: #{flan_t5_forward.1} parent=1 // pred_check
      _
    $region43: #{flan_t5_forward.1} parent=1 // pred_check_branch
      %90 = sbr.rel (0) target = $region45
    $region44: #{flan_t5_forward.1} parent=1 // pred_region
      _
    $region45: #{flan_t5_forward.1} parent=1 // pred_fallthru
      _
    // Predicated region
    $region46: #{flan_t5_forward.1} parent=1 // pred_check
      _
    $region47: #{flan_t5_forward.1} parent=1 // pred_check_branch
      %92 = sbr.rel (0) target = $region49
    $region48: #{flan_t5_forward.1} parent=1 // pred_region
      _
    $region49: #{flan_t5_forward.1} parent=1 // pred_fallthru
      _
    // Predicated region
    $region50: #{flan_t5_forward.1} parent=1 // pred_check
      _
    $region51: #{flan_t5_forward.1} parent=1 // pred_check_branch
      %94 = sbr.rel (0) target = $region53
    $region52: #{flan_t5_forward.1} parent=1 // pred_region
      _
    $region53: #{flan_t5_forward.1} parent=1 // pred_fallthru
      _
    // Predicated region
    $region54: #{flan_t5_forward.1} parent=1 // pred_check
      _
    $region55: #{flan_t5_forward.1} parent=1 // pred_check_branch
      %96 = sbr.rel (0) target = $region57
    $region56: #{flan_t5_forward.1} parent=1 // pred_region
      _
    $region57: #{flan_t5_forward.1} parent=1 // pred_fallthru
      _
    // Predicated region
    $region58: #{flan_t5_forward.1} parent=1 // pred_check
      _
    $region59: #{flan_t5_forward.1} parent=1 // pred_check_branch
      %98 = sbr.rel (0) target = $region61
    $region60: #{flan_t5_forward.1} parent=1 // pred_region
      _
    $region61: #{flan_t5_forward.1} parent=1 // pred_fallthru
      _
    // Predicated region
    $region62: #{flan_t5_forward.1} parent=1 // pred_check
      _
    $region63: #{flan_t5_forward.1} parent=1 // pred_check_branch
      %100 = sbr.rel (0) target = $region65
    $region64: #{flan_t5_forward.1} parent=1 // pred_region
      _
    $region65: #{flan_t5_forward.1} parent=1 // pred_fallthru
      _
    // Predicated region
    $region66: #{flan_t5_forward.1} parent=1 // pred_check
      _
    $region67: #{flan_t5_forward.1} parent=1 // pred_check_branch
      %102 = sbr.rel (0) target = $region69
    $region68: #{flan_t5_forward.1} parent=1 // pred_region
      _
    $region69: #{flan_t5_forward.1} parent=1 // pred_fallthru
      _
    // Predicated region
    $region70: #{flan_t5_forward.1} parent=1 // pred_check
      _
    $region71: #{flan_t5_forward.1} parent=1 // pred_check_branch
      %104 = sbr.rel (0) target = $region73
    $region72: #{flan_t5_forward.1} parent=1 // pred_region
      _
    $region73: #{flan_t5_forward.1} parent=1 // pred_fallthru
      _
    // Predicated region
    $region74: #{flan_t5_forward.1} parent=1 // pred_check
      _
    $region75: #{flan_t5_forward.1} parent=1 // pred_check_branch
      %106 = sbr.rel (0) target = $region77
    $region76: #{flan_t5_forward.1} parent=1 // pred_region
      _
    $region77: #{flan_t5_forward.1} parent=1 // pred_fallthru
      _
    // Predicated region
    $region78: #{flan_t5_forward.1} parent=1 // pred_check
      _
    $region79: #{flan_t5_forward.1} parent=1 // pred_check_branch
      %108 = sbr.rel (0) target = $region81
    $region80: #{flan_t5_forward.1} parent=1 // pred_region
      _
    $region81: #{flan_t5_forward.1} parent=1 // pred_fallthru
      _
    // Predicated region
    $region82: #{flan_t5_forward.1} parent=1 // pred_check
      _
    $region83: #{flan_t5_forward.1} parent=1 // pred_check_branch
      %110 = sbr.rel (0) target = $region85
    $region84: #{flan_t5_forward.1} parent=1 // pred_region
      _
    $region85: #{flan_t5_forward.1} parent=1 // pred_fallthru
      _
    // Predicated region
    $region86: #{flan_t5_forward.1} parent=1 // pred_check
      _
    $region87: #{flan_t5_forward.1} parent=1 // pred_check_branch
      %112 = sbr.rel (0) target = $region89
    $region88: #{flan_t5_forward.1} parent=1 // pred_region
      _
    $region89: #{flan_t5_forward.1} parent=1 // pred_fallthru
      _
    // Predicated region
    $region90: #{flan_t5_forward.1} parent=1 // pred_check
      _
    $region91: #{flan_t5_forward.1} parent=1 // pred_check_branch
      %114 = sbr.rel (0) target = $region93
    $region92: #{flan_t5_forward.1} parent=1 // pred_region
      _
    $region93: #{flan_t5_forward.1} parent=1 // pred_fallthru
      _
    // Predicated region
    $region94: #{flan_t5_forward.1} parent=1 // pred_check
      _
    $region95: #{flan_t5_forward.1} parent=1 // pred_check_branch
      %116 = sbr.rel (0) target = $region97
    $region96: #{flan_t5_forward.1} parent=1 // pred_region
      _
    $region97: #{flan_t5_forward.1} parent=1 // pred_fallthru
      _
    // Predicated region
    $region98: #{flan_t5_forward.1} parent=1 // pred_check
      _
    $region99: #{flan_t5_forward.1} parent=1 // pred_check_branch
      %118 = sbr.rel (0) target = $region101
    $region100: #{flan_t5_forward.1} parent=1 // pred_region
      _
    $region101: #{flan_t5_forward.1} parent=1 // pred_fallthru
      _
    // Predicated region
    $region102: #{flan_t5_forward.1} parent=1 // pred_check
      _
    $region103: #{flan_t5_forward.1} parent=1 // pred_check_branch
      %120 = sbr.rel (0) target = $region105
    $region104: #{flan_t5_forward.1} parent=1 // pred_region
      _
    $region105: #{flan_t5_forward.1} parent=1 // pred_fallthru
      _
    // Predicated region
    $region106: #{flan_t5_forward.1} parent=1 // pred_check
      _
    $region107: #{flan_t5_forward.1} parent=1 // pred_check_branch
      %122 = sbr.rel (0) target = $region109
    $region108: #{flan_t5_forward.1} parent=1 // pred_region
      _
    $region109: #{flan_t5_forward.1} parent=1 // pred_fallthru
      _
    // Predicated region
    $region110: #{flan_t5_forward.1} parent=1 // pred_check
      _
    $region111: #{flan_t5_forward.1} parent=1 // pred_check_branch
      %124 = sbr.rel (0) target = $region113
    $region112: #{flan_t5_forward.1} parent=1 // pred_region
      _
    $region113: #{flan_t5_forward.1} parent=1 // pred_fallthru
      _
    // Predicated region
    $region114: #{flan_t5_forward.1} parent=1 // pred_check
      _
    $region115: #{flan_t5_forward.1} parent=1 // pred_check_branch
      %126 = sbr.rel (0) target = $region117
    $region116: #{flan_t5_forward.1} parent=1 // pred_region
      _
    $region117: #{flan_t5_forward.1} parent=1 // pred_fallthru
      _
    // Predicated region
    $region118: #{flan_t5_forward.1} parent=1 // pred_check
      _
    $region119: #{flan_t5_forward.1} parent=1 // pred_check_branch
      %128 = sbr.rel (0) target = $region121
    $region120: #{flan_t5_forward.1} parent=1 // pred_region
      _
    $region121: #{flan_t5_forward.1} parent=1 // pred_fallthru
      _
    // Predicated region
    $region122: #{flan_t5_forward.1} parent=1 // pred_check
      _
    $region123: #{flan_t5_forward.1} parent=1 // pred_check_branch
      %130 = sbr.rel (0) target = $region125
    $region124: #{flan_t5_forward.1} parent=1 // pred_region
      _
    $region125: #{flan_t5_forward.1} parent=1 // pred_fallthru
      _
    %v132 = vld [vmem:[%s5] sm:$0x1]
    %v133 = vld [vmem:[%s5 + $0x1] sm:$0x1]
    %v134 = vld [vmem:[%s7] sm:$0xff]
    %v135 = vld [vmem:[%s7 + $0x8] sm:$0xff]
    %v136 = vld [vmem:[%s7 + $0x10] sm:$0xff]
    %v137 = vld [vmem:[%s7 + $0x18] sm:$0xff]
    %v138 = vld [vmem:[%s9] sm:$0xff]
    %v139 = vld [vmem:[%s9 + $0x8] sm:$0xff]
    %v140 = vld [vmem:[%s9 + $0x10] sm:$0xff]
    %v141 = vld [vmem:[%s9 + $0x18] sm:$0xff]
    %v142 = vld [vmem:[%s1] sm:$0xff]
    %v143 = vld [vmem:[%s1 + $0x8] sm:$0xff]
    %v144 = vld [vmem:[%s11] sm:$0x1]
    %v145 = vmul.f32 %v142, %v142
    %v146 = vmul.f32 %v143, %v143
    %vm147 = vcmask 261120
    %v148 = vsel %vm147, %v145, 0.0
    %149 = vadd.xlane.f32.xlu0 %v148
    %v150 = vpop.xlane.xlu0 %149
    %v151 = vsel %vm147, %v146, 0.0
    %152 = vadd.xlane.f32.xlu0 %v151
    %v153 = vpop.xlane.xlu0 %152
    %v154 = vrcp.pop 32.0
    %v155 = vmul.f32 %v150, %v154
    %v156 = vmul.f32 %v153, %v154
    %v157 = vadd.f32 %v155, 1e-06
    %v158 = vadd.f32 %v156, 1e-06
    %v159 = vrsqrt.pop %v157
    %v160 = vrsqrt.pop %v158
    %v161 = vmul.f32 %v142, %v159
    %v162 = vmul.f32 %v143, %v160
    %v164 = vlaneseq
    %v165 = vshrl.u32 %v164, 7
    %v166 = vsub.s32 0, %v165
    %v167 = vrot.slane %v144, %v166
    %v169 = vmul.f32 %v161, %v167
    %v170 = vmul.f32 %v162, %v167
    %v171 = vld [vmem:[%s13] sm:$0xf]
    %v172 = vld [vmem:[%s13 + $0x4] sm:$0xf]
    %v173 = vld [vmem:[%s13 + $0x8] sm:$0xf]
    %v174 = vld [vmem:[%s13 + $0xc] sm:$0xf]
    %v175 = vpack.c.bf16 %v170, %v169
    %v180 = vunpack.c.l.b16 %v171
    %v181 = vunpack.c.l.b16 %v172
    %v182 = vunpack.c.l.b16 %v173
    %v183 = vunpack.c.l.b16 %v174
    %v184 = vpack.c.b16 %v181, %v180
    %v185 = vpack.c.b16 %v183, %v182
    %v189 = vsel %vm147, %v175, 0
    %191 = vmatprep.subr.bf16.mxu0 0
    %192 = vmatpush1.bf16.msra.mxu0 0
    %193 = vmatprep.subr.bf16.mxu0 0
    %194 = vmatpush1.bf16.msra.mxu0 0
    %195 = vmatprep.subr.bf16.mxu0 0
    %196 = vmatpush1.bf16.msra.mxu0 0
    %197 = vmatprep.subr.bf16.mxu0 0
    %198 = vmatpush1.bf16.msra.mxu0 0
    %199 = vmatprep.subr.bf16.mxu0 0
    %200 = vmatpush1.bf16.msra.mxu0 0
    %201 = vmatprep.subr.bf16.mxu0 0
    %202 = vmatpush1.bf16.msra.mxu0 0
    %203 = vmatprep.subr.bf16.mxu0 0
    %204 = vmatpush1.bf16.msra.mxu0 %v185
    %205 = vmatprep.subr.bf16.mxu0 0
    %206 = vmatpush1.bf16.msra.mxu0 %v184
    %207 = vmatprep.subr.bf16.mxu0 0
    %208 = vmatpush2.bf16.msra.mxu0 0
    %209 = vmatprep.subr.bf16.mxu0 0
    %210 = vmatpush2.bf16.msra.mxu0 0
    %211 = vmatprep.subr.bf16.mxu0 0
    %212 = vmatpush2.bf16.msra.mxu0 0
    %213 = vmatprep.subr.bf16.mxu0 0
    %214 = vmatpush2.bf16.msra.mxu0 0
    %215 = vmatprep.subr.bf16.mxu0 0
    %216 = vmatpush2.bf16.msra.mxu0 0
    %217 = vmatprep.subr.bf16.mxu0 0
    %218 = vmatpush2.bf16.msra.mxu0 0
    %219 = vmatprep.subr.bf16.mxu0 0
    %220 = vmatpush2.bf16.msra.mxu0 0
    %221 = vmatprep.subr.bf16.mxu0 0
    %222 = vmatpush2.bf16.msra.mxu0 0
    %223 = vmatprep.mubr.bf16.mxu0 0
    %224 = vmatmul.mubr.bf16.gmra.mxu0 %v189
    %v225 = vpop.f32.mrf.mxu0
    %v226 = vadd.f32 0.0, %v225
    %v227 = vpop.f32.mrf.mxu0
    %v228 = vpop.f32.mrf.mxu0
    %v229 = vadd.f32 0.0, %v228
    %v230 = vpop.f32.mrf.mxu0
    %231 = vdwg.mxu0
    %v232 = vld [vmem:[%s15] sm:$0xf]
    %v233 = vld [vmem:[%s15 + $0x4] sm:$0xf]
    %v234 = vld [vmem:[%s15 + $0x8] sm:$0xf]
    %v235 = vld [vmem:[%s15 + $0xc] sm:$0xf]
    %v240 = vunpack.c.l.b16 %v232
    %v241 = vunpack.c.l.b16 %v233
    %v242 = vunpack.c.l.b16 %v234
    %v243 = vunpack.c.l.b16 %v235
    %v244 = vpack.c.b16 %v241, %v240
    %v245 = vpack.c.b16 %v243, %v242
    %248 = vmatprep.subr.bf16.mxu0 0
    %249 = vmatpush1.bf16.msra.mxu0 0
    %250 = vmatprep.subr.bf16.mxu0 0
    %251 = vmatpush1.bf16.msra.mxu0 0
    %252 = vmatprep.subr.bf16.mxu0 0
    %253 = vmatpush1.bf16.msra.mxu0 0
    %254 = vmatprep.subr.bf16.mxu0 0
    %255 = vmatpush1.bf16.msra.mxu0 0
    %256 = vmatprep.subr.bf16.mxu0 0
    %257 = vmatpush1.bf16.msra.mxu0 0
    %258 = vmatprep.subr.bf16.mxu0 0
    %259 = vmatpush1.bf16.msra.mxu0 0
    %260 = vmatprep.subr.bf16.mxu0 0
    %261 = vmatpush1.bf16.msra.mxu0 %v245
    %262 = vmatprep.subr.bf16.mxu0 0
    %263 = vmatpush1.bf16.msra.mxu0 %v244
    %264 = vmatprep.subr.bf16.mxu0 0
    %265 = vmatpush2.bf16.msra.mxu0 0
    %266 = vmatprep.subr.bf16.mxu0 0
    %267 = vmatpush2.bf16.msra.mxu0 0
    %268 = vmatprep.subr.bf16.mxu0 0
    %269 = vmatpush2.bf16.msra.mxu0 0
    %270 = vmatprep.subr.bf16.mxu0 0
    %271 = vmatpush2.bf16.msra.mxu0 0
    %272 = vmatprep.subr.bf16.mxu0 0
    %273 = vmatpush2.bf16.msra.mxu0 0
    %274 = vmatprep.subr.bf16.mxu0 0
    %275 = vmatpush2.bf16.msra.mxu0 0
    %276 = vmatprep.subr.bf16.mxu0 0
    %277 = vmatpush2.bf16.msra.mxu0 0
    %278 = vmatprep.subr.bf16.mxu0 0
    %279 = vmatpush2.bf16.msra.mxu0 0
    %280 = vmatprep.mubr.bf16.mxu0 0
    %281 = vmatmul.mubr.bf16.gmra.mxu0 %v189
    %v282 = vpop.f32.mrf.mxu0
    %v283 = vadd.f32 0.0, %v282
    %v284 = vpop.f32.mrf.mxu0
    %v285 = vpop.f32.mrf.mxu0
    %v286 = vadd.f32 0.0, %v285
    %v287 = vpop.f32.mrf.mxu0
    %288 = vdwg.mxu0
    %v289 = vld [vmem:[%s17] sm:$0xf]
    %v290 = vld [vmem:[%s17 + $0x4] sm:$0xf]
    %v291 = vld [vmem:[%s17 + $0x8] sm:$0xf]
    %v292 = vld [vmem:[%s17 + $0xc] sm:$0xf]
    %v297 = vunpack.c.l.b16 %v289
    %v298 = vunpack.c.l.b16 %v290
    %v299 = vunpack.c.l.b16 %v291
    %v300 = vunpack.c.l.b16 %v292
    %v301 = vpack.c.b16 %v298, %v297
    %v302 = vpack.c.b16 %v300, %v299
    %305 = vmatprep.subr.bf16.mxu0 0
    %306 = vmatpush1.bf16.msra.mxu0 0
    %307 = vmatprep.subr.bf16.mxu0 0
    %308 = vmatpush1.bf16.msra.mxu0 0
    %309 = vmatprep.subr.bf16.mxu0 0
    %310 = vmatpush1.bf16.msra.mxu0 0
    %311 = vmatprep.subr.bf16.mxu0 0
    %312 = vmatpush1.bf16.msra.mxu0 0
    %313 = vmatprep.subr.bf16.mxu0 0
    %314 = vmatpush1.bf16.msra.mxu0 0
    %315 = vmatprep.subr.bf16.mxu0 0
    %316 = vmatpush1.bf16.msra.mxu0 0
    %317 = vmatprep.subr.bf16.mxu0 0
    %318 = vmatpush1.bf16.msra.mxu0 %v302
    %319 = vmatprep.subr.bf16.mxu0 0
    %320 = vmatpush1.bf16.msra.mxu0 %v301
    %321 = vmatprep.subr.bf16.mxu0 0
    %322 = vmatpush2.bf16.msra.mxu0 0
    %323 = vmatprep.subr.bf16.mxu0 0
    %324 = vmatpush2.bf16.msra.mxu0 0
    %325 = vmatprep.subr.bf16.mxu0 0
    %326 = vmatpush2.bf16.msra.mxu0 0
    %327 = vmatprep.subr.bf16.mxu0 0
    %328 = vmatpush2.bf16.msra.mxu0 0
    %329 = vmatprep.subr.bf16.mxu0 0
    %330 = vmatpush2.bf16.msra.mxu0 0
    %331 = vmatprep.subr.bf16.mxu0 0
    %332 = vmatpush2.bf16.msra.mxu0 0
    %333 = vmatprep.subr.bf16.mxu0 0
    %334 = vmatpush2.bf16.msra.mxu0 0
    %335 = vmatprep.subr.bf16.mxu0 0
    %336 = vmatpush2.bf16.msra.mxu0 0
    %337 = vmatprep.mubr.bf16.mxu0 0
    %338 = vmatmul.mubr.bf16.gmra.mxu0 %v189
    %v339 = vpop.f32.mrf.mxu0
    %v340 = vadd.f32 0.0, %v339
    %v341 = vpop.f32.mrf.mxu0
    %v342 = vpop.f32.mrf.mxu0
    %v343 = vadd.f32 0.0, %v342
    %v344 = vpop.f32.mrf.mxu0
    %345 = vdwg.mxu0
    %347 = vrot.lane.b32.xlu0 %v226, 120
    %v348 = vpop.permute.xlu0 %347
    %350 = vrot.lane.b32.xlu0 %v226, 112
    %v351 = vpop.permute.xlu0 %350
    %353 = vrot.lane.b32.xlu0 %v226, 104
    %v354 = vpop.permute.xlu0 %353
    %v356 = vcombine.low %v226, %v351
    %v357 = vcombine.high %v226, %v351
    %v359 = vunpack.c.l.s4 1983009808
    %v360 = vunpack.c.0.s8 %v359
    %v361 = vlaneseq
    %v362 = vshrl.u32 %v361, 7
    %v363 = vsub.s32 %v360, %v362
    %v364 = vrot.slane %v356, %v363
    %v366 = vunpack.c.l.s4 1983009808
    %v367 = vunpack.c.0.s8 %v366
    %v368 = vlaneseq
    %v369 = vshrl.u32 %v368, 7
    %v370 = vsub.s32 %v367, %v369
    %v371 = vrot.slane %v357, %v370
    %v372 = vcombine.low %v348, %v354
    %v373 = vcombine.high %v348, %v354
    %v375 = vunpack.c.l.s4 1983009808
    %v376 = vunpack.c.0.s8 %v375
    %v377 = vlaneseq
    %v378 = vshrl.u32 %v377, 7
    %v379 = vsub.s32 %v376, %v378
    %v380 = vrot.slane %v372, %v379
    %v382 = vunpack.c.l.s4 1983009808
    %v383 = vunpack.c.0.s8 %v382
    %v384 = vlaneseq
    %v385 = vshrl.u32 %v384, 7
    %v386 = vsub.s32 %v383, %v385
    %v387 = vrot.slane %v373, %v386
    %v388 = vcombine.low %v364, %v380
    %v389 = vcombine.high %v364, %v380
    %v391 = vunpack.c.l.s4 1934713408
    %v392 = vunpack.c.0.s8 %v391
    %v393 = vlaneseq
    %v394 = vshrl.u32 %v393, 7
    %v395 = vsub.s32 %v392, %v394
    %v396 = vrot.slane %v388, %v395
    %v398 = vunpack.c.l.s4 1934713408
    %v399 = vunpack.c.0.s8 %v398
    %v400 = vlaneseq
    %v401 = vshrl.u32 %v400, 7
    %v402 = vsub.s32 %v399, %v401
    %v403 = vrot.slane %v389, %v402
    %v404 = vcombine.low %v371, %v387
    %v405 = vcombine.high %v371, %v387
    %v407 = vunpack.c.l.s4 1934713408
    %v408 = vunpack.c.0.s8 %v407
    %v409 = vlaneseq
    %v410 = vshrl.u32 %v409, 7
    %v411 = vsub.s32 %v408, %v410
    %v412 = vrot.slane %v404, %v411
    %v414 = vunpack.c.l.s4 1934713408
    %v415 = vunpack.c.0.s8 %v414
    %v416 = vlaneseq
    %v417 = vshrl.u32 %v416, 7
    %v418 = vsub.s32 %v415, %v417
    %v419 = vrot.slane %v405, %v418
    %v420 = vcombine.high %v396, 0.0
    %v421 = vcombine.high %v403, 0.0
    %v422 = vcombine.high %v412, 0.0
    %v423 = vcombine.high %v419, 0.0
    %v424 = vcombine.low %v396, %v403
    %v426 = vunpack.c.l.s4 1983009808
    %v427 = vunpack.c.0.s8 %v426
    %v428 = vlaneseq
    %v429 = vshrl.u32 %v428, 7
    %v430 = vsub.s32 %v427, %v429
    %v431 = vrot.slane %v424, %v430
    %v432 = vcombine.low %v420, %v421
    %v434 = vunpack.c.l.s4 1983009808
    %v435 = vunpack.c.0.s8 %v434
    %v436 = vlaneseq
    %v437 = vshrl.u32 %v436, 7
    %v438 = vsub.s32 %v435, %v437
    %v439 = vrot.slane %v432, %v438
    %v440 = vcombine.low %v412, %v419
    %v442 = vunpack.c.l.s4 1983009808
    %v443 = vunpack.c.0.s8 %v442
    %v444 = vlaneseq
    %v445 = vshrl.u32 %v444, 7
    %v446 = vsub.s32 %v443, %v445
    %v447 = vrot.slane %v440, %v446
    %v448 = vcombine.low %v422, %v423
    %v450 = vunpack.c.l.s4 1983009808
    %v451 = vunpack.c.0.s8 %v450
    %v452 = vlaneseq
    %v453 = vshrl.u32 %v452, 7
    %v454 = vsub.s32 %v451, %v453
    %v455 = vrot.slane %v448, %v454
    %v456 = vcombine.low %v431, %v439
    %v457 = vcombine.high %v431, %v439
    %v459 = vunpack.c.l.s4 1934713408
    %v460 = vunpack.c.0.s8 %v459
    %v461 = vlaneseq
    %v462 = vshrl.u32 %v461, 7
    %v463 = vsub.s32 %v460, %v462
    %v464 = vrot.slane %v456, %v463
    %v466 = vunpack.c.l.s4 1934713408
    %v467 = vunpack.c.0.s8 %v466
    %v468 = vlaneseq
    %v469 = vshrl.u32 %v468, 7
    %v470 = vsub.s32 %v467, %v469
    %v471 = vrot.slane %v457, %v470
    %v472 = vcombine.low %v447, %v455
    %v473 = vcombine.high %v447, %v455
    %v475 = vunpack.c.l.s4 1934713408
    %v476 = vunpack.c.0.s8 %v475
    %v477 = vlaneseq
    %v478 = vshrl.u32 %v477, 7
    %v479 = vsub.s32 %v476, %v478
    %v480 = vrot.slane %v472, %v479
    %v482 = vunpack.c.l.s4 1934713408
    %v483 = vunpack.c.0.s8 %v482
    %v484 = vlaneseq
    %v485 = vshrl.u32 %v484, 7
    %v486 = vsub.s32 %v483, %v485
    %v487 = vrot.slane %v473, %v486
    %v488 = vcombine.low %v464, %v480
    %v489 = vcombine.high %v464, %v480
    %v490 = vcombine.low %v471, %v487
    %v491 = vcombine.high %v471, %v487
    %v492 = vpack.c.bf16 %v488, %v488
    %v493 = vpack.c.bf16 %v489, %v489
    %v494 = vpack.c.bf16 %v490, %v490
    %v495 = vpack.c.bf16 %v491, %v491
    %497 = vrot.lane.b32.xlu0 %v283, 120
    %v498 = vpop.permute.xlu0 %497
    %500 = vrot.lane.b32.xlu0 %v283, 112
    %v501 = vpop.permute.xlu0 %500
    %503 = vrot.lane.b32.xlu0 %v283, 104
    %v504 = vpop.permute.xlu0 %503
    %v506 = vcombine.low %v283, %v501
    %v507 = vcombine.high %v283, %v501
    %v509 = vunpack.c.l.s4 1983009808
    %v510 = vunpack.c.0.s8 %v509
    %v511 = vlaneseq
    %v512 = vshrl.u32 %v511, 7
    %v513 = vsub.s32 %v510, %v512
    %v514 = vrot.slane %v506, %v513
    %v516 = vunpack.c.l.s4 1983009808
    %v517 = vunpack.c.0.s8 %v516
    %v518 = vlaneseq
    %v519 = vshrl.u32 %v518, 7
    %v520 = vsub.s32 %v517, %v519
    %v521 = vrot.slane %v507, %v520
    %v522 = vcombine.low %v498, %v504
    %v523 = vcombine.high %v498, %v504
    %v525 = vunpack.c.l.s4 1983009808
    %v526 = vunpack.c.0.s8 %v525
    %v527 = vlaneseq
    %v528 = vshrl.u32 %v527, 7
    %v529 = vsub.s32 %v526, %v528
    %v530 = vrot.slane %v522, %v529
    %v532 = vunpack.c.l.s4 1983009808
    %v533 = vunpack.c.0.s8 %v532
    %v534 = vlaneseq
    %v535 = vshrl.u32 %v534, 7
    %v536 = vsub.s32 %v533, %v535
    %v537 = vrot.slane %v523, %v536
    %v538 = vcombine.low %v514, %v530
    %v539 = vcombine.high %v514, %v530
    %v541 = vunpack.c.l.s4 1934713408
    %v542 = vunpack.c.0.s8 %v541
    %v543 = vlaneseq
    %v544 = vshrl.u32 %v543, 7
    %v545 = vsub.s32 %v542, %v544
    %v546 = vrot.slane %v538, %v545
    %v548 = vunpack.c.l.s4 1934713408
    %v549 = vunpack.c.0.s8 %v548
    %v550 = vlaneseq
    %v551 = vshrl.u32 %v550, 7
    %v552 = vsub.s32 %v549, %v551
    %v553 = vrot.slane %v539, %v552
    %v554 = vcombine.low %v521, %v537
    %v555 = vcombine.high %v521, %v537
    %v557 = vunpack.c.l.s4 1934713408
    %v558 = vunpack.c.0.s8 %v557
    %v559 = vlaneseq
    %v560 = vshrl.u32 %v559, 7
    %v561 = vsub.s32 %v558, %v560
    %v562 = vrot.slane %v554, %v561
    %v564 = vunpack.c.l.s4 1934713408
    %v565 = vunpack.c.0.s8 %v564
    %v566 = vlaneseq
    %v567 = vshrl.u32 %v566, 7
    %v568 = vsub.s32 %v565, %v567
    %v569 = vrot.slane %v555, %v568
    %v570 = vcombine.high %v546, 0.0
    %v571 = vcombine.high %v553, 0.0
    %v572 = vcombine.high %v562, 0.0
    %v573 = vcombine.high %v569, 0.0
    %v574 = vcombine.low %v546, %v553
    %v576 = vunpack.c.l.s4 1983009808
    %v577 = vunpack.c.0.s8 %v576
    %v578 = vlaneseq
    %v579 = vshrl.u32 %v578, 7
    %v580 = vsub.s32 %v577, %v579
    %v581 = vrot.slane %v574, %v580
    %v582 = vcombine.low %v570, %v571
    %v584 = vunpack.c.l.s4 1983009808
    %v585 = vunpack.c.0.s8 %v584
    %v586 = vlaneseq
    %v587 = vshrl.u32 %v586, 7
    %v588 = vsub.s32 %v585, %v587
    %v589 = vrot.slane %v582, %v588
    %v590 = vcombine.low %v562, %v569
    %v592 = vunpack.c.l.s4 1983009808
    %v593 = vunpack.c.0.s8 %v592
    %v594 = vlaneseq
    %v595 = vshrl.u32 %v594, 7
    %v596 = vsub.s32 %v593, %v595
    %v597 = vrot.slane %v590, %v596
    %v598 = vcombine.low %v572, %v573
    %v600 = vunpack.c.l.s4 1983009808
    %v601 = vunpack.c.0.s8 %v600
    %v602 = vlaneseq
    %v603 = vshrl.u32 %v602, 7
    %v604 = vsub.s32 %v601, %v603
    %v605 = vrot.slane %v598, %v604
    %v606 = vcombine.low %v581, %v589
    %v607 = vcombine.high %v581, %v589
    %v609 = vunpack.c.l.s4 1934713408
    %v610 = vunpack.c.0.s8 %v609
    %v611 = vlaneseq
    %v612 = vshrl.u32 %v611, 7
    %v613 = vsub.s32 %v610, %v612
    %v614 = vrot.slane %v606, %v613
    %v616 = vunpack.c.l.s4 1934713408
    %v617 = vunpack.c.0.s8 %v616
    %v618 = vlaneseq
    %v619 = vshrl.u32 %v618, 7
    %v620 = vsub.s32 %v617, %v619
    %v621 = vrot.slane %v607, %v620
    %v622 = vcombine.low %v597, %v605
    %v623 = vcombine.high %v597, %v605
    %v625 = vunpack.c.l.s4 1934713408
    %v626 = vunpack.c.0.s8 %v625
    %v627 = vlaneseq
    %v628 = vshrl.u32 %v627, 7
    %v629 = vsub.s32 %v626, %v628
    %v630 = vrot.slane %v622, %v629
    %v632 = vunpack.c.l.s4 1934713408
    %v633 = vunpack.c.0.s8 %v632
    %v634 = vlaneseq
    %v635 = vshrl.u32 %v634, 7
    %v636 = vsub.s32 %v633, %v635
    %v637 = vrot.slane %v623, %v636
    %v638 = vcombine.low %v614, %v630
    %v639 = vcombine.high %v614, %v630
    %v640 = vcombine.low %v621, %v637
    %v641 = vcombine.high %v621, %v637
    %v642 = vpack.c.bf16 %v638, %v638
    %v643 = vpack.c.bf16 %v639, %v639
    %v644 = vpack.c.bf16 %v640, %v640
    %v645 = vpack.c.bf16 %v641, %v641
    %647 = vrot.lane.b32.xlu0 %v340, 120
    %v648 = vpop.permute.xlu0 %647
    %650 = vrot.lane.b32.xlu0 %v340, 112
    %v651 = vpop.permute.xlu0 %650
    %653 = vrot.lane.b32.xlu0 %v340, 104
    %v654 = vpop.permute.xlu0 %653
    %v656 = vcombine.low %v340, %v651
    %v657 = vcombine.high %v340, %v651
    %v659 = vunpack.c.l.s4 1983009808
    %v660 = vunpack.c.0.s8 %v659
    %v661 = vlaneseq
    %v662 = vshrl.u32 %v661, 7
    %v663 = vsub.s32 %v660, %v662
    %v664 = vrot.slane %v656, %v663
    %v666 = vunpack.c.l.s4 1983009808
    %v667 = vunpack.c.0.s8 %v666
    %v668 = vlaneseq
    %v669 = vshrl.u32 %v668, 7
    %v670 = vsub.s32 %v667, %v669
    %v671 = vrot.slane %v657, %v670
    %v672 = vcombine.low %v648, %v654
    %v673 = vcombine.high %v648, %v654
    %v675 = vunpack.c.l.s4 1983009808
    %v676 = vunpack.c.0.s8 %v675
    %v677 = vlaneseq
    %v678 = vshrl.u32 %v677, 7
    %v679 = vsub.s32 %v676, %v678
    %v680 = vrot.slane %v672, %v679
    %v682 = vunpack.c.l.s4 1983009808
    %v683 = vunpack.c.0.s8 %v682
    %v684 = vlaneseq
    %v685 = vshrl.u32 %v684, 7
    %v686 = vsub.s32 %v683, %v685
    %v687 = vrot.slane %v673, %v686
    %v688 = vcombine.low %v664, %v680
    %v689 = vcombine.high %v664, %v680
    %v691 = vunpack.c.l.s4 1934713408
    %v692 = vunpack.c.0.s8 %v691
    %v693 = vlaneseq
    %v694 = vshrl.u32 %v693, 7
    %v695 = vsub.s32 %v692, %v694
    %v696 = vrot.slane %v688, %v695
    %v698 = vunpack.c.l.s4 1934713408
    %v699 = vunpack.c.0.s8 %v698
    %v700 = vlaneseq
    %v701 = vshrl.u32 %v700, 7
    %v702 = vsub.s32 %v699, %v701
    %v703 = vrot.slane %v689, %v702
    %v704 = vcombine.low %v671, %v687
    %v705 = vcombine.high %v671, %v687
    %v707 = vunpack.c.l.s4 1934713408
    %v708 = vunpack.c.0.s8 %v707
    %v709 = vlaneseq
    %v710 = vshrl.u32 %v709, 7
    %v711 = vsub.s32 %v708, %v710
    %v712 = vrot.slane %v704, %v711
    %v714 = vunpack.c.l.s4 1934713408
    %v715 = vunpack.c.0.s8 %v714
    %v716 = vlaneseq
    %v717 = vshrl.u32 %v716, 7
    %v718 = vsub.s32 %v715, %v717
    %v719 = vrot.slane %v705, %v718
    %v720 = vcombine.high %v696, 0.0
    %v721 = vcombine.high %v703, 0.0
    %v722 = vcombine.high %v712, 0.0
    %v723 = vcombine.high %v719, 0.0
    %v724 = vcombine.low %v696, %v703
    %v726 = vunpack.c.l.s4 1983009808
    %v727 = vunpack.c.0.s8 %v726
    %v728 = vlaneseq
    %v729 = vshrl.u32 %v728, 7
    %v730 = vsub.s32 %v727, %v729
    %v731 = vrot.slane %v724, %v730
    %v732 = vcombine.low %v720, %v721
    %v734 = vunpack.c.l.s4 1983009808
    %v735 = vunpack.c.0.s8 %v734
    %v736 = vlaneseq
    %v737 = vshrl.u32 %v736, 7
    %v738 = vsub.s32 %v735, %v737
    %v739 = vrot.slane %v732, %v738
    %v740 = vcombine.low %v712, %v719
    %v742 = vunpack.c.l.s4 1983009808
    %v743 = vunpack.c.0.s8 %v742
    %v744 = vlaneseq
    %v745 = vshrl.u32 %v744, 7
    %v746 = vsub.s32 %v743, %v745
    %v747 = vrot.slane %v740, %v746
    %v748 = vcombine.low %v722, %v723
    %v750 = vunpack.c.l.s4 1983009808
    %v751 = vunpack.c.0.s8 %v750
    %v752 = vlaneseq
    %v753 = vshrl.u32 %v752, 7
    %v754 = vsub.s32 %v751, %v753
    %v755 = vrot.slane %v748, %v754
    %v756 = vcombine.low %v731, %v739
    %v757 = vcombine.high %v731, %v739
    %v759 = vunpack.c.l.s4 1934713408
    %v760 = vunpack.c.0.s8 %v759
    %v761 = vlaneseq
    %v762 = vshrl.u32 %v761, 7
    %v763 = vsub.s32 %v760, %v762
    %v764 = vrot.slane %v756, %v763
    %v766 = vunpack.c.l.s4 1934713408
    %v767 = vunpack.c.0.s8 %v766
    %v768 = vlaneseq
    %v769 = vshrl.u32 %v768, 7
    %v770 = vsub.s32 %v767, %v769
    %v771 = vrot.slane %v757, %v770
    %v772 = vcombine.low %v747, %v755
    %v773 = vcombine.high %v747, %v755
    %v775 = vunpack.c.l.s4 1934713408
    %v776 = vunpack.c.0.s8 %v775
    %v777 = vlaneseq
    %v778 = vshrl.u32 %v777, 7
    %v779 = vsub.s32 %v776, %v778
    %v780 = vrot.slane %v772, %v779
    %v782 = vunpack.c.l.s4 1934713408
    %v783 = vunpack.c.0.s8 %v782
    %v784 = vlaneseq
    %v785 = vshrl.u32 %v784, 7
    %v786 = vsub.s32 %v783, %v785
    %v787 = vrot.slane %v773, %v786
    %v788 = vcombine.low %v764, %v780
    %v789 = vcombine.high %v764, %v780
    %v790 = vcombine.low %v771, %v787
    %v791 = vcombine.high %v771, %v787
    %v792 = vpack.c.bf16 %v788, %v788
    %v793 = vpack.c.bf16 %v789, %v789
    %v794 = vpack.c.bf16 %v790, %v790
    %v795 = vpack.c.bf16 %v791, %v791
    %vm796 = vcmask 64512
    %v798 = vsel %vm796, %v492, 0
    %v801 = vsel %vm796, %v642, 0
    %803 = vmatprep.subr.bf16.mxu0 0
    %804 = vmatpush1.bf16.xpose.msra.mxu0 0
    %805 = vmatprep.subr.bf16.mxu0 0
    %806 = vmatpush1.bf16.xpose.msra.mxu0 0
    %807 = vmatprep.subr.bf16.mxu0 0
    %808 = vmatpush1.bf16.xpose.msra.mxu0 0
    %809 = vmatprep.subr.bf16.mxu0 0
    %810 = vmatpush1.bf16.xpose.msra.mxu0 0
    %811 = vmatprep.subr.bf16.mxu0 0
    %812 = vmatpush1.bf16.xpose.msra.mxu0 0
    %813 = vmatprep.subr.bf16.mxu0 0
    %814 = vmatpush1.bf16.xpose.msra.mxu0 0
    %815 = vmatprep.subr.bf16.mxu0 0
    %816 = vmatpush1.bf16.xpose.msra.mxu0 0
    %817 = vmatprep.subr.bf16.mxu0 0
    %818 = vmatpush1.bf16.xpose.msra.mxu0 %v801
    %819 = vmatprep.subr.bf16.mxu0 0
    %820 = vmatpush2.bf16.xpose.msra.mxu0 0
    %821 = vmatprep.subr.bf16.mxu0 0
    %822 = vmatpush2.bf16.xpose.msra.mxu0 0
    %823 = vmatprep.subr.bf16.mxu0 0
    %824 = vmatpush2.bf16.xpose.msra.mxu0 0
    %825 = vmatprep.subr.bf16.mxu0 0
    %826 = vmatpush2.bf16.xpose.msra.mxu0 0
    %827 = vmatprep.subr.bf16.mxu0 0
    %828 = vmatpush2.bf16.xpose.msra.mxu0 0
    %829 = vmatprep.subr.bf16.mxu0 0
    %830 = vmatpush2.bf16.xpose.msra.mxu0 0
    %831 = vmatprep.subr.bf16.mxu0 0
    %832 = vmatpush2.bf16.xpose.msra.mxu0 0
    %833 = vmatprep.subr.bf16.mxu0 0
    %834 = vmatpush2.bf16.xpose.msra.mxu0 0
    %835 = vmatprep.mubr.bf16.mxu0 0
    %836 = vmatmul.mubr.bf16.gmra.mxu0 %v798
    %v837 = vpop.f32.mrf.mxu0
    %v838 = vadd.f32 %v134, %v837
    %v839 = vpop.f32.mrf.mxu0
    %v840 = vpop.f32.mrf.mxu0
    %v841 = vpop.f32.mrf.mxu0
    %842 = vdwg.mxu0
    %v844 = vsel %vm796, %v493, 0
    %v847 = vsel %vm796, %v643, 0
    %849 = vmatprep.subr.bf16.mxu0 0
    %850 = vmatpush1.bf16.xpose.msra.mxu0 0
    %851 = vmatprep.subr.bf16.mxu0 0
    %852 = vmatpush1.bf16.xpose.msra.mxu0 0
    %853 = vmatprep.subr.bf16.mxu0 0
    %854 = vmatpush1.bf16.xpose.msra.mxu0 0
    %855 = vmatprep.subr.bf16.mxu0 0
    %856 = vmatpush1.bf16.xpose.msra.mxu0 0
    %857 = vmatprep.subr.bf16.mxu0 0
    %858 = vmatpush1.bf16.xpose.msra.mxu0 0
    %859 = vmatprep.subr.bf16.mxu0 0
    %860 = vmatpush1.bf16.xpose.msra.mxu0 0
    %861 = vmatprep.subr.bf16.mxu0 0
    %862 = vmatpush1.bf16.xpose.msra.mxu0 0
    %863 = vmatprep.subr.bf16.mxu0 0
    %864 = vmatpush1.bf16.xpose.msra.mxu0 %v847
    %865 = vmatprep.subr.bf16.mxu0 0
    %866 = vmatpush2.bf16.xpose.msra.mxu0 0
    %867 = vmatprep.subr.bf16.mxu0 0
    %868 = vmatpush2.bf16.xpose.msra.mxu0 0
    %869 = vmatprep.subr.bf16.mxu0 0
    %870 = vmatpush2.bf16.xpose.msra.mxu0 0
    %871 = vmatprep.subr.bf16.mxu0 0
    %872 = vmatpush2.bf16.xpose.msra.mxu0 0
    %873 = vmatprep.subr.bf16.mxu0 0
    %874 = vmatpush2.bf16.xpose.msra.mxu0 0
    %875 = vmatprep.subr.bf16.mxu0 0
    %876 = vmatpush2.bf16.xpose.msra.mxu0 0
    %877 = vmatprep.subr.bf16.mxu0 0
    %878 = vmatpush2.bf16.xpose.msra.mxu0 0
    %879 = vmatprep.subr.bf16.mxu0 0
    %880 = vmatpush2.bf16.xpose.msra.mxu0 0
    %881 = vmatprep.mubr.bf16.mxu0 0
    %882 = vmatmul.mubr.bf16.gmra.mxu0 %v844
    %v883 = vpop.f32.mrf.mxu0
    %v884 = vadd.f32 %v135, %v883
    %v885 = vpop.f32.mrf.mxu0
    %v886 = vpop.f32.mrf.mxu0
    %v887 = vpop.f32.mrf.mxu0
    %888 = vdwg.mxu0
    %v890 = vsel %vm796, %v494, 0
    %v893 = vsel %vm796, %v644, 0
    %895 = vmatprep.subr.bf16.mxu0 0
    %896 = vmatpush1.bf16.xpose.msra.mxu0 0
    %897 = vmatprep.subr.bf16.mxu0 0
    %898 = vmatpush1.bf16.xpose.msra.mxu0 0
    %899 = vmatprep.subr.bf16.mxu0 0
    %900 = vmatpush1.bf16.xpose.msra.mxu0 0
    %901 = vmatprep.subr.bf16.mxu0 0
    %902 = vmatpush1.bf16.xpose.msra.mxu0 0
    %903 = vmatprep.subr.bf16.mxu0 0
    %904 = vmatpush1.bf16.xpose.msra.mxu0 0
    %905 = vmatprep.subr.bf16.mxu0 0
    %906 = vmatpush1.bf16.xpose.msra.mxu0 0
    %907 = vmatprep.subr.bf16.mxu0 0
    %908 = vmatpush1.bf16.xpose.msra.mxu0 0
    %909 = vmatprep.subr.bf16.mxu0 0
    %910 = vmatpush1.bf16.xpose.msra.mxu0 %v893
    %911 = vmatprep.subr.bf16.mxu0 0
    %912 = vmatpush2.bf16.xpose.msra.mxu0 0
    %913 = vmatprep.subr.bf16.mxu0 0
    %914 = vmatpush2.bf16.xpose.msra.mxu0 0
    %915 = vmatprep.subr.bf16.mxu0 0
    %916 = vmatpush2.bf16.xpose.msra.mxu0 0
    %917 = vmatprep.subr.bf16.mxu0 0
    %918 = vmatpush2.bf16.xpose.msra.mxu0 0
    %919 = vmatprep.subr.bf16.mxu0 0
    %920 = vmatpush2.bf16.xpose.msra.mxu0 0
    %921 = vmatprep.subr.bf16.mxu0 0
    %922 = vmatpush2.bf16.xpose.msra.mxu0 0
    %923 = vmatprep.subr.bf16.mxu0 0
    %924 = vmatpush2.bf16.xpose.msra.mxu0 0
    %925 = vmatprep.subr.bf16.mxu0 0
    %926 = vmatpush2.bf16.xpose.msra.mxu0 0
    %927 = vmatprep.mubr.bf16.mxu0 0
    %928 = vmatmul.mubr.bf16.gmra.mxu0 %v890
    %v929 = vpop.f32.mrf.mxu0
    %v930 = vadd.f32 %v136, %v929
    %v931 = vpop.f32.mrf.mxu0
    %v932 = vpop.f32.mrf.mxu0
    %v933 = vpop.f32.mrf.mxu0
    %934 = vdwg.mxu0
    %v936 = vsel %vm796, %v495, 0
    %v939 = vsel %vm796, %v645, 0
    %941 = vmatprep.subr.bf16.mxu0 0
    %942 = vmatpush1.bf16.xpose.msra.mxu0 0
    %943 = vmatprep.subr.bf16.mxu0 0
    %944 = vmatpush1.bf16.xpose.msra.mxu0 0
    %945 = vmatprep.subr.bf16.mxu0 0
    %946 = vmatpush1.bf16.xpose.msra.mxu0 0
    %947 = vmatprep.subr.bf16.mxu0 0
    %948 = vmatpush1.bf16.xpose.msra.mxu0 0
    %949 = vmatprep.subr.bf16.mxu0 0
    %950 = vmatpush1.bf16.xpose.msra.mxu0 0
    %951 = vmatprep.subr.bf16.mxu0 0
    %952 = vmatpush1.bf16.xpose.msra.mxu0 0
    %953 = vmatprep.subr.bf16.mxu0 0
    %954 = vmatpush1.bf16.xpose.msra.mxu0 0
    %955 = vmatprep.subr.bf16.mxu0 0
    %956 = vmatpush1.bf16.xpose.msra.mxu0 %v939
    %957 = vmatprep.subr.bf16.mxu0 0
    %958 = vmatpush2.bf16.xpose.msra.mxu0 0
    %959 = vmatprep.subr.bf16.mxu0 0
    %960 = vmatpush2.bf16.xpose.msra.mxu0 0
    %961 = vmatprep.subr.bf16.mxu0 0
    %962 = vmatpush2.bf16.xpose.msra.mxu0 0
    %963 = vmatprep.subr.bf16.mxu0 0
    %964 = vmatpush2.bf16.xpose.msra.mxu0 0
    %965 = vmatprep.subr.bf16.mxu0 0
    %966 = vmatpush2.bf16.xpose.msra.mxu0 0
    %967 = vmatprep.subr.bf16.mxu0 0
    %968 = vmatpush2.bf16.xpose.msra.mxu0 0
    %969 = vmatprep.subr.bf16.mxu0 0
    %970 = vmatpush2.bf16.xpose.msra.mxu0 0
    %971 = vmatprep.subr.bf16.mxu0 0
    %972 = vmatpush2.bf16.xpose.msra.mxu0 0
    %973 = vmatprep.mubr.bf16.mxu0 0
    %974 = vmatmul.mubr.bf16.gmra.mxu0 %v936
    %v975 = vpop.f32.mrf.mxu0
    %v976 = vadd.f32 %v137, %v975
    %v977 = vpop.f32.mrf.mxu0
    %v978 = vpop.f32.mrf.mxu0
    %v979 = vpop.f32.mrf.mxu0
    %980 = vdwg.mxu0
    %v982 = vlaneseq
    %v983 = vshrl.u32 %v982, 7
    %v984 = vsub.s32 0, %v983
    %v985 = vrot.slane %v132, %v984
    %v987 = vadd.f32 %v838, %v985
    %v988 = vadd.f32 %v884, %v985
    %v989 = vadd.f32 %v930, %v985
    %v990 = vadd.f32 %v976, %v985
    %v991 = vsel %vm796, %v987, -inf
    %992 = vmax.xlane.f32.xlu0 %v991
    %v993 = vpop.xlane.xlu0 %992
    %v994 = vsel %vm796, %v988, -inf
    %995 = vmax.xlane.f32.xlu0 %v994
    %v996 = vpop.xlane.xlu0 %995
    %v997 = vsel %vm796, %v989, -inf
    %998 = vmax.xlane.f32.xlu0 %v997
    %v999 = vpop.xlane.xlu0 %998
    %v1000 = vsel %vm796, %v990, -inf
    %1001 = vmax.xlane.f32.xlu0 %v1000
    %v1002 = vpop.xlane.xlu0 %1001
    %v1003 = vsub.f32 %v987, %v993
    %v1004 = vsub.f32 %v988, %v996
    %v1005 = vsub.f32 %v989, %v999
    %v1006 = vsub.f32 %v990, %v1002
    %v1007 = vmul.f32 %v1003, 1.442695
    %v1008 = vpow.pop %v1007
    %v1009 = vmul.f32 %v1004, 1.442695
    %v1010 = vpow.pop %v1009
    %v1011 = vmul.f32 %v1005, 1.442695
    %v1012 = vpow.pop %v1011
    %v1013 = vmul.f32 %v1006, 1.442695
    %v1014 = vpow.pop %v1013
    %v1015 = vsel %vm796, %v1008, 0.0
    %1016 = vadd.xlane.f32.xlu0 %v1015
    %v1017 = vpop.xlane.xlu0 %1016
    %v1018 = vsel %vm796, %v1010, 0.0
    %1019 = vadd.xlane.f32.xlu0 %v1018
    %v1020 = vpop.xlane.xlu0 %1019
    %v1021 = vsel %vm796, %v1012, 0.0
    %1022 = vadd.xlane.f32.xlu0 %v1021
    %v1023 = vpop.xlane.xlu0 %1022
    %v1024 = vsel %vm796, %v1014, 0.0
    %1025 = vadd.xlane.f32.xlu0 %v1024
    %v1026 = vpop.xlane.xlu0 %1025
    %v1027 = vrcp.pop %v1017
    %v1028 = vrcp.pop %v1020
    %v1029 = vrcp.pop %v1023
    %v1030 = vrcp.pop %v1026
    %v1031 = vmul.f32 %v1008, %v1027
    %v1032 = vmul.f32 %v1010, %v1028
    %v1033 = vmul.f32 %v1012, %v1029
    %v1034 = vmul.f32 %v1014, %v1030
    %v1035 = vpack.c.bf16 %v1031, %v1031
    %v1036 = vpack.c.bf16 %v1032, %v1032
    %v1037 = vpack.c.bf16 %v1033, %v1033
    %v1038 = vpack.c.bf16 %v1034, %v1034
    %v1040 = vsel %vm796, %v1035, 0
    %vm1042 = vcmask 1043456
    %v1044 = vsel %vm1042, %v792, 0
    %1046 = vmatprep.subr.bf16.mxu0 0
    %1047 = vmatpush1.bf16.msra.mxu0 0
    %1048 = vmatprep.subr.bf16.mxu0 0
    %1049 = vmatpush1.bf16.msra.mxu0 0
    %1050 = vmatprep.subr.bf16.mxu0 0
    %1051 = vmatpush1.bf16.msra.mxu0 0
    %1052 = vmatprep.subr.bf16.mxu0 0
    %1053 = vmatpush1.bf16.msra.mxu0 0
    %1054 = vmatprep.subr.bf16.mxu0 0
    %1055 = vmatpush1.bf16.msra.mxu0 0
    %1056 = vmatprep.subr.bf16.mxu0 0
    %1057 = vmatpush1.bf16.msra.mxu0 0
    %1058 = vmatprep.subr.bf16.mxu0 0
    %1059 = vmatpush1.bf16.msra.mxu0 0
    %1060 = vmatprep.subr.bf16.mxu0 0
    %1061 = vmatpush1.bf16.msra.mxu0 %v1044
    %1062 = vmatprep.subr.bf16.mxu0 0
    %1063 = vmatpush2.bf16.msra.mxu0 0
    %1064 = vmatprep.subr.bf16.mxu0 0
    %1065 = vmatpush2.bf16.msra.mxu0 0
    %1066 = vmatprep.subr.bf16.mxu0 0
    %1067 = vmatpush2.bf16.msra.mxu0 0
    %1068 = vmatprep.subr.bf16.mxu0 0
    %1069 = vmatpush2.bf16.msra.mxu0 0
    %1070 = vmatprep.subr.bf16.mxu0 0
    %1071 = vmatpush2.bf16.msra.mxu0 0
    %1072 = vmatprep.subr.bf16.mxu0 0
    %1073 = vmatpush2.bf16.msra.mxu0 0
    %1074 = vmatprep.subr.bf16.mxu0 0
    %1075 = vmatpush2.bf16.msra.mxu0 0
    %1076 = vmatprep.subr.bf16.mxu0 0
    %1077 = vmatpush2.bf16.msra.mxu0 0
    %1078 = vmatprep.mubr.bf16.mxu0 0
    %1079 = vmatmul.mubr.bf16.gmra.mxu0 %v1040
    %v1080 = vpop.f32.mrf.mxu0
    %v1081 = vadd.f32 0.0, %v1080
    %v1082 = vpop.f32.mrf.mxu0
    %v1083 = vpop.f32.mrf.mxu0
    %v1084 = vpop.f32.mrf.mxu0
    %1085 = vdwg.mxu0
    %v1087 = vsel %vm796, %v1036, 0
    %v1090 = vsel %vm1042, %v793, 0
    %1092 = vmatprep.subr.bf16.mxu0 0
    %1093 = vmatpush1.bf16.msra.mxu0 0
    %1094 = vmatprep.subr.bf16.mxu0 0
    %1095 = vmatpush1.bf16.msra.mxu0 0
    %1096 = vmatprep.subr.bf16.mxu0 0
    %1097 = vmatpush1.bf16.msra.mxu0 0
    %1098 = vmatprep.subr.bf16.mxu0 0
    %1099 = vmatpush1.bf16.msra.mxu0 0
    %1100 = vmatprep.subr.bf16.mxu0 0
    %1101 = vmatpush1.bf16.msra.mxu0 0
    %1102 = vmatprep.subr.bf16.mxu0 0
    %1103 = vmatpush1.bf16.msra.mxu0 0
    %1104 = vmatprep.subr.bf16.mxu0 0
    %1105 = vmatpush1.bf16.msra.mxu0 0
    %1106 = vmatprep.subr.bf16.mxu0 0
    %1107 = vmatpush1.bf16.msra.mxu0 %v1090
    %1108 = vmatprep.subr.bf16.mxu0 0
    %1109 = vmatpush2.bf16.msra.mxu0 0
    %1110 = vmatprep.subr.bf16.mxu0 0
    %1111 = vmatpush2.bf16.msra.mxu0 0
    %1112 = vmatprep.subr.bf16.mxu0 0
    %1113 = vmatpush2.bf16.msra.mxu0 0
    %1114 = vmatprep.subr.bf16.mxu0 0
    %1115 = vmatpush2.bf16.msra.mxu0 0
    %1116 = vmatprep.subr.bf16.mxu0 0
    %1117 = vmatpush2.bf16.msra.mxu0 0
    %1118 = vmatprep.subr.bf16.mxu0 0
    %1119 = vmatpush2.bf16.msra.mxu0 0
    %1120 = vmatprep.subr.bf16.mxu0 0
    %1121 = vmatpush2.bf16.msra.mxu0 0
    %1122 = vmatprep.subr.bf16.mxu0 0
    %1123 = vmatpush2.bf16.msra.mxu0 0
    %1124 = vmatprep.mubr.bf16.mxu0 0
    %1125 = vmatmul.mubr.bf16.gmra.mxu0 %v1087
    %v1126 = vpop.f32.mrf.mxu0
    %v1127 = vadd.f32 0.0, %v1126
    %v1128 = vpop.f32.mrf.mxu0
    %v1129 = vpop.f32.mrf.mxu0
    %v1130 = vpop.f32.mrf.mxu0
    %1131 = vdwg.mxu0
    %v1133 = vsel %vm796, %v1037, 0
    %v1136 = vsel %vm1042, %v794, 0
    %1138 = vmatprep.subr.bf16.mxu0 0
    %1139 = vmatpush1.bf16.msra.mxu0 0
    %1140 = vmatprep.subr.bf16.mxu0 0
    %1141 = vmatpush1.bf16.msra.mxu0 0
    %1142 = vmatprep.subr.bf16.mxu0 0
    %1143 = vmatpush1.bf16.msra.mxu0 0
    %1144 = vmatprep.subr.bf16.mxu0 0
    %1145 = vmatpush1.bf16.msra.mxu0 0
    %1146 = vmatprep.subr.bf16.mxu0 0
    %1147 = vmatpush1.bf16.msra.mxu0 0
    %1148 = vmatprep.subr.bf16.mxu0 0
    %1149 = vmatpush1.bf16.msra.mxu0 0
    %1150 = vmatprep.subr.bf16.mxu0 0
    %1151 = vmatpush1.bf16.msra.mxu0 0
    %1152 = vmatprep.subr.bf16.mxu0 0
    %1153 = vmatpush1.bf16.msra.mxu0 %v1136
    %1154 = vmatprep.subr.bf16.mxu0 0
    %1155 = vmatpush2.bf16.msra.mxu0 0
    %1156 = vmatprep.subr.bf16.mxu0 0
    %1157 = vmatpush2.bf16.msra.mxu0 0
    %1158 = vmatprep.subr.bf16.mxu0 0
    %1159 = vmatpush2.bf16.msra.mxu0 0
    %1160 = vmatprep.subr.bf16.mxu0 0
    %1161 = vmatpush2.bf16.msra.mxu0 0
    %1162 = vmatprep.subr.bf16.mxu0 0
    %1163 = vmatpush2.bf16.msra.mxu0 0
    %1164 = vmatprep.subr.bf16.mxu0 0
    %1165 = vmatpush2.bf16.msra.mxu0 0
    %1166 = vmatprep.subr.bf16.mxu0 0
    %1167 = vmatpush2.bf16.msra.mxu0 0
    %1168 = vmatprep.subr.bf16.mxu0 0
    %1169 = vmatpush2.bf16.msra.mxu0 0
    %1170 = vmatprep.mubr.bf16.mxu0 0
    %1171 = vmatmul.mubr.bf16.gmra.mxu0 %v1133
    %v1172 = vpop.f32.mrf.mxu0
    %v1173 = vadd.f32 0.0, %v1172
    %v1174 = vpop.f32.mrf.mxu0
    %v1175 = vpop.f32.mrf.mxu0
    %v1176 = vpop.f32.mrf.mxu0
    %1177 = vdwg.mxu0
    %v1179 = vsel %vm796, %v1038, 0
    %v1182 = vsel %vm1042, %v795, 0
    %1184 = vmatprep.subr.bf16.mxu0 0
    %1185 = vmatpush1.bf16.msra.mxu0 0
    %1186 = vmatprep.subr.bf16.mxu0 0
    %1187 = vmatpush1.bf16.msra.mxu0 0
    %1188 = vmatprep.subr.bf16.mxu0 0
    %1189 = vmatpush1.bf16.msra.mxu0 0
    %1190 = vmatprep.subr.bf16.mxu0 0
    %1191 = vmatpush1.bf16.msra.mxu0 0
    %1192 = vmatprep.subr.bf16.mxu0 0
    %1193 = vmatpush1.bf16.msra.mxu0 0
    %1194 = vmatprep.subr.bf16.mxu0 0
    %1195 = vmatpush1.bf16.msra.mxu0 0
    %1196 = vmatprep.subr.bf16.mxu0 0
    %1197 = vmatpush1.bf16.msra.mxu0 0
    %1198 = vmatprep.subr.bf16.mxu0 0
    %1199 = vmatpush1.bf16.msra.mxu0 %v1182
    %1200 = vmatprep.subr.bf16.mxu0 0
    %1201 = vmatpush2.bf16.msra.mxu0 0
    %1202 = vmatprep.subr.bf16.mxu0 0
    %1203 = vmatpush2.bf16.msra.mxu0 0
    %1204 = vmatprep.subr.bf16.mxu0 0
    %1205 = vmatpush2.bf16.msra.mxu0 0
    %1206 = vmatprep.subr.bf16.mxu0 0
    %1207 = vmatpush2.bf16.msra.mxu0 0
    %1208 = vmatprep.subr.bf16.mxu0 0
    %1209 = vmatpush2.bf16.msra.mxu0 0
    %1210 = vmatprep.subr.bf16.mxu0 0
    %1211 = vmatpush2.bf16.msra.mxu0 0
    %1212 = vmatprep.subr.bf16.mxu0 0
    %1213 = vmatpush2.bf16.msra.mxu0 0
    %1214 = vmatprep.subr.bf16.mxu0 0
    %1215 = vmatpush2.bf16.msra.mxu0 0
    %1216 = vmatprep.mubr.bf16.mxu0 0
    %1217 = vmatmul.mubr.bf16.gmra.mxu0 %v1179
    %v1218 = vpop.f32.mrf.mxu0
    %v1219 = vadd.f32 0.0, %v1218
    %v1220 = vpop.f32.mrf.mxu0
    %v1221 = vpop.f32.mrf.mxu0
    %v1222 = vpop.f32.mrf.mxu0
    %1223 = vdwg.mxu0
    %v1224 = vcombine.low %v1081, %v1173
    %v1225 = vcombine.high %v1081, %v1173
    %v1227 = vunpack.c.l.s4 1983009808
    %v1228 = vunpack.c.0.s8 %v1227
    %v1229 = vlaneseq
    %v1230 = vshrl.u32 %v1229, 7
    %v1231 = vsub.s32 %v1228, %v1230
    %v1232 = vrot.slane %v1224, %v1231
    %v1234 = vunpack.c.l.s4 1983009808
    %v1235 = vunpack.c.0.s8 %v1234
    %v1236 = vlaneseq
    %v1237 = vshrl.u32 %v1236, 7
    %v1238 = vsub.s32 %v1235, %v1237
    %v1239 = vrot.slane %v1225, %v1238
    %v1240 = vcombine.low %v1127, %v1219
    %v1241 = vcombine.high %v1127, %v1219
    %v1243 = vunpack.c.l.s4 1983009808
    %v1244 = vunpack.c.0.s8 %v1243
    %v1245 = vlaneseq
    %v1246 = vshrl.u32 %v1245, 7
    %v1247 = vsub.s32 %v1244, %v1246
    %v1248 = vrot.slane %v1240, %v1247
    %v1250 = vunpack.c.l.s4 1983009808
    %v1251 = vunpack.c.0.s8 %v1250
    %v1252 = vlaneseq
    %v1253 = vshrl.u32 %v1252, 7
    %v1254 = vsub.s32 %v1251, %v1253
    %v1255 = vrot.slane %v1241, %v1254
    %v1256 = vcombine.low %v1232, %v1248
    %v1257 = vcombine.high %v1232, %v1248
    %v1259 = vunpack.c.l.s4 1934713408
    %v1260 = vunpack.c.0.s8 %v1259
    %v1261 = vlaneseq
    %v1262 = vshrl.u32 %v1261, 7
    %v1263 = vsub.s32 %v1260, %v1262
    %v1264 = vrot.slane %v1256, %v1263
    %v1266 = vunpack.c.l.s4 1934713408
    %v1267 = vunpack.c.0.s8 %v1266
    %v1268 = vlaneseq
    %v1269 = vshrl.u32 %v1268, 7
    %v1270 = vsub.s32 %v1267, %v1269
    %v1271 = vrot.slane %v1257, %v1270
    %v1272 = vcombine.low %v1239, %v1255
    %v1273 = vcombine.high %v1239, %v1255
    %v1275 = vunpack.c.l.s4 1934713408
    %v1276 = vunpack.c.0.s8 %v1275
    %v1277 = vlaneseq
    %v1278 = vshrl.u32 %v1277, 7
    %v1279 = vsub.s32 %v1276, %v1278
    %v1280 = vrot.slane %v1272, %v1279
    %v1282 = vunpack.c.l.s4 1934713408
    %v1283 = vunpack.c.0.s8 %v1282
    %v1284 = vlaneseq
    %v1285 = vshrl.u32 %v1284, 7
    %v1286 = vsub.s32 %v1283, %v1285
    %v1287 = vrot.slane %v1273, %v1286
    %v1288 = vcombine.high %v1264, 0.0
    %v1289 = vcombine.high %v1271, 0.0
    %v1290 = vcombine.high %v1280, 0.0
    %v1291 = vcombine.high %v1287, 0.0
    %v1292 = vcombine.low %v1264, %v1271
    %v1294 = vunpack.c.l.s4 1983009808
    %v1295 = vunpack.c.0.s8 %v1294
    %v1296 = vlaneseq
    %v1297 = vshrl.u32 %v1296, 7
    %v1298 = vsub.s32 %v1295, %v1297
    %v1299 = vrot.slane %v1292, %v1298
    %v1300 = vcombine.low %v1288, %v1289
    %v1302 = vunpack.c.l.s4 1983009808
    %v1303 = vunpack.c.0.s8 %v1302
    %v1304 = vlaneseq
    %v1305 = vshrl.u32 %v1304, 7
    %v1306 = vsub.s32 %v1303, %v1305
    %v1307 = vrot.slane %v1300, %v1306
    %v1308 = vcombine.low %v1280, %v1287
    %v1310 = vunpack.c.l.s4 1983009808
    %v1311 = vunpack.c.0.s8 %v1310
    %v1312 = vlaneseq
    %v1313 = vshrl.u32 %v1312, 7
    %v1314 = vsub.s32 %v1311, %v1313
    %v1315 = vrot.slane %v1308, %v1314
    %v1316 = vcombine.low %v1290, %v1291
    %v1318 = vunpack.c.l.s4 1983009808
    %v1319 = vunpack.c.0.s8 %v1318
    %v1320 = vlaneseq
    %v1321 = vshrl.u32 %v1320, 7
    %v1322 = vsub.s32 %v1319, %v1321
    %v1323 = vrot.slane %v1316, %v1322
    %v1324 = vcombine.low %v1299, %v1307
    %v1325 = vcombine.high %v1299, %v1307
    %v1327 = vunpack.c.l.s4 1934713408
    %v1328 = vunpack.c.0.s8 %v1327
    %v1329 = vlaneseq
    %v1330 = vshrl.u32 %v1329, 7
    %v1331 = vsub.s32 %v1328, %v1330
    %v1332 = vrot.slane %v1324, %v1331
    %v1334 = vunpack.c.l.s4 1934713408
    %v1335 = vunpack.c.0.s8 %v1334
    %v1336 = vlaneseq
    %v1337 = vshrl.u32 %v1336, 7
    %v1338 = vsub.s32 %v1335, %v1337
    %v1339 = vrot.slane %v1325, %v1338
    %v1340 = vcombine.low %v1315, %v1323
    %v1341 = vcombine.high %v1315, %v1323
    %v1343 = vunpack.c.l.s4 1934713408
    %v1344 = vunpack.c.0.s8 %v1343
    %v1345 = vlaneseq
    %v1346 = vshrl.u32 %v1345, 7
    %v1347 = vsub.s32 %v1344, %v1346
    %v1348 = vrot.slane %v1340, %v1347
    %v1350 = vunpack.c.l.s4 1934713408
    %v1351 = vunpack.c.0.s8 %v1350
    %v1352 = vlaneseq
    %v1353 = vshrl.u32 %v1352, 7
    %v1354 = vsub.s32 %v1351, %v1353
    %v1355 = vrot.slane %v1341, %v1354
    %v1356 = vcombine.low %v1332, %v1348
    %v1357 = vcombine.high %v1332, %v1348
    %v1358 = vcombine.low %v1339, %v1355
    %v1359 = vcombine.high %v1339, %v1355
    %1361 = vrot.lane.b32.xlu0 %v1357, 8
    %v1362 = vpop.permute.xlu0 %1361
    %1365 = vrot.lane.b32.xlu0 %v1358, 16
    %v1366 = vpop.permute.xlu0 %1365
    %1369 = vrot.lane.b32.xlu0 %v1359, 24
    %v1370 = vpop.permute.xlu0 %1369
    %v1372 = vsel %vm796, %v1356, %v1362
    %vm1373 = vcmask 130048
    %v1374 = vsel %vm1373, %v1372, %v1366
    %vm1375 = vcmask 195584
    %v1376 = vsel %vm1375, %v1374, %v1370
    %1378 = vrot.lane.b32.xlu0 %v229, 120
    %v1379 = vpop.permute.xlu0 %1378
    %1381 = vrot.lane.b32.xlu0 %v229, 112
    %v1382 = vpop.permute.xlu0 %1381
    %1384 = vrot.lane.b32.xlu0 %v229, 104
    %v1385 = vpop.permute.xlu0 %1384
    %v1387 = vcombine.low %v229, %v1382
    %v1388 = vcombine.high %v229, %v1382
    %v1390 = vunpack.c.l.s4 1983009808
    %v1391 = vunpack.c.0.s8 %v1390
    %v1392 = vlaneseq
    %v1393 = vshrl.u32 %v1392, 7
    %v1394 = vsub.s32 %v1391, %v1393
    %v1395 = vrot.slane %v1387, %v1394
    %v1397 = vunpack.c.l.s4 1983009808
    %v1398 = vunpack.c.0.s8 %v1397
    %v1399 = vlaneseq
    %v1400 = vshrl.u32 %v1399, 7
    %v1401 = vsub.s32 %v1398, %v1400
    %v1402 = vrot.slane %v1388, %v1401
    %v1403 = vcombine.low %v1379, %v1385
    %v1404 = vcombine.high %v1379, %v1385
    %v1406 = vunpack.c.l.s4 1983009808
    %v1407 = vunpack.c.0.s8 %v1406
    %v1408 = vlaneseq
    %v1409 = vshrl.u32 %v1408, 7
    %v1410 = vsub.s32 %v1407, %v1409
    %v1411 = vrot.slane %v1403, %v1410
    %v1413 = vunpack.c.l.s4 1983009808
    %v1414 = vunpack.c.0.s8 %v1413
    %v1415 = vlaneseq
    %v1416 = vshrl.u32 %v1415, 7
    %v1417 = vsub.s32 %v1414, %v1416
    %v1418 = vrot.slane %v1404, %v1417
    %v1419 = vcombine.low %v1395, %v1411
    %v1420 = vcombine.high %v1395, %v1411
    %v1422 = vunpack.c.l.s4 1934713408
    %v1423 = vunpack.c.0.s8 %v1422
    %v1424 = vlaneseq
    %v1425 = vshrl.u32 %v1424, 7
    %v1426 = vsub.s32 %v1423, %v1425
    %v1427 = vrot.slane %v1419, %v1426
    %v1429 = vunpack.c.l.s4 1934713408
    %v1430 = vunpack.c.0.s8 %v1429
    %v1431 = vlaneseq
    %v1432 = vshrl.u32 %v1431, 7
    %v1433 = vsub.s32 %v1430, %v1432
    %v1434 = vrot.slane %v1420, %v1433
    %v1435 = vcombine.low %v1402, %v1418
    %v1436 = vcombine.high %v1402, %v1418
    %v1438 = vunpack.c.l.s4 1934713408
    %v1439 = vunpack.c.0.s8 %v1438
    %v1440 = vlaneseq
    %v1441 = vshrl.u32 %v1440, 7
    %v1442 = vsub.s32 %v1439, %v1441
    %v1443 = vrot.slane %v1435, %v1442
    %v1445 = vunpack.c.l.s4 1934713408
    %v1446 = vunpack.c.0.s8 %v1445
    %v1447 = vlaneseq
    %v1448 = vshrl.u32 %v1447, 7
    %v1449 = vsub.s32 %v1446, %v1448
    %v1450 = vrot.slane %v1436, %v1449
    %v1451 = vcombine.high %v1427, 0.0
    %v1452 = vcombine.high %v1434, 0.0
    %v1453 = vcombine.high %v1443, 0.0
    %v1454 = vcombine.high %v1450, 0.0
    %v1455 = vcombine.low %v1427, %v1434
    %v1457 = vunpack.c.l.s4 1983009808
    %v1458 = vunpack.c.0.s8 %v1457
    %v1459 = vlaneseq
    %v1460 = vshrl.u32 %v1459, 7
    %v1461 = vsub.s32 %v1458, %v1460
    %v1462 = vrot.slane %v1455, %v1461
    %v1463 = vcombine.low %v1451, %v1452
    %v1465 = vunpack.c.l.s4 1983009808
    %v1466 = vunpack.c.0.s8 %v1465
    %v1467 = vlaneseq
    %v1468 = vshrl.u32 %v1467, 7
    %v1469 = vsub.s32 %v1466, %v1468
    %v1470 = vrot.slane %v1463, %v1469
    %v1471 = vcombine.low %v1443, %v1450
    %v1473 = vunpack.c.l.s4 1983009808
    %v1474 = vunpack.c.0.s8 %v1473
    %v1475 = vlaneseq
    %v1476 = vshrl.u32 %v1475, 7
    %v1477 = vsub.s32 %v1474, %v1476
    %v1478 = vrot.slane %v1471, %v1477
    %v1479 = vcombine.low %v1453, %v1454
    %v1481 = vunpack.c.l.s4 1983009808
    %v1482 = vunpack.c.0.s8 %v1481
    %v1483 = vlaneseq
    %v1484 = vshrl.u32 %v1483, 7
    %v1485 = vsub.s32 %v1482, %v1484
    %v1486 = vrot.slane %v1479, %v1485
    %v1487 = vcombine.low %v1462, %v1470
    %v1488 = vcombine.high %v1462, %v1470
    %v1490 = vunpack.c.l.s4 1934713408
    %v1491 = vunpack.c.0.s8 %v1490
    %v1492 = vlaneseq
    %v1493 = vshrl.u32 %v1492, 7
    %v1494 = vsub.s32 %v1491, %v1493
    %v1495 = vrot.slane %v1487, %v1494
    %v1497 = vunpack.c.l.s4 1934713408
    %v1498 = vunpack.c.0.s8 %v1497
    %v1499 = vlaneseq
    %v1500 = vshrl.u32 %v1499, 7
    %v1501 = vsub.s32 %v1498, %v1500
    %v1502 = vrot.slane %v1488, %v1501
    %v1503 = vcombine.low %v1478, %v1486
    %v1504 = vcombine.high %v1478, %v1486
    %v1506 = vunpack.c.l.s4 1934713408
    %v1507 = vunpack.c.0.s8 %v1506
    %v1508 = vlaneseq
    %v1509 = vshrl.u32 %v1508, 7
    %v1510 = vsub.s32 %v1507, %v1509
    %v1511 = vrot.slane %v1503, %v1510
    %v1513 = vunpack.c.l.s4 1934713408
    %v1514 = vunpack.c.0.s8 %v1513
    %v1515 = vlaneseq
    %v1516 = vshrl.u32 %v1515, 7
    %v1517 = vsub.s32 %v1514, %v1516
    %v1518 = vrot.slane %v1504, %v1517
    %v1519 = vcombine.low %v1495, %v1511
    %v1520 = vcombine.high %v1495, %v1511
    %v1521 = vcombine.low %v1502, %v1518
    %v1522 = vcombine.high %v1502, %v1518
    %v1523 = vpack.c.bf16 %v1519, %v1519
    %v1524 = vpack.c.bf16 %v1520, %v1520
    %v1525 = vpack.c.bf16 %v1521, %v1521
    %v1526 = vpack.c.bf16 %v1522, %v1522
    %1528 = vrot.lane.b32.xlu0 %v286, 120
    %v1529 = vpop.permute.xlu0 %1528
    %1531 = vrot.lane.b32.xlu0 %v286, 112
    %v1532 = vpop.permute.xlu0 %1531
    %1534 = vrot.lane.b32.xlu0 %v286, 104
    %v1535 = vpop.permute.xlu0 %1534
    %v1537 = vcombine.low %v286, %v1532
    %v1538 = vcombine.high %v286, %v1532
    %v1540 = vunpack.c.l.s4 1983009808
    %v1541 = vunpack.c.0.s8 %v1540
    %v1542 = vlaneseq
    %v1543 = vshrl.u32 %v1542, 7
    %v1544 = vsub.s32 %v1541, %v1543
    %v1545 = vrot.slane %v1537, %v1544
    %v1547 = vunpack.c.l.s4 1983009808
    %v1548 = vunpack.c.0.s8 %v1547
    %v1549 = vlaneseq
    %v1550 = vshrl.u32 %v1549, 7
    %v1551 = vsub.s32 %v1548, %v1550
    %v1552 = vrot.slane %v1538, %v1551
    %v1553 = vcombine.low %v1529, %v1535
    %v1554 = vcombine.high %v1529, %v1535
    %v1556 = vunpack.c.l.s4 1983009808
    %v1557 = vunpack.c.0.s8 %v1556
    %v1558 = vlaneseq
    %v1559 = vshrl.u32 %v1558, 7
    %v1560 = vsub.s32 %v1557, %v1559
    %v1561 = vrot.slane %v1553, %v1560
    %v1563 = vunpack.c.l.s4 1983009808
    %v1564 = vunpack.c.0.s8 %v1563
    %v1565 = vlaneseq
    %v1566 = vshrl.u32 %v1565, 7
    %v1567 = vsub.s32 %v1564, %v1566
    %v1568 = vrot.slane %v1554, %v1567
    %v1569 = vcombine.low %v1545, %v1561
    %v1570 = vcombine.high %v1545, %v1561
    %v1572 = vunpack.c.l.s4 1934713408
    %v1573 = vunpack.c.0.s8 %v1572
    %v1574 = vlaneseq
    %v1575 = vshrl.u32 %v1574, 7
    %v1576 = vsub.s32 %v1573, %v1575
    %v1577 = vrot.slane %v1569, %v1576
    %v1579 = vunpack.c.l.s4 1934713408
    %v1580 = vunpack.c.0.s8 %v1579
    %v1581 = vlaneseq
    %v1582 = vshrl.u32 %v1581, 7
    %v1583 = vsub.s32 %v1580, %v1582
    %v1584 = vrot.slane %v1570, %v1583
    %v1585 = vcombine.low %v1552, %v1568
    %v1586 = vcombine.high %v1552, %v1568
    %v1588 = vunpack.c.l.s4 1934713408
    %v1589 = vunpack.c.0.s8 %v1588
    %v1590 = vlaneseq
    %v1591 = vshrl.u32 %v1590, 7
    %v1592 = vsub.s32 %v1589, %v1591
    %v1593 = vrot.slane %v1585, %v1592
    %v1595 = vunpack.c.l.s4 1934713408
    %v1596 = vunpack.c.0.s8 %v1595
    %v1597 = vlaneseq
    %v1598 = vshrl.u32 %v1597, 7
    %v1599 = vsub.s32 %v1596, %v1598
    %v1600 = vrot.slane %v1586, %v1599
    %v1601 = vcombine.high %v1577, 0.0
    %v1602 = vcombine.high %v1584, 0.0
    %v1603 = vcombine.high %v1593, 0.0
    %v1604 = vcombine.high %v1600, 0.0
    %v1605 = vcombine.low %v1577, %v1584
    %v1607 = vunpack.c.l.s4 1983009808
    %v1608 = vunpack.c.0.s8 %v1607
    %v1609 = vlaneseq
    %v1610 = vshrl.u32 %v1609, 7
    %v1611 = vsub.s32 %v1608, %v1610
    %v1612 = vrot.slane %v1605, %v1611
    %v1613 = vcombine.low %v1601, %v1602
    %v1615 = vunpack.c.l.s4 1983009808
    %v1616 = vunpack.c.0.s8 %v1615
    %v1617 = vlaneseq
    %v1618 = vshrl.u32 %v1617, 7
    %v1619 = vsub.s32 %v1616, %v1618
    %v1620 = vrot.slane %v1613, %v1619
    %v1621 = vcombine.low %v1593, %v1600
    %v1623 = vunpack.c.l.s4 1983009808
    %v1624 = vunpack.c.0.s8 %v1623
    %v1625 = vlaneseq
    %v1626 = vshrl.u32 %v1625, 7
    %v1627 = vsub.s32 %v1624, %v1626
    %v1628 = vrot.slane %v1621, %v1627
    %v1629 = vcombine.low %v1603, %v1604
    %v1631 = vunpack.c.l.s4 1983009808
    %v1632 = vunpack.c.0.s8 %v1631
    %v1633 = vlaneseq
    %v1634 = vshrl.u32 %v1633, 7
    %v1635 = vsub.s32 %v1632, %v1634
    %v1636 = vrot.slane %v1629, %v1635
    %v1637 = vcombine.low %v1612, %v1620
    %v1638 = vcombine.high %v1612, %v1620
    %v1640 = vunpack.c.l.s4 1934713408
    %v1641 = vunpack.c.0.s8 %v1640
    %v1642 = vlaneseq
    %v1643 = vshrl.u32 %v1642, 7
    %v1644 = vsub.s32 %v1641, %v1643
    %v1645 = vrot.slane %v1637, %v1644
    %v1647 = vunpack.c.l.s4 1934713408
    %v1648 = vunpack.c.0.s8 %v1647
    %v1649 = vlaneseq
    %v1650 = vshrl.u32 %v1649, 7
    %v1651 = vsub.s32 %v1648, %v1650
    %v1652 = vrot.slane %v1638, %v1651
    %v1653 = vcombine.low %v1628, %v1636
    %v1654 = vcombine.high %v1628, %v1636
    %v1656 = vunpack.c.l.s4 1934713408
    %v1657 = vunpack.c.0.s8 %v1656
    %v1658 = vlaneseq
    %v1659 = vshrl.u32 %v1658, 7
    %v1660 = vsub.s32 %v1657, %v1659
    %v1661 = vrot.slane %v1653, %v1660
    %v1663 = vunpack.c.l.s4 1934713408
    %v1664 = vunpack.c.0.s8 %v1663
    %v1665 = vlaneseq
    %v1666 = vshrl.u32 %v1665, 7
    %v1667 = vsub.s32 %v1664, %v1666
    %v1668 = vrot.slane %v1654, %v1667
    %v1669 = vcombine.low %v1645, %v1661
    %v1670 = vcombine.high %v1645, %v1661
    %v1671 = vcombine.low %v1652, %v1668
    %v1672 = vcombine.high %v1652, %v1668
    %v1673 = vpack.c.bf16 %v1669, %v1669
    %v1674 = vpack.c.bf16 %v1670, %v1670
    %v1675 = vpack.c.bf16 %v1671, %v1671
    %v1676 = vpack.c.bf16 %v1672, %v1672
    %1678 = vrot.lane.b32.xlu0 %v343, 120
    %v1679 = vpop.permute.xlu0 %1678
    %1681 = vrot.lane.b32.xlu0 %v343, 112
    %v1682 = vpop.permute.xlu0 %1681
    %1684 = vrot.lane.b32.xlu0 %v343, 104
    %v1685 = vpop.permute.xlu0 %1684
    %v1687 = vcombine.low %v343, %v1682
    %v1688 = vcombine.high %v343, %v1682
    %v1690 = vunpack.c.l.s4 1983009808
    %v1691 = vunpack.c.0.s8 %v1690
    %v1692 = vlaneseq
    %v1693 = vshrl.u32 %v1692, 7
    %v1694 = vsub.s32 %v1691, %v1693
    %v1695 = vrot.slane %v1687, %v1694
    %v1697 = vunpack.c.l.s4 1983009808
    %v1698 = vunpack.c.0.s8 %v1697
    %v1699 = vlaneseq
    %v1700 = vshrl.u32 %v1699, 7
    %v1701 = vsub.s32 %v1698, %v1700
    %v1702 = vrot.slane %v1688, %v1701
    %v1703 = vcombine.low %v1679, %v1685
    %v1704 = vcombine.high %v1679, %v1685
    %v1706 = vunpack.c.l.s4 1983009808
    %v1707 = vunpack.c.0.s8 %v1706
    %v1708 = vlaneseq
    %v1709 = vshrl.u32 %v1708, 7
    %v1710 = vsub.s32 %v1707, %v1709
    %v1711 = vrot.slane %v1703, %v1710
    %v1713 = vunpack.c.l.s4 1983009808
    %v1714 = vunpack.c.0.s8 %v1713
    %v1715 = vlaneseq
    %v1716 = vshrl.u32 %v1715, 7
    %v1717 = vsub.s32 %v1714, %v1716
    %v1718 = vrot.slane %v1704, %v1717
    %v1719 = vcombine.low %v1695, %v1711
    %v1720 = vcombine.high %v1695, %v1711
    %v1722 = vunpack.c.l.s4 1934713408
    %v1723 = vunpack.c.0.s8 %v1722
    %v1724 = vlaneseq
    %v1725 = vshrl.u32 %v1724, 7
    %v1726 = vsub.s32 %v1723, %v1725
    %v1727 = vrot.slane %v1719, %v1726
    %v1729 = vunpack.c.l.s4 1934713408
    %v1730 = vunpack.c.0.s8 %v1729
    %v1731 = vlaneseq
    %v1732 = vshrl.u32 %v1731, 7
    %v1733 = vsub.s32 %v1730, %v1732
    %v1734 = vrot.slane %v1720, %v1733
    %v1735 = vcombine.low %v1702, %v1718
    %v1736 = vcombine.high %v1702, %v1718
    %v1738 = vunpack.c.l.s4 1934713408
    %v1739 = vunpack.c.0.s8 %v1738
    %v1740 = vlaneseq
    %v1741 = vshrl.u32 %v1740, 7
    %v1742 = vsub.s32 %v1739, %v1741
    %v1743 = vrot.slane %v1735, %v1742
    %v1745 = vunpack.c.l.s4 1934713408
    %v1746 = vunpack.c.0.s8 %v1745
    %v1747 = vlaneseq
    %v1748 = vshrl.u32 %v1747, 7
    %v1749 = vsub.s32 %v1746, %v1748
    %v1750 = vrot.slane %v1736, %v1749
    %v1751 = vcombine.high %v1727, 0.0
    %v1752 = vcombine.high %v1734, 0.0
    %v1753 = vcombine.high %v1743, 0.0
    %v1754 = vcombine.high %v1750, 0.0
    %v1755 = vcombine.low %v1727, %v1734
    %v1757 = vunpack.c.l.s4 1983009808
    %v1758 = vunpack.c.0.s8 %v1757
    %v1759 = vlaneseq
    %v1760 = vshrl.u32 %v1759, 7
    %v1761 = vsub.s32 %v1758, %v1760
    %v1762 = vrot.slane %v1755, %v1761
    %v1763 = vcombine.low %v1751, %v1752
    %v1765 = vunpack.c.l.s4 1983009808
    %v1766 = vunpack.c.0.s8 %v1765
    %v1767 = vlaneseq
    %v1768 = vshrl.u32 %v1767, 7
    %v1769 = vsub.s32 %v1766, %v1768
    %v1770 = vrot.slane %v1763, %v1769
    %v1771 = vcombine.low %v1743, %v1750
    %v1773 = vunpack.c.l.s4 1983009808
    %v1774 = vunpack.c.0.s8 %v1773
    %v1775 = vlaneseq
    %v1776 = vshrl.u32 %v1775, 7
    %v1777 = vsub.s32 %v1774, %v1776
    %v1778 = vrot.slane %v1771, %v1777
    %v1779 = vcombine.low %v1753, %v1754
    %v1781 = vunpack.c.l.s4 1983009808
    %v1782 = vunpack.c.0.s8 %v1781
    %v1783 = vlaneseq
    %v1784 = vshrl.u32 %v1783, 7
    %v1785 = vsub.s32 %v1782, %v1784
    %v1786 = vrot.slane %v1779, %v1785
    %v1787 = vcombine.low %v1762, %v1770
    %v1788 = vcombine.high %v1762, %v1770
    %v1790 = vunpack.c.l.s4 1934713408
    %v1791 = vunpack.c.0.s8 %v1790
    %v1792 = vlaneseq
    %v1793 = vshrl.u32 %v1792, 7
    %v1794 = vsub.s32 %v1791, %v1793
    %v1795 = vrot.slane %v1787, %v1794
    %v1797 = vunpack.c.l.s4 1934713408
    %v1798 = vunpack.c.0.s8 %v1797
    %v1799 = vlaneseq
    %v1800 = vshrl.u32 %v1799, 7
    %v1801 = vsub.s32 %v1798, %v1800
    %v1802 = vrot.slane %v1788, %v1801
    %v1803 = vcombine.low %v1778, %v1786
    %v1804 = vcombine.high %v1778, %v1786
    %v1806 = vunpack.c.l.s4 1934713408
    %v1807 = vunpack.c.0.s8 %v1806
    %v1808 = vlaneseq
    %v1809 = vshrl.u32 %v1808, 7
    %v1810 = vsub.s32 %v1807, %v1809
    %v1811 = vrot.slane %v1803, %v1810
    %v1813 = vunpack.c.l.s4 1934713408
    %v1814 = vunpack.c.0.s8 %v1813
    %v1815 = vlaneseq
    %v1816 = vshrl.u32 %v1815, 7
    %v1817 = vsub.s32 %v1814, %v1816
    %v1818 = vrot.slane %v1804, %v1817
    %v1819 = vcombine.low %v1795, %v1811
    %v1820 = vcombine.high %v1795, %v1811
    %v1821 = vcombine.low %v1802, %v1818
    %v1822 = vcombine.high %v1802, %v1818
    %v1823 = vpack.c.bf16 %v1819, %v1819
    %v1824 = vpack.c.bf16 %v1820, %v1820
    %v1825 = vpack.c.bf16 %v1821, %v1821
    %v1826 = vpack.c.bf16 %v1822, %v1822
    %v1828 = vsel %vm796, %v1523, 0
    %v1831 = vsel %vm796, %v1673, 0
    %1833 = vmatprep.subr.bf16.mxu0 0
    %1834 = vmatpush1.bf16.xpose.msra.mxu0 0
    %1835 = vmatprep.subr.bf16.mxu0 0
    %1836 = vmatpush1.bf16.xpose.msra.mxu0 0
    %1837 = vmatprep.subr.bf16.mxu0 0
    %1838 = vmatpush1.bf16.xpose.msra.mxu0 0
    %1839 = vmatprep.subr.bf16.mxu0 0
    %1840 = vmatpush1.bf16.xpose.msra.mxu0 0
    %1841 = vmatprep.subr.bf16.mxu0 0
    %1842 = vmatpush1.bf16.xpose.msra.mxu0 0
    %1843 = vmatprep.subr.bf16.mxu0 0
    %1844 = vmatpush1.bf16.xpose.msra.mxu0 0
    %1845 = vmatprep.subr.bf16.mxu0 0
    %1846 = vmatpush1.bf16.xpose.msra.mxu0 0
    %1847 = vmatprep.subr.bf16.mxu0 0
    %1848 = vmatpush1.bf16.xpose.msra.mxu0 %v1831
    %1849 = vmatprep.subr.bf16.mxu0 0
    %1850 = vmatpush2.bf16.xpose.msra.mxu0 0
    %1851 = vmatprep.subr.bf16.mxu0 0
    %1852 = vmatpush2.bf16.xpose.msra.mxu0 0
    %1853 = vmatprep.subr.bf16.mxu0 0
    %1854 = vmatpush2.bf16.xpose.msra.mxu0 0
    %1855 = vmatprep.subr.bf16.mxu0 0
    %1856 = vmatpush2.bf16.xpose.msra.mxu0 0
    %1857 = vmatprep.subr.bf16.mxu0 0
    %1858 = vmatpush2.bf16.xpose.msra.mxu0 0
    %1859 = vmatprep.subr.bf16.mxu0 0
    %1860 = vmatpush2.bf16.xpose.msra.mxu0 0
    %1861 = vmatprep.subr.bf16.mxu0 0
    %1862 = vmatpush2.bf16.xpose.msra.mxu0 0
    %1863 = vmatprep.subr.bf16.mxu0 0
    %1864 = vmatpush2.bf16.xpose.msra.mxu0 0
    %1865 = vmatprep.mubr.bf16.mxu0 0
    %1866 = vmatmul.mubr.bf16.gmra.mxu0 %v1828
    %v1867 = vpop.f32.mrf.mxu0
    %v1868 = vadd.f32 %v134, %v1867
    %v1869 = vpop.f32.mrf.mxu0
    %v1870 = vpop.f32.mrf.mxu0
    %v1871 = vpop.f32.mrf.mxu0
    %1872 = vdwg.mxu0
    %v1874 = vsel %vm796, %v1524, 0
    %v1877 = vsel %vm796, %v1674, 0
    %1879 = vmatprep.subr.bf16.mxu0 0
    %1880 = vmatpush1.bf16.xpose.msra.mxu0 0
    %1881 = vmatprep.subr.bf16.mxu0 0
    %1882 = vmatpush1.bf16.xpose.msra.mxu0 0
    %1883 = vmatprep.subr.bf16.mxu0 0
    %1884 = vmatpush1.bf16.xpose.msra.mxu0 0
    %1885 = vmatprep.subr.bf16.mxu0 0
    %1886 = vmatpush1.bf16.xpose.msra.mxu0 0
    %1887 = vmatprep.subr.bf16.mxu0 0
    %1888 = vmatpush1.bf16.xpose.msra.mxu0 0
    %1889 = vmatprep.subr.bf16.mxu0 0
    %1890 = vmatpush1.bf16.xpose.msra.mxu0 0
    %1891 = vmatprep.subr.bf16.mxu0 0
    %1892 = vmatpush1.bf16.xpose.msra.mxu0 0
    %1893 = vmatprep.subr.bf16.mxu0 0
    %1894 = vmatpush1.bf16.xpose.msra.mxu0 %v1877
    %1895 = vmatprep.subr.bf16.mxu0 0
    %1896 = vmatpush2.bf16.xpose.msra.mxu0 0
    %1897 = vmatprep.subr.bf16.mxu0 0
    %1898 = vmatpush2.bf16.xpose.msra.mxu0 0
    %1899 = vmatprep.subr.bf16.mxu0 0
    %1900 = vmatpush2.bf16.xpose.msra.mxu0 0
    %1901 = vmatprep.subr.bf16.mxu0 0
    %1902 = vmatpush2.bf16.xpose.msra.mxu0 0
    %1903 = vmatprep.subr.bf16.mxu0 0
    %1904 = vmatpush2.bf16.xpose.msra.mxu0 0
    %1905 = vmatprep.subr.bf16.mxu0 0
    %1906 = vmatpush2.bf16.xpose.msra.mxu0 0
    %1907 = vmatprep.subr.bf16.mxu0 0
    %1908 = vmatpush2.bf16.xpose.msra.mxu0 0
    %1909 = vmatprep.subr.bf16.mxu0 0
    %1910 = vmatpush2.bf16.xpose.msra.mxu0 0
    %1911 = vmatprep.mubr.bf16.mxu0 0
    %1912 = vmatmul.mubr.bf16.gmra.mxu0 %v1874
    %v1913 = vpop.f32.mrf.mxu0
    %v1914 = vadd.f32 %v135, %v1913
    %v1915 = vpop.f32.mrf.mxu0
    %v1916 = vpop.f32.mrf.mxu0
    %v1917 = vpop.f32.mrf.mxu0
    %1918 = vdwg.mxu0
    %v1920 = vsel %vm796, %v1525, 0
    %v1923 = vsel %vm796, %v1675, 0
    %1925 = vmatprep.subr.bf16.mxu0 0
    %1926 = vmatpush1.bf16.xpose.msra.mxu0 0
    %1927 = vmatprep.subr.bf16.mxu0 0
    %1928 = vmatpush1.bf16.xpose.msra.mxu0 0
    %1929 = vmatprep.subr.bf16.mxu0 0
    %1930 = vmatpush1.bf16.xpose.msra.mxu0 0
    %1931 = vmatprep.subr.bf16.mxu0 0
    %1932 = vmatpush1.bf16.xpose.msra.mxu0 0
    %1933 = vmatprep.subr.bf16.mxu0 0
    %1934 = vmatpush1.bf16.xpose.msra.mxu0 0
    %1935 = vmatprep.subr.bf16.mxu0 0
    %1936 = vmatpush1.bf16.xpose.msra.mxu0 0
    %1937 = vmatprep.subr.bf16.mxu0 0
    %1938 = vmatpush1.bf16.xpose.msra.mxu0 0
    %1939 = vmatprep.subr.bf16.mxu0 0
    %1940 = vmatpush1.bf16.xpose.msra.mxu0 %v1923
    %1941 = vmatprep.subr.bf16.mxu0 0
    %1942 = vmatpush2.bf16.xpose.msra.mxu0 0
    %1943 = vmatprep.subr.bf16.mxu0 0
    %1944 = vmatpush2.bf16.xpose.msra.mxu0 0
    %1945 = vmatprep.subr.bf16.mxu0 0
    %1946 = vmatpush2.bf16.xpose.msra.mxu0 0
    %1947 = vmatprep.subr.bf16.mxu0 0
    %1948 = vmatpush2.bf16.xpose.msra.mxu0 0
    %1949 = vmatprep.subr.bf16.mxu0 0
    %1950 = vmatpush2.bf16.xpose.msra.mxu0 0
    %1951 = vmatprep.subr.bf16.mxu0 0
    %1952 = vmatpush2.bf16.xpose.msra.mxu0 0
    %1953 = vmatprep.subr.bf16.mxu0 0
    %1954 = vmatpush2.bf16.xpose.msra.mxu0 0
    %1955 = vmatprep.subr.bf16.mxu0 0
    %1956 = vmatpush2.bf16.xpose.msra.mxu0 0
    %1957 = vmatprep.mubr.bf16.mxu0 0
    %1958 = vmatmul.mubr.bf16.gmra.mxu0 %v1920
    %v1959 = vpop.f32.mrf.mxu0
    %v1960 = vadd.f32 %v136, %v1959
    %v1961 = vpop.f32.mrf.mxu0
    %v1962 = vpop.f32.mrf.mxu0
    %v1963 = vpop.f32.mrf.mxu0
    %1964 = vdwg.mxu0
    %v1966 = vsel %vm796, %v1526, 0
    %v1969 = vsel %vm796, %v1676, 0
    %1971 = vmatprep.subr.bf16.mxu0 0
    %1972 = vmatpush1.bf16.xpose.msra.mxu0 0
    %1973 = vmatprep.subr.bf16.mxu0 0
    %1974 = vmatpush1.bf16.xpose.msra.mxu0 0
    %1975 = vmatprep.subr.bf16.mxu0 0
    %1976 = vmatpush1.bf16.xpose.msra.mxu0 0
    %1977 = vmatprep.subr.bf16.mxu0 0
    %1978 = vmatpush1.bf16.xpose.msra.mxu0 0
    %1979 = vmatprep.subr.bf16.mxu0 0
    %1980 = vmatpush1.bf16.xpose.msra.mxu0 0
    %1981 = vmatprep.subr.bf16.mxu0 0
    %1982 = vmatpush1.bf16.xpose.msra.mxu0 0
    %1983 = vmatprep.subr.bf16.mxu0 0
    %1984 = vmatpush1.bf16.xpose.msra.mxu0 0
    %1985 = vmatprep.subr.bf16.mxu0 0
    %1986 = vmatpush1.bf16.xpose.msra.mxu0 %v1969
    %1987 = vmatprep.subr.bf16.mxu0 0
    %1988 = vmatpush2.bf16.xpose.msra.mxu0 0
    %1989 = vmatprep.subr.bf16.mxu0 0
    %1990 = vmatpush2.bf16.xpose.msra.mxu0 0
    %1991 = vmatprep.subr.bf16.mxu0 0
    %1992 = vmatpush2.bf16.xpose.msra.mxu0 0
    %1993 = vmatprep.subr.bf16.mxu0 0
    %1994 = vmatpush2.bf16.xpose.msra.mxu0 0
    %1995 = vmatprep.subr.bf16.mxu0 0
    %1996 = vmatpush2.bf16.xpose.msra.mxu0 0
    %1997 = vmatprep.subr.bf16.mxu0 0
    %1998 = vmatpush2.bf16.xpose.msra.mxu0 0
    %1999 = vmatprep.subr.bf16.mxu0 0
    %2000 = vmatpush2.bf16.xpose.msra.mxu0 0
    %2001 = vmatprep.subr.bf16.mxu0 0
    %2002 = vmatpush2.bf16.xpose.msra.mxu0 0
    %2003 = vmatprep.mubr.bf16.mxu0 0
    %2004 = vmatmul.mubr.bf16.gmra.mxu0 %v1966
    %v2005 = vpop.f32.mrf.mxu0
    %v2006 = vadd.f32 %v137, %v2005
    %v2007 = vpop.f32.mrf.mxu0
    %v2008 = vpop.f32.mrf.mxu0
    %v2009 = vpop.f32.mrf.mxu0
    %2010 = vdwg.mxu0
    %v2012 = vlaneseq
    %v2013 = vshrl.u32 %v2012, 7
    %v2014 = vsub.s32 0, %v2013
    %v2015 = vrot.slane %v133, %v2014
    %v2017 = vadd.f32 %v1868, %v2015
    %v2018 = vadd.f32 %v1914, %v2015
    %v2019 = vadd.f32 %v1960, %v2015
    %v2020 = vadd.f32 %v2006, %v2015
    %v2021 = vsel %vm796, %v2017, -inf
    %2022 = vmax.xlane.f32.xlu0 %v2021
    %v2023 = vpop.xlane.xlu0 %2022
    %v2024 = vsel %vm796, %v2018, -inf
    %2025 = vmax.xlane.f32.xlu0 %v2024
    %v2026 = vpop.xlane.xlu0 %2025
    %v2027 = vsel %vm796, %v2019, -inf
    %2028 = vmax.xlane.f32.xlu0 %v2027
    %v2029 = vpop.xlane.xlu0 %2028
    %v2030 = vsel %vm796, %v2020, -inf
    %2031 = vmax.xlane.f32.xlu0 %v2030
    %v2032 = vpop.xlane.xlu0 %2031
    %v2033 = vsub.f32 %v2017, %v2023
    %v2034 = vsub.f32 %v2018, %v2026
    %v2035 = vsub.f32 %v2019, %v2029
    %v2036 = vsub.f32 %v2020, %v2032
    %v2037 = vmul.f32 %v2033, 1.442695
    %v2038 = vpow.pop %v2037
    %v2039 = vmul.f32 %v2034, 1.442695
    %v2040 = vpow.pop %v2039
    %v2041 = vmul.f32 %v2035, 1.442695
    %v2042 = vpow.pop %v2041
    %v2043 = vmul.f32 %v2036, 1.442695
    %v2044 = vpow.pop %v2043
    %v2045 = vsel %vm796, %v2038, 0.0
    %2046 = vadd.xlane.f32.xlu0 %v2045
    %v2047 = vpop.xlane.xlu0 %2046
    %v2048 = vsel %vm796, %v2040, 0.0
    %2049 = vadd.xlane.f32.xlu0 %v2048
    %v2050 = vpop.xlane.xlu0 %2049
    %v2051 = vsel %vm796, %v2042, 0.0
    %2052 = vadd.xlane.f32.xlu0 %v2051
    %v2053 = vpop.xlane.xlu0 %2052
    %v2054 = vsel %vm796, %v2044, 0.0
    %2055 = vadd.xlane.f32.xlu0 %v2054
    %v2056 = vpop.xlane.xlu0 %2055
    %v2057 = vrcp.pop %v2047
    %v2058 = vrcp.pop %v2050
    %v2059 = vrcp.pop %v2053
    %v2060 = vrcp.pop %v2056
    %v2061 = vmul.f32 %v2038, %v2057
    %v2062 = vmul.f32 %v2040, %v2058
    %v2063 = vmul.f32 %v2042, %v2059
    %v2064 = vmul.f32 %v2044, %v2060
    %v2065 = vpack.c.bf16 %v2061, %v2061
    %v2066 = vpack.c.bf16 %v2062, %v2062
    %v2067 = vpack.c.bf16 %v2063, %v2063
    %v2068 = vpack.c.bf16 %v2064, %v2064
    %v2070 = vsel %vm796, %v2065, 0
    %v2073 = vsel %vm1042, %v1823, 0
    %2075 = vmatprep.subr.bf16.mxu0 0
    %2076 = vmatpush1.bf16.msra.mxu0 0
    %2077 = vmatprep.subr.bf16.mxu0 0
    %2078 = vmatpush1.bf16.msra.mxu0 0
    %2079 = vmatprep.subr.bf16.mxu0 0
    %2080 = vmatpush1.bf16.msra.mxu0 0
    %2081 = vmatprep.subr.bf16.mxu0 0
    %2082 = vmatpush1.bf16.msra.mxu0 0
    %2083 = vmatprep.subr.bf16.mxu0 0
    %2084 = vmatpush1.bf16.msra.mxu0 0
    %2085 = vmatprep.subr.bf16.mxu0 0
    %2086 = vmatpush1.bf16.msra.mxu0 0
    %2087 = vmatprep.subr.bf16.mxu0 0
    %2088 = vmatpush1.bf16.msra.mxu0 0
    %2089 = vmatprep.subr.bf16.mxu0 0
    %2090 = vmatpush1.bf16.msra.mxu0 %v2073
    %2091 = vmatprep.subr.bf16.mxu0 0
    %2092 = vmatpush2.bf16.msra.mxu0 0
    %2093 = vmatprep.subr.bf16.mxu0 0
    %2094 = vmatpush2.bf16.msra.mxu0 0
    %2095 = vmatprep.subr.bf16.mxu0 0
    %2096 = vmatpush2.bf16.msra.mxu0 0
    %2097 = vmatprep.subr.bf16.mxu0 0
    %2098 = vmatpush2.bf16.msra.mxu0 0
    %2099 = vmatprep.subr.bf16.mxu0 0
    %2100 = vmatpush2.bf16.msra.mxu0 0
    %2101 = vmatprep.subr.bf16.mxu0 0
    %2102 = vmatpush2.bf16.msra.mxu0 0
    %2103 = vmatprep.subr.bf16.mxu0 0
    %2104 = vmatpush2.bf16.msra.mxu0 0
    %2105 = vmatprep.subr.bf16.mxu0 0
    %2106 = vmatpush2.bf16.msra.mxu0 0
    %2107 = vmatprep.mubr.bf16.mxu0 0
    %2108 = vmatmul.mubr.bf16.gmra.mxu0 %v2070
    %v2109 = vpop.f32.mrf.mxu0
    %v2110 = vadd.f32 0.0, %v2109
    %v2111 = vpop.f32.mrf.mxu0
    %v2112 = vpop.f32.mrf.mxu0
    %v2113 = vpop.f32.mrf.mxu0
    %2114 = vdwg.mxu0
    %v2116 = vsel %vm796, %v2066, 0
    %v2119 = vsel %vm1042, %v1824, 0
    %2121 = vmatprep.subr.bf16.mxu0 0
    %2122 = vmatpush1.bf16.msra.mxu0 0
    %2123 = vmatprep.subr.bf16.mxu0 0
    %2124 = vmatpush1.bf16.msra.mxu0 0
    %2125 = vmatprep.subr.bf16.mxu0 0
    %2126 = vmatpush1.bf16.msra.mxu0 0
    %2127 = vmatprep.subr.bf16.mxu0 0
    %2128 = vmatpush1.bf16.msra.mxu0 0
    %2129 = vmatprep.subr.bf16.mxu0 0
    %2130 = vmatpush1.bf16.msra.mxu0 0
    %2131 = vmatprep.subr.bf16.mxu0 0
    %2132 = vmatpush1.bf16.msra.mxu0 0
    %2133 = vmatprep.subr.bf16.mxu0 0
    %2134 = vmatpush1.bf16.msra.mxu0 0
    %2135 = vmatprep.subr.bf16.mxu0 0
    %2136 = vmatpush1.bf16.msra.mxu0 %v2119
    %2137 = vmatprep.subr.bf16.mxu0 0
    %2138 = vmatpush2.bf16.msra.mxu0 0
    %2139 = vmatprep.subr.bf16.mxu0 0
    %2140 = vmatpush2.bf16.msra.mxu0 0
    %2141 = vmatprep.subr.bf16.mxu0 0
    %2142 = vmatpush2.bf16.msra.mxu0 0
    %2143 = vmatprep.subr.bf16.mxu0 0
    %2144 = vmatpush2.bf16.msra.mxu0 0
    %2145 = vmatprep.subr.bf16.mxu0 0
    %2146 = vmatpush2.bf16.msra.mxu0 0
    %2147 = vmatprep.subr.bf16.mxu0 0
    %2148 = vmatpush2.bf16.msra.mxu0 0
    %2149 = vmatprep.subr.bf16.mxu0 0
    %2150 = vmatpush2.bf16.msra.mxu0 0
    %2151 = vmatprep.subr.bf16.mxu0 0
    %2152 = vmatpush2.bf16.msra.mxu0 0
    %2153 = vmatprep.mubr.bf16.mxu0 0
    %2154 = vmatmul.mubr.bf16.gmra.mxu0 %v2116
    %v2155 = vpop.f32.mrf.mxu0
    %v2156 = vadd.f32 0.0, %v2155
    %v2157 = vpop.f32.mrf.mxu0
    %v2158 = vpop.f32.mrf.mxu0
    %v2159 = vpop.f32.mrf.mxu0
    %2160 = vdwg.mxu0
    %v2162 = vsel %vm796, %v2067, 0
    %v2165 = vsel %vm1042, %v1825, 0
    %2167 = vmatprep.subr.bf16.mxu0 0
    %2168 = vmatpush1.bf16.msra.mxu0 0
    %2169 = vmatprep.subr.bf16.mxu0 0
    %2170 = vmatpush1.bf16.msra.mxu0 0
    %2171 = vmatprep.subr.bf16.mxu0 0
    %2172 = vmatpush1.bf16.msra.mxu0 0
    %2173 = vmatprep.subr.bf16.mxu0 0
    %2174 = vmatpush1.bf16.msra.mxu0 0
    %2175 = vmatprep.subr.bf16.mxu0 0
    %2176 = vmatpush1.bf16.msra.mxu0 0
    %2177 = vmatprep.subr.bf16.mxu0 0
    %2178 = vmatpush1.bf16.msra.mxu0 0
    %2179 = vmatprep.subr.bf16.mxu0 0
    %2180 = vmatpush1.bf16.msra.mxu0 0
    %2181 = vmatprep.subr.bf16.mxu0 0
    %2182 = vmatpush1.bf16.msra.mxu0 %v2165
    %2183 = vmatprep.subr.bf16.mxu0 0
    %2184 = vmatpush2.bf16.msra.mxu0 0
    %2185 = vmatprep.subr.bf16.mxu0 0
    %2186 = vmatpush2.bf16.msra.mxu0 0
    %2187 = vmatprep.subr.bf16.mxu0 0
    %2188 = vmatpush2.bf16.msra.mxu0 0
    %2189 = vmatprep.subr.bf16.mxu0 0
    %2190 = vmatpush2.bf16.msra.mxu0 0
    %2191 = vmatprep.subr.bf16.mxu0 0
    %2192 = vmatpush2.bf16.msra.mxu0 0
    %2193 = vmatprep.subr.bf16.mxu0 0
    %2194 = vmatpush2.bf16.msra.mxu0 0
    %2195 = vmatprep.subr.bf16.mxu0 0
    %2196 = vmatpush2.bf16.msra.mxu0 0
    %2197 = vmatprep.subr.bf16.mxu0 0
    %2198 = vmatpush2.bf16.msra.mxu0 0
    %2199 = vmatprep.mubr.bf16.mxu0 0
    %2200 = vmatmul.mubr.bf16.gmra.mxu0 %v2162
    %v2201 = vpop.f32.mrf.mxu0
    %v2202 = vadd.f32 0.0, %v2201
    %v2203 = vpop.f32.mrf.mxu0
    %v2204 = vpop.f32.mrf.mxu0
    %v2205 = vpop.f32.mrf.mxu0
    %2206 = vdwg.mxu0
    %v2208 = vsel %vm796, %v2068, 0
    %v2211 = vsel %vm1042, %v1826, 0
    %2213 = vmatprep.subr.bf16.mxu0 0
    %2214 = vmatpush1.bf16.msra.mxu0 0
    %2215 = vmatprep.subr.bf16.mxu0 0
    %2216 = vmatpush1.bf16.msra.mxu0 0
    %2217 = vmatprep.subr.bf16.mxu0 0
    %2218 = vmatpush1.bf16.msra.mxu0 0
    %2219 = vmatprep.subr.bf16.mxu0 0
    %2220 = vmatpush1.bf16.msra.mxu0 0
    %2221 = vmatprep.subr.bf16.mxu0 0
    %2222 = vmatpush1.bf16.msra.mxu0 0
    %2223 = vmatprep.subr.bf16.mxu0 0
    %2224 = vmatpush1.bf16.msra.mxu0 0
    %2225 = vmatprep.subr.bf16.mxu0 0
    %2226 = vmatpush1.bf16.msra.mxu0 0
    %2227 = vmatprep.subr.bf16.mxu0 0
    %2228 = vmatpush1.bf16.msra.mxu0 %v2211
    %2229 = vmatprep.subr.bf16.mxu0 0
    %2230 = vmatpush2.bf16.msra.mxu0 0
    %2231 = vmatprep.subr.bf16.mxu0 0
    %2232 = vmatpush2.bf16.msra.mxu0 0
    %2233 = vmatprep.subr.bf16.mxu0 0
    %2234 = vmatpush2.bf16.msra.mxu0 0
    %2235 = vmatprep.subr.bf16.mxu0 0
    %2236 = vmatpush2.bf16.msra.mxu0 0
    %2237 = vmatprep.subr.bf16.mxu0 0
    %2238 = vmatpush2.bf16.msra.mxu0 0
    %2239 = vmatprep.subr.bf16.mxu0 0
    %2240 = vmatpush2.bf16.msra.mxu0 0
    %2241 = vmatprep.subr.bf16.mxu0 0
    %2242 = vmatpush2.bf16.msra.mxu0 0
    %2243 = vmatprep.subr.bf16.mxu0 0
    %2244 = vmatpush2.bf16.msra.mxu0 0
    %2245 = vmatprep.mubr.bf16.mxu0 0
    %2246 = vmatmul.mubr.bf16.gmra.mxu0 %v2208
    %v2247 = vpop.f32.mrf.mxu0
    %v2248 = vadd.f32 0.0, %v2247
    %v2249 = vpop.f32.mrf.mxu0
    %v2250 = vpop.f32.mrf.mxu0
    %v2251 = vpop.f32.mrf.mxu0
    %2252 = vdwg.mxu0
    %v2253 = vcombine.low %v2110, %v2202
    %v2254 = vcombine.high %v2110, %v2202
    %v2256 = vunpack.c.l.s4 1983009808
    %v2257 = vunpack.c.0.s8 %v2256
    %v2258 = vlaneseq
    %v2259 = vshrl.u32 %v2258, 7
    %v2260 = vsub.s32 %v2257, %v2259
    %v2261 = vrot.slane %v2253, %v2260
    %v2263 = vunpack.c.l.s4 1983009808
    %v2264 = vunpack.c.0.s8 %v2263
    %v2265 = vlaneseq
    %v2266 = vshrl.u32 %v2265, 7
    %v2267 = vsub.s32 %v2264, %v2266
    %v2268 = vrot.slane %v2254, %v2267
    %v2269 = vcombine.low %v2156, %v2248
    %v2270 = vcombine.high %v2156, %v2248
    %v2272 = vunpack.c.l.s4 1983009808
    %v2273 = vunpack.c.0.s8 %v2272
    %v2274 = vlaneseq
    %v2275 = vshrl.u32 %v2274, 7
    %v2276 = vsub.s32 %v2273, %v2275
    %v2277 = vrot.slane %v2269, %v2276
    %v2279 = vunpack.c.l.s4 1983009808
    %v2280 = vunpack.c.0.s8 %v2279
    %v2281 = vlaneseq
    %v2282 = vshrl.u32 %v2281, 7
    %v2283 = vsub.s32 %v2280, %v2282
    %v2284 = vrot.slane %v2270, %v2283
    %v2285 = vcombine.low %v2261, %v2277
    %v2286 = vcombine.high %v2261, %v2277
    %v2288 = vunpack.c.l.s4 1934713408
    %v2289 = vunpack.c.0.s8 %v2288
    %v2290 = vlaneseq
    %v2291 = vshrl.u32 %v2290, 7
    %v2292 = vsub.s32 %v2289, %v2291
    %v2293 = vrot.slane %v2285, %v2292
    %v2295 = vunpack.c.l.s4 1934713408
    %v2296 = vunpack.c.0.s8 %v2295
    %v2297 = vlaneseq
    %v2298 = vshrl.u32 %v2297, 7
    %v2299 = vsub.s32 %v2296, %v2298
    %v2300 = vrot.slane %v2286, %v2299
    %v2301 = vcombine.low %v2268, %v2284
    %v2302 = vcombine.high %v2268, %v2284
    %v2304 = vunpack.c.l.s4 1934713408
    %v2305 = vunpack.c.0.s8 %v2304
    %v2306 = vlaneseq
    %v2307 = vshrl.u32 %v2306, 7
    %v2308 = vsub.s32 %v2305, %v2307
    %v2309 = vrot.slane %v2301, %v2308
    %v2311 = vunpack.c.l.s4 1934713408
    %v2312 = vunpack.c.0.s8 %v2311
    %v2313 = vlaneseq
    %v2314 = vshrl.u32 %v2313, 7
    %v2315 = vsub.s32 %v2312, %v2314
    %v2316 = vrot.slane %v2302, %v2315
    %v2317 = vcombine.high %v2293, 0.0
    %v2318 = vcombine.high %v2300, 0.0
    %v2319 = vcombine.high %v2309, 0.0
    %v2320 = vcombine.high %v2316, 0.0
    %v2321 = vcombine.low %v2293, %v2300
    %v2323 = vunpack.c.l.s4 1983009808
    %v2324 = vunpack.c.0.s8 %v2323
    %v2325 = vlaneseq
    %v2326 = vshrl.u32 %v2325, 7
    %v2327 = vsub.s32 %v2324, %v2326
    %v2328 = vrot.slane %v2321, %v2327
    %v2329 = vcombine.low %v2317, %v2318
    %v2331 = vunpack.c.l.s4 1983009808
    %v2332 = vunpack.c.0.s8 %v2331
    %v2333 = vlaneseq
    %v2334 = vshrl.u32 %v2333, 7
    %v2335 = vsub.s32 %v2332, %v2334
    %v2336 = vrot.slane %v2329, %v2335
    %v2337 = vcombine.low %v2309, %v2316
    %v2339 = vunpack.c.l.s4 1983009808
    %v2340 = vunpack.c.0.s8 %v2339
    %v2341 = vlaneseq
    %v2342 = vshrl.u32 %v2341, 7
    %v2343 = vsub.s32 %v2340, %v2342
    %v2344 = vrot.slane %v2337, %v2343
    %v2345 = vcombine.low %v2319, %v2320
    %v2347 = vunpack.c.l.s4 1983009808
    %v2348 = vunpack.c.0.s8 %v2347
    %v2349 = vlaneseq
    %v2350 = vshrl.u32 %v2349, 7
    %v2351 = vsub.s32 %v2348, %v2350
    %v2352 = vrot.slane %v2345, %v2351
    %v2353 = vcombine.low %v2328, %v2336
    %v2354 = vcombine.high %v2328, %v2336
    %v2356 = vunpack.c.l.s4 1934713408
    %v2357 = vunpack.c.0.s8 %v2356
    %v2358 = vlaneseq
    %v2359 = vshrl.u32 %v2358, 7
    %v2360 = vsub.s32 %v2357, %v2359
    %v2361 = vrot.slane %v2353, %v2360
    %v2363 = vunpack.c.l.s4 1934713408
    %v2364 = vunpack.c.0.s8 %v2363
    %v2365 = vlaneseq
    %v2366 = vshrl.u32 %v2365, 7
    %v2367 = vsub.s32 %v2364, %v2366
    %v2368 = vrot.slane %v2354, %v2367
    %v2369 = vcombine.low %v2344, %v2352
    %v2370 = vcombine.high %v2344, %v2352
    %v2372 = vunpack.c.l.s4 1934713408
    %v2373 = vunpack.c.0.s8 %v2372
    %v2374 = vlaneseq
    %v2375 = vshrl.u32 %v2374, 7
    %v2376 = vsub.s32 %v2373, %v2375
    %v2377 = vrot.slane %v2369, %v2376
    %v2379 = vunpack.c.l.s4 1934713408
    %v2380 = vunpack.c.0.s8 %v2379
    %v2381 = vlaneseq
    %v2382 = vshrl.u32 %v2381, 7
    %v2383 = vsub.s32 %v2380, %v2382
    %v2384 = vrot.slane %v2370, %v2383
    %v2385 = vcombine.low %v2361, %v2377
    %v2386 = vcombine.high %v2361, %v2377
    %v2387 = vcombine.low %v2368, %v2384
    %v2388 = vcombine.high %v2368, %v2384
    %2390 = vrot.lane.b32.xlu0 %v2386, 8
    %v2391 = vpop.permute.xlu0 %2390
    %2394 = vrot.lane.b32.xlu0 %v2387, 16
    %v2395 = vpop.permute.xlu0 %2394
    %2398 = vrot.lane.b32.xlu0 %v2388, 24
    %v2399 = vpop.permute.xlu0 %2398
    %v2401 = vsel %vm796, %v2385, %v2391
    %v2402 = vsel %vm1373, %v2401, %v2395
    %v2403 = vsel %vm1375, %v2402, %v2399
    %v2404 = vld [vmem:[%s19] sm:$0xf]
    %v2405 = vld [vmem:[%s19 + $0x4] sm:$0xf]
    %v2406 = vld [vmem:[%s19 + $0x8] sm:$0xf]
    %v2407 = vld [vmem:[%s19 + $0xc] sm:$0xf]
    %v2408 = vpack.c.bf16 %v2403, %v1376
    %v2413 = vunpack.c.l.b16 %v2404
    %v2414 = vunpack.c.l.b16 %v2405
    %v2415 = vunpack.c.l.b16 %v2406
    %v2416 = vunpack.c.l.b16 %v2407
    %v2417 = vpack.c.b16 %v2414, %v2413
    %v2418 = vpack.c.b16 %v2416, %v2415
    %v2422 = vsel %vm147, %v2408, 0
    %2424 = vmatprep.subr.bf16.mxu0 0
    %2425 = vmatpush1.bf16.msra.mxu0 0
    %2426 = vmatprep.subr.bf16.mxu0 0
    %2427 = vmatpush1.bf16.msra.mxu0 0
    %2428 = vmatprep.subr.bf16.mxu0 0
    %2429 = vmatpush1.bf16.msra.mxu0 0
    %2430 = vmatprep.subr.bf16.mxu0 0
    %2431 = vmatpush1.bf16.msra.mxu0 0
    %2432 = vmatprep.subr.bf16.mxu0 0
    %2433 = vmatpush1.bf16.msra.mxu0 0
    %2434 = vmatprep.subr.bf16.mxu0 0
    %2435 = vmatpush1.bf16.msra.mxu0 0
    %2436 = vmatprep.subr.bf16.mxu0 0
    %2437 = vmatpush1.bf16.msra.mxu0 %v2418
    %2438 = vmatprep.subr.bf16.mxu0 0
    %2439 = vmatpush1.bf16.msra.mxu0 %v2417
    %2440 = vmatprep.subr.bf16.mxu0 0
    %2441 = vmatpush2.bf16.msra.mxu0 0
    %2442 = vmatprep.subr.bf16.mxu0 0
    %2443 = vmatpush2.bf16.msra.mxu0 0
    %2444 = vmatprep.subr.bf16.mxu0 0
    %2445 = vmatpush2.bf16.msra.mxu0 0
    %2446 = vmatprep.subr.bf16.mxu0 0
    %2447 = vmatpush2.bf16.msra.mxu0 0
    %2448 = vmatprep.subr.bf16.mxu0 0
    %2449 = vmatpush2.bf16.msra.mxu0 0
    %2450 = vmatprep.subr.bf16.mxu0 0
    %2451 = vmatpush2.bf16.msra.mxu0 0
    %2452 = vmatprep.subr.bf16.mxu0 0
    %2453 = vmatpush2.bf16.msra.mxu0 0
    %2454 = vmatprep.subr.bf16.mxu0 0
    %2455 = vmatpush2.bf16.msra.mxu0 0
    %2456 = vmatprep.mubr.bf16.mxu0 0
    %2457 = vmatmul.mubr.bf16.gmra.mxu0 %v2422
    %v2458 = vpop.f32.mrf.mxu0
    %v2459 = vadd.f32 0.0, %v2458
    %v2460 = vpop.f32.mrf.mxu0
    %v2461 = vpop.f32.mrf.mxu0
    %v2462 = vadd.f32 0.0, %v2461
    %v2463 = vpop.f32.mrf.mxu0
    %2464 = vdwg.mxu0
    %v2465 = vadd.f32 %v142, %v2459
    %v2466 = vadd.f32 %v143, %v2462
    %v2467 = vld [vmem:[%s21] sm:$0x1]
    %v2468 = vmul.f32 %v2465, %v2465
    %v2469 = vmul.f32 %v2466, %v2466
    %v2470 = vsel %vm147, %v2468, 0.0
    %2471 = vadd.xlane.f32.xlu0 %v2470
    %v2472 = vpop.xlane.xlu0 %2471
    %v2473 = vsel %vm147, %v2469, 0.0
    %2474 = vadd.xlane.f32.xlu0 %v2473
    %v2475 = vpop.xlane.xlu0 %2474
    %v2476 = vmul.f32 %v2472, %v154
    %v2477 = vmul.f32 %v2475, %v154
    %v2478 = vadd.f32 %v2476, 1e-06
    %v2479 = vadd.f32 %v2477, 1e-06
    %v2480 = vrsqrt.pop %v2478
    %v2481 = vrsqrt.pop %v2479
    %v2482 = vmul.f32 %v2465, %v2480
    %v2483 = vmul.f32 %v2466, %v2481
    %v2485 = vlaneseq
    %v2486 = vshrl.u32 %v2485, 7
    %v2487 = vsub.s32 0, %v2486
    %v2488 = vrot.slane %v2467, %v2487
    %v2490 = vmul.f32 %v2482, %v2488
    %v2491 = vmul.f32 %v2483, %v2488
    %v2492 = vld [vmem:[%s23] sm:$0xf]
    %v2493 = vld [vmem:[%s23 + $0x4] sm:$0xf]
    %v2494 = vld [vmem:[%s23 + $0x8] sm:$0xf]
    %v2495 = vld [vmem:[%s23 + $0xc] sm:$0xf]
    %v2496 = vld [vmem:[%s25] sm:$0xf]
    %v2497 = vld [vmem:[%s25 + $0x4] sm:$0xf]
    %v2498 = vld [vmem:[%s25 + $0x8] sm:$0xf]
    %v2499 = vld [vmem:[%s25 + $0xc] sm:$0xf]
    %v2500 = vld [vmem:[%s27] sm:$0xf]
    %v2501 = vld [vmem:[%s27 + $0x4] sm:$0xf]
    %v2502 = vld [vmem:[%s27 + $0x8] sm:$0xf]
    %v2503 = vld [vmem:[%s27 + $0xc] sm:$0xf]
    %v2504 = vld [vmem:[%s27 + $0x10] sm:$0xf]
    %v2505 = vld [vmem:[%s27 + $0x14] sm:$0xf]
    %v2506 = vld [vmem:[%s27 + $0x18] sm:$0xf]
    %v2507 = vld [vmem:[%s27 + $0x1c] sm:$0xf]
    %v2508 = vpack.c.bf16 %v2491, %v2490
    %v2513 = vunpack.c.l.b16 %v2492
    %v2514 = vunpack.c.l.b16 %v2493
    %v2515 = vunpack.c.l.b16 %v2494
    %v2516 = vunpack.c.l.b16 %v2495
    %v2517 = vpack.c.b16 %v2514, %v2513
    %v2518 = vpack.c.b16 %v2516, %v2515
    %v2522 = vsel %vm147, %v2508, 0
    %2524 = vmatprep.subr.bf16.mxu0 0
    %2525 = vmatpush1.bf16.msra.mxu0 0
    %2526 = vmatprep.subr.bf16.mxu0 0
    %2527 = vmatpush1.bf16.msra.mxu0 0
    %2528 = vmatprep.subr.bf16.mxu0 0
    %2529 = vmatpush1.bf16.msra.mxu0 0
    %2530 = vmatprep.subr.bf16.mxu0 0
    %2531 = vmatpush1.bf16.msra.mxu0 0
    %2532 = vmatprep.subr.bf16.mxu0 0
    %2533 = vmatpush1.bf16.msra.mxu0 0
    %2534 = vmatprep.subr.bf16.mxu0 0
    %2535 = vmatpush1.bf16.msra.mxu0 0
    %2536 = vmatprep.subr.bf16.mxu0 0
    %2537 = vmatpush1.bf16.msra.mxu0 %v2518
    %2538 = vmatprep.subr.bf16.mxu0 0
    %2539 = vmatpush1.bf16.msra.mxu0 %v2517
    %2540 = vmatprep.subr.bf16.mxu0 0
    %2541 = vmatpush2.bf16.msra.mxu0 0
    %2542 = vmatprep.subr.bf16.mxu0 0
    %2543 = vmatpush2.bf16.msra.mxu0 0
    %2544 = vmatprep.subr.bf16.mxu0 0
    %2545 = vmatpush2.bf16.msra.mxu0 0
    %2546 = vmatprep.subr.bf16.mxu0 0
    %2547 = vmatpush2.bf16.msra.mxu0 0
    %2548 = vmatprep.subr.bf16.mxu0 0
    %2549 = vmatpush2.bf16.msra.mxu0 0
    %2550 = vmatprep.subr.bf16.mxu0 0
    %2551 = vmatpush2.bf16.msra.mxu0 0
    %2552 = vmatprep.subr.bf16.mxu0 0
    %2553 = vmatpush2.bf16.msra.mxu0 0
    %2554 = vmatprep.subr.bf16.mxu0 0
    %2555 = vmatpush2.bf16.msra.mxu0 0
    %2556 = vmatprep.mubr.bf16.mxu0 0
    %2557 = vmatmul.mubr.bf16.gmra.mxu0 %v2522
    %v2558 = vpop.f32.mrf.mxu0
    %v2559 = vadd.f32 0.0, %v2558
    %v2560 = vpop.f32.mrf.mxu0
    %v2561 = vpop.f32.mrf.mxu0
    %v2562 = vadd.f32 0.0, %v2561
    %v2563 = vpop.f32.mrf.mxu0
    %2564 = vdwg.mxu0
    %v2569 = vunpack.c.l.b16 %v2496
    %v2570 = vunpack.c.l.b16 %v2497
    %v2571 = vunpack.c.l.b16 %v2498
    %v2572 = vunpack.c.l.b16 %v2499
    %v2573 = vpack.c.b16 %v2570, %v2569
    %v2574 = vpack.c.b16 %v2572, %v2571
    %2577 = vmatprep.subr.bf16.mxu0 0
    %2578 = vmatpush1.bf16.msra.mxu0 0
    %2579 = vmatprep.subr.bf16.mxu0 0
    %2580 = vmatpush1.bf16.msra.mxu0 0
    %2581 = vmatprep.subr.bf16.mxu0 0
    %2582 = vmatpush1.bf16.msra.mxu0 0
    %2583 = vmatprep.subr.bf16.mxu0 0
    %2584 = vmatpush1.bf16.msra.mxu0 0
    %2585 = vmatprep.subr.bf16.mxu0 0
    %2586 = vmatpush1.bf16.msra.mxu0 0
    %2587 = vmatprep.subr.bf16.mxu0 0
    %2588 = vmatpush1.bf16.msra.mxu0 0
    %2589 = vmatprep.subr.bf16.mxu0 0
    %2590 = vmatpush1.bf16.msra.mxu0 %v2574
    %2591 = vmatprep.subr.bf16.mxu0 0
    %2592 = vmatpush1.bf16.msra.mxu0 %v2573
    %2593 = vmatprep.subr.bf16.mxu0 0
    %2594 = vmatpush2.bf16.msra.mxu0 0
    %2595 = vmatprep.subr.bf16.mxu0 0
    %2596 = vmatpush2.bf16.msra.mxu0 0
    %2597 = vmatprep.subr.bf16.mxu0 0
    %2598 = vmatpush2.bf16.msra.mxu0 0
    %2599 = vmatprep.subr.bf16.mxu0 0
    %2600 = vmatpush2.bf16.msra.mxu0 0
    %2601 = vmatprep.subr.bf16.mxu0 0
    %2602 = vmatpush2.bf16.msra.mxu0 0
    %2603 = vmatprep.subr.bf16.mxu0 0
    %2604 = vmatpush2.bf16.msra.mxu0 0
    %2605 = vmatprep.subr.bf16.mxu0 0
    %2606 = vmatpush2.bf16.msra.mxu0 0
    %2607 = vmatprep.subr.bf16.mxu0 0
    %2608 = vmatpush2.bf16.msra.mxu0 0
    %2609 = vmatprep.mubr.bf16.mxu0 0
    %2610 = vmatmul.mubr.bf16.gmra.mxu0 %v2522
    %v2611 = vpop.f32.mrf.mxu0
    %v2612 = vadd.f32 0.0, %v2611
    %v2613 = vpop.f32.mrf.mxu0
    %v2614 = vpop.f32.mrf.mxu0
    %v2615 = vadd.f32 0.0, %v2614
    %v2616 = vpop.f32.mrf.mxu0
    %2617 = vdwg.mxu0
    %v2618 = vmul.f32 %v2559, 0.5
    %v2619 = vmul.f32 %v2562, 0.5
    %v2620 = vmul.f32 %v2559, 0.044715
    %v2621 = vmul.f32 %v2562, 0.044715
    %v2622 = vmul.f32 %v2620, %v2559
    %v2623 = vmul.f32 %v2621, %v2562
    %v2624 = vmul.f32 %v2622, %v2559
    %v2625 = vmul.f32 %v2623, %v2562
    %v2626 = vadd.f32 %v2559, %v2624
    %v2627 = vadd.f32 %v2562, %v2625
    %v2628 = vmul.f32 %v2626, 0.7978846
    %v2629 = vmul.f32 %v2627, 0.7978846
    %v2630 = vtanh.pop %v2628
    %v2631 = vtanh.pop %v2629
    %v2632 = vadd.f32 %v2630, 1.0
    %v2633 = vadd.f32 %v2631, 1.0
    %v2634 = vmul.f32 %v2618, %v2632
    %v2635 = vmul.f32 %v2619, %v2633
    %v2636 = vmul.f32 %v2634, %v2612
    %v2637 = vmul.f32 %v2635, %v2615
    %v2638 = vpack.c.bf16 %v2637, %v2636
    %v2647 = vunpack.c.l.b16 %v2500
    %v2648 = vunpack.c.l.b16 %v2501
    %v2649 = vunpack.c.l.b16 %v2502
    %v2650 = vunpack.c.l.b16 %v2503
    %v2651 = vunpack.c.l.b16 %v2504
    %v2652 = vunpack.c.l.b16 %v2505
    %v2653 = vunpack.c.l.b16 %v2506
    %v2654 = vunpack.c.l.b16 %v2507
    %v2655 = vpack.c.b16 %v2648, %v2647
    %v2656 = vpack.c.b16 %v2650, %v2649
    %v2657 = vpack.c.b16 %v2652, %v2651
    %v2658 = vpack.c.b16 %v2654, %v2653
    %vm2663 = vcmask 523264
    %v2665 = vsel %vm2663, %v2638, 0
    %2667 = vmatprep.subr.bf16.mxu0 0
    %2668 = vmatpush1.bf16.msra.mxu0 0
    %2669 = vmatprep.subr.bf16.mxu0 0
    %2670 = vmatpush1.bf16.msra.mxu0 0
    %2671 = vmatprep.subr.bf16.mxu0 0
    %2672 = vmatpush1.bf16.msra.mxu0 0
    %2673 = vmatprep.subr.bf16.mxu0 0
    %2674 = vmatpush1.bf16.msra.mxu0 0
    %2675 = vmatprep.subr.bf16.mxu0 0
    %2676 = vmatpush1.bf16.msra.mxu0 %v2658
    %2677 = vmatprep.subr.bf16.mxu0 0
    %2678 = vmatpush1.bf16.msra.mxu0 %v2657
    %2679 = vmatprep.subr.bf16.mxu0 0
    %2680 = vmatpush1.bf16.msra.mxu0 %v2656
    %2681 = vmatprep.subr.bf16.mxu0 0
    %2682 = vmatpush1.bf16.msra.mxu0 %v2655
    %2683 = vmatprep.subr.bf16.mxu0 0
    %2684 = vmatpush2.bf16.msra.mxu0 0
    %2685 = vmatprep.subr.bf16.mxu0 0
    %2686 = vmatpush2.bf16.msra.mxu0 0
    %2687 = vmatprep.subr.bf16.mxu0 0
    %2688 = vmatpush2.bf16.msra.mxu0 0
    %2689 = vmatprep.subr.bf16.mxu0 0
    %2690 = vmatpush2.bf16.msra.mxu0 0
    %2691 = vmatprep.subr.bf16.mxu0 0
    %2692 = vmatpush2.bf16.msra.mxu0 0
    %2693 = vmatprep.subr.bf16.mxu0 0
    %2694 = vmatpush2.bf16.msra.mxu0 0
    %2695 = vmatprep.subr.bf16.mxu0 0
    %2696 = vmatpush2.bf16.msra.mxu0 0
    %2697 = vmatprep.subr.bf16.mxu0 0
    %2698 = vmatpush2.bf16.msra.mxu0 0
    %2699 = vmatprep.mubr.bf16.mxu0 0
    %2700 = vmatmul.mubr.bf16.gmra.mxu0 %v2665
    %v2701 = vpop.f32.mrf.mxu0
    %v2702 = vadd.f32 0.0, %v2701
    %v2703 = vpop.f32.mrf.mxu0
    %v2704 = vpop.f32.mrf.mxu0
    %v2705 = vadd.f32 0.0, %v2704
    %v2706 = vpop.f32.mrf.mxu0
    %2707 = vdwg.mxu0
    %v2708 = vadd.f32 %v2465, %v2702
    %v2709 = vadd.f32 %v2466, %v2705
    %v2710 = vld [vmem:[%s29] sm:$0x1]
    %v2711 = vmul.f32 %v2708, %v2708
    %v2712 = vmul.f32 %v2709, %v2709
    %v2713 = vsel %vm147, %v2711, 0.0
    %2714 = vadd.xlane.f32.xlu0 %v2713
    %v2715 = vpop.xlane.xlu0 %2714
    %v2716 = vsel %vm147, %v2712, 0.0
    %2717 = vadd.xlane.f32.xlu0 %v2716
    %v2718 = vpop.xlane.xlu0 %2717
    %v2719 = vmul.f32 %v2715, %v154
    %v2720 = vmul.f32 %v2718, %v154
    %v2721 = vadd.f32 %v2719, 1e-06
    %v2722 = vadd.f32 %v2720, 1e-06
    %v2723 = vrsqrt.pop %v2721
    %v2724 = vrsqrt.pop %v2722
    %v2725 = vmul.f32 %v2708, %v2723
    %v2726 = vmul.f32 %v2709, %v2724
    %v2728 = vlaneseq
    %v2729 = vshrl.u32 %v2728, 7
    %v2730 = vsub.s32 0, %v2729
    %v2731 = vrot.slane %v2710, %v2730
    %v2733 = vmul.f32 %v2725, %v2731
    %v2734 = vmul.f32 %v2726, %v2731
    %v2735 = vld [vmem:[%s3] sm:$0xff]
    %v2736 = vld [vmem:[%s3 + $0x8] sm:$0xff]
    %v2737 = vld [vmem:[%s31] sm:$0x1]
    %v2738 = vmul.f32 %v2735, %v2735
    %v2739 = vmul.f32 %v2736, %v2736
    %v2740 = vsel %vm147, %v2738, 0.0
    %2741 = vadd.xlane.f32.xlu0 %v2740
    %v2742 = vpop.xlane.xlu0 %2741
    %v2743 = vsel %vm147, %v2739, 0.0
    %2744 = vadd.xlane.f32.xlu0 %v2743
    %v2745 = vpop.xlane.xlu0 %2744
    %v2746 = vmul.f32 %v2742, %v154
    %v2747 = vmul.f32 %v2745, %v154
    %v2748 = vadd.f32 %v2746, 1e-06
    %v2749 = vadd.f32 %v2747, 1e-06
    %v2750 = vrsqrt.pop %v2748
    %v2751 = vrsqrt.pop %v2749
    %v2752 = vmul.f32 %v2735, %v2750
    %v2753 = vmul.f32 %v2736, %v2751
    %v2755 = vlaneseq
    %v2756 = vshrl.u32 %v2755, 7
    %v2757 = vsub.s32 0, %v2756
    %v2758 = vrot.slane %v2737, %v2757
    %v2760 = vmul.f32 %v2752, %v2758
    %v2761 = vmul.f32 %v2753, %v2758
    %v2762 = vld [vmem:[%s33] sm:$0xf]
    %v2763 = vld [vmem:[%s33 + $0x4] sm:$0xf]
    %v2764 = vld [vmem:[%s33 + $0x8] sm:$0xf]
    %v2765 = vld [vmem:[%s33 + $0xc] sm:$0xf]
    %v2766 = vpack.c.bf16 %v2761, %v2760
    %v2771 = vunpack.c.l.b16 %v2762
    %v2772 = vunpack.c.l.b16 %v2763
    %v2773 = vunpack.c.l.b16 %v2764
    %v2774 = vunpack.c.l.b16 %v2765
    %v2775 = vpack.c.b16 %v2772, %v2771
    %v2776 = vpack.c.b16 %v2774, %v2773
    %v2780 = vsel %vm147, %v2766, 0
    %2782 = vmatprep.subr.bf16.mxu0 0
    %2783 = vmatpush1.bf16.msra.mxu0 0
    %2784 = vmatprep.subr.bf16.mxu0 0
    %2785 = vmatpush1.bf16.msra.mxu0 0
    %2786 = vmatprep.subr.bf16.mxu0 0
    %2787 = vmatpush1.bf16.msra.mxu0 0
    %2788 = vmatprep.subr.bf16.mxu0 0
    %2789 = vmatpush1.bf16.msra.mxu0 0
    %2790 = vmatprep.subr.bf16.mxu0 0
    %2791 = vmatpush1.bf16.msra.mxu0 0
    %2792 = vmatprep.subr.bf16.mxu0 0
    %2793 = vmatpush1.bf16.msra.mxu0 0
    %2794 = vmatprep.subr.bf16.mxu0 0
    %2795 = vmatpush1.bf16.msra.mxu0 %v2776
    %2796 = vmatprep.subr.bf16.mxu0 0
    %2797 = vmatpush1.bf16.msra.mxu0 %v2775
    %2798 = vmatprep.subr.bf16.mxu0 0
    %2799 = vmatpush2.bf16.msra.mxu0 0
    %2800 = vmatprep.subr.bf16.mxu0 0
    %2801 = vmatpush2.bf16.msra.mxu0 0
    %2802 = vmatprep.subr.bf16.mxu0 0
    %2803 = vmatpush2.bf16.msra.mxu0 0
    %2804 = vmatprep.subr.bf16.mxu0 0
    %2805 = vmatpush2.bf16.msra.mxu0 0
    %2806 = vmatprep.subr.bf16.mxu0 0
    %2807 = vmatpush2.bf16.msra.mxu0 0
    %2808 = vmatprep.subr.bf16.mxu0 0
    %2809 = vmatpush2.bf16.msra.mxu0 0
    %2810 = vmatprep.subr.bf16.mxu0 0
    %2811 = vmatpush2.bf16.msra.mxu0 0
    %2812 = vmatprep.subr.bf16.mxu0 0
    %2813 = vmatpush2.bf16.msra.mxu0 0
    %2814 = vmatprep.mubr.bf16.mxu0 0
    %2815 = vmatmul.mubr.bf16.gmra.mxu0 %v2780
    %v2816 = vpop.f32.mrf.mxu0
    %v2817 = vadd.f32 0.0, %v2816
    %v2818 = vpop.f32.mrf.mxu0
    %v2819 = vpop.f32.mrf.mxu0
    %v2820 = vadd.f32 0.0, %v2819
    %v2821 = vpop.f32.mrf.mxu0
    %2822 = vdwg.mxu0
    %v2823 = vld [vmem:[%s35] sm:$0xf]
    %v2824 = vld [vmem:[%s35 + $0x4] sm:$0xf]
    %v2825 = vld [vmem:[%s35 + $0x8] sm:$0xf]
    %v2826 = vld [vmem:[%s35 + $0xc] sm:$0xf]
    %v2831 = vunpack.c.l.b16 %v2823
    %v2832 = vunpack.c.l.b16 %v2824
    %v2833 = vunpack.c.l.b16 %v2825
    %v2834 = vunpack.c.l.b16 %v2826
    %v2835 = vpack.c.b16 %v2832, %v2831
    %v2836 = vpack.c.b16 %v2834, %v2833
    %2839 = vmatprep.subr.bf16.mxu0 0
    %2840 = vmatpush1.bf16.msra.mxu0 0
    %2841 = vmatprep.subr.bf16.mxu0 0
    %2842 = vmatpush1.bf16.msra.mxu0 0
    %2843 = vmatprep.subr.bf16.mxu0 0
    %2844 = vmatpush1.bf16.msra.mxu0 0
    %2845 = vmatprep.subr.bf16.mxu0 0
    %2846 = vmatpush1.bf16.msra.mxu0 0
    %2847 = vmatprep.subr.bf16.mxu0 0
    %2848 = vmatpush1.bf16.msra.mxu0 0
    %2849 = vmatprep.subr.bf16.mxu0 0
    %2850 = vmatpush1.bf16.msra.mxu0 0
    %2851 = vmatprep.subr.bf16.mxu0 0
    %2852 = vmatpush1.bf16.msra.mxu0 %v2836
    %2853 = vmatprep.subr.bf16.mxu0 0
    %2854 = vmatpush1.bf16.msra.mxu0 %v2835
    %2855 = vmatprep.subr.bf16.mxu0 0
    %2856 = vmatpush2.bf16.msra.mxu0 0
    %2857 = vmatprep.subr.bf16.mxu0 0
    %2858 = vmatpush2.bf16.msra.mxu0 0
    %2859 = vmatprep.subr.bf16.mxu0 0
    %2860 = vmatpush2.bf16.msra.mxu0 0
    %2861 = vmatprep.subr.bf16.mxu0 0
    %2862 = vmatpush2.bf16.msra.mxu0 0
    %2863 = vmatprep.subr.bf16.mxu0 0
    %2864 = vmatpush2.bf16.msra.mxu0 0
    %2865 = vmatprep.subr.bf16.mxu0 0
    %2866 = vmatpush2.bf16.msra.mxu0 0
    %2867 = vmatprep.subr.bf16.mxu0 0
    %2868 = vmatpush2.bf16.msra.mxu0 0
    %2869 = vmatprep.subr.bf16.mxu0 0
    %2870 = vmatpush2.bf16.msra.mxu0 0
    %2871 = vmatprep.mubr.bf16.mxu0 0
    %2872 = vmatmul.mubr.bf16.gmra.mxu0 %v2780
    %v2873 = vpop.f32.mrf.mxu0
    %v2874 = vadd.f32 0.0, %v2873
    %v2875 = vpop.f32.mrf.mxu0
    %v2876 = vpop.f32.mrf.mxu0
    %v2877 = vadd.f32 0.0, %v2876
    %v2878 = vpop.f32.mrf.mxu0
    %2879 = vdwg.mxu0
    %v2880 = vld [vmem:[%s37] sm:$0xf]
    %v2881 = vld [vmem:[%s37 + $0x4] sm:$0xf]
    %v2882 = vld [vmem:[%s37 + $0x8] sm:$0xf]
    %v2883 = vld [vmem:[%s37 + $0xc] sm:$0xf]
    %v2888 = vunpack.c.l.b16 %v2880
    %v2889 = vunpack.c.l.b16 %v2881
    %v2890 = vunpack.c.l.b16 %v2882
    %v2891 = vunpack.c.l.b16 %v2883
    %v2892 = vpack.c.b16 %v2889, %v2888
    %v2893 = vpack.c.b16 %v2891, %v2890
    %2896 = vmatprep.subr.bf16.mxu0 0
    %2897 = vmatpush1.bf16.msra.mxu0 0
    %2898 = vmatprep.subr.bf16.mxu0 0
    %2899 = vmatpush1.bf16.msra.mxu0 0
    %2900 = vmatprep.subr.bf16.mxu0 0
    %2901 = vmatpush1.bf16.msra.mxu0 0
    %2902 = vmatprep.subr.bf16.mxu0 0
    %2903 = vmatpush1.bf16.msra.mxu0 0
    %2904 = vmatprep.subr.bf16.mxu0 0
    %2905 = vmatpush1.bf16.msra.mxu0 0
    %2906 = vmatprep.subr.bf16.mxu0 0
    %2907 = vmatpush1.bf16.msra.mxu0 0
    %2908 = vmatprep.subr.bf16.mxu0 0
    %2909 = vmatpush1.bf16.msra.mxu0 %v2893
    %2910 = vmatprep.subr.bf16.mxu0 0
    %2911 = vmatpush1.bf16.msra.mxu0 %v2892
    %2912 = vmatprep.subr.bf16.mxu0 0
    %2913 = vmatpush2.bf16.msra.mxu0 0
    %2914 = vmatprep.subr.bf16.mxu0 0
    %2915 = vmatpush2.bf16.msra.mxu0 0
    %2916 = vmatprep.subr.bf16.mxu0 0
    %2917 = vmatpush2.bf16.msra.mxu0 0
    %2918 = vmatprep.subr.bf16.mxu0 0
    %2919 = vmatpush2.bf16.msra.mxu0 0
    %2920 = vmatprep.subr.bf16.mxu0 0
    %2921 = vmatpush2.bf16.msra.mxu0 0
    %2922 = vmatprep.subr.bf16.mxu0 0
    %2923 = vmatpush2.bf16.msra.mxu0 0
    %2924 = vmatprep.subr.bf16.mxu0 0
    %2925 = vmatpush2.bf16.msra.mxu0 0
    %2926 = vmatprep.subr.bf16.mxu0 0
    %2927 = vmatpush2.bf16.msra.mxu0 0
    %2928 = vmatprep.mubr.bf16.mxu0 0
    %2929 = vmatmul.mubr.bf16.gmra.mxu0 %v2780
    %v2930 = vpop.f32.mrf.mxu0
    %v2931 = vadd.f32 0.0, %v2930
    %v2932 = vpop.f32.mrf.mxu0
    %v2933 = vpop.f32.mrf.mxu0
    %v2934 = vadd.f32 0.0, %v2933
    %v2935 = vpop.f32.mrf.mxu0
    %2936 = vdwg.mxu0
    %2938 = vrot.lane.b32.xlu0 %v2817, 120
    %v2939 = vpop.permute.xlu0 %2938
    %2941 = vrot.lane.b32.xlu0 %v2817, 112
    %v2942 = vpop.permute.xlu0 %2941
    %2944 = vrot.lane.b32.xlu0 %v2817, 104
    %v2945 = vpop.permute.xlu0 %2944
    %v2947 = vcombine.low %v2817, %v2942
    %v2948 = vcombine.high %v2817, %v2942
    %v2950 = vunpack.c.l.s4 1983009808
    %v2951 = vunpack.c.0.s8 %v2950
    %v2952 = vlaneseq
    %v2953 = vshrl.u32 %v2952, 7
    %v2954 = vsub.s32 %v2951, %v2953
    %v2955 = vrot.slane %v2947, %v2954
    %v2957 = vunpack.c.l.s4 1983009808
    %v2958 = vunpack.c.0.s8 %v2957
    %v2959 = vlaneseq
    %v2960 = vshrl.u32 %v2959, 7
    %v2961 = vsub.s32 %v2958, %v2960
    %v2962 = vrot.slane %v2948, %v2961
    %v2963 = vcombine.low %v2939, %v2945
    %v2964 = vcombine.high %v2939, %v2945
    %v2966 = vunpack.c.l.s4 1983009808
    %v2967 = vunpack.c.0.s8 %v2966
    %v2968 = vlaneseq
    %v2969 = vshrl.u32 %v2968, 7
    %v2970 = vsub.s32 %v2967, %v2969
    %v2971 = vrot.slane %v2963, %v2970
    %v2973 = vunpack.c.l.s4 1983009808
    %v2974 = vunpack.c.0.s8 %v2973
    %v2975 = vlaneseq
    %v2976 = vshrl.u32 %v2975, 7
    %v2977 = vsub.s32 %v2974, %v2976
    %v2978 = vrot.slane %v2964, %v2977
    %v2979 = vcombine.low %v2955, %v2971
    %v2980 = vcombine.high %v2955, %v2971
    %v2982 = vunpack.c.l.s4 1934713408
    %v2983 = vunpack.c.0.s8 %v2982
    %v2984 = vlaneseq
    %v2985 = vshrl.u32 %v2984, 7
    %v2986 = vsub.s32 %v2983, %v2985
    %v2987 = vrot.slane %v2979, %v2986
    %v2989 = vunpack.c.l.s4 1934713408
    %v2990 = vunpack.c.0.s8 %v2989
    %v2991 = vlaneseq
    %v2992 = vshrl.u32 %v2991, 7
    %v2993 = vsub.s32 %v2990, %v2992
    %v2994 = vrot.slane %v2980, %v2993
    %v2995 = vcombine.low %v2962, %v2978
    %v2996 = vcombine.high %v2962, %v2978
    %v2998 = vunpack.c.l.s4 1934713408
    %v2999 = vunpack.c.0.s8 %v2998
    %v3000 = vlaneseq
    %v3001 = vshrl.u32 %v3000, 7
    %v3002 = vsub.s32 %v2999, %v3001
    %v3003 = vrot.slane %v2995, %v3002
    %v3005 = vunpack.c.l.s4 1934713408
    %v3006 = vunpack.c.0.s8 %v3005
    %v3007 = vlaneseq
    %v3008 = vshrl.u32 %v3007, 7
    %v3009 = vsub.s32 %v3006, %v3008
    %v3010 = vrot.slane %v2996, %v3009
    %v3011 = vcombine.high %v2987, 0.0
    %v3012 = vcombine.high %v2994, 0.0
    %v3013 = vcombine.high %v3003, 0.0
    %v3014 = vcombine.high %v3010, 0.0
    %v3015 = vcombine.low %v2987, %v2994
    %v3017 = vunpack.c.l.s4 1983009808
    %v3018 = vunpack.c.0.s8 %v3017
    %v3019 = vlaneseq
    %v3020 = vshrl.u32 %v3019, 7
    %v3021 = vsub.s32 %v3018, %v3020
    %v3022 = vrot.slane %v3015, %v3021
    %v3023 = vcombine.low %v3011, %v3012
    %v3025 = vunpack.c.l.s4 1983009808
    %v3026 = vunpack.c.0.s8 %v3025
    %v3027 = vlaneseq
    %v3028 = vshrl.u32 %v3027, 7
    %v3029 = vsub.s32 %v3026, %v3028
    %v3030 = vrot.slane %v3023, %v3029
    %v3031 = vcombine.low %v3003, %v3010
    %v3033 = vunpack.c.l.s4 1983009808
    %v3034 = vunpack.c.0.s8 %v3033
    %v3035 = vlaneseq
    %v3036 = vshrl.u32 %v3035, 7
    %v3037 = vsub.s32 %v3034, %v3036
    %v3038 = vrot.slane %v3031, %v3037
    %v3039 = vcombine.low %v3013, %v3014
    %v3041 = vunpack.c.l.s4 1983009808
    %v3042 = vunpack.c.0.s8 %v3041
    %v3043 = vlaneseq
    %v3044 = vshrl.u32 %v3043, 7
    %v3045 = vsub.s32 %v3042, %v3044
    %v3046 = vrot.slane %v3039, %v3045
    %v3047 = vcombine.low %v3022, %v3030
    %v3048 = vcombine.high %v3022, %v3030
    %v3050 = vunpack.c.l.s4 1934713408
    %v3051 = vunpack.c.0.s8 %v3050
    %v3052 = vlaneseq
    %v3053 = vshrl.u32 %v3052, 7
    %v3054 = vsub.s32 %v3051, %v3053
    %v3055 = vrot.slane %v3047, %v3054
    %v3057 = vunpack.c.l.s4 1934713408
    %v3058 = vunpack.c.0.s8 %v3057
    %v3059 = vlaneseq
    %v3060 = vshrl.u32 %v3059, 7
    %v3061 = vsub.s32 %v3058, %v3060
    %v3062 = vrot.slane %v3048, %v3061
    %v3063 = vcombine.low %v3038, %v3046
    %v3064 = vcombine.high %v3038, %v3046
    %v3066 = vunpack.c.l.s4 1934713408
    %v3067 = vunpack.c.0.s8 %v3066
    %v3068 = vlaneseq
    %v3069 = vshrl.u32 %v3068, 7
    %v3070 = vsub.s32 %v3067, %v3069
    %v3071 = vrot.slane %v3063, %v3070
    %v3073 = vunpack.c.l.s4 1934713408
    %v3074 = vunpack.c.0.s8 %v3073
    %v3075 = vlaneseq
    %v3076 = vshrl.u32 %v3075, 7
    %v3077 = vsub.s32 %v3074, %v3076
    %v3078 = vrot.slane %v3064, %v3077
    %v3079 = vcombine.low %v3055, %v3071
    %v3080 = vcombine.high %v3055, %v3071
    %v3081 = vcombine.low %v3062, %v3078
    %v3082 = vcombine.high %v3062, %v3078
    %v3083 = vpack.c.bf16 %v3079, %v3079
    %v3084 = vpack.c.bf16 %v3080, %v3080
    %v3085 = vpack.c.bf16 %v3081, %v3081
    %v3086 = vpack.c.bf16 %v3082, %v3082
    %3088 = vrot.lane.b32.xlu0 %v2874, 120
    %v3089 = vpop.permute.xlu0 %3088
    %3091 = vrot.lane.b32.xlu0 %v2874, 112
    %v3092 = vpop.permute.xlu0 %3091
    %3094 = vrot.lane.b32.xlu0 %v2874, 104
    %v3095 = vpop.permute.xlu0 %3094
    %v3097 = vcombine.low %v2874, %v3092
    %v3098 = vcombine.high %v2874, %v3092
    %v3100 = vunpack.c.l.s4 1983009808
    %v3101 = vunpack.c.0.s8 %v3100
    %v3102 = vlaneseq
    %v3103 = vshrl.u32 %v3102, 7
    %v3104 = vsub.s32 %v3101, %v3103
    %v3105 = vrot.slane %v3097, %v3104
    %v3107 = vunpack.c.l.s4 1983009808
    %v3108 = vunpack.c.0.s8 %v3107
    %v3109 = vlaneseq
    %v3110 = vshrl.u32 %v3109, 7
    %v3111 = vsub.s32 %v3108, %v3110
    %v3112 = vrot.slane %v3098, %v3111
    %v3113 = vcombine.low %v3089, %v3095
    %v3114 = vcombine.high %v3089, %v3095
    %v3116 = vunpack.c.l.s4 1983009808
    %v3117 = vunpack.c.0.s8 %v3116
    %v3118 = vlaneseq
    %v3119 = vshrl.u32 %v3118, 7
    %v3120 = vsub.s32 %v3117, %v3119
    %v3121 = vrot.slane %v3113, %v3120
    %v3123 = vunpack.c.l.s4 1983009808
    %v3124 = vunpack.c.0.s8 %v3123
    %v3125 = vlaneseq
    %v3126 = vshrl.u32 %v3125, 7
    %v3127 = vsub.s32 %v3124, %v3126
    %v3128 = vrot.slane %v3114, %v3127
    %v3129 = vcombine.low %v3105, %v3121
    %v3130 = vcombine.high %v3105, %v3121
    %v3132 = vunpack.c.l.s4 1934713408
    %v3133 = vunpack.c.0.s8 %v3132
    %v3134 = vlaneseq
    %v3135 = vshrl.u32 %v3134, 7
    %v3136 = vsub.s32 %v3133, %v3135
    %v3137 = vrot.slane %v3129, %v3136
    %v3139 = vunpack.c.l.s4 1934713408
    %v3140 = vunpack.c.0.s8 %v3139
    %v3141 = vlaneseq
    %v3142 = vshrl.u32 %v3141, 7
    %v3143 = vsub.s32 %v3140, %v3142
    %v3144 = vrot.slane %v3130, %v3143
    %v3145 = vcombine.low %v3112, %v3128
    %v3146 = vcombine.high %v3112, %v3128
    %v3148 = vunpack.c.l.s4 1934713408
    %v3149 = vunpack.c.0.s8 %v3148
    %v3150 = vlaneseq
    %v3151 = vshrl.u32 %v3150, 7
    %v3152 = vsub.s32 %v3149, %v3151
    %v3153 = vrot.slane %v3145, %v3152
    %v3155 = vunpack.c.l.s4 1934713408
    %v3156 = vunpack.c.0.s8 %v3155
    %v3157 = vlaneseq
    %v3158 = vshrl.u32 %v3157, 7
    %v3159 = vsub.s32 %v3156, %v3158
    %v3160 = vrot.slane %v3146, %v3159
    %v3161 = vcombine.high %v3137, 0.0
    %v3162 = vcombine.high %v3144, 0.0
    %v3163 = vcombine.high %v3153, 0.0
    %v3164 = vcombine.high %v3160, 0.0
    %v3165 = vcombine.low %v3137, %v3144
    %v3167 = vunpack.c.l.s4 1983009808
    %v3168 = vunpack.c.0.s8 %v3167
    %v3169 = vlaneseq
    %v3170 = vshrl.u32 %v3169, 7
    %v3171 = vsub.s32 %v3168, %v3170
    %v3172 = vrot.slane %v3165, %v3171
    %v3173 = vcombine.low %v3161, %v3162
    %v3175 = vunpack.c.l.s4 1983009808
    %v3176 = vunpack.c.0.s8 %v3175
    %v3177 = vlaneseq
    %v3178 = vshrl.u32 %v3177, 7
    %v3179 = vsub.s32 %v3176, %v3178
    %v3180 = vrot.slane %v3173, %v3179
    %v3181 = vcombine.low %v3153, %v3160
    %v3183 = vunpack.c.l.s4 1983009808
    %v3184 = vunpack.c.0.s8 %v3183
    %v3185 = vlaneseq
    %v3186 = vshrl.u32 %v3185, 7
    %v3187 = vsub.s32 %v3184, %v3186
    %v3188 = vrot.slane %v3181, %v3187
    %v3189 = vcombine.low %v3163, %v3164
    %v3191 = vunpack.c.l.s4 1983009808
    %v3192 = vunpack.c.0.s8 %v3191
    %v3193 = vlaneseq
    %v3194 = vshrl.u32 %v3193, 7
    %v3195 = vsub.s32 %v3192, %v3194
    %v3196 = vrot.slane %v3189, %v3195
    %v3197 = vcombine.low %v3172, %v3180
    %v3198 = vcombine.high %v3172, %v3180
    %v3200 = vunpack.c.l.s4 1934713408
    %v3201 = vunpack.c.0.s8 %v3200
    %v3202 = vlaneseq
    %v3203 = vshrl.u32 %v3202, 7
    %v3204 = vsub.s32 %v3201, %v3203
    %v3205 = vrot.slane %v3197, %v3204
    %v3207 = vunpack.c.l.s4 1934713408
    %v3208 = vunpack.c.0.s8 %v3207
    %v3209 = vlaneseq
    %v3210 = vshrl.u32 %v3209, 7
    %v3211 = vsub.s32 %v3208, %v3210
    %v3212 = vrot.slane %v3198, %v3211
    %v3213 = vcombine.low %v3188, %v3196
    %v3214 = vcombine.high %v3188, %v3196
    %v3216 = vunpack.c.l.s4 1934713408
    %v3217 = vunpack.c.0.s8 %v3216
    %v3218 = vlaneseq
    %v3219 = vshrl.u32 %v3218, 7
    %v3220 = vsub.s32 %v3217, %v3219
    %v3221 = vrot.slane %v3213, %v3220
    %v3223 = vunpack.c.l.s4 1934713408
    %v3224 = vunpack.c.0.s8 %v3223
    %v3225 = vlaneseq
    %v3226 = vshrl.u32 %v3225, 7
    %v3227 = vsub.s32 %v3224, %v3226
    %v3228 = vrot.slane %v3214, %v3227
    %v3229 = vcombine.low %v3205, %v3221
    %v3230 = vcombine.high %v3205, %v3221
    %v3231 = vcombine.low %v3212, %v3228
    %v3232 = vcombine.high %v3212, %v3228
    %v3233 = vpack.c.bf16 %v3229, %v3229
    %v3234 = vpack.c.bf16 %v3230, %v3230
    %v3235 = vpack.c.bf16 %v3231, %v3231
    %v3236 = vpack.c.bf16 %v3232, %v3232
    %3238 = vrot.lane.b32.xlu0 %v2931, 120
    %v3239 = vpop.permute.xlu0 %3238
    %3241 = vrot.lane.b32.xlu0 %v2931, 112
    %v3242 = vpop.permute.xlu0 %3241
    %3244 = vrot.lane.b32.xlu0 %v2931, 104
    %v3245 = vpop.permute.xlu0 %3244
    %v3247 = vcombine.low %v2931, %v3242
    %v3248 = vcombine.high %v2931, %v3242
    %v3250 = vunpack.c.l.s4 1983009808
    %v3251 = vunpack.c.0.s8 %v3250
    %v3252 = vlaneseq
    %v3253 = vshrl.u32 %v3252, 7
    %v3254 = vsub.s32 %v3251, %v3253
    %v3255 = vrot.slane %v3247, %v3254
    %v3257 = vunpack.c.l.s4 1983009808
    %v3258 = vunpack.c.0.s8 %v3257
    %v3259 = vlaneseq
    %v3260 = vshrl.u32 %v3259, 7
    %v3261 = vsub.s32 %v3258, %v3260
    %v3262 = vrot.slane %v3248, %v3261
    %v3263 = vcombine.low %v3239, %v3245
    %v3264 = vcombine.high %v3239, %v3245
    %v3266 = vunpack.c.l.s4 1983009808
    %v3267 = vunpack.c.0.s8 %v3266
    %v3268 = vlaneseq
    %v3269 = vshrl.u32 %v3268, 7
    %v3270 = vsub.s32 %v3267, %v3269
    %v3271 = vrot.slane %v3263, %v3270
    %v3273 = vunpack.c.l.s4 1983009808
    %v3274 = vunpack.c.0.s8 %v3273
    %v3275 = vlaneseq
    %v3276 = vshrl.u32 %v3275, 7
    %v3277 = vsub.s32 %v3274, %v3276
    %v3278 = vrot.slane %v3264, %v3277
    %v3279 = vcombine.low %v3255, %v3271
    %v3280 = vcombine.high %v3255, %v3271
    %v3282 = vunpack.c.l.s4 1934713408
    %v3283 = vunpack.c.0.s8 %v3282
    %v3284 = vlaneseq
    %v3285 = vshrl.u32 %v3284, 7
    %v3286 = vsub.s32 %v3283, %v3285
    %v3287 = vrot.slane %v3279, %v3286
    %v3289 = vunpack.c.l.s4 1934713408
    %v3290 = vunpack.c.0.s8 %v3289
    %v3291 = vlaneseq
    %v3292 = vshrl.u32 %v3291, 7
    %v3293 = vsub.s32 %v3290, %v3292
    %v3294 = vrot.slane %v3280, %v3293
    %v3295 = vcombine.low %v3262, %v3278
    %v3296 = vcombine.high %v3262, %v3278
    %v3298 = vunpack.c.l.s4 1934713408
    %v3299 = vunpack.c.0.s8 %v3298
    %v3300 = vlaneseq
    %v3301 = vshrl.u32 %v3300, 7
    %v3302 = vsub.s32 %v3299, %v3301
    %v3303 = vrot.slane %v3295, %v3302
    %v3305 = vunpack.c.l.s4 1934713408
    %v3306 = vunpack.c.0.s8 %v3305
    %v3307 = vlaneseq
    %v3308 = vshrl.u32 %v3307, 7
    %v3309 = vsub.s32 %v3306, %v3308
    %v3310 = vrot.slane %v3296, %v3309
    %v3311 = vcombine.high %v3287, 0.0
    %v3312 = vcombine.high %v3294, 0.0
    %v3313 = vcombine.high %v3303, 0.0
    %v3314 = vcombine.high %v3310, 0.0
    %v3315 = vcombine.low %v3287, %v3294
    %v3317 = vunpack.c.l.s4 1983009808
    %v3318 = vunpack.c.0.s8 %v3317
    %v3319 = vlaneseq
    %v3320 = vshrl.u32 %v3319, 7
    %v3321 = vsub.s32 %v3318, %v3320
    %v3322 = vrot.slane %v3315, %v3321
    %v3323 = vcombine.low %v3311, %v3312
    %v3325 = vunpack.c.l.s4 1983009808
    %v3326 = vunpack.c.0.s8 %v3325
    %v3327 = vlaneseq
    %v3328 = vshrl.u32 %v3327, 7
    %v3329 = vsub.s32 %v3326, %v3328
    %v3330 = vrot.slane %v3323, %v3329
    %v3331 = vcombine.low %v3303, %v3310
    %v3333 = vunpack.c.l.s4 1983009808
    %v3334 = vunpack.c.0.s8 %v3333
    %v3335 = vlaneseq
    %v3336 = vshrl.u32 %v3335, 7
    %v3337 = vsub.s32 %v3334, %v3336
    %v3338 = vrot.slane %v3331, %v3337
    %v3339 = vcombine.low %v3313, %v3314
    %v3341 = vunpack.c.l.s4 1983009808
    %v3342 = vunpack.c.0.s8 %v3341
    %v3343 = vlaneseq
    %v3344 = vshrl.u32 %v3343, 7
    %v3345 = vsub.s32 %v3342, %v3344
    %v3346 = vrot.slane %v3339, %v3345
    %v3347 = vcombine.low %v3322, %v3330
    %v3348 = vcombine.high %v3322, %v3330
    %v3350 = vunpack.c.l.s4 1934713408
    %v3351 = vunpack.c.0.s8 %v3350
    %v3352 = vlaneseq
    %v3353 = vshrl.u32 %v3352, 7
    %v3354 = vsub.s32 %v3351, %v3353
    %v3355 = vrot.slane %v3347, %v3354
    %v3357 = vunpack.c.l.s4 1934713408
    %v3358 = vunpack.c.0.s8 %v3357
    %v3359 = vlaneseq
    %v3360 = vshrl.u32 %v3359, 7
    %v3361 = vsub.s32 %v3358, %v3360
    %v3362 = vrot.slane %v3348, %v3361
    %v3363 = vcombine.low %v3338, %v3346
    %v3364 = vcombine.high %v3338, %v3346
    %v3366 = vunpack.c.l.s4 1934713408
    %v3367 = vunpack.c.0.s8 %v3366
    %v3368 = vlaneseq
    %v3369 = vshrl.u32 %v3368, 7
    %v3370 = vsub.s32 %v3367, %v3369
    %v3371 = vrot.slane %v3363, %v3370
    %v3373 = vunpack.c.l.s4 1934713408
    %v3374 = vunpack.c.0.s8 %v3373
    %v3375 = vlaneseq
    %v3376 = vshrl.u32 %v3375, 7
    %v3377 = vsub.s32 %v3374, %v3376
    %v3378 = vrot.slane %v3364, %v3377
    %v3379 = vcombine.low %v3355, %v3371
    %v3380 = vcombine.high %v3355, %v3371
    %v3381 = vcombine.low %v3362, %v3378
    %v3382 = vcombine.high %v3362, %v3378
    %v3383 = vpack.c.bf16 %v3379, %v3379
    %v3384 = vpack.c.bf16 %v3380, %v3380
    %v3385 = vpack.c.bf16 %v3381, %v3381
    %v3386 = vpack.c.bf16 %v3382, %v3382
    %v3388 = vsel %vm796, %v3083, 0
    %v3391 = vsel %vm796, %v3233, 0
    %3393 = vmatprep.subr.bf16.mxu0 0
    %3394 = vmatpush1.bf16.xpose.msra.mxu0 0
    %3395 = vmatprep.subr.bf16.mxu0 0
    %3396 = vmatpush1.bf16.xpose.msra.mxu0 0
    %3397 = vmatprep.subr.bf16.mxu0 0
    %3398 = vmatpush1.bf16.xpose.msra.mxu0 0
    %3399 = vmatprep.subr.bf16.mxu0 0
    %3400 = vmatpush1.bf16.xpose.msra.mxu0 0
    %3401 = vmatprep.subr.bf16.mxu0 0
    %3402 = vmatpush1.bf16.xpose.msra.mxu0 0
    %3403 = vmatprep.subr.bf16.mxu0 0
    %3404 = vmatpush1.bf16.xpose.msra.mxu0 0
    %3405 = vmatprep.subr.bf16.mxu0 0
    %3406 = vmatpush1.bf16.xpose.msra.mxu0 0
    %3407 = vmatprep.subr.bf16.mxu0 0
    %3408 = vmatpush1.bf16.xpose.msra.mxu0 %v3391
    %3409 = vmatprep.subr.bf16.mxu0 0
    %3410 = vmatpush2.bf16.xpose.msra.mxu0 0
    %3411 = vmatprep.subr.bf16.mxu0 0
    %3412 = vmatpush2.bf16.xpose.msra.mxu0 0
    %3413 = vmatprep.subr.bf16.mxu0 0
    %3414 = vmatpush2.bf16.xpose.msra.mxu0 0
    %3415 = vmatprep.subr.bf16.mxu0 0
    %3416 = vmatpush2.bf16.xpose.msra.mxu0 0
    %3417 = vmatprep.subr.bf16.mxu0 0
    %3418 = vmatpush2.bf16.xpose.msra.mxu0 0
    %3419 = vmatprep.subr.bf16.mxu0 0
    %3420 = vmatpush2.bf16.xpose.msra.mxu0 0
    %3421 = vmatprep.subr.bf16.mxu0 0
    %3422 = vmatpush2.bf16.xpose.msra.mxu0 0
    %3423 = vmatprep.subr.bf16.mxu0 0
    %3424 = vmatpush2.bf16.xpose.msra.mxu0 0
    %3425 = vmatprep.mubr.bf16.mxu0 0
    %3426 = vmatmul.mubr.bf16.gmra.mxu0 %v3388
    %v3427 = vpop.f32.mrf.mxu0
    %v3428 = vadd.f32 %v138, %v3427
    %v3429 = vpop.f32.mrf.mxu0
    %v3430 = vpop.f32.mrf.mxu0
    %v3431 = vpop.f32.mrf.mxu0
    %3432 = vdwg.mxu0
    %v3434 = vsel %vm796, %v3084, 0
    %v3437 = vsel %vm796, %v3234, 0
    %3439 = vmatprep.subr.bf16.mxu0 0
    %3440 = vmatpush1.bf16.xpose.msra.mxu0 0
    %3441 = vmatprep.subr.bf16.mxu0 0
    %3442 = vmatpush1.bf16.xpose.msra.mxu0 0
    %3443 = vmatprep.subr.bf16.mxu0 0
    %3444 = vmatpush1.bf16.xpose.msra.mxu0 0
    %3445 = vmatprep.subr.bf16.mxu0 0
    %3446 = vmatpush1.bf16.xpose.msra.mxu0 0
    %3447 = vmatprep.subr.bf16.mxu0 0
    %3448 = vmatpush1.bf16.xpose.msra.mxu0 0
    %3449 = vmatprep.subr.bf16.mxu0 0
    %3450 = vmatpush1.bf16.xpose.msra.mxu0 0
    %3451 = vmatprep.subr.bf16.mxu0 0
    %3452 = vmatpush1.bf16.xpose.msra.mxu0 0
    %3453 = vmatprep.subr.bf16.mxu0 0
    %3454 = vmatpush1.bf16.xpose.msra.mxu0 %v3437
    %3455 = vmatprep.subr.bf16.mxu0 0
    %3456 = vmatpush2.bf16.xpose.msra.mxu0 0
    %3457 = vmatprep.subr.bf16.mxu0 0
    %3458 = vmatpush2.bf16.xpose.msra.mxu0 0
    %3459 = vmatprep.subr.bf16.mxu0 0
    %3460 = vmatpush2.bf16.xpose.msra.mxu0 0
    %3461 = vmatprep.subr.bf16.mxu0 0
    %3462 = vmatpush2.bf16.xpose.msra.mxu0 0
    %3463 = vmatprep.subr.bf16.mxu0 0
    %3464 = vmatpush2.bf16.xpose.msra.mxu0 0
    %3465 = vmatprep.subr.bf16.mxu0 0
    %3466 = vmatpush2.bf16.xpose.msra.mxu0 0
    %3467 = vmatprep.subr.bf16.mxu0 0
    %3468 = vmatpush2.bf16.xpose.msra.mxu0 0
    %3469 = vmatprep.subr.bf16.mxu0 0
    %3470 = vmatpush2.bf16.xpose.msra.mxu0 0
    %3471 = vmatprep.mubr.bf16.mxu0 0
    %3472 = vmatmul.mubr.bf16.gmra.mxu0 %v3434
    %v3473 = vpop.f32.mrf.mxu0
    %v3474 = vadd.f32 %v139, %v3473
    %v3475 = vpop.f32.mrf.mxu0
    %v3476 = vpop.f32.mrf.mxu0
    %v3477 = vpop.f32.mrf.mxu0
    %3478 = vdwg.mxu0
    %v3480 = vsel %vm796, %v3085, 0
    %v3483 = vsel %vm796, %v3235, 0
    %3485 = vmatprep.subr.bf16.mxu0 0
    %3486 = vmatpush1.bf16.xpose.msra.mxu0 0
    %3487 = vmatprep.subr.bf16.mxu0 0
    %3488 = vmatpush1.bf16.xpose.msra.mxu0 0
    %3489 = vmatprep.subr.bf16.mxu0 0
    %3490 = vmatpush1.bf16.xpose.msra.mxu0 0
    %3491 = vmatprep.subr.bf16.mxu0 0
    %3492 = vmatpush1.bf16.xpose.msra.mxu0 0
    %3493 = vmatprep.subr.bf16.mxu0 0
    %3494 = vmatpush1.bf16.xpose.msra.mxu0 0
    %3495 = vmatprep.subr.bf16.mxu0 0
    %3496 = vmatpush1.bf16.xpose.msra.mxu0 0
    %3497 = vmatprep.subr.bf16.mxu0 0
    %3498 = vmatpush1.bf16.xpose.msra.mxu0 0
    %3499 = vmatprep.subr.bf16.mxu0 0
    %3500 = vmatpush1.bf16.xpose.msra.mxu0 %v3483
    %3501 = vmatprep.subr.bf16.mxu0 0
    %3502 = vmatpush2.bf16.xpose.msra.mxu0 0
    %3503 = vmatprep.subr.bf16.mxu0 0
    %3504 = vmatpush2.bf16.xpose.msra.mxu0 0
    %3505 = vmatprep.subr.bf16.mxu0 0
    %3506 = vmatpush2.bf16.xpose.msra.mxu0 0
    %3507 = vmatprep.subr.bf16.mxu0 0
    %3508 = vmatpush2.bf16.xpose.msra.mxu0 0
    %3509 = vmatprep.subr.bf16.mxu0 0
    %3510 = vmatpush2.bf16.xpose.msra.mxu0 0
    %3511 = vmatprep.subr.bf16.mxu0 0
    %3512 = vmatpush2.bf16.xpose.msra.mxu0 0
    %3513 = vmatprep.subr.bf16.mxu0 0
    %3514 = vmatpush2.bf16.xpose.msra.mxu0 0
    %3515 = vmatprep.subr.bf16.mxu0 0
    %3516 = vmatpush2.bf16.xpose.msra.mxu0 0
    %3517 = vmatprep.mubr.bf16.mxu0 0
    %3518 = vmatmul.mubr.bf16.gmra.mxu0 %v3480
    %v3519 = vpop.f32.mrf.mxu0
    %v3520 = vadd.f32 %v140, %v3519
    %v3521 = vpop.f32.mrf.mxu0
    %v3522 = vpop.f32.mrf.mxu0
    %v3523 = vpop.f32.mrf.mxu0
    %3524 = vdwg.mxu0
    %v3526 = vsel %vm796, %v3086, 0
    %v3529 = vsel %vm796, %v3236, 0
    %3531 = vmatprep.subr.bf16.mxu0 0
    %3532 = vmatpush1.bf16.xpose.msra.mxu0 0
    %3533 = vmatprep.subr.bf16.mxu0 0
    %3534 = vmatpush1.bf16.xpose.msra.mxu0 0
    %3535 = vmatprep.subr.bf16.mxu0 0
    %3536 = vmatpush1.bf16.xpose.msra.mxu0 0
    %3537 = vmatprep.subr.bf16.mxu0 0
    %3538 = vmatpush1.bf16.xpose.msra.mxu0 0
    %3539 = vmatprep.subr.bf16.mxu0 0
    %3540 = vmatpush1.bf16.xpose.msra.mxu0 0
    %3541 = vmatprep.subr.bf16.mxu0 0
    %3542 = vmatpush1.bf16.xpose.msra.mxu0 0
    %3543 = vmatprep.subr.bf16.mxu0 0
    %3544 = vmatpush1.bf16.xpose.msra.mxu0 0
    %3545 = vmatprep.subr.bf16.mxu0 0
    %3546 = vmatpush1.bf16.xpose.msra.mxu0 %v3529
    %3547 = vmatprep.subr.bf16.mxu0 0
    %3548 = vmatpush2.bf16.xpose.msra.mxu0 0
    %3549 = vmatprep.subr.bf16.mxu0 0
    %3550 = vmatpush2.bf16.xpose.msra.mxu0 0
    %3551 = vmatprep.subr.bf16.mxu0 0
    %3552 = vmatpush2.bf16.xpose.msra.mxu0 0
    %3553 = vmatprep.subr.bf16.mxu0 0
    %3554 = vmatpush2.bf16.xpose.msra.mxu0 0
    %3555 = vmatprep.subr.bf16.mxu0 0
    %3556 = vmatpush2.bf16.xpose.msra.mxu0 0
    %3557 = vmatprep.subr.bf16.mxu0 0
    %3558 = vmatpush2.bf16.xpose.msra.mxu0 0
    %3559 = vmatprep.subr.bf16.mxu0 0
    %3560 = vmatpush2.bf16.xpose.msra.mxu0 0
    %3561 = vmatprep.subr.bf16.mxu0 0
    %3562 = vmatpush2.bf16.xpose.msra.mxu0 0
    %3563 = vmatprep.mubr.bf16.mxu0 0
    %3564 = vmatmul.mubr.bf16.gmra.mxu0 %v3526
    %v3565 = vpop.f32.mrf.mxu0
    %v3566 = vadd.f32 %v141, %v3565
    %v3567 = vpop.f32.mrf.mxu0
    %v3568 = vpop.f32.mrf.mxu0
    %v3569 = vpop.f32.mrf.mxu0
    %3570 = vdwg.mxu0
    %v3571 = vsel %vm796, %v3428, -inf
    %3572 = vmax.xlane.f32.xlu0 %v3571
    %v3573 = vpop.xlane.xlu0 %3572
    %v3574 = vsel %vm796, %v3474, -inf
    %3575 = vmax.xlane.f32.xlu0 %v3574
    %v3576 = vpop.xlane.xlu0 %3575
    %v3577 = vsel %vm796, %v3520, -inf
    %3578 = vmax.xlane.f32.xlu0 %v3577
    %v3579 = vpop.xlane.xlu0 %3578
    %v3580 = vsel %vm796, %v3566, -inf
    %3581 = vmax.xlane.f32.xlu0 %v3580
    %v3582 = vpop.xlane.xlu0 %3581
    %v3583 = vsub.f32 %v3428, %v3573
    %v3584 = vsub.f32 %v3474, %v3576
    %v3585 = vsub.f32 %v3520, %v3579
    %v3586 = vsub.f32 %v3566, %v3582
    %v3587 = vmul.f32 %v3583, 1.442695
    %v3588 = vpow.pop %v3587
    %v3589 = vmul.f32 %v3584, 1.442695
    %v3590 = vpow.pop %v3589
    %v3591 = vmul.f32 %v3585, 1.442695
    %v3592 = vpow.pop %v3591
    %v3593 = vmul.f32 %v3586, 1.442695
    %v3594 = vpow.pop %v3593
    %v3595 = vsel %vm796, %v3588, 0.0
    %3596 = vadd.xlane.f32.xlu0 %v3595
    %v3597 = vpop.xlane.xlu0 %3596
    %v3598 = vsel %vm796, %v3590, 0.0
    %3599 = vadd.xlane.f32.xlu0 %v3598
    %v3600 = vpop.xlane.xlu0 %3599
    %v3601 = vsel %vm796, %v3592, 0.0
    %3602 = vadd.xlane.f32.xlu0 %v3601
    %v3603 = vpop.xlane.xlu0 %3602
    %v3604 = vsel %vm796, %v3594, 0.0
    %3605 = vadd.xlane.f32.xlu0 %v3604
    %v3606 = vpop.xlane.xlu0 %3605
    %v3607 = vrcp.pop %v3597
    %v3608 = vrcp.pop %v3600
    %v3609 = vrcp.pop %v3603
    %v3610 = vrcp.pop %v3606
    %v3611 = vmul.f32 %v3588, %v3607
    %v3612 = vmul.f32 %v3590, %v3608
    %v3613 = vmul.f32 %v3592, %v3609
    %v3614 = vmul.f32 %v3594, %v3610
    %v3615 = vpack.c.bf16 %v3611, %v3611
    %v3616 = vpack.c.bf16 %v3612, %v3612
    %v3617 = vpack.c.bf16 %v3613, %v3613
    %v3618 = vpack.c.bf16 %v3614, %v3614
    %v3620 = vsel %vm796, %v3615, 0
    %v3623 = vsel %vm1042, %v3383, 0
    %3625 = vmatprep.subr.bf16.mxu0 0
    %3626 = vmatpush1.bf16.msra.mxu0 0
    %3627 = vmatprep.subr.bf16.mxu0 0
    %3628 = vmatpush1.bf16.msra.mxu0 0
    %3629 = vmatprep.subr.bf16.mxu0 0
    %3630 = vmatpush1.bf16.msra.mxu0 0
    %3631 = vmatprep.subr.bf16.mxu0 0
    %3632 = vmatpush1.bf16.msra.mxu0 0
    %3633 = vmatprep.subr.bf16.mxu0 0
    %3634 = vmatpush1.bf16.msra.mxu0 0
    %3635 = vmatprep.subr.bf16.mxu0 0
    %3636 = vmatpush1.bf16.msra.mxu0 0
    %3637 = vmatprep.subr.bf16.mxu0 0
    %3638 = vmatpush1.bf16.msra.mxu0 0
    %3639 = vmatprep.subr.bf16.mxu0 0
    %3640 = vmatpush1.bf16.msra.mxu0 %v3623
    %3641 = vmatprep.subr.bf16.mxu0 0
    %3642 = vmatpush2.bf16.msra.mxu0 0
    %3643 = vmatprep.subr.bf16.mxu0 0
    %3644 = vmatpush2.bf16.msra.mxu0 0
    %3645 = vmatprep.subr.bf16.mxu0 0
    %3646 = vmatpush2.bf16.msra.mxu0 0
    %3647 = vmatprep.subr.bf16.mxu0 0
    %3648 = vmatpush2.bf16.msra.mxu0 0
    %3649 = vmatprep.subr.bf16.mxu0 0
    %3650 = vmatpush2.bf16.msra.mxu0 0
    %3651 = vmatprep.subr.bf16.mxu0 0
    %3652 = vmatpush2.bf16.msra.mxu0 0
    %3653 = vmatprep.subr.bf16.mxu0 0
    %3654 = vmatpush2.bf16.msra.mxu0 0
    %3655 = vmatprep.subr.bf16.mxu0 0
    %3656 = vmatpush2.bf16.msra.mxu0 0
    %3657 = vmatprep.mubr.bf16.mxu0 0
    %3658 = vmatmul.mubr.bf16.gmra.mxu0 %v3620
    %v3659 = vpop.f32.mrf.mxu0
    %v3660 = vadd.f32 0.0, %v3659
    %v3661 = vpop.f32.mrf.mxu0
    %v3662 = vpop.f32.mrf.mxu0
    %v3663 = vpop.f32.mrf.mxu0
    %3664 = vdwg.mxu0
    %v3666 = vsel %vm796, %v3616, 0
    %v3669 = vsel %vm1042, %v3384, 0
    %3671 = vmatprep.subr.bf16.mxu0 0
    %3672 = vmatpush1.bf16.msra.mxu0 0
    %3673 = vmatprep.subr.bf16.mxu0 0
    %3674 = vmatpush1.bf16.msra.mxu0 0
    %3675 = vmatprep.subr.bf16.mxu0 0
    %3676 = vmatpush1.bf16.msra.mxu0 0
    %3677 = vmatprep.subr.bf16.mxu0 0
    %3678 = vmatpush1.bf16.msra.mxu0 0
    %3679 = vmatprep.subr.bf16.mxu0 0
    %3680 = vmatpush1.bf16.msra.mxu0 0
    %3681 = vmatprep.subr.bf16.mxu0 0
    %3682 = vmatpush1.bf16.msra.mxu0 0
    %3683 = vmatprep.subr.bf16.mxu0 0
    %3684 = vmatpush1.bf16.msra.mxu0 0
    %3685 = vmatprep.subr.bf16.mxu0 0
    %3686 = vmatpush1.bf16.msra.mxu0 %v3669
    %3687 = vmatprep.subr.bf16.mxu0 0
    %3688 = vmatpush2.bf16.msra.mxu0 0
    %3689 = vmatprep.subr.bf16.mxu0 0
    %3690 = vmatpush2.bf16.msra.mxu0 0
    %3691 = vmatprep.subr.bf16.mxu0 0
    %3692 = vmatpush2.bf16.msra.mxu0 0
    %3693 = vmatprep.subr.bf16.mxu0 0
    %3694 = vmatpush2.bf16.msra.mxu0 0
    %3695 = vmatprep.subr.bf16.mxu0 0
    %3696 = vmatpush2.bf16.msra.mxu0 0
    %3697 = vmatprep.subr.bf16.mxu0 0
    %3698 = vmatpush2.bf16.msra.mxu0 0
    %3699 = vmatprep.subr.bf16.mxu0 0
    %3700 = vmatpush2.bf16.msra.mxu0 0
    %3701 = vmatprep.subr.bf16.mxu0 0
    %3702 = vmatpush2.bf16.msra.mxu0 0
    %3703 = vmatprep.mubr.bf16.mxu0 0
    %3704 = vmatmul.mubr.bf16.gmra.mxu0 %v3666
    %v3705 = vpop.f32.mrf.mxu0
    %v3706 = vadd.f32 0.0, %v3705
    %v3707 = vpop.f32.mrf.mxu0
    %v3708 = vpop.f32.mrf.mxu0
    %v3709 = vpop.f32.mrf.mxu0
    %3710 = vdwg.mxu0
    %v3712 = vsel %vm796, %v3617, 0
    %v3715 = vsel %vm1042, %v3385, 0
    %3717 = vmatprep.subr.bf16.mxu0 0
    %3718 = vmatpush1.bf16.msra.mxu0 0
    %3719 = vmatprep.subr.bf16.mxu0 0
    %3720 = vmatpush1.bf16.msra.mxu0 0
    %3721 = vmatprep.subr.bf16.mxu0 0
    %3722 = vmatpush1.bf16.msra.mxu0 0
    %3723 = vmatprep.subr.bf16.mxu0 0
    %3724 = vmatpush1.bf16.msra.mxu0 0
    %3725 = vmatprep.subr.bf16.mxu0 0
    %3726 = vmatpush1.bf16.msra.mxu0 0
    %3727 = vmatprep.subr.bf16.mxu0 0
    %3728 = vmatpush1.bf16.msra.mxu0 0
    %3729 = vmatprep.subr.bf16.mxu0 0
    %3730 = vmatpush1.bf16.msra.mxu0 0
    %3731 = vmatprep.subr.bf16.mxu0 0
    %3732 = vmatpush1.bf16.msra.mxu0 %v3715
    %3733 = vmatprep.subr.bf16.mxu0 0
    %3734 = vmatpush2.bf16.msra.mxu0 0
    %3735 = vmatprep.subr.bf16.mxu0 0
    %3736 = vmatpush2.bf16.msra.mxu0 0
    %3737 = vmatprep.subr.bf16.mxu0 0
    %3738 = vmatpush2.bf16.msra.mxu0 0
    %3739 = vmatprep.subr.bf16.mxu0 0
    %3740 = vmatpush2.bf16.msra.mxu0 0
    %3741 = vmatprep.subr.bf16.mxu0 0
    %3742 = vmatpush2.bf16.msra.mxu0 0
    %3743 = vmatprep.subr.bf16.mxu0 0
    %3744 = vmatpush2.bf16.msra.mxu0 0
    %3745 = vmatprep.subr.bf16.mxu0 0
    %3746 = vmatpush2.bf16.msra.mxu0 0
    %3747 = vmatprep.subr.bf16.mxu0 0
    %3748 = vmatpush2.bf16.msra.mxu0 0
    %3749 = vmatprep.mubr.bf16.mxu0 0
    %3750 = vmatmul.mubr.bf16.gmra.mxu0 %v3712
    %v3751 = vpop.f32.mrf.mxu0
    %v3752 = vadd.f32 0.0, %v3751
    %v3753 = vpop.f32.mrf.mxu0
    %v3754 = vpop.f32.mrf.mxu0
    %v3755 = vpop.f32.mrf.mxu0
    %3756 = vdwg.mxu0
    %v3758 = vsel %vm796, %v3618, 0
    %v3761 = vsel %vm1042, %v3386, 0
    %3763 = vmatprep.subr.bf16.mxu0 0
    %3764 = vmatpush1.bf16.msra.mxu0 0
    %3765 = vmatprep.subr.bf16.mxu0 0
    %3766 = vmatpush1.bf16.msra.mxu0 0
    %3767 = vmatprep.subr.bf16.mxu0 0
    %3768 = vmatpush1.bf16.msra.mxu0 0
    %3769 = vmatprep.subr.bf16.mxu0 0
    %3770 = vmatpush1.bf16.msra.mxu0 0
    %3771 = vmatprep.subr.bf16.mxu0 0
    %3772 = vmatpush1.bf16.msra.mxu0 0
    %3773 = vmatprep.subr.bf16.mxu0 0
    %3774 = vmatpush1.bf16.msra.mxu0 0
    %3775 = vmatprep.subr.bf16.mxu0 0
    %3776 = vmatpush1.bf16.msra.mxu0 0
    %3777 = vmatprep.subr.bf16.mxu0 0
    %3778 = vmatpush1.bf16.msra.mxu0 %v3761
    %3779 = vmatprep.subr.bf16.mxu0 0
    %3780 = vmatpush2.bf16.msra.mxu0 0
    %3781 = vmatprep.subr.bf16.mxu0 0
    %3782 = vmatpush2.bf16.msra.mxu0 0
    %3783 = vmatprep.subr.bf16.mxu0 0
    %3784 = vmatpush2.bf16.msra.mxu0 0
    %3785 = vmatprep.subr.bf16.mxu0 0
    %3786 = vmatpush2.bf16.msra.mxu0 0
    %3787 = vmatprep.subr.bf16.mxu0 0
    %3788 = vmatpush2.bf16.msra.mxu0 0
    %3789 = vmatprep.subr.bf16.mxu0 0
    %3790 = vmatpush2.bf16.msra.mxu0 0
    %3791 = vmatprep.subr.bf16.mxu0 0
    %3792 = vmatpush2.bf16.msra.mxu0 0
    %3793 = vmatprep.subr.bf16.mxu0 0
    %3794 = vmatpush2.bf16.msra.mxu0 0
    %3795 = vmatprep.mubr.bf16.mxu0 0
    %3796 = vmatmul.mubr.bf16.gmra.mxu0 %v3758
    %v3797 = vpop.f32.mrf.mxu0
    %v3798 = vadd.f32 0.0, %v3797
    %v3799 = vpop.f32.mrf.mxu0
    %v3800 = vpop.f32.mrf.mxu0
    %v3801 = vpop.f32.mrf.mxu0
    %3802 = vdwg.mxu0
    %v3803 = vcombine.low %v3660, %v3752
    %v3804 = vcombine.high %v3660, %v3752
    %v3806 = vunpack.c.l.s4 1983009808
    %v3807 = vunpack.c.0.s8 %v3806
    %v3808 = vlaneseq
    %v3809 = vshrl.u32 %v3808, 7
    %v3810 = vsub.s32 %v3807, %v3809
    %v3811 = vrot.slane %v3803, %v3810
    %v3813 = vunpack.c.l.s4 1983009808
    %v3814 = vunpack.c.0.s8 %v3813
    %v3815 = vlaneseq
    %v3816 = vshrl.u32 %v3815, 7
    %v3817 = vsub.s32 %v3814, %v3816
    %v3818 = vrot.slane %v3804, %v3817
    %v3819 = vcombine.low %v3706, %v3798
    %v3820 = vcombine.high %v3706, %v3798
    %v3822 = vunpack.c.l.s4 1983009808
    %v3823 = vunpack.c.0.s8 %v3822
    %v3824 = vlaneseq
    %v3825 = vshrl.u32 %v3824, 7
    %v3826 = vsub.s32 %v3823, %v3825
    %v3827 = vrot.slane %v3819, %v3826
    %v3829 = vunpack.c.l.s4 1983009808
    %v3830 = vunpack.c.0.s8 %v3829
    %v3831 = vlaneseq
    %v3832 = vshrl.u32 %v3831, 7
    %v3833 = vsub.s32 %v3830, %v3832
    %v3834 = vrot.slane %v3820, %v3833
    %v3835 = vcombine.low %v3811, %v3827
    %v3836 = vcombine.high %v3811, %v3827
    %v3838 = vunpack.c.l.s4 1934713408
    %v3839 = vunpack.c.0.s8 %v3838
    %v3840 = vlaneseq
    %v3841 = vshrl.u32 %v3840, 7
    %v3842 = vsub.s32 %v3839, %v3841
    %v3843 = vrot.slane %v3835, %v3842
    %v3845 = vunpack.c.l.s4 1934713408
    %v3846 = vunpack.c.0.s8 %v3845
    %v3847 = vlaneseq
    %v3848 = vshrl.u32 %v3847, 7
    %v3849 = vsub.s32 %v3846, %v3848
    %v3850 = vrot.slane %v3836, %v3849
    %v3851 = vcombine.low %v3818, %v3834
    %v3852 = vcombine.high %v3818, %v3834
    %v3854 = vunpack.c.l.s4 1934713408
    %v3855 = vunpack.c.0.s8 %v3854
    %v3856 = vlaneseq
    %v3857 = vshrl.u32 %v3856, 7
    %v3858 = vsub.s32 %v3855, %v3857
    %v3859 = vrot.slane %v3851, %v3858
    %v3861 = vunpack.c.l.s4 1934713408
    %v3862 = vunpack.c.0.s8 %v3861
    %v3863 = vlaneseq
    %v3864 = vshrl.u32 %v3863, 7
    %v3865 = vsub.s32 %v3862, %v3864
    %v3866 = vrot.slane %v3852, %v3865
    %v3867 = vcombine.high %v3843, 0.0
    %v3868 = vcombine.high %v3850, 0.0
    %v3869 = vcombine.high %v3859, 0.0
    %v3870 = vcombine.high %v3866, 0.0
    %v3871 = vcombine.low %v3843, %v3850
    %v3873 = vunpack.c.l.s4 1983009808
    %v3874 = vunpack.c.0.s8 %v3873
    %v3875 = vlaneseq
    %v3876 = vshrl.u32 %v3875, 7
    %v3877 = vsub.s32 %v3874, %v3876
    %v3878 = vrot.slane %v3871, %v3877
    %v3879 = vcombine.low %v3867, %v3868
    %v3881 = vunpack.c.l.s4 1983009808
    %v3882 = vunpack.c.0.s8 %v3881
    %v3883 = vlaneseq
    %v3884 = vshrl.u32 %v3883, 7
    %v3885 = vsub.s32 %v3882, %v3884
    %v3886 = vrot.slane %v3879, %v3885
    %v3887 = vcombine.low %v3859, %v3866
    %v3889 = vunpack.c.l.s4 1983009808
    %v3890 = vunpack.c.0.s8 %v3889
    %v3891 = vlaneseq
    %v3892 = vshrl.u32 %v3891, 7
    %v3893 = vsub.s32 %v3890, %v3892
    %v3894 = vrot.slane %v3887, %v3893
    %v3895 = vcombine.low %v3869, %v3870
    %v3897 = vunpack.c.l.s4 1983009808
    %v3898 = vunpack.c.0.s8 %v3897
    %v3899 = vlaneseq
    %v3900 = vshrl.u32 %v3899, 7
    %v3901 = vsub.s32 %v3898, %v3900
    %v3902 = vrot.slane %v3895, %v3901
    %v3903 = vcombine.low %v3878, %v3886
    %v3904 = vcombine.high %v3878, %v3886
    %v3906 = vunpack.c.l.s4 1934713408
    %v3907 = vunpack.c.0.s8 %v3906
    %v3908 = vlaneseq
    %v3909 = vshrl.u32 %v3908, 7
    %v3910 = vsub.s32 %v3907, %v3909
    %v3911 = vrot.slane %v3903, %v3910
    %v3913 = vunpack.c.l.s4 1934713408
    %v3914 = vunpack.c.0.s8 %v3913
    %v3915 = vlaneseq
    %v3916 = vshrl.u32 %v3915, 7
    %v3917 = vsub.s32 %v3914, %v3916
    %v3918 = vrot.slane %v3904, %v3917
    %v3919 = vcombine.low %v3894, %v3902
    %v3920 = vcombine.high %v3894, %v3902
    %v3922 = vunpack.c.l.s4 1934713408
    %v3923 = vunpack.c.0.s8 %v3922
    %v3924 = vlaneseq
    %v3925 = vshrl.u32 %v3924, 7
    %v3926 = vsub.s32 %v3923, %v3925
    %v3927 = vrot.slane %v3919, %v3926
    %v3929 = vunpack.c.l.s4 1934713408
    %v3930 = vunpack.c.0.s8 %v3929
    %v3931 = vlaneseq
    %v3932 = vshrl.u32 %v3931, 7
    %v3933 = vsub.s32 %v3930, %v3932
    %v3934 = vrot.slane %v3920, %v3933
    %v3935 = vcombine.low %v3911, %v3927
    %v3936 = vcombine.high %v3911, %v3927
    %v3937 = vcombine.low %v3918, %v3934
    %v3938 = vcombine.high %v3918, %v3934
    %3940 = vrot.lane.b32.xlu0 %v3936, 8
    %v3941 = vpop.permute.xlu0 %3940
    %3944 = vrot.lane.b32.xlu0 %v3937, 16
    %v3945 = vpop.permute.xlu0 %3944
    %3948 = vrot.lane.b32.xlu0 %v3938, 24
    %v3949 = vpop.permute.xlu0 %3948
    %v3951 = vsel %vm796, %v3935, %v3941
    %v3952 = vsel %vm1373, %v3951, %v3945
    %v3953 = vsel %vm1375, %v3952, %v3949
    %3955 = vrot.lane.b32.xlu0 %v2820, 120
    %v3956 = vpop.permute.xlu0 %3955
    %3958 = vrot.lane.b32.xlu0 %v2820, 112
    %v3959 = vpop.permute.xlu0 %3958
    %3961 = vrot.lane.b32.xlu0 %v2820, 104
    %v3962 = vpop.permute.xlu0 %3961
    %v3964 = vcombine.low %v2820, %v3959
    %v3965 = vcombine.high %v2820, %v3959
    %v3967 = vunpack.c.l.s4 1983009808
    %v3968 = vunpack.c.0.s8 %v3967
    %v3969 = vlaneseq
    %v3970 = vshrl.u32 %v3969, 7
    %v3971 = vsub.s32 %v3968, %v3970
    %v3972 = vrot.slane %v3964, %v3971
    %v3974 = vunpack.c.l.s4 1983009808
    %v3975 = vunpack.c.0.s8 %v3974
    %v3976 = vlaneseq
    %v3977 = vshrl.u32 %v3976, 7
    %v3978 = vsub.s32 %v3975, %v3977
    %v3979 = vrot.slane %v3965, %v3978
    %v3980 = vcombine.low %v3956, %v3962
    %v3981 = vcombine.high %v3956, %v3962
    %v3983 = vunpack.c.l.s4 1983009808
    %v3984 = vunpack.c.0.s8 %v3983
    %v3985 = vlaneseq
    %v3986 = vshrl.u32 %v3985, 7
    %v3987 = vsub.s32 %v3984, %v3986
    %v3988 = vrot.slane %v3980, %v3987
    %v3990 = vunpack.c.l.s4 1983009808
    %v3991 = vunpack.c.0.s8 %v3990
    %v3992 = vlaneseq
    %v3993 = vshrl.u32 %v3992, 7
    %v3994 = vsub.s32 %v3991, %v3993
    %v3995 = vrot.slane %v3981, %v3994
    %v3996 = vcombine.low %v3972, %v3988
    %v3997 = vcombine.high %v3972, %v3988
    %v3999 = vunpack.c.l.s4 1934713408
    %v4000 = vunpack.c.0.s8 %v3999
    %v4001 = vlaneseq
    %v4002 = vshrl.u32 %v4001, 7
    %v4003 = vsub.s32 %v4000, %v4002
    %v4004 = vrot.slane %v3996, %v4003
    %v4006 = vunpack.c.l.s4 1934713408
    %v4007 = vunpack.c.0.s8 %v4006
    %v4008 = vlaneseq
    %v4009 = vshrl.u32 %v4008, 7
    %v4010 = vsub.s32 %v4007, %v4009
    %v4011 = vrot.slane %v3997, %v4010
    %v4012 = vcombine.low %v3979, %v3995
    %v4013 = vcombine.high %v3979, %v3995
    %v4015 = vunpack.c.l.s4 1934713408
    %v4016 = vunpack.c.0.s8 %v4015
    %v4017 = vlaneseq
    %v4018 = vshrl.u32 %v4017, 7
    %v4019 = vsub.s32 %v4016, %v4018
    %v4020 = vrot.slane %v4012, %v4019
    %v4022 = vunpack.c.l.s4 1934713408
    %v4023 = vunpack.c.0.s8 %v4022
    %v4024 = vlaneseq
    %v4025 = vshrl.u32 %v4024, 7
    %v4026 = vsub.s32 %v4023, %v4025
    %v4027 = vrot.slane %v4013, %v4026
    %v4028 = vcombine.high %v4004, 0.0
    %v4029 = vcombine.high %v4011, 0.0
    %v4030 = vcombine.high %v4020, 0.0
    %v4031 = vcombine.high %v4027, 0.0
    %v4032 = vcombine.low %v4004, %v4011
    %v4034 = vunpack.c.l.s4 1983009808
    %v4035 = vunpack.c.0.s8 %v4034
    %v4036 = vlaneseq
    %v4037 = vshrl.u32 %v4036, 7
    %v4038 = vsub.s32 %v4035, %v4037
    %v4039 = vrot.slane %v4032, %v4038
    %v4040 = vcombine.low %v4028, %v4029
    %v4042 = vunpack.c.l.s4 1983009808
    %v4043 = vunpack.c.0.s8 %v4042
    %v4044 = vlaneseq
    %v4045 = vshrl.u32 %v4044, 7
    %v4046 = vsub.s32 %v4043, %v4045
    %v4047 = vrot.slane %v4040, %v4046
    %v4048 = vcombine.low %v4020, %v4027
    %v4050 = vunpack.c.l.s4 1983009808
    %v4051 = vunpack.c.0.s8 %v4050
    %v4052 = vlaneseq
    %v4053 = vshrl.u32 %v4052, 7
    %v4054 = vsub.s32 %v4051, %v4053
    %v4055 = vrot.slane %v4048, %v4054
    %v4056 = vcombine.low %v4030, %v4031
    %v4058 = vunpack.c.l.s4 1983009808
    %v4059 = vunpack.c.0.s8 %v4058
    %v4060 = vlaneseq
    %v4061 = vshrl.u32 %v4060, 7
    %v4062 = vsub.s32 %v4059, %v4061
    %v4063 = vrot.slane %v4056, %v4062
    %v4064 = vcombine.low %v4039, %v4047
    %v4065 = vcombine.high %v4039, %v4047
    %v4067 = vunpack.c.l.s4 1934713408
    %v4068 = vunpack.c.0.s8 %v4067
    %v4069 = vlaneseq
    %v4070 = vshrl.u32 %v4069, 7
    %v4071 = vsub.s32 %v4068, %v4070
    %v4072 = vrot.slane %v4064, %v4071
    %v4074 = vunpack.c.l.s4 1934713408
    %v4075 = vunpack.c.0.s8 %v4074
    %v4076 = vlaneseq
    %v4077 = vshrl.u32 %v4076, 7
    %v4078 = vsub.s32 %v4075, %v4077
    %v4079 = vrot.slane %v4065, %v4078
    %v4080 = vcombine.low %v4055, %v4063
    %v4081 = vcombine.high %v4055, %v4063
    %v4083 = vunpack.c.l.s4 1934713408
    %v4084 = vunpack.c.0.s8 %v4083
    %v4085 = vlaneseq
    %v4086 = vshrl.u32 %v4085, 7
    %v4087 = vsub.s32 %v4084, %v4086
    %v4088 = vrot.slane %v4080, %v4087
    %v4090 = vunpack.c.l.s4 1934713408
    %v4091 = vunpack.c.0.s8 %v4090
    %v4092 = vlaneseq
    %v4093 = vshrl.u32 %v4092, 7
    %v4094 = vsub.s32 %v4091, %v4093
    %v4095 = vrot.slane %v4081, %v4094
    %v4096 = vcombine.low %v4072, %v4088
    %v4097 = vcombine.high %v4072, %v4088
    %v4098 = vcombine.low %v4079, %v4095
    %v4099 = vcombine.high %v4079, %v4095
    %v4100 = vpack.c.bf16 %v4096, %v4096
    %v4101 = vpack.c.bf16 %v4097, %v4097
    %v4102 = vpack.c.bf16 %v4098, %v4098
    %v4103 = vpack.c.bf16 %v4099, %v4099
    %4105 = vrot.lane.b32.xlu0 %v2877, 120
    %v4106 = vpop.permute.xlu0 %4105
    %4108 = vrot.lane.b32.xlu0 %v2877, 112
    %v4109 = vpop.permute.xlu0 %4108
    %4111 = vrot.lane.b32.xlu0 %v2877, 104
    %v4112 = vpop.permute.xlu0 %4111
    %v4114 = vcombine.low %v2877, %v4109
    %v4115 = vcombine.high %v2877, %v4109
    %v4117 = vunpack.c.l.s4 1983009808
    %v4118 = vunpack.c.0.s8 %v4117
    %v4119 = vlaneseq
    %v4120 = vshrl.u32 %v4119, 7
    %v4121 = vsub.s32 %v4118, %v4120
    %v4122 = vrot.slane %v4114, %v4121
    %v4124 = vunpack.c.l.s4 1983009808
    %v4125 = vunpack.c.0.s8 %v4124
    %v4126 = vlaneseq
    %v4127 = vshrl.u32 %v4126, 7
    %v4128 = vsub.s32 %v4125, %v4127
    %v4129 = vrot.slane %v4115, %v4128
    %v4130 = vcombine.low %v4106, %v4112
    %v4131 = vcombine.high %v4106, %v4112
    %v4133 = vunpack.c.l.s4 1983009808
    %v4134 = vunpack.c.0.s8 %v4133
    %v4135 = vlaneseq
    %v4136 = vshrl.u32 %v4135, 7
    %v4137 = vsub.s32 %v4134, %v4136
    %v4138 = vrot.slane %v4130, %v4137
    %v4140 = vunpack.c.l.s4 1983009808
    %v4141 = vunpack.c.0.s8 %v4140
    %v4142 = vlaneseq
    %v4143 = vshrl.u32 %v4142, 7
    %v4144 = vsub.s32 %v4141, %v4143
    %v4145 = vrot.slane %v4131, %v4144
    %v4146 = vcombine.low %v4122, %v4138
    %v4147 = vcombine.high %v4122, %v4138
    %v4149 = vunpack.c.l.s4 1934713408
    %v4150 = vunpack.c.0.s8 %v4149
    %v4151 = vlaneseq
    %v4152 = vshrl.u32 %v4151, 7
    %v4153 = vsub.s32 %v4150, %v4152
    %v4154 = vrot.slane %v4146, %v4153
    %v4156 = vunpack.c.l.s4 1934713408
    %v4157 = vunpack.c.0.s8 %v4156
    %v4158 = vlaneseq
    %v4159 = vshrl.u32 %v4158, 7
    %v4160 = vsub.s32 %v4157, %v4159
    %v4161 = vrot.slane %v4147, %v4160
    %v4162 = vcombine.low %v4129, %v4145
    %v4163 = vcombine.high %v4129, %v4145
    %v4165 = vunpack.c.l.s4 1934713408
    %v4166 = vunpack.c.0.s8 %v4165
    %v4167 = vlaneseq
    %v4168 = vshrl.u32 %v4167, 7
    %v4169 = vsub.s32 %v4166, %v4168
    %v4170 = vrot.slane %v4162, %v4169
    %v4172 = vunpack.c.l.s4 1934713408
    %v4173 = vunpack.c.0.s8 %v4172
    %v4174 = vlaneseq
    %v4175 = vshrl.u32 %v4174, 7
    %v4176 = vsub.s32 %v4173, %v4175
    %v4177 = vrot.slane %v4163, %v4176
    %v4178 = vcombine.high %v4154, 0.0
    %v4179 = vcombine.high %v4161, 0.0
    %v4180 = vcombine.high %v4170, 0.0
    %v4181 = vcombine.high %v4177, 0.0
    %v4182 = vcombine.low %v4154, %v4161
    %v4184 = vunpack.c.l.s4 1983009808
    %v4185 = vunpack.c.0.s8 %v4184
    %v4186 = vlaneseq
    %v4187 = vshrl.u32 %v4186, 7
    %v4188 = vsub.s32 %v4185, %v4187
    %v4189 = vrot.slane %v4182, %v4188
    %v4190 = vcombine.low %v4178, %v4179
    %v4192 = vunpack.c.l.s4 1983009808
    %v4193 = vunpack.c.0.s8 %v4192
    %v4194 = vlaneseq
    %v4195 = vshrl.u32 %v4194, 7
    %v4196 = vsub.s32 %v4193, %v4195
    %v4197 = vrot.slane %v4190, %v4196
    %v4198 = vcombine.low %v4170, %v4177
    %v4200 = vunpack.c.l.s4 1983009808
    %v4201 = vunpack.c.0.s8 %v4200
    %v4202 = vlaneseq
    %v4203 = vshrl.u32 %v4202, 7
    %v4204 = vsub.s32 %v4201, %v4203
    %v4205 = vrot.slane %v4198, %v4204
    %v4206 = vcombine.low %v4180, %v4181
    %v4208 = vunpack.c.l.s4 1983009808
    %v4209 = vunpack.c.0.s8 %v4208
    %v4210 = vlaneseq
    %v4211 = vshrl.u32 %v4210, 7
    %v4212 = vsub.s32 %v4209, %v4211
    %v4213 = vrot.slane %v4206, %v4212
    %v4214 = vcombine.low %v4189, %v4197
    %v4215 = vcombine.high %v4189, %v4197
    %v4217 = vunpack.c.l.s4 1934713408
    %v4218 = vunpack.c.0.s8 %v4217
    %v4219 = vlaneseq
    %v4220 = vshrl.u32 %v4219, 7
    %v4221 = vsub.s32 %v4218, %v4220
    %v4222 = vrot.slane %v4214, %v4221
    %v4224 = vunpack.c.l.s4 1934713408
    %v4225 = vunpack.c.0.s8 %v4224
    %v4226 = vlaneseq
    %v4227 = vshrl.u32 %v4226, 7
    %v4228 = vsub.s32 %v4225, %v4227
    %v4229 = vrot.slane %v4215, %v4228
    %v4230 = vcombine.low %v4205, %v4213
    %v4231 = vcombine.high %v4205, %v4213
    %v4233 = vunpack.c.l.s4 1934713408
    %v4234 = vunpack.c.0.s8 %v4233
    %v4235 = vlaneseq
    %v4236 = vshrl.u32 %v4235, 7
    %v4237 = vsub.s32 %v4234, %v4236
    %v4238 = vrot.slane %v4230, %v4237
    %v4240 = vunpack.c.l.s4 1934713408
    %v4241 = vunpack.c.0.s8 %v4240
    %v4242 = vlaneseq
    %v4243 = vshrl.u32 %v4242, 7
    %v4244 = vsub.s32 %v4241, %v4243
    %v4245 = vrot.slane %v4231, %v4244
    %v4246 = vcombine.low %v4222, %v4238
    %v4247 = vcombine.high %v4222, %v4238
    %v4248 = vcombine.low %v4229, %v4245
    %v4249 = vcombine.high %v4229, %v4245
    %v4250 = vpack.c.bf16 %v4246, %v4246
    %v4251 = vpack.c.bf16 %v4247, %v4247
    %v4252 = vpack.c.bf16 %v4248, %v4248
    %v4253 = vpack.c.bf16 %v4249, %v4249
    %4255 = vrot.lane.b32.xlu0 %v2934, 120
    %v4256 = vpop.permute.xlu0 %4255
    %4258 = vrot.lane.b32.xlu0 %v2934, 112
    %v4259 = vpop.permute.xlu0 %4258
    %4261 = vrot.lane.b32.xlu0 %v2934, 104
    %v4262 = vpop.permute.xlu0 %4261
    %v4264 = vcombine.low %v2934, %v4259
    %v4265 = vcombine.high %v2934, %v4259
    %v4267 = vunpack.c.l.s4 1983009808
    %v4268 = vunpack.c.0.s8 %v4267
    %v4269 = vlaneseq
    %v4270 = vshrl.u32 %v4269, 7
    %v4271 = vsub.s32 %v4268, %v4270
    %v4272 = vrot.slane %v4264, %v4271
    %v4274 = vunpack.c.l.s4 1983009808
    %v4275 = vunpack.c.0.s8 %v4274
    %v4276 = vlaneseq
    %v4277 = vshrl.u32 %v4276, 7
    %v4278 = vsub.s32 %v4275, %v4277
    %v4279 = vrot.slane %v4265, %v4278
    %v4280 = vcombine.low %v4256, %v4262
    %v4281 = vcombine.high %v4256, %v4262
    %v4283 = vunpack.c.l.s4 1983009808
    %v4284 = vunpack.c.0.s8 %v4283
    %v4285 = vlaneseq
    %v4286 = vshrl.u32 %v4285, 7
    %v4287 = vsub.s32 %v4284, %v4286
    %v4288 = vrot.slane %v4280, %v4287
    %v4290 = vunpack.c.l.s4 1983009808
    %v4291 = vunpack.c.0.s8 %v4290
    %v4292 = vlaneseq
    %v4293 = vshrl.u32 %v4292, 7
    %v4294 = vsub.s32 %v4291, %v4293
    %v4295 = vrot.slane %v4281, %v4294
    %v4296 = vcombine.low %v4272, %v4288
    %v4297 = vcombine.high %v4272, %v4288
    %v4299 = vunpack.c.l.s4 1934713408
    %v4300 = vunpack.c.0.s8 %v4299
    %v4301 = vlaneseq
    %v4302 = vshrl.u32 %v4301, 7
    %v4303 = vsub.s32 %v4300, %v4302
    %v4304 = vrot.slane %v4296, %v4303
    %v4306 = vunpack.c.l.s4 1934713408
    %v4307 = vunpack.c.0.s8 %v4306
    %v4308 = vlaneseq
    %v4309 = vshrl.u32 %v4308, 7
    %v4310 = vsub.s32 %v4307, %v4309
    %v4311 = vrot.slane %v4297, %v4310
    %v4312 = vcombine.low %v4279, %v4295
    %v4313 = vcombine.high %v4279, %v4295
    %v4315 = vunpack.c.l.s4 1934713408
    %v4316 = vunpack.c.0.s8 %v4315
    %v4317 = vlaneseq
    %v4318 = vshrl.u32 %v4317, 7
    %v4319 = vsub.s32 %v4316, %v4318
    %v4320 = vrot.slane %v4312, %v4319
    %v4322 = vunpack.c.l.s4 1934713408
    %v4323 = vunpack.c.0.s8 %v4322
    %v4324 = vlaneseq
    %v4325 = vshrl.u32 %v4324, 7
    %v4326 = vsub.s32 %v4323, %v4325
    %v4327 = vrot.slane %v4313, %v4326
    %v4328 = vcombine.high %v4304, 0.0
    %v4329 = vcombine.high %v4311, 0.0
    %v4330 = vcombine.high %v4320, 0.0
    %v4331 = vcombine.high %v4327, 0.0
    %v4332 = vcombine.low %v4304, %v4311
    %v4334 = vunpack.c.l.s4 1983009808
    %v4335 = vunpack.c.0.s8 %v4334
    %v4336 = vlaneseq
    %v4337 = vshrl.u32 %v4336, 7
    %v4338 = vsub.s32 %v4335, %v4337
    %v4339 = vrot.slane %v4332, %v4338
    %v4340 = vcombine.low %v4328, %v4329
    %v4342 = vunpack.c.l.s4 1983009808
    %v4343 = vunpack.c.0.s8 %v4342
    %v4344 = vlaneseq
    %v4345 = vshrl.u32 %v4344, 7
    %v4346 = vsub.s32 %v4343, %v4345
    %v4347 = vrot.slane %v4340, %v4346
    %v4348 = vcombine.low %v4320, %v4327
    %v4350 = vunpack.c.l.s4 1983009808
    %v4351 = vunpack.c.0.s8 %v4350
    %v4352 = vlaneseq
    %v4353 = vshrl.u32 %v4352, 7
    %v4354 = vsub.s32 %v4351, %v4353
    %v4355 = vrot.slane %v4348, %v4354
    %v4356 = vcombine.low %v4330, %v4331
    %v4358 = vunpack.c.l.s4 1983009808
    %v4359 = vunpack.c.0.s8 %v4358
    %v4360 = vlaneseq
    %v4361 = vshrl.u32 %v4360, 7
    %v4362 = vsub.s32 %v4359, %v4361
    %v4363 = vrot.slane %v4356, %v4362
    %v4364 = vcombine.low %v4339, %v4347
    %v4365 = vcombine.high %v4339, %v4347
    %v4367 = vunpack.c.l.s4 1934713408
    %v4368 = vunpack.c.0.s8 %v4367
    %v4369 = vlaneseq
    %v4370 = vshrl.u32 %v4369, 7
    %v4371 = vsub.s32 %v4368, %v4370
    %v4372 = vrot.slane %v4364, %v4371
    %v4374 = vunpack.c.l.s4 1934713408
    %v4375 = vunpack.c.0.s8 %v4374
    %v4376 = vlaneseq
    %v4377 = vshrl.u32 %v4376, 7
    %v4378 = vsub.s32 %v4375, %v4377
    %v4379 = vrot.slane %v4365, %v4378
    %v4380 = vcombine.low %v4355, %v4363
    %v4381 = vcombine.high %v4355, %v4363
    %v4383 = vunpack.c.l.s4 1934713408
    %v4384 = vunpack.c.0.s8 %v4383
    %v4385 = vlaneseq
    %v4386 = vshrl.u32 %v4385, 7
    %v4387 = vsub.s32 %v4384, %v4386
    %v4388 = vrot.slane %v4380, %v4387
    %v4390 = vunpack.c.l.s4 1934713408
    %v4391 = vunpack.c.0.s8 %v4390
    %v4392 = vlaneseq
    %v4393 = vshrl.u32 %v4392, 7
    %v4394 = vsub.s32 %v4391, %v4393
    %v4395 = vrot.slane %v4381, %v4394
    %v4396 = vcombine.low %v4372, %v4388
    %v4397 = vcombine.high %v4372, %v4388
    %v4398 = vcombine.low %v4379, %v4395
    %v4399 = vcombine.high %v4379, %v4395
    %v4400 = vpack.c.bf16 %v4396, %v4396
    %v4401 = vpack.c.bf16 %v4397, %v4397
    %v4402 = vpack.c.bf16 %v4398, %v4398
    %v4403 = vpack.c.bf16 %v4399, %v4399
    %v4405 = vsel %vm796, %v4100, 0
    %v4408 = vsel %vm796, %v4250, 0
    %4410 = vmatprep.subr.bf16.mxu0 0
    %4411 = vmatpush1.bf16.xpose.msra.mxu0 0
    %4412 = vmatprep.subr.bf16.mxu0 0
    %4413 = vmatpush1.bf16.xpose.msra.mxu0 0
    %4414 = vmatprep.subr.bf16.mxu0 0
    %4415 = vmatpush1.bf16.xpose.msra.mxu0 0
    %4416 = vmatprep.subr.bf16.mxu0 0
    %4417 = vmatpush1.bf16.xpose.msra.mxu0 0
    %4418 = vmatprep.subr.bf16.mxu0 0
    %4419 = vmatpush1.bf16.xpose.msra.mxu0 0
    %4420 = vmatprep.subr.bf16.mxu0 0
    %4421 = vmatpush1.bf16.xpose.msra.mxu0 0
    %4422 = vmatprep.subr.bf16.mxu0 0
    %4423 = vmatpush1.bf16.xpose.msra.mxu0 0
    %4424 = vmatprep.subr.bf16.mxu0 0
    %4425 = vmatpush1.bf16.xpose.msra.mxu0 %v4408
    %4426 = vmatprep.subr.bf16.mxu0 0
    %4427 = vmatpush2.bf16.xpose.msra.mxu0 0
    %4428 = vmatprep.subr.bf16.mxu0 0
    %4429 = vmatpush2.bf16.xpose.msra.mxu0 0
    %4430 = vmatprep.subr.bf16.mxu0 0
    %4431 = vmatpush2.bf16.xpose.msra.mxu0 0
    %4432 = vmatprep.subr.bf16.mxu0 0
    %4433 = vmatpush2.bf16.xpose.msra.mxu0 0
    %4434 = vmatprep.subr.bf16.mxu0 0
    %4435 = vmatpush2.bf16.xpose.msra.mxu0 0
    %4436 = vmatprep.subr.bf16.mxu0 0
    %4437 = vmatpush2.bf16.xpose.msra.mxu0 0
    %4438 = vmatprep.subr.bf16.mxu0 0
    %4439 = vmatpush2.bf16.xpose.msra.mxu0 0
    %4440 = vmatprep.subr.bf16.mxu0 0
    %4441 = vmatpush2.bf16.xpose.msra.mxu0 0
    %4442 = vmatprep.mubr.bf16.mxu0 0
    %4443 = vmatmul.mubr.bf16.gmra.mxu0 %v4405
    %v4444 = vpop.f32.mrf.mxu0
    %v4445 = vadd.f32 %v138, %v4444
    %v4446 = vpop.f32.mrf.mxu0
    %v4447 = vpop.f32.mrf.mxu0
    %v4448 = vpop.f32.mrf.mxu0
    %4449 = vdwg.mxu0
    %v4451 = vsel %vm796, %v4101, 0
    %v4454 = vsel %vm796, %v4251, 0
    %4456 = vmatprep.subr.bf16.mxu0 0
    %4457 = vmatpush1.bf16.xpose.msra.mxu0 0
    %4458 = vmatprep.subr.bf16.mxu0 0
    %4459 = vmatpush1.bf16.xpose.msra.mxu0 0
    %4460 = vmatprep.subr.bf16.mxu0 0
    %4461 = vmatpush1.bf16.xpose.msra.mxu0 0
    %4462 = vmatprep.subr.bf16.mxu0 0
    %4463 = vmatpush1.bf16.xpose.msra.mxu0 0
    %4464 = vmatprep.subr.bf16.mxu0 0
    %4465 = vmatpush1.bf16.xpose.msra.mxu0 0
    %4466 = vmatprep.subr.bf16.mxu0 0
    %4467 = vmatpush1.bf16.xpose.msra.mxu0 0
    %4468 = vmatprep.subr.bf16.mxu0 0
    %4469 = vmatpush1.bf16.xpose.msra.mxu0 0
    %4470 = vmatprep.subr.bf16.mxu0 0
    %4471 = vmatpush1.bf16.xpose.msra.mxu0 %v4454
    %4472 = vmatprep.subr.bf16.mxu0 0
    %4473 = vmatpush2.bf16.xpose.msra.mxu0 0
    %4474 = vmatprep.subr.bf16.mxu0 0
    %4475 = vmatpush2.bf16.xpose.msra.mxu0 0
    %4476 = vmatprep.subr.bf16.mxu0 0
    %4477 = vmatpush2.bf16.xpose.msra.mxu0 0
    %4478 = vmatprep.subr.bf16.mxu0 0
    %4479 = vmatpush2.bf16.xpose.msra.mxu0 0
    %4480 = vmatprep.subr.bf16.mxu0 0
    %4481 = vmatpush2.bf16.xpose.msra.mxu0 0
    %4482 = vmatprep.subr.bf16.mxu0 0
    %4483 = vmatpush2.bf16.xpose.msra.mxu0 0
    %4484 = vmatprep.subr.bf16.mxu0 0
    %4485 = vmatpush2.bf16.xpose.msra.mxu0 0
    %4486 = vmatprep.subr.bf16.mxu0 0
    %4487 = vmatpush2.bf16.xpose.msra.mxu0 0
    %4488 = vmatprep.mubr.bf16.mxu0 0
    %4489 = vmatmul.mubr.bf16.gmra.mxu0 %v4451
    %v4490 = vpop.f32.mrf.mxu0
    %v4491 = vadd.f32 %v139, %v4490
    %v4492 = vpop.f32.mrf.mxu0
    %v4493 = vpop.f32.mrf.mxu0
    %v4494 = vpop.f32.mrf.mxu0
    %4495 = vdwg.mxu0
    %v4497 = vsel %vm796, %v4102, 0
    %v4500 = vsel %vm796, %v4252, 0
    %4502 = vmatprep.subr.bf16.mxu0 0
    %4503 = vmatpush1.bf16.xpose.msra.mxu0 0
    %4504 = vmatprep.subr.bf16.mxu0 0
    %4505 = vmatpush1.bf16.xpose.msra.mxu0 0
    %4506 = vmatprep.subr.bf16.mxu0 0
    %4507 = vmatpush1.bf16.xpose.msra.mxu0 0
    %4508 = vmatprep.subr.bf16.mxu0 0
    %4509 = vmatpush1.bf16.xpose.msra.mxu0 0
    %4510 = vmatprep.subr.bf16.mxu0 0
    %4511 = vmatpush1.bf16.xpose.msra.mxu0 0
    %4512 = vmatprep.subr.bf16.mxu0 0
    %4513 = vmatpush1.bf16.xpose.msra.mxu0 0
    %4514 = vmatprep.subr.bf16.mxu0 0
    %4515 = vmatpush1.bf16.xpose.msra.mxu0 0
    %4516 = vmatprep.subr.bf16.mxu0 0
    %4517 = vmatpush1.bf16.xpose.msra.mxu0 %v4500
    %4518 = vmatprep.subr.bf16.mxu0 0
    %4519 = vmatpush2.bf16.xpose.msra.mxu0 0
    %4520 = vmatprep.subr.bf16.mxu0 0
    %4521 = vmatpush2.bf16.xpose.msra.mxu0 0
    %4522 = vmatprep.subr.bf16.mxu0 0
    %4523 = vmatpush2.bf16.xpose.msra.mxu0 0
    %4524 = vmatprep.subr.bf16.mxu0 0
    %4525 = vmatpush2.bf16.xpose.msra.mxu0 0
    %4526 = vmatprep.subr.bf16.mxu0 0
    %4527 = vmatpush2.bf16.xpose.msra.mxu0 0
    %4528 = vmatprep.subr.bf16.mxu0 0
    %4529 = vmatpush2.bf16.xpose.msra.mxu0 0
    %4530 = vmatprep.subr.bf16.mxu0 0
    %4531 = vmatpush2.bf16.xpose.msra.mxu0 0
    %4532 = vmatprep.subr.bf16.mxu0 0
    %4533 = vmatpush2.bf16.xpose.msra.mxu0 0
    %4534 = vmatprep.mubr.bf16.mxu0 0
    %4535 = vmatmul.mubr.bf16.gmra.mxu0 %v4497
    %v4536 = vpop.f32.mrf.mxu0
    %v4537 = vadd.f32 %v140, %v4536
    %v4538 = vpop.f32.mrf.mxu0
    %v4539 = vpop.f32.mrf.mxu0
    %v4540 = vpop.f32.mrf.mxu0
    %4541 = vdwg.mxu0
    %v4543 = vsel %vm796, %v4103, 0
    %v4546 = vsel %vm796, %v4253, 0
    %4548 = vmatprep.subr.bf16.mxu0 0
    %4549 = vmatpush1.bf16.xpose.msra.mxu0 0
    %4550 = vmatprep.subr.bf16.mxu0 0
    %4551 = vmatpush1.bf16.xpose.msra.mxu0 0
    %4552 = vmatprep.subr.bf16.mxu0 0
    %4553 = vmatpush1.bf16.xpose.msra.mxu0 0
    %4554 = vmatprep.subr.bf16.mxu0 0
    %4555 = vmatpush1.bf16.xpose.msra.mxu0 0
    %4556 = vmatprep.subr.bf16.mxu0 0
    %4557 = vmatpush1.bf16.xpose.msra.mxu0 0
    %4558 = vmatprep.subr.bf16.mxu0 0
    %4559 = vmatpush1.bf16.xpose.msra.mxu0 0
    %4560 = vmatprep.subr.bf16.mxu0 0
    %4561 = vmatpush1.bf16.xpose.msra.mxu0 0
    %4562 = vmatprep.subr.bf16.mxu0 0
    %4563 = vmatpush1.bf16.xpose.msra.mxu0 %v4546
    %4564 = vmatprep.subr.bf16.mxu0 0
    %4565 = vmatpush2.bf16.xpose.msra.mxu0 0
    %4566 = vmatprep.subr.bf16.mxu0 0
    %4567 = vmatpush2.bf16.xpose.msra.mxu0 0
    %4568 = vmatprep.subr.bf16.mxu0 0
    %4569 = vmatpush2.bf16.xpose.msra.mxu0 0
    %4570 = vmatprep.subr.bf16.mxu0 0
    %4571 = vmatpush2.bf16.xpose.msra.mxu0 0
    %4572 = vmatprep.subr.bf16.mxu0 0
    %4573 = vmatpush2.bf16.xpose.msra.mxu0 0
    %4574 = vmatprep.subr.bf16.mxu0 0
    %4575 = vmatpush2.bf16.xpose.msra.mxu0 0
    %4576 = vmatprep.subr.bf16.mxu0 0
    %4577 = vmatpush2.bf16.xpose.msra.mxu0 0
    %4578 = vmatprep.subr.bf16.mxu0 0
    %4579 = vmatpush2.bf16.xpose.msra.mxu0 0
    %4580 = vmatprep.mubr.bf16.mxu0 0
    %4581 = vmatmul.mubr.bf16.gmra.mxu0 %v4543
    %v4582 = vpop.f32.mrf.mxu0
    %v4583 = vadd.f32 %v141, %v4582
    %v4584 = vpop.f32.mrf.mxu0
    %v4585 = vpop.f32.mrf.mxu0
    %v4586 = vpop.f32.mrf.mxu0
    %4587 = vdwg.mxu0
    %v4588 = vsel %vm796, %v4445, -inf
    %4589 = vmax.xlane.f32.xlu0 %v4588
    %v4590 = vpop.xlane.xlu0 %4589
    %v4591 = vsel %vm796, %v4491, -inf
    %4592 = vmax.xlane.f32.xlu0 %v4591
    %v4593 = vpop.xlane.xlu0 %4592
    %v4594 = vsel %vm796, %v4537, -inf
    %4595 = vmax.xlane.f32.xlu0 %v4594
    %v4596 = vpop.xlane.xlu0 %4595
    %v4597 = vsel %vm796, %v4583, -inf
    %4598 = vmax.xlane.f32.xlu0 %v4597
    %v4599 = vpop.xlane.xlu0 %4598
    %v4600 = vsub.f32 %v4445, %v4590
    %v4601 = vsub.f32 %v4491, %v4593
    %v4602 = vsub.f32 %v4537, %v4596
    %v4603 = vsub.f32 %v4583, %v4599
    %v4604 = vmul.f32 %v4600, 1.442695
    %v4605 = vpow.pop %v4604
    %v4606 = vmul.f32 %v4601, 1.442695
    %v4607 = vpow.pop %v4606
    %v4608 = vmul.f32 %v4602, 1.442695
    %v4609 = vpow.pop %v4608
    %v4610 = vmul.f32 %v4603, 1.442695
    %v4611 = vpow.pop %v4610
    %v4612 = vsel %vm796, %v4605, 0.0
    %4613 = vadd.xlane.f32.xlu0 %v4612
    %v4614 = vpop.xlane.xlu0 %4613
    %v4615 = vsel %vm796, %v4607, 0.0
    %4616 = vadd.xlane.f32.xlu0 %v4615
    %v4617 = vpop.xlane.xlu0 %4616
    %v4618 = vsel %vm796, %v4609, 0.0
    %4619 = vadd.xlane.f32.xlu0 %v4618
    %v4620 = vpop.xlane.xlu0 %4619
    %v4621 = vsel %vm796, %v4611, 0.0
    %4622 = vadd.xlane.f32.xlu0 %v4621
    %v4623 = vpop.xlane.xlu0 %4622
    %v4624 = vrcp.pop %v4614
    %v4625 = vrcp.pop %v4617
    %v4626 = vrcp.pop %v4620
    %v4627 = vrcp.pop %v4623
    %v4628 = vmul.f32 %v4605, %v4624
    %v4629 = vmul.f32 %v4607, %v4625
    %v4630 = vmul.f32 %v4609, %v4626
    %v4631 = vmul.f32 %v4611, %v4627
    %v4632 = vpack.c.bf16 %v4628, %v4628
    %v4633 = vpack.c.bf16 %v4629, %v4629
    %v4634 = vpack.c.bf16 %v4630, %v4630
    %v4635 = vpack.c.bf16 %v4631, %v4631
    %v4637 = vsel %vm796, %v4632, 0
    %v4640 = vsel %vm1042, %v4400, 0
    %4642 = vmatprep.subr.bf16.mxu0 0
    %4643 = vmatpush1.bf16.msra.mxu0 0
    %4644 = vmatprep.subr.bf16.mxu0 0
    %4645 = vmatpush1.bf16.msra.mxu0 0
    %4646 = vmatprep.subr.bf16.mxu0 0
    %4647 = vmatpush1.bf16.msra.mxu0 0
    %4648 = vmatprep.subr.bf16.mxu0 0
    %4649 = vmatpush1.bf16.msra.mxu0 0
    %4650 = vmatprep.subr.bf16.mxu0 0
    %4651 = vmatpush1.bf16.msra.mxu0 0
    %4652 = vmatprep.subr.bf16.mxu0 0
    %4653 = vmatpush1.bf16.msra.mxu0 0
    %4654 = vmatprep.subr.bf16.mxu0 0
    %4655 = vmatpush1.bf16.msra.mxu0 0
    %4656 = vmatprep.subr.bf16.mxu0 0
    %4657 = vmatpush1.bf16.msra.mxu0 %v4640
    %4658 = vmatprep.subr.bf16.mxu0 0
    %4659 = vmatpush2.bf16.msra.mxu0 0
    %4660 = vmatprep.subr.bf16.mxu0 0
    %4661 = vmatpush2.bf16.msra.mxu0 0
    %4662 = vmatprep.subr.bf16.mxu0 0
    %4663 = vmatpush2.bf16.msra.mxu0 0
    %4664 = vmatprep.subr.bf16.mxu0 0
    %4665 = vmatpush2.bf16.msra.mxu0 0
    %4666 = vmatprep.subr.bf16.mxu0 0
    %4667 = vmatpush2.bf16.msra.mxu0 0
    %4668 = vmatprep.subr.bf16.mxu0 0
    %4669 = vmatpush2.bf16.msra.mxu0 0
    %4670 = vmatprep.subr.bf16.mxu0 0
    %4671 = vmatpush2.bf16.msra.mxu0 0
    %4672 = vmatprep.subr.bf16.mxu0 0
    %4673 = vmatpush2.bf16.msra.mxu0 0
    %4674 = vmatprep.mubr.bf16.mxu0 0
    %4675 = vmatmul.mubr.bf16.gmra.mxu0 %v4637
    %v4676 = vpop.f32.mrf.mxu0
    %v4677 = vadd.f32 0.0, %v4676
    %v4678 = vpop.f32.mrf.mxu0
    %v4679 = vpop.f32.mrf.mxu0
    %v4680 = vpop.f32.mrf.mxu0
    %4681 = vdwg.mxu0
    %v4683 = vsel %vm796, %v4633, 0
    %v4686 = vsel %vm1042, %v4401, 0
    %4688 = vmatprep.subr.bf16.mxu0 0
    %4689 = vmatpush1.bf16.msra.mxu0 0
    %4690 = vmatprep.subr.bf16.mxu0 0
    %4691 = vmatpush1.bf16.msra.mxu0 0
    %4692 = vmatprep.subr.bf16.mxu0 0
    %4693 = vmatpush1.bf16.msra.mxu0 0
    %4694 = vmatprep.subr.bf16.mxu0 0
    %4695 = vmatpush1.bf16.msra.mxu0 0
    %4696 = vmatprep.subr.bf16.mxu0 0
    %4697 = vmatpush1.bf16.msra.mxu0 0
    %4698 = vmatprep.subr.bf16.mxu0 0
    %4699 = vmatpush1.bf16.msra.mxu0 0
    %4700 = vmatprep.subr.bf16.mxu0 0
    %4701 = vmatpush1.bf16.msra.mxu0 0
    %4702 = vmatprep.subr.bf16.mxu0 0
    %4703 = vmatpush1.bf16.msra.mxu0 %v4686
    %4704 = vmatprep.subr.bf16.mxu0 0
    %4705 = vmatpush2.bf16.msra.mxu0 0
    %4706 = vmatprep.subr.bf16.mxu0 0
    %4707 = vmatpush2.bf16.msra.mxu0 0
    %4708 = vmatprep.subr.bf16.mxu0 0
    %4709 = vmatpush2.bf16.msra.mxu0 0
    %4710 = vmatprep.subr.bf16.mxu0 0
    %4711 = vmatpush2.bf16.msra.mxu0 0
    %4712 = vmatprep.subr.bf16.mxu0 0
    %4713 = vmatpush2.bf16.msra.mxu0 0
    %4714 = vmatprep.subr.bf16.mxu0 0
    %4715 = vmatpush2.bf16.msra.mxu0 0
    %4716 = vmatprep.subr.bf16.mxu0 0
    %4717 = vmatpush2.bf16.msra.mxu0 0
    %4718 = vmatprep.subr.bf16.mxu0 0
    %4719 = vmatpush2.bf16.msra.mxu0 0
    %4720 = vmatprep.mubr.bf16.mxu0 0
    %4721 = vmatmul.mubr.bf16.gmra.mxu0 %v4683
    %v4722 = vpop.f32.mrf.mxu0
    %v4723 = vadd.f32 0.0, %v4722
    %v4724 = vpop.f32.mrf.mxu0
    %v4725 = vpop.f32.mrf.mxu0
    %v4726 = vpop.f32.mrf.mxu0
    %4727 = vdwg.mxu0
    %v4729 = vsel %vm796, %v4634, 0
    %v4732 = vsel %vm1042, %v4402, 0
    %4734 = vmatprep.subr.bf16.mxu0 0
    %4735 = vmatpush1.bf16.msra.mxu0 0
    %4736 = vmatprep.subr.bf16.mxu0 0
    %4737 = vmatpush1.bf16.msra.mxu0 0
    %4738 = vmatprep.subr.bf16.mxu0 0
    %4739 = vmatpush1.bf16.msra.mxu0 0
    %4740 = vmatprep.subr.bf16.mxu0 0
    %4741 = vmatpush1.bf16.msra.mxu0 0
    %4742 = vmatprep.subr.bf16.mxu0 0
    %4743 = vmatpush1.bf16.msra.mxu0 0
    %4744 = vmatprep.subr.bf16.mxu0 0
    %4745 = vmatpush1.bf16.msra.mxu0 0
    %4746 = vmatprep.subr.bf16.mxu0 0
    %4747 = vmatpush1.bf16.msra.mxu0 0
    %4748 = vmatprep.subr.bf16.mxu0 0
    %4749 = vmatpush1.bf16.msra.mxu0 %v4732
    %4750 = vmatprep.subr.bf16.mxu0 0
    %4751 = vmatpush2.bf16.msra.mxu0 0
    %4752 = vmatprep.subr.bf16.mxu0 0
    %4753 = vmatpush2.bf16.msra.mxu0 0
    %4754 = vmatprep.subr.bf16.mxu0 0
    %4755 = vmatpush2.bf16.msra.mxu0 0
    %4756 = vmatprep.subr.bf16.mxu0 0
    %4757 = vmatpush2.bf16.msra.mxu0 0
    %4758 = vmatprep.subr.bf16.mxu0 0
    %4759 = vmatpush2.bf16.msra.mxu0 0
    %4760 = vmatprep.subr.bf16.mxu0 0
    %4761 = vmatpush2.bf16.msra.mxu0 0
    %4762 = vmatprep.subr.bf16.mxu0 0
    %4763 = vmatpush2.bf16.msra.mxu0 0
    %4764 = vmatprep.subr.bf16.mxu0 0
    %4765 = vmatpush2.bf16.msra.mxu0 0
    %4766 = vmatprep.mubr.bf16.mxu0 0
    %4767 = vmatmul.mubr.bf16.gmra.mxu0 %v4729
    %v4768 = vpop.f32.mrf.mxu0
    %v4769 = vadd.f32 0.0, %v4768
    %v4770 = vpop.f32.mrf.mxu0
    %v4771 = vpop.f32.mrf.mxu0
    %v4772 = vpop.f32.mrf.mxu0
    %4773 = vdwg.mxu0
    %v4775 = vsel %vm796, %v4635, 0
    %v4778 = vsel %vm1042, %v4403, 0
    %4780 = vmatprep.subr.bf16.mxu0 0
    %4781 = vmatpush1.bf16.msra.mxu0 0
    %4782 = vmatprep.subr.bf16.mxu0 0
    %4783 = vmatpush1.bf16.msra.mxu0 0
    %4784 = vmatprep.subr.bf16.mxu0 0
    %4785 = vmatpush1.bf16.msra.mxu0 0
    %4786 = vmatprep.subr.bf16.mxu0 0
    %4787 = vmatpush1.bf16.msra.mxu0 0
    %4788 = vmatprep.subr.bf16.mxu0 0
    %4789 = vmatpush1.bf16.msra.mxu0 0
    %4790 = vmatprep.subr.bf16.mxu0 0
    %4791 = vmatpush1.bf16.msra.mxu0 0
    %4792 = vmatprep.subr.bf16.mxu0 0
    %4793 = vmatpush1.bf16.msra.mxu0 0
    %4794 = vmatprep.subr.bf16.mxu0 0
    %4795 = vmatpush1.bf16.msra.mxu0 %v4778
    %4796 = vmatprep.subr.bf16.mxu0 0
    %4797 = vmatpush2.bf16.msra.mxu0 0
    %4798 = vmatprep.subr.bf16.mxu0 0
    %4799 = vmatpush2.bf16.msra.mxu0 0
    %4800 = vmatprep.subr.bf16.mxu0 0
    %4801 = vmatpush2.bf16.msra.mxu0 0
    %4802 = vmatprep.subr.bf16.mxu0 0
    %4803 = vmatpush2.bf16.msra.mxu0 0
    %4804 = vmatprep.subr.bf16.mxu0 0
    %4805 = vmatpush2.bf16.msra.mxu0 0
    %4806 = vmatprep.subr.bf16.mxu0 0
    %4807 = vmatpush2.bf16.msra.mxu0 0
    %4808 = vmatprep.subr.bf16.mxu0 0
    %4809 = vmatpush2.bf16.msra.mxu0 0
    %4810 = vmatprep.subr.bf16.mxu0 0
    %4811 = vmatpush2.bf16.msra.mxu0 0
    %4812 = vmatprep.mubr.bf16.mxu0 0
    %4813 = vmatmul.mubr.bf16.gmra.mxu0 %v4775
    %v4814 = vpop.f32.mrf.mxu0
    %v4815 = vadd.f32 0.0, %v4814
    %v4816 = vpop.f32.mrf.mxu0
    %v4817 = vpop.f32.mrf.mxu0
    %v4818 = vpop.f32.mrf.mxu0
    %4819 = vdwg.mxu0
    %v4820 = vcombine.low %v4677, %v4769
    %v4821 = vcombine.high %v4677, %v4769
    %v4823 = vunpack.c.l.s4 1983009808
    %v4824 = vunpack.c.0.s8 %v4823
    %v4825 = vlaneseq
    %v4826 = vshrl.u32 %v4825, 7
    %v4827 = vsub.s32 %v4824, %v4826
    %v4828 = vrot.slane %v4820, %v4827
    %v4830 = vunpack.c.l.s4 1983009808
    %v4831 = vunpack.c.0.s8 %v4830
    %v4832 = vlaneseq
    %v4833 = vshrl.u32 %v4832, 7
    %v4834 = vsub.s32 %v4831, %v4833
    %v4835 = vrot.slane %v4821, %v4834
    %v4836 = vcombine.low %v4723, %v4815
    %v4837 = vcombine.high %v4723, %v4815
    %v4839 = vunpack.c.l.s4 1983009808
    %v4840 = vunpack.c.0.s8 %v4839
    %v4841 = vlaneseq
    %v4842 = vshrl.u32 %v4841, 7
    %v4843 = vsub.s32 %v4840, %v4842
    %v4844 = vrot.slane %v4836, %v4843
    %v4846 = vunpack.c.l.s4 1983009808
    %v4847 = vunpack.c.0.s8 %v4846
    %v4848 = vlaneseq
    %v4849 = vshrl.u32 %v4848, 7
    %v4850 = vsub.s32 %v4847, %v4849
    %v4851 = vrot.slane %v4837, %v4850
    %v4852 = vcombine.low %v4828, %v4844
    %v4853 = vcombine.high %v4828, %v4844
    %v4855 = vunpack.c.l.s4 1934713408
    %v4856 = vunpack.c.0.s8 %v4855
    %v4857 = vlaneseq
    %v4858 = vshrl.u32 %v4857, 7
    %v4859 = vsub.s32 %v4856, %v4858
    %v4860 = vrot.slane %v4852, %v4859
    %v4862 = vunpack.c.l.s4 1934713408
    %v4863 = vunpack.c.0.s8 %v4862
    %v4864 = vlaneseq
    %v4865 = vshrl.u32 %v4864, 7
    %v4866 = vsub.s32 %v4863, %v4865
    %v4867 = vrot.slane %v4853, %v4866
    %v4868 = vcombine.low %v4835, %v4851
    %v4869 = vcombine.high %v4835, %v4851
    %v4871 = vunpack.c.l.s4 1934713408
    %v4872 = vunpack.c.0.s8 %v4871
    %v4873 = vlaneseq
    %v4874 = vshrl.u32 %v4873, 7
    %v4875 = vsub.s32 %v4872, %v4874
    %v4876 = vrot.slane %v4868, %v4875
    %v4878 = vunpack.c.l.s4 1934713408
    %v4879 = vunpack.c.0.s8 %v4878
    %v4880 = vlaneseq
    %v4881 = vshrl.u32 %v4880, 7
    %v4882 = vsub.s32 %v4879, %v4881
    %v4883 = vrot.slane %v4869, %v4882
    %v4884 = vcombine.high %v4860, 0.0
    %v4885 = vcombine.high %v4867, 0.0
    %v4886 = vcombine.high %v4876, 0.0
    %v4887 = vcombine.high %v4883, 0.0
    %v4888 = vcombine.low %v4860, %v4867
    %v4890 = vunpack.c.l.s4 1983009808
    %v4891 = vunpack.c.0.s8 %v4890
    %v4892 = vlaneseq
    %v4893 = vshrl.u32 %v4892, 7
    %v4894 = vsub.s32 %v4891, %v4893
    %v4895 = vrot.slane %v4888, %v4894
    %v4896 = vcombine.low %v4884, %v4885
    %v4898 = vunpack.c.l.s4 1983009808
    %v4899 = vunpack.c.0.s8 %v4898
    %v4900 = vlaneseq
    %v4901 = vshrl.u32 %v4900, 7
    %v4902 = vsub.s32 %v4899, %v4901
    %v4903 = vrot.slane %v4896, %v4902
    %v4904 = vcombine.low %v4876, %v4883
    %v4906 = vunpack.c.l.s4 1983009808
    %v4907 = vunpack.c.0.s8 %v4906
    %v4908 = vlaneseq
    %v4909 = vshrl.u32 %v4908, 7
    %v4910 = vsub.s32 %v4907, %v4909
    %v4911 = vrot.slane %v4904, %v4910
    %v4912 = vcombine.low %v4886, %v4887
    %v4914 = vunpack.c.l.s4 1983009808
    %v4915 = vunpack.c.0.s8 %v4914
    %v4916 = vlaneseq
    %v4917 = vshrl.u32 %v4916, 7
    %v4918 = vsub.s32 %v4915, %v4917
    %v4919 = vrot.slane %v4912, %v4918
    %v4920 = vcombine.low %v4895, %v4903
    %v4921 = vcombine.high %v4895, %v4903
    %v4923 = vunpack.c.l.s4 1934713408
    %v4924 = vunpack.c.0.s8 %v4923
    %v4925 = vlaneseq
    %v4926 = vshrl.u32 %v4925, 7
    %v4927 = vsub.s32 %v4924, %v4926
    %v4928 = vrot.slane %v4920, %v4927
    %v4930 = vunpack.c.l.s4 1934713408
    %v4931 = vunpack.c.0.s8 %v4930
    %v4932 = vlaneseq
    %v4933 = vshrl.u32 %v4932, 7
    %v4934 = vsub.s32 %v4931, %v4933
    %v4935 = vrot.slane %v4921, %v4934
    %v4936 = vcombine.low %v4911, %v4919
    %v4937 = vcombine.high %v4911, %v4919
    %v4939 = vunpack.c.l.s4 1934713408
    %v4940 = vunpack.c.0.s8 %v4939
    %v4941 = vlaneseq
    %v4942 = vshrl.u32 %v4941, 7
    %v4943 = vsub.s32 %v4940, %v4942
    %v4944 = vrot.slane %v4936, %v4943
    %v4946 = vunpack.c.l.s4 1934713408
    %v4947 = vunpack.c.0.s8 %v4946
    %v4948 = vlaneseq
    %v4949 = vshrl.u32 %v4948, 7
    %v4950 = vsub.s32 %v4947, %v4949
    %v4951 = vrot.slane %v4937, %v4950
    %v4952 = vcombine.low %v4928, %v4944
    %v4953 = vcombine.high %v4928, %v4944
    %v4954 = vcombine.low %v4935, %v4951
    %v4955 = vcombine.high %v4935, %v4951
    %4957 = vrot.lane.b32.xlu0 %v4953, 8
    %v4958 = vpop.permute.xlu0 %4957
    %4961 = vrot.lane.b32.xlu0 %v4954, 16
    %v4962 = vpop.permute.xlu0 %4961
    %4965 = vrot.lane.b32.xlu0 %v4955, 24
    %v4966 = vpop.permute.xlu0 %4965
    %v4968 = vsel %vm796, %v4952, %v4958
    %v4969 = vsel %vm1373, %v4968, %v4962
    %v4970 = vsel %vm1375, %v4969, %v4966
    %v4971 = vld [vmem:[%s39] sm:$0xf]
    %v4972 = vld [vmem:[%s39 + $0x4] sm:$0xf]
    %v4973 = vld [vmem:[%s39 + $0x8] sm:$0xf]
    %v4974 = vld [vmem:[%s39 + $0xc] sm:$0xf]
    %v4975 = vpack.c.bf16 %v4970, %v3953
    %v4980 = vunpack.c.l.b16 %v4971
    %v4981 = vunpack.c.l.b16 %v4972
    %v4982 = vunpack.c.l.b16 %v4973
    %v4983 = vunpack.c.l.b16 %v4974
    %v4984 = vpack.c.b16 %v4981, %v4980
    %v4985 = vpack.c.b16 %v4983, %v4982
    %v4989 = vsel %vm147, %v4975, 0
    %4991 = vmatprep.subr.bf16.mxu0 0
    %4992 = vmatpush1.bf16.msra.mxu0 0
    %4993 = vmatprep.subr.bf16.mxu0 0
    %4994 = vmatpush1.bf16.msra.mxu0 0
    %4995 = vmatprep.subr.bf16.mxu0 0
    %4996 = vmatpush1.bf16.msra.mxu0 0
    %4997 = vmatprep.subr.bf16.mxu0 0
    %4998 = vmatpush1.bf16.msra.mxu0 0
    %4999 = vmatprep.subr.bf16.mxu0 0
    %5000 = vmatpush1.bf16.msra.mxu0 0
    %5001 = vmatprep.subr.bf16.mxu0 0
    %5002 = vmatpush1.bf16.msra.mxu0 0
    %5003 = vmatprep.subr.bf16.mxu0 0
    %5004 = vmatpush1.bf16.msra.mxu0 %v4985
    %5005 = vmatprep.subr.bf16.mxu0 0
    %5006 = vmatpush1.bf16.msra.mxu0 %v4984
    %5007 = vmatprep.subr.bf16.mxu0 0
    %5008 = vmatpush2.bf16.msra.mxu0 0
    %5009 = vmatprep.subr.bf16.mxu0 0
    %5010 = vmatpush2.bf16.msra.mxu0 0
    %5011 = vmatprep.subr.bf16.mxu0 0
    %5012 = vmatpush2.bf16.msra.mxu0 0
    %5013 = vmatprep.subr.bf16.mxu0 0
    %5014 = vmatpush2.bf16.msra.mxu0 0
    %5015 = vmatprep.subr.bf16.mxu0 0
    %5016 = vmatpush2.bf16.msra.mxu0 0
    %5017 = vmatprep.subr.bf16.mxu0 0
    %5018 = vmatpush2.bf16.msra.mxu0 0
    %5019 = vmatprep.subr.bf16.mxu0 0
    %5020 = vmatpush2.bf16.msra.mxu0 0
    %5021 = vmatprep.subr.bf16.mxu0 0
    %5022 = vmatpush2.bf16.msra.mxu0 0
    %5023 = vmatprep.mubr.bf16.mxu0 0
    %5024 = vmatmul.mubr.bf16.gmra.mxu0 %v4989
    %v5025 = vpop.f32.mrf.mxu0
    %v5026 = vadd.f32 0.0, %v5025
    %v5027 = vpop.f32.mrf.mxu0
    %v5028 = vpop.f32.mrf.mxu0
    %v5029 = vadd.f32 0.0, %v5028
    %v5030 = vpop.f32.mrf.mxu0
    %5031 = vdwg.mxu0
    %v5032 = vadd.f32 %v2735, %v5026
    %v5033 = vadd.f32 %v2736, %v5029
    %v5034 = vld [vmem:[%s41] sm:$0x1]
    %v5035 = vmul.f32 %v5032, %v5032
    %v5036 = vmul.f32 %v5033, %v5033
    %v5037 = vsel %vm147, %v5035, 0.0
    %5038 = vadd.xlane.f32.xlu0 %v5037
    %v5039 = vpop.xlane.xlu0 %5038
    %v5040 = vsel %vm147, %v5036, 0.0
    %5041 = vadd.xlane.f32.xlu0 %v5040
    %v5042 = vpop.xlane.xlu0 %5041
    %v5043 = vmul.f32 %v5039, %v154
    %v5044 = vmul.f32 %v5042, %v154
    %v5045 = vadd.f32 %v5043, 1e-06
    %v5046 = vadd.f32 %v5044, 1e-06
    %v5047 = vrsqrt.pop %v5045
    %v5048 = vrsqrt.pop %v5046
    %v5049 = vmul.f32 %v5032, %v5047
    %v5050 = vmul.f32 %v5033, %v5048
    %v5052 = vlaneseq
    %v5053 = vshrl.u32 %v5052, 7
    %v5054 = vsub.s32 0, %v5053
    %v5055 = vrot.slane %v5034, %v5054
    %v5057 = vmul.f32 %v5049, %v5055
    %v5058 = vmul.f32 %v5050, %v5055
    %v5059 = vld [vmem:[%s43] sm:$0xf]
    %v5060 = vld [vmem:[%s43 + $0x4] sm:$0xf]
    %v5061 = vld [vmem:[%s43 + $0x8] sm:$0xf]
    %v5062 = vld [vmem:[%s43 + $0xc] sm:$0xf]
    %v5063 = vpack.c.bf16 %v5058, %v5057
    %v5068 = vunpack.c.l.b16 %v5059
    %v5069 = vunpack.c.l.b16 %v5060
    %v5070 = vunpack.c.l.b16 %v5061
    %v5071 = vunpack.c.l.b16 %v5062
    %v5072 = vpack.c.b16 %v5069, %v5068
    %v5073 = vpack.c.b16 %v5071, %v5070
    %v5077 = vsel %vm147, %v5063, 0
    %5079 = vmatprep.subr.bf16.mxu0 0
    %5080 = vmatpush1.bf16.msra.mxu0 0
    %5081 = vmatprep.subr.bf16.mxu0 0
    %5082 = vmatpush1.bf16.msra.mxu0 0
    %5083 = vmatprep.subr.bf16.mxu0 0
    %5084 = vmatpush1.bf16.msra.mxu0 0
    %5085 = vmatprep.subr.bf16.mxu0 0
    %5086 = vmatpush1.bf16.msra.mxu0 0
    %5087 = vmatprep.subr.bf16.mxu0 0
    %5088 = vmatpush1.bf16.msra.mxu0 0
    %5089 = vmatprep.subr.bf16.mxu0 0
    %5090 = vmatpush1.bf16.msra.mxu0 0
    %5091 = vmatprep.subr.bf16.mxu0 0
    %5092 = vmatpush1.bf16.msra.mxu0 %v5073
    %5093 = vmatprep.subr.bf16.mxu0 0
    %5094 = vmatpush1.bf16.msra.mxu0 %v5072
    %5095 = vmatprep.subr.bf16.mxu0 0
    %5096 = vmatpush2.bf16.msra.mxu0 0
    %5097 = vmatprep.subr.bf16.mxu0 0
    %5098 = vmatpush2.bf16.msra.mxu0 0
    %5099 = vmatprep.subr.bf16.mxu0 0
    %5100 = vmatpush2.bf16.msra.mxu0 0
    %5101 = vmatprep.subr.bf16.mxu0 0
    %5102 = vmatpush2.bf16.msra.mxu0 0
    %5103 = vmatprep.subr.bf16.mxu0 0
    %5104 = vmatpush2.bf16.msra.mxu0 0
    %5105 = vmatprep.subr.bf16.mxu0 0
    %5106 = vmatpush2.bf16.msra.mxu0 0
    %5107 = vmatprep.subr.bf16.mxu0 0
    %5108 = vmatpush2.bf16.msra.mxu0 0
    %5109 = vmatprep.subr.bf16.mxu0 0
    %5110 = vmatpush2.bf16.msra.mxu0 0
    %5111 = vmatprep.mubr.bf16.mxu0 0
    %5112 = vmatmul.mubr.bf16.gmra.mxu0 %v5077
    %v5113 = vpop.f32.mrf.mxu0
    %v5114 = vadd.f32 0.0, %v5113
    %v5115 = vpop.f32.mrf.mxu0
    %v5116 = vpop.f32.mrf.mxu0
    %v5117 = vadd.f32 0.0, %v5116
    %v5118 = vpop.f32.mrf.mxu0
    %5119 = vdwg.mxu0
    %v5120 = vld [vmem:[%s45] sm:$0xf]
    %v5121 = vld [vmem:[%s45 + $0x4] sm:$0xf]
    %v5122 = vld [vmem:[%s45 + $0x8] sm:$0xf]
    %v5123 = vld [vmem:[%s45 + $0xc] sm:$0xf]
    %v5124 = vpack.c.bf16 %v2734, %v2733
    %v5129 = vunpack.c.l.b16 %v5120
    %v5130 = vunpack.c.l.b16 %v5121
    %v5131 = vunpack.c.l.b16 %v5122
    %v5132 = vunpack.c.l.b16 %v5123
    %v5133 = vpack.c.b16 %v5130, %v5129
    %v5134 = vpack.c.b16 %v5132, %v5131
    %v5138 = vsel %vm147, %v5124, 0
    %5140 = vmatprep.subr.bf16.mxu0 0
    %5141 = vmatpush1.bf16.msra.mxu0 0
    %5142 = vmatprep.subr.bf16.mxu0 0
    %5143 = vmatpush1.bf16.msra.mxu0 0
    %5144 = vmatprep.subr.bf16.mxu0 0
    %5145 = vmatpush1.bf16.msra.mxu0 0
    %5146 = vmatprep.subr.bf16.mxu0 0
    %5147 = vmatpush1.bf16.msra.mxu0 0
    %5148 = vmatprep.subr.bf16.mxu0 0
    %5149 = vmatpush1.bf16.msra.mxu0 0
    %5150 = vmatprep.subr.bf16.mxu0 0
    %5151 = vmatpush1.bf16.msra.mxu0 0
    %5152 = vmatprep.subr.bf16.mxu0 0
    %5153 = vmatpush1.bf16.msra.mxu0 %v5134
    %5154 = vmatprep.subr.bf16.mxu0 0
    %5155 = vmatpush1.bf16.msra.mxu0 %v5133
    %5156 = vmatprep.subr.bf16.mxu0 0
    %5157 = vmatpush2.bf16.msra.mxu0 0
    %5158 = vmatprep.subr.bf16.mxu0 0
    %5159 = vmatpush2.bf16.msra.mxu0 0
    %5160 = vmatprep.subr.bf16.mxu0 0
    %5161 = vmatpush2.bf16.msra.mxu0 0
    %5162 = vmatprep.subr.bf16.mxu0 0
    %5163 = vmatpush2.bf16.msra.mxu0 0
    %5164 = vmatprep.subr.bf16.mxu0 0
    %5165 = vmatpush2.bf16.msra.mxu0 0
    %5166 = vmatprep.subr.bf16.mxu0 0
    %5167 = vmatpush2.bf16.msra.mxu0 0
    %5168 = vmatprep.subr.bf16.mxu0 0
    %5169 = vmatpush2.bf16.msra.mxu0 0
    %5170 = vmatprep.subr.bf16.mxu0 0
    %5171 = vmatpush2.bf16.msra.mxu0 0
    %5172 = vmatprep.mubr.bf16.mxu0 0
    %5173 = vmatmul.mubr.bf16.gmra.mxu0 %v5138
    %v5174 = vpop.f32.mrf.mxu0
    %v5175 = vadd.f32 0.0, %v5174
    %v5176 = vpop.f32.mrf.mxu0
    %v5177 = vpop.f32.mrf.mxu0
    %v5178 = vadd.f32 0.0, %v5177
    %v5179 = vpop.f32.mrf.mxu0
    %5180 = vdwg.mxu0
    %v5181 = vld [vmem:[%s47] sm:$0xf]
    %v5182 = vld [vmem:[%s47 + $0x4] sm:$0xf]
    %v5183 = vld [vmem:[%s47 + $0x8] sm:$0xf]
    %v5184 = vld [vmem:[%s47 + $0xc] sm:$0xf]
    %v5189 = vunpack.c.l.b16 %v5181
    %v5190 = vunpack.c.l.b16 %v5182
    %v5191 = vunpack.c.l.b16 %v5183
    %v5192 = vunpack.c.l.b16 %v5184
    %v5193 = vpack.c.b16 %v5190, %v5189
    %v5194 = vpack.c.b16 %v5192, %v5191
    %5197 = vmatprep.subr.bf16.mxu0 0
    %5198 = vmatpush1.bf16.msra.mxu0 0
    %5199 = vmatprep.subr.bf16.mxu0 0
    %5200 = vmatpush1.bf16.msra.mxu0 0
    %5201 = vmatprep.subr.bf16.mxu0 0
    %5202 = vmatpush1.bf16.msra.mxu0 0
    %5203 = vmatprep.subr.bf16.mxu0 0
    %5204 = vmatpush1.bf16.msra.mxu0 0
    %5205 = vmatprep.subr.bf16.mxu0 0
    %5206 = vmatpush1.bf16.msra.mxu0 0
    %5207 = vmatprep.subr.bf16.mxu0 0
    %5208 = vmatpush1.bf16.msra.mxu0 0
    %5209 = vmatprep.subr.bf16.mxu0 0
    %5210 = vmatpush1.bf16.msra.mxu0 %v5194
    %5211 = vmatprep.subr.bf16.mxu0 0
    %5212 = vmatpush1.bf16.msra.mxu0 %v5193
    %5213 = vmatprep.subr.bf16.mxu0 0
    %5214 = vmatpush2.bf16.msra.mxu0 0
    %5215 = vmatprep.subr.bf16.mxu0 0
    %5216 = vmatpush2.bf16.msra.mxu0 0
    %5217 = vmatprep.subr.bf16.mxu0 0
    %5218 = vmatpush2.bf16.msra.mxu0 0
    %5219 = vmatprep.subr.bf16.mxu0 0
    %5220 = vmatpush2.bf16.msra.mxu0 0
    %5221 = vmatprep.subr.bf16.mxu0 0
    %5222 = vmatpush2.bf16.msra.mxu0 0
    %5223 = vmatprep.subr.bf16.mxu0 0
    %5224 = vmatpush2.bf16.msra.mxu0 0
    %5225 = vmatprep.subr.bf16.mxu0 0
    %5226 = vmatpush2.bf16.msra.mxu0 0
    %5227 = vmatprep.subr.bf16.mxu0 0
    %5228 = vmatpush2.bf16.msra.mxu0 0
    %5229 = vmatprep.mubr.bf16.mxu0 0
    %5230 = vmatmul.mubr.bf16.gmra.mxu0 %v5138
    %v5231 = vpop.f32.mrf.mxu0
    %v5232 = vadd.f32 0.0, %v5231
    %v5233 = vpop.f32.mrf.mxu0
    %v5234 = vpop.f32.mrf.mxu0
    %v5235 = vadd.f32 0.0, %v5234
    %v5236 = vpop.f32.mrf.mxu0
    %5237 = vdwg.mxu0
    %5239 = vrot.lane.b32.xlu0 %v5114, 120
    %v5240 = vpop.permute.xlu0 %5239
    %5242 = vrot.lane.b32.xlu0 %v5114, 112
    %v5243 = vpop.permute.xlu0 %5242
    %5245 = vrot.lane.b32.xlu0 %v5114, 104
    %v5246 = vpop.permute.xlu0 %5245
    %v5248 = vcombine.low %v5114, %v5243
    %v5249 = vcombine.high %v5114, %v5243
    %v5251 = vunpack.c.l.s4 1983009808
    %v5252 = vunpack.c.0.s8 %v5251
    %v5253 = vlaneseq
    %v5254 = vshrl.u32 %v5253, 7
    %v5255 = vsub.s32 %v5252, %v5254
    %v5256 = vrot.slane %v5248, %v5255
    %v5258 = vunpack.c.l.s4 1983009808
    %v5259 = vunpack.c.0.s8 %v5258
    %v5260 = vlaneseq
    %v5261 = vshrl.u32 %v5260, 7
    %v5262 = vsub.s32 %v5259, %v5261
    %v5263 = vrot.slane %v5249, %v5262
    %v5264 = vcombine.low %v5240, %v5246
    %v5265 = vcombine.high %v5240, %v5246
    %v5267 = vunpack.c.l.s4 1983009808
    %v5268 = vunpack.c.0.s8 %v5267
    %v5269 = vlaneseq
    %v5270 = vshrl.u32 %v5269, 7
    %v5271 = vsub.s32 %v5268, %v5270
    %v5272 = vrot.slane %v5264, %v5271
    %v5274 = vunpack.c.l.s4 1983009808
    %v5275 = vunpack.c.0.s8 %v5274
    %v5276 = vlaneseq
    %v5277 = vshrl.u32 %v5276, 7
    %v5278 = vsub.s32 %v5275, %v5277
    %v5279 = vrot.slane %v5265, %v5278
    %v5280 = vcombine.low %v5256, %v5272
    %v5281 = vcombine.high %v5256, %v5272
    %v5283 = vunpack.c.l.s4 1934713408
    %v5284 = vunpack.c.0.s8 %v5283
    %v5285 = vlaneseq
    %v5286 = vshrl.u32 %v5285, 7
    %v5287 = vsub.s32 %v5284, %v5286
    %v5288 = vrot.slane %v5280, %v5287
    %v5290 = vunpack.c.l.s4 1934713408
    %v5291 = vunpack.c.0.s8 %v5290
    %v5292 = vlaneseq
    %v5293 = vshrl.u32 %v5292, 7
    %v5294 = vsub.s32 %v5291, %v5293
    %v5295 = vrot.slane %v5281, %v5294
    %v5296 = vcombine.low %v5263, %v5279
    %v5297 = vcombine.high %v5263, %v5279
    %v5299 = vunpack.c.l.s4 1934713408
    %v5300 = vunpack.c.0.s8 %v5299
    %v5301 = vlaneseq
    %v5302 = vshrl.u32 %v5301, 7
    %v5303 = vsub.s32 %v5300, %v5302
    %v5304 = vrot.slane %v5296, %v5303
    %v5306 = vunpack.c.l.s4 1934713408
    %v5307 = vunpack.c.0.s8 %v5306
    %v5308 = vlaneseq
    %v5309 = vshrl.u32 %v5308, 7
    %v5310 = vsub.s32 %v5307, %v5309
    %v5311 = vrot.slane %v5297, %v5310
    %v5312 = vcombine.high %v5288, 0.0
    %v5313 = vcombine.high %v5295, 0.0
    %v5314 = vcombine.high %v5304, 0.0
    %v5315 = vcombine.high %v5311, 0.0
    %v5316 = vcombine.low %v5288, %v5295
    %v5318 = vunpack.c.l.s4 1983009808
    %v5319 = vunpack.c.0.s8 %v5318
    %v5320 = vlaneseq
    %v5321 = vshrl.u32 %v5320, 7
    %v5322 = vsub.s32 %v5319, %v5321
    %v5323 = vrot.slane %v5316, %v5322
    %v5324 = vcombine.low %v5312, %v5313
    %v5326 = vunpack.c.l.s4 1983009808
    %v5327 = vunpack.c.0.s8 %v5326
    %v5328 = vlaneseq
    %v5329 = vshrl.u32 %v5328, 7
    %v5330 = vsub.s32 %v5327, %v5329
    %v5331 = vrot.slane %v5324, %v5330
    %v5332 = vcombine.low %v5304, %v5311
    %v5334 = vunpack.c.l.s4 1983009808
    %v5335 = vunpack.c.0.s8 %v5334
    %v5336 = vlaneseq
    %v5337 = vshrl.u32 %v5336, 7
    %v5338 = vsub.s32 %v5335, %v5337
    %v5339 = vrot.slane %v5332, %v5338
    %v5340 = vcombine.low %v5314, %v5315
    %v5342 = vunpack.c.l.s4 1983009808
    %v5343 = vunpack.c.0.s8 %v5342
    %v5344 = vlaneseq
    %v5345 = vshrl.u32 %v5344, 7
    %v5346 = vsub.s32 %v5343, %v5345
    %v5347 = vrot.slane %v5340, %v5346
    %v5348 = vcombine.low %v5323, %v5331
    %v5349 = vcombine.high %v5323, %v5331
    %v5351 = vunpack.c.l.s4 1934713408
    %v5352 = vunpack.c.0.s8 %v5351
    %v5353 = vlaneseq
    %v5354 = vshrl.u32 %v5353, 7
    %v5355 = vsub.s32 %v5352, %v5354
    %v5356 = vrot.slane %v5348, %v5355
    %v5358 = vunpack.c.l.s4 1934713408
    %v5359 = vunpack.c.0.s8 %v5358
    %v5360 = vlaneseq
    %v5361 = vshrl.u32 %v5360, 7
    %v5362 = vsub.s32 %v5359, %v5361
    %v5363 = vrot.slane %v5349, %v5362
    %v5364 = vcombine.low %v5339, %v5347
    %v5365 = vcombine.high %v5339, %v5347
    %v5367 = vunpack.c.l.s4 1934713408
    %v5368 = vunpack.c.0.s8 %v5367
    %v5369 = vlaneseq
    %v5370 = vshrl.u32 %v5369, 7
    %v5371 = vsub.s32 %v5368, %v5370
    %v5372 = vrot.slane %v5364, %v5371
    %v5374 = vunpack.c.l.s4 1934713408
    %v5375 = vunpack.c.0.s8 %v5374
    %v5376 = vlaneseq
    %v5377 = vshrl.u32 %v5376, 7
    %v5378 = vsub.s32 %v5375, %v5377
    %v5379 = vrot.slane %v5365, %v5378
    %v5380 = vcombine.low %v5356, %v5372
    %v5381 = vcombine.high %v5356, %v5372
    %v5382 = vcombine.low %v5363, %v5379
    %v5383 = vcombine.high %v5363, %v5379
    %v5384 = vpack.c.bf16 %v5380, %v5380
    %v5385 = vpack.c.bf16 %v5381, %v5381
    %v5386 = vpack.c.bf16 %v5382, %v5382
    %v5387 = vpack.c.bf16 %v5383, %v5383
    %5389 = vrot.lane.b32.xlu0 %v5175, 120
    %v5390 = vpop.permute.xlu0 %5389
    %5392 = vrot.lane.b32.xlu0 %v5175, 112
    %v5393 = vpop.permute.xlu0 %5392
    %5395 = vrot.lane.b32.xlu0 %v5175, 104
    %v5396 = vpop.permute.xlu0 %5395
    %v5398 = vcombine.low %v5175, %v5393
    %v5399 = vcombine.high %v5175, %v5393
    %v5401 = vunpack.c.l.s4 1983009808
    %v5402 = vunpack.c.0.s8 %v5401
    %v5403 = vlaneseq
    %v5404 = vshrl.u32 %v5403, 7
    %v5405 = vsub.s32 %v5402, %v5404
    %v5406 = vrot.slane %v5398, %v5405
    %v5408 = vunpack.c.l.s4 1983009808
    %v5409 = vunpack.c.0.s8 %v5408
    %v5410 = vlaneseq
    %v5411 = vshrl.u32 %v5410, 7
    %v5412 = vsub.s32 %v5409, %v5411
    %v5413 = vrot.slane %v5399, %v5412
    %v5414 = vcombine.low %v5390, %v5396
    %v5415 = vcombine.high %v5390, %v5396
    %v5417 = vunpack.c.l.s4 1983009808
    %v5418 = vunpack.c.0.s8 %v5417
    %v5419 = vlaneseq
    %v5420 = vshrl.u32 %v5419, 7
    %v5421 = vsub.s32 %v5418, %v5420
    %v5422 = vrot.slane %v5414, %v5421
    %v5424 = vunpack.c.l.s4 1983009808
    %v5425 = vunpack.c.0.s8 %v5424
    %v5426 = vlaneseq
    %v5427 = vshrl.u32 %v5426, 7
    %v5428 = vsub.s32 %v5425, %v5427
    %v5429 = vrot.slane %v5415, %v5428
    %v5430 = vcombine.low %v5406, %v5422
    %v5431 = vcombine.high %v5406, %v5422
    %v5433 = vunpack.c.l.s4 1934713408
    %v5434 = vunpack.c.0.s8 %v5433
    %v5435 = vlaneseq
    %v5436 = vshrl.u32 %v5435, 7
    %v5437 = vsub.s32 %v5434, %v5436
    %v5438 = vrot.slane %v5430, %v5437
    %v5440 = vunpack.c.l.s4 1934713408
    %v5441 = vunpack.c.0.s8 %v5440
    %v5442 = vlaneseq
    %v5443 = vshrl.u32 %v5442, 7
    %v5444 = vsub.s32 %v5441, %v5443
    %v5445 = vrot.slane %v5431, %v5444
    %v5446 = vcombine.low %v5413, %v5429
    %v5447 = vcombine.high %v5413, %v5429
    %v5449 = vunpack.c.l.s4 1934713408
    %v5450 = vunpack.c.0.s8 %v5449
    %v5451 = vlaneseq
    %v5452 = vshrl.u32 %v5451, 7
    %v5453 = vsub.s32 %v5450, %v5452
    %v5454 = vrot.slane %v5446, %v5453
    %v5456 = vunpack.c.l.s4 1934713408
    %v5457 = vunpack.c.0.s8 %v5456
    %v5458 = vlaneseq
    %v5459 = vshrl.u32 %v5458, 7
    %v5460 = vsub.s32 %v5457, %v5459
    %v5461 = vrot.slane %v5447, %v5460
    %v5462 = vcombine.high %v5438, 0.0
    %v5463 = vcombine.high %v5445, 0.0
    %v5464 = vcombine.high %v5454, 0.0
    %v5465 = vcombine.high %v5461, 0.0
    %v5466 = vcombine.low %v5438, %v5445
    %v5468 = vunpack.c.l.s4 1983009808
    %v5469 = vunpack.c.0.s8 %v5468
    %v5470 = vlaneseq
    %v5471 = vshrl.u32 %v5470, 7
    %v5472 = vsub.s32 %v5469, %v5471
    %v5473 = vrot.slane %v5466, %v5472
    %v5474 = vcombine.low %v5462, %v5463
    %v5476 = vunpack.c.l.s4 1983009808
    %v5477 = vunpack.c.0.s8 %v5476
    %v5478 = vlaneseq
    %v5479 = vshrl.u32 %v5478, 7
    %v5480 = vsub.s32 %v5477, %v5479
    %v5481 = vrot.slane %v5474, %v5480
    %v5482 = vcombine.low %v5454, %v5461
    %v5484 = vunpack.c.l.s4 1983009808
    %v5485 = vunpack.c.0.s8 %v5484
    %v5486 = vlaneseq
    %v5487 = vshrl.u32 %v5486, 7
    %v5488 = vsub.s32 %v5485, %v5487
    %v5489 = vrot.slane %v5482, %v5488
    %v5490 = vcombine.low %v5464, %v5465
    %v5492 = vunpack.c.l.s4 1983009808
    %v5493 = vunpack.c.0.s8 %v5492
    %v5494 = vlaneseq
    %v5495 = vshrl.u32 %v5494, 7
    %v5496 = vsub.s32 %v5493, %v5495
    %v5497 = vrot.slane %v5490, %v5496
    %v5498 = vcombine.low %v5473, %v5481
    %v5499 = vcombine.high %v5473, %v5481
    %v5501 = vunpack.c.l.s4 1934713408
    %v5502 = vunpack.c.0.s8 %v5501
    %v5503 = vlaneseq
    %v5504 = vshrl.u32 %v5503, 7
    %v5505 = vsub.s32 %v5502, %v5504
    %v5506 = vrot.slane %v5498, %v5505
    %v5508 = vunpack.c.l.s4 1934713408
    %v5509 = vunpack.c.0.s8 %v5508
    %v5510 = vlaneseq
    %v5511 = vshrl.u32 %v5510, 7
    %v5512 = vsub.s32 %v5509, %v5511
    %v5513 = vrot.slane %v5499, %v5512
    %v5514 = vcombine.low %v5489, %v5497
    %v5515 = vcombine.high %v5489, %v5497
    %v5517 = vunpack.c.l.s4 1934713408
    %v5518 = vunpack.c.0.s8 %v5517
    %v5519 = vlaneseq
    %v5520 = vshrl.u32 %v5519, 7
    %v5521 = vsub.s32 %v5518, %v5520
    %v5522 = vrot.slane %v5514, %v5521
    %v5524 = vunpack.c.l.s4 1934713408
    %v5525 = vunpack.c.0.s8 %v5524
    %v5526 = vlaneseq
    %v5527 = vshrl.u32 %v5526, 7
    %v5528 = vsub.s32 %v5525, %v5527
    %v5529 = vrot.slane %v5515, %v5528
    %v5530 = vcombine.low %v5506, %v5522
    %v5531 = vcombine.high %v5506, %v5522
    %v5532 = vcombine.low %v5513, %v5529
    %v5533 = vcombine.high %v5513, %v5529
    %v5534 = vpack.c.bf16 %v5530, %v5530
    %v5535 = vpack.c.bf16 %v5531, %v5531
    %v5536 = vpack.c.bf16 %v5532, %v5532
    %v5537 = vpack.c.bf16 %v5533, %v5533
    %5539 = vrot.lane.b32.xlu0 %v5232, 120
    %v5540 = vpop.permute.xlu0 %5539
    %5542 = vrot.lane.b32.xlu0 %v5232, 112
    %v5543 = vpop.permute.xlu0 %5542
    %5545 = vrot.lane.b32.xlu0 %v5232, 104
    %v5546 = vpop.permute.xlu0 %5545
    %v5548 = vcombine.low %v5232, %v5543
    %v5549 = vcombine.high %v5232, %v5543
    %v5551 = vunpack.c.l.s4 1983009808
    %v5552 = vunpack.c.0.s8 %v5551
    %v5553 = vlaneseq
    %v5554 = vshrl.u32 %v5553, 7
    %v5555 = vsub.s32 %v5552, %v5554
    %v5556 = vrot.slane %v5548, %v5555
    %v5558 = vunpack.c.l.s4 1983009808
    %v5559 = vunpack.c.0.s8 %v5558
    %v5560 = vlaneseq
    %v5561 = vshrl.u32 %v5560, 7
    %v5562 = vsub.s32 %v5559, %v5561
    %v5563 = vrot.slane %v5549, %v5562
    %v5564 = vcombine.low %v5540, %v5546
    %v5565 = vcombine.high %v5540, %v5546
    %v5567 = vunpack.c.l.s4 1983009808
    %v5568 = vunpack.c.0.s8 %v5567
    %v5569 = vlaneseq
    %v5570 = vshrl.u32 %v5569, 7
    %v5571 = vsub.s32 %v5568, %v5570
    %v5572 = vrot.slane %v5564, %v5571
    %v5574 = vunpack.c.l.s4 1983009808
    %v5575 = vunpack.c.0.s8 %v5574
    %v5576 = vlaneseq
    %v5577 = vshrl.u32 %v5576, 7
    %v5578 = vsub.s32 %v5575, %v5577
    %v5579 = vrot.slane %v5565, %v5578
    %v5580 = vcombine.low %v5556, %v5572
    %v5581 = vcombine.high %v5556, %v5572
    %v5583 = vunpack.c.l.s4 1934713408
    %v5584 = vunpack.c.0.s8 %v5583
    %v5585 = vlaneseq
    %v5586 = vshrl.u32 %v5585, 7
    %v5587 = vsub.s32 %v5584, %v5586
    %v5588 = vrot.slane %v5580, %v5587
    %v5590 = vunpack.c.l.s4 1934713408
    %v5591 = vunpack.c.0.s8 %v5590
    %v5592 = vlaneseq
    %v5593 = vshrl.u32 %v5592, 7
    %v5594 = vsub.s32 %v5591, %v5593
    %v5595 = vrot.slane %v5581, %v5594
    %v5596 = vcombine.low %v5563, %v5579
    %v5597 = vcombine.high %v5563, %v5579
    %v5599 = vunpack.c.l.s4 1934713408
    %v5600 = vunpack.c.0.s8 %v5599
    %v5601 = vlaneseq
    %v5602 = vshrl.u32 %v5601, 7
    %v5603 = vsub.s32 %v5600, %v5602
    %v5604 = vrot.slane %v5596, %v5603
    %v5606 = vunpack.c.l.s4 1934713408
    %v5607 = vunpack.c.0.s8 %v5606
    %v5608 = vlaneseq
    %v5609 = vshrl.u32 %v5608, 7
    %v5610 = vsub.s32 %v5607, %v5609
    %v5611 = vrot.slane %v5597, %v5610
    %v5612 = vcombine.high %v5588, 0.0
    %v5613 = vcombine.high %v5595, 0.0
    %v5614 = vcombine.high %v5604, 0.0
    %v5615 = vcombine.high %v5611, 0.0
    %v5616 = vcombine.low %v5588, %v5595
    %v5618 = vunpack.c.l.s4 1983009808
    %v5619 = vunpack.c.0.s8 %v5618
    %v5620 = vlaneseq
    %v5621 = vshrl.u32 %v5620, 7
    %v5622 = vsub.s32 %v5619, %v5621
    %v5623 = vrot.slane %v5616, %v5622
    %v5624 = vcombine.low %v5612, %v5613
    %v5626 = vunpack.c.l.s4 1983009808
    %v5627 = vunpack.c.0.s8 %v5626
    %v5628 = vlaneseq
    %v5629 = vshrl.u32 %v5628, 7
    %v5630 = vsub.s32 %v5627, %v5629
    %v5631 = vrot.slane %v5624, %v5630
    %v5632 = vcombine.low %v5604, %v5611
    %v5634 = vunpack.c.l.s4 1983009808
    %v5635 = vunpack.c.0.s8 %v5634
    %v5636 = vlaneseq
    %v5637 = vshrl.u32 %v5636, 7
    %v5638 = vsub.s32 %v5635, %v5637
    %v5639 = vrot.slane %v5632, %v5638
    %v5640 = vcombine.low %v5614, %v5615
    %v5642 = vunpack.c.l.s4 1983009808
    %v5643 = vunpack.c.0.s8 %v5642
    %v5644 = vlaneseq
    %v5645 = vshrl.u32 %v5644, 7
    %v5646 = vsub.s32 %v5643, %v5645
    %v5647 = vrot.slane %v5640, %v5646
    %v5648 = vcombine.low %v5623, %v5631
    %v5649 = vcombine.high %v5623, %v5631
    %v5651 = vunpack.c.l.s4 1934713408
    %v5652 = vunpack.c.0.s8 %v5651
    %v5653 = vlaneseq
    %v5654 = vshrl.u32 %v5653, 7
    %v5655 = vsub.s32 %v5652, %v5654
    %v5656 = vrot.slane %v5648, %v5655
    %v5658 = vunpack.c.l.s4 1934713408
    %v5659 = vunpack.c.0.s8 %v5658
    %v5660 = vlaneseq
    %v5661 = vshrl.u32 %v5660, 7
    %v5662 = vsub.s32 %v5659, %v5661
    %v5663 = vrot.slane %v5649, %v5662
    %v5664 = vcombine.low %v5639, %v5647
    %v5665 = vcombine.high %v5639, %v5647
    %v5667 = vunpack.c.l.s4 1934713408
    %v5668 = vunpack.c.0.s8 %v5667
    %v5669 = vlaneseq
    %v5670 = vshrl.u32 %v5669, 7
    %v5671 = vsub.s32 %v5668, %v5670
    %v5672 = vrot.slane %v5664, %v5671
    %v5674 = vunpack.c.l.s4 1934713408
    %v5675 = vunpack.c.0.s8 %v5674
    %v5676 = vlaneseq
    %v5677 = vshrl.u32 %v5676, 7
    %v5678 = vsub.s32 %v5675, %v5677
    %v5679 = vrot.slane %v5665, %v5678
    %v5680 = vcombine.low %v5656, %v5672
    %v5681 = vcombine.high %v5656, %v5672
    %v5682 = vcombine.low %v5663, %v5679
    %v5683 = vcombine.high %v5663, %v5679
    %v5684 = vpack.c.bf16 %v5680, %v5680
    %v5685 = vpack.c.bf16 %v5681, %v5681
    %v5686 = vpack.c.bf16 %v5682, %v5682
    %v5687 = vpack.c.bf16 %v5683, %v5683
    %v5689 = vsel %vm796, %v5384, 0
    %v5692 = vsel %vm796, %v5534, 0
    %5694 = vmatprep.subr.bf16.mxu0 0
    %5695 = vmatpush1.bf16.xpose.msra.mxu0 0
    %5696 = vmatprep.subr.bf16.mxu0 0
    %5697 = vmatpush1.bf16.xpose.msra.mxu0 0
    %5698 = vmatprep.subr.bf16.mxu0 0
    %5699 = vmatpush1.bf16.xpose.msra.mxu0 0
    %5700 = vmatprep.subr.bf16.mxu0 0
    %5701 = vmatpush1.bf16.xpose.msra.mxu0 0
    %5702 = vmatprep.subr.bf16.mxu0 0
    %5703 = vmatpush1.bf16.xpose.msra.mxu0 0
    %5704 = vmatprep.subr.bf16.mxu0 0
    %5705 = vmatpush1.bf16.xpose.msra.mxu0 0
    %5706 = vmatprep.subr.bf16.mxu0 0
    %5707 = vmatpush1.bf16.xpose.msra.mxu0 0
    %5708 = vmatprep.subr.bf16.mxu0 0
    %5709 = vmatpush1.bf16.xpose.msra.mxu0 %v5692
    %5710 = vmatprep.subr.bf16.mxu0 0
    %5711 = vmatpush2.bf16.xpose.msra.mxu0 0
    %5712 = vmatprep.subr.bf16.mxu0 0
    %5713 = vmatpush2.bf16.xpose.msra.mxu0 0
    %5714 = vmatprep.subr.bf16.mxu0 0
    %5715 = vmatpush2.bf16.xpose.msra.mxu0 0
    %5716 = vmatprep.subr.bf16.mxu0 0
    %5717 = vmatpush2.bf16.xpose.msra.mxu0 0
    %5718 = vmatprep.subr.bf16.mxu0 0
    %5719 = vmatpush2.bf16.xpose.msra.mxu0 0
    %5720 = vmatprep.subr.bf16.mxu0 0
    %5721 = vmatpush2.bf16.xpose.msra.mxu0 0
    %5722 = vmatprep.subr.bf16.mxu0 0
    %5723 = vmatpush2.bf16.xpose.msra.mxu0 0
    %5724 = vmatprep.subr.bf16.mxu0 0
    %5725 = vmatpush2.bf16.xpose.msra.mxu0 0
    %5726 = vmatprep.mubr.bf16.mxu0 0
    %5727 = vmatmul.mubr.bf16.gmra.mxu0 %v5689
    %v5728 = vpop.f32.mrf.mxu0
    %v5729 = vadd.f32 %v985, %v5728
    %v5730 = vpop.f32.mrf.mxu0
    %v5731 = vpop.f32.mrf.mxu0
    %v5732 = vpop.f32.mrf.mxu0
    %5733 = vdwg.mxu0
    %v5735 = vsel %vm796, %v5385, 0
    %v5738 = vsel %vm796, %v5535, 0
    %5740 = vmatprep.subr.bf16.mxu0 0
    %5741 = vmatpush1.bf16.xpose.msra.mxu0 0
    %5742 = vmatprep.subr.bf16.mxu0 0
    %5743 = vmatpush1.bf16.xpose.msra.mxu0 0
    %5744 = vmatprep.subr.bf16.mxu0 0
    %5745 = vmatpush1.bf16.xpose.msra.mxu0 0
    %5746 = vmatprep.subr.bf16.mxu0 0
    %5747 = vmatpush1.bf16.xpose.msra.mxu0 0
    %5748 = vmatprep.subr.bf16.mxu0 0
    %5749 = vmatpush1.bf16.xpose.msra.mxu0 0
    %5750 = vmatprep.subr.bf16.mxu0 0
    %5751 = vmatpush1.bf16.xpose.msra.mxu0 0
    %5752 = vmatprep.subr.bf16.mxu0 0
    %5753 = vmatpush1.bf16.xpose.msra.mxu0 0
    %5754 = vmatprep.subr.bf16.mxu0 0
    %5755 = vmatpush1.bf16.xpose.msra.mxu0 %v5738
    %5756 = vmatprep.subr.bf16.mxu0 0
    %5757 = vmatpush2.bf16.xpose.msra.mxu0 0
    %5758 = vmatprep.subr.bf16.mxu0 0
    %5759 = vmatpush2.bf16.xpose.msra.mxu0 0
    %5760 = vmatprep.subr.bf16.mxu0 0
    %5761 = vmatpush2.bf16.xpose.msra.mxu0 0
    %5762 = vmatprep.subr.bf16.mxu0 0
    %5763 = vmatpush2.bf16.xpose.msra.mxu0 0
    %5764 = vmatprep.subr.bf16.mxu0 0
    %5765 = vmatpush2.bf16.xpose.msra.mxu0 0
    %5766 = vmatprep.subr.bf16.mxu0 0
    %5767 = vmatpush2.bf16.xpose.msra.mxu0 0
    %5768 = vmatprep.subr.bf16.mxu0 0
    %5769 = vmatpush2.bf16.xpose.msra.mxu0 0
    %5770 = vmatprep.subr.bf16.mxu0 0
    %5771 = vmatpush2.bf16.xpose.msra.mxu0 0
    %5772 = vmatprep.mubr.bf16.mxu0 0
    %5773 = vmatmul.mubr.bf16.gmra.mxu0 %v5735
    %v5774 = vpop.f32.mrf.mxu0
    %v5775 = vadd.f32 %v985, %v5774
    %v5776 = vpop.f32.mrf.mxu0
    %v5777 = vpop.f32.mrf.mxu0
    %v5778 = vpop.f32.mrf.mxu0
    %5779 = vdwg.mxu0
    %v5781 = vsel %vm796, %v5386, 0
    %v5784 = vsel %vm796, %v5536, 0
    %5786 = vmatprep.subr.bf16.mxu0 0
    %5787 = vmatpush1.bf16.xpose.msra.mxu0 0
    %5788 = vmatprep.subr.bf16.mxu0 0
    %5789 = vmatpush1.bf16.xpose.msra.mxu0 0
    %5790 = vmatprep.subr.bf16.mxu0 0
    %5791 = vmatpush1.bf16.xpose.msra.mxu0 0
    %5792 = vmatprep.subr.bf16.mxu0 0
    %5793 = vmatpush1.bf16.xpose.msra.mxu0 0
    %5794 = vmatprep.subr.bf16.mxu0 0
    %5795 = vmatpush1.bf16.xpose.msra.mxu0 0
    %5796 = vmatprep.subr.bf16.mxu0 0
    %5797 = vmatpush1.bf16.xpose.msra.mxu0 0
    %5798 = vmatprep.subr.bf16.mxu0 0
    %5799 = vmatpush1.bf16.xpose.msra.mxu0 0
    %5800 = vmatprep.subr.bf16.mxu0 0
    %5801 = vmatpush1.bf16.xpose.msra.mxu0 %v5784
    %5802 = vmatprep.subr.bf16.mxu0 0
    %5803 = vmatpush2.bf16.xpose.msra.mxu0 0
    %5804 = vmatprep.subr.bf16.mxu0 0
    %5805 = vmatpush2.bf16.xpose.msra.mxu0 0
    %5806 = vmatprep.subr.bf16.mxu0 0
    %5807 = vmatpush2.bf16.xpose.msra.mxu0 0
    %5808 = vmatprep.subr.bf16.mxu0 0
    %5809 = vmatpush2.bf16.xpose.msra.mxu0 0
    %5810 = vmatprep.subr.bf16.mxu0 0
    %5811 = vmatpush2.bf16.xpose.msra.mxu0 0
    %5812 = vmatprep.subr.bf16.mxu0 0
    %5813 = vmatpush2.bf16.xpose.msra.mxu0 0
    %5814 = vmatprep.subr.bf16.mxu0 0
    %5815 = vmatpush2.bf16.xpose.msra.mxu0 0
    %5816 = vmatprep.subr.bf16.mxu0 0
    %5817 = vmatpush2.bf16.xpose.msra.mxu0 0
    %5818 = vmatprep.mubr.bf16.mxu0 0
    %5819 = vmatmul.mubr.bf16.gmra.mxu0 %v5781
    %v5820 = vpop.f32.mrf.mxu0
    %v5821 = vadd.f32 %v985, %v5820
    %v5822 = vpop.f32.mrf.mxu0
    %v5823 = vpop.f32.mrf.mxu0
    %v5824 = vpop.f32.mrf.mxu0
    %5825 = vdwg.mxu0
    %v5827 = vsel %vm796, %v5387, 0
    %v5830 = vsel %vm796, %v5537, 0
    %5832 = vmatprep.subr.bf16.mxu0 0
    %5833 = vmatpush1.bf16.xpose.msra.mxu0 0
    %5834 = vmatprep.subr.bf16.mxu0 0
    %5835 = vmatpush1.bf16.xpose.msra.mxu0 0
    %5836 = vmatprep.subr.bf16.mxu0 0
    %5837 = vmatpush1.bf16.xpose.msra.mxu0 0
    %5838 = vmatprep.subr.bf16.mxu0 0
    %5839 = vmatpush1.bf16.xpose.msra.mxu0 0
    %5840 = vmatprep.subr.bf16.mxu0 0
    %5841 = vmatpush1.bf16.xpose.msra.mxu0 0
    %5842 = vmatprep.subr.bf16.mxu0 0
    %5843 = vmatpush1.bf16.xpose.msra.mxu0 0
    %5844 = vmatprep.subr.bf16.mxu0 0
    %5845 = vmatpush1.bf16.xpose.msra.mxu0 0
    %5846 = vmatprep.subr.bf16.mxu0 0
    %5847 = vmatpush1.bf16.xpose.msra.mxu0 %v5830
    %5848 = vmatprep.subr.bf16.mxu0 0
    %5849 = vmatpush2.bf16.xpose.msra.mxu0 0
    %5850 = vmatprep.subr.bf16.mxu0 0
    %5851 = vmatpush2.bf16.xpose.msra.mxu0 0
    %5852 = vmatprep.subr.bf16.mxu0 0
    %5853 = vmatpush2.bf16.xpose.msra.mxu0 0
    %5854 = vmatprep.subr.bf16.mxu0 0
    %5855 = vmatpush2.bf16.xpose.msra.mxu0 0
    %5856 = vmatprep.subr.bf16.mxu0 0
    %5857 = vmatpush2.bf16.xpose.msra.mxu0 0
    %5858 = vmatprep.subr.bf16.mxu0 0
    %5859 = vmatpush2.bf16.xpose.msra.mxu0 0
    %5860 = vmatprep.subr.bf16.mxu0 0
    %5861 = vmatpush2.bf16.xpose.msra.mxu0 0
    %5862 = vmatprep.subr.bf16.mxu0 0
    %5863 = vmatpush2.bf16.xpose.msra.mxu0 0
    %5864 = vmatprep.mubr.bf16.mxu0 0
    %5865 = vmatmul.mubr.bf16.gmra.mxu0 %v5827
    %v5866 = vpop.f32.mrf.mxu0
    %v5867 = vadd.f32 %v985, %v5866
    %v5868 = vpop.f32.mrf.mxu0
    %v5869 = vpop.f32.mrf.mxu0
    %v5870 = vpop.f32.mrf.mxu0
    %5871 = vdwg.mxu0
    %v5872 = vsel %vm796, %v5729, -inf
    %5873 = vmax.xlane.f32.xlu0 %v5872
    %v5874 = vpop.xlane.xlu0 %5873
    %v5875 = vsel %vm796, %v5775, -inf
    %5876 = vmax.xlane.f32.xlu0 %v5875
    %v5877 = vpop.xlane.xlu0 %5876
    %v5878 = vsel %vm796, %v5821, -inf
    %5879 = vmax.xlane.f32.xlu0 %v5878
    %v5880 = vpop.xlane.xlu0 %5879
    %v5881 = vsel %vm796, %v5867, -inf
    %5882 = vmax.xlane.f32.xlu0 %v5881
    %v5883 = vpop.xlane.xlu0 %5882
    %v5884 = vsub.f32 %v5729, %v5874
    %v5885 = vsub.f32 %v5775, %v5877
    %v5886 = vsub.f32 %v5821, %v5880
    %v5887 = vsub.f32 %v5867, %v5883
    %v5888 = vmul.f32 %v5884, 1.442695
    %v5889 = vpow.pop %v5888
    %v5890 = vmul.f32 %v5885, 1.442695
    %v5891 = vpow.pop %v5890
    %v5892 = vmul.f32 %v5886, 1.442695
    %v5893 = vpow.pop %v5892
    %v5894 = vmul.f32 %v5887, 1.442695
    %v5895 = vpow.pop %v5894
    %v5896 = vsel %vm796, %v5889, 0.0
    %5897 = vadd.xlane.f32.xlu0 %v5896
    %v5898 = vpop.xlane.xlu0 %5897
    %v5899 = vsel %vm796, %v5891, 0.0
    %5900 = vadd.xlane.f32.xlu0 %v5899
    %v5901 = vpop.xlane.xlu0 %5900
    %v5902 = vsel %vm796, %v5893, 0.0
    %5903 = vadd.xlane.f32.xlu0 %v5902
    %v5904 = vpop.xlane.xlu0 %5903
    %v5905 = vsel %vm796, %v5895, 0.0
    %5906 = vadd.xlane.f32.xlu0 %v5905
    %v5907 = vpop.xlane.xlu0 %5906
    %v5908 = vrcp.pop %v5898
    %v5909 = vrcp.pop %v5901
    %v5910 = vrcp.pop %v5904
    %v5911 = vrcp.pop %v5907
    %v5912 = vmul.f32 %v5889, %v5908
    %v5913 = vmul.f32 %v5891, %v5909
    %v5914 = vmul.f32 %v5893, %v5910
    %v5915 = vmul.f32 %v5895, %v5911
    %v5916 = vpack.c.bf16 %v5912, %v5912
    %v5917 = vpack.c.bf16 %v5913, %v5913
    %v5918 = vpack.c.bf16 %v5914, %v5914
    %v5919 = vpack.c.bf16 %v5915, %v5915
    %v5921 = vsel %vm796, %v5916, 0
    %v5924 = vsel %vm1042, %v5684, 0
    %5926 = vmatprep.subr.bf16.mxu0 0
    %5927 = vmatpush1.bf16.msra.mxu0 0
    %5928 = vmatprep.subr.bf16.mxu0 0
    %5929 = vmatpush1.bf16.msra.mxu0 0
    %5930 = vmatprep.subr.bf16.mxu0 0
    %5931 = vmatpush1.bf16.msra.mxu0 0
    %5932 = vmatprep.subr.bf16.mxu0 0
    %5933 = vmatpush1.bf16.msra.mxu0 0
    %5934 = vmatprep.subr.bf16.mxu0 0
    %5935 = vmatpush1.bf16.msra.mxu0 0
    %5936 = vmatprep.subr.bf16.mxu0 0
    %5937 = vmatpush1.bf16.msra.mxu0 0
    %5938 = vmatprep.subr.bf16.mxu0 0
    %5939 = vmatpush1.bf16.msra.mxu0 0
    %5940 = vmatprep.subr.bf16.mxu0 0
    %5941 = vmatpush1.bf16.msra.mxu0 %v5924
    %5942 = vmatprep.subr.bf16.mxu0 0
    %5943 = vmatpush2.bf16.msra.mxu0 0
    %5944 = vmatprep.subr.bf16.mxu0 0
    %5945 = vmatpush2.bf16.msra.mxu0 0
    %5946 = vmatprep.subr.bf16.mxu0 0
    %5947 = vmatpush2.bf16.msra.mxu0 0
    %5948 = vmatprep.subr.bf16.mxu0 0
    %5949 = vmatpush2.bf16.msra.mxu0 0
    %5950 = vmatprep.subr.bf16.mxu0 0
    %5951 = vmatpush2.bf16.msra.mxu0 0
    %5952 = vmatprep.subr.bf16.mxu0 0
    %5953 = vmatpush2.bf16.msra.mxu0 0
    %5954 = vmatprep.subr.bf16.mxu0 0
    %5955 = vmatpush2.bf16.msra.mxu0 0
    %5956 = vmatprep.subr.bf16.mxu0 0
    %5957 = vmatpush2.bf16.msra.mxu0 0
    %5958 = vmatprep.mubr.bf16.mxu0 0
    %5959 = vmatmul.mubr.bf16.gmra.mxu0 %v5921
    %v5960 = vpop.f32.mrf.mxu0
    %v5961 = vadd.f32 0.0, %v5960
    %v5962 = vpop.f32.mrf.mxu0
    %v5963 = vpop.f32.mrf.mxu0
    %v5964 = vpop.f32.mrf.mxu0
    %5965 = vdwg.mxu0
    %v5967 = vsel %vm796, %v5917, 0
    %v5970 = vsel %vm1042, %v5685, 0
    %5972 = vmatprep.subr.bf16.mxu0 0
    %5973 = vmatpush1.bf16.msra.mxu0 0
    %5974 = vmatprep.subr.bf16.mxu0 0
    %5975 = vmatpush1.bf16.msra.mxu0 0
    %5976 = vmatprep.subr.bf16.mxu0 0
    %5977 = vmatpush1.bf16.msra.mxu0 0
    %5978 = vmatprep.subr.bf16.mxu0 0
    %5979 = vmatpush1.bf16.msra.mxu0 0
    %5980 = vmatprep.subr.bf16.mxu0 0
    %5981 = vmatpush1.bf16.msra.mxu0 0
    %5982 = vmatprep.subr.bf16.mxu0 0
    %5983 = vmatpush1.bf16.msra.mxu0 0
    %5984 = vmatprep.subr.bf16.mxu0 0
    %5985 = vmatpush1.bf16.msra.mxu0 0
    %5986 = vmatprep.subr.bf16.mxu0 0
    %5987 = vmatpush1.bf16.msra.mxu0 %v5970
    %5988 = vmatprep.subr.bf16.mxu0 0
    %5989 = vmatpush2.bf16.msra.mxu0 0
    %5990 = vmatprep.subr.bf16.mxu0 0
    %5991 = vmatpush2.bf16.msra.mxu0 0
    %5992 = vmatprep.subr.bf16.mxu0 0
    %5993 = vmatpush2.bf16.msra.mxu0 0
    %5994 = vmatprep.subr.bf16.mxu0 0
    %5995 = vmatpush2.bf16.msra.mxu0 0
    %5996 = vmatprep.subr.bf16.mxu0 0
    %5997 = vmatpush2.bf16.msra.mxu0 0
    %5998 = vmatprep.subr.bf16.mxu0 0
    %5999 = vmatpush2.bf16.msra.mxu0 0
    %6000 = vmatprep.subr.bf16.mxu0 0
    %6001 = vmatpush2.bf16.msra.mxu0 0
    %6002 = vmatprep.subr.bf16.mxu0 0
    %6003 = vmatpush2.bf16.msra.mxu0 0
    %6004 = vmatprep.mubr.bf16.mxu0 0
    %6005 = vmatmul.mubr.bf16.gmra.mxu0 %v5967
    %v6006 = vpop.f32.mrf.mxu0
    %v6007 = vadd.f32 0.0, %v6006
    %v6008 = vpop.f32.mrf.mxu0
    %v6009 = vpop.f32.mrf.mxu0
    %v6010 = vpop.f32.mrf.mxu0
    %6011 = vdwg.mxu0
    %v6013 = vsel %vm796, %v5918, 0
    %v6016 = vsel %vm1042, %v5686, 0
    %6018 = vmatprep.subr.bf16.mxu0 0
    %6019 = vmatpush1.bf16.msra.mxu0 0
    %6020 = vmatprep.subr.bf16.mxu0 0
    %6021 = vmatpush1.bf16.msra.mxu0 0
    %6022 = vmatprep.subr.bf16.mxu0 0
    %6023 = vmatpush1.bf16.msra.mxu0 0
    %6024 = vmatprep.subr.bf16.mxu0 0
    %6025 = vmatpush1.bf16.msra.mxu0 0
    %6026 = vmatprep.subr.bf16.mxu0 0
    %6027 = vmatpush1.bf16.msra.mxu0 0
    %6028 = vmatprep.subr.bf16.mxu0 0
    %6029 = vmatpush1.bf16.msra.mxu0 0
    %6030 = vmatprep.subr.bf16.mxu0 0
    %6031 = vmatpush1.bf16.msra.mxu0 0
    %6032 = vmatprep.subr.bf16.mxu0 0
    %6033 = vmatpush1.bf16.msra.mxu0 %v6016
    %6034 = vmatprep.subr.bf16.mxu0 0
    %6035 = vmatpush2.bf16.msra.mxu0 0
    %6036 = vmatprep.subr.bf16.mxu0 0
    %6037 = vmatpush2.bf16.msra.mxu0 0
    %6038 = vmatprep.subr.bf16.mxu0 0
    %6039 = vmatpush2.bf16.msra.mxu0 0
    %6040 = vmatprep.subr.bf16.mxu0 0
    %6041 = vmatpush2.bf16.msra.mxu0 0
    %6042 = vmatprep.subr.bf16.mxu0 0
    %6043 = vmatpush2.bf16.msra.mxu0 0
    %6044 = vmatprep.subr.bf16.mxu0 0
    %6045 = vmatpush2.bf16.msra.mxu0 0
    %6046 = vmatprep.subr.bf16.mxu0 0
    %6047 = vmatpush2.bf16.msra.mxu0 0
    %6048 = vmatprep.subr.bf16.mxu0 0
    %6049 = vmatpush2.bf16.msra.mxu0 0
    %6050 = vmatprep.mubr.bf16.mxu0 0
    %6051 = vmatmul.mubr.bf16.gmra.mxu0 %v6013
    %v6052 = vpop.f32.mrf.mxu0
    %v6053 = vadd.f32 0.0, %v6052
    %v6054 = vpop.f32.mrf.mxu0
    %v6055 = vpop.f32.mrf.mxu0
    %v6056 = vpop.f32.mrf.mxu0
    %6057 = vdwg.mxu0
    %v6059 = vsel %vm796, %v5919, 0
    %v6062 = vsel %vm1042, %v5687, 0
    %6064 = vmatprep.subr.bf16.mxu0 0
    %6065 = vmatpush1.bf16.msra.mxu0 0
    %6066 = vmatprep.subr.bf16.mxu0 0
    %6067 = vmatpush1.bf16.msra.mxu0 0
    %6068 = vmatprep.subr.bf16.mxu0 0
    %6069 = vmatpush1.bf16.msra.mxu0 0
    %6070 = vmatprep.subr.bf16.mxu0 0
    %6071 = vmatpush1.bf16.msra.mxu0 0
    %6072 = vmatprep.subr.bf16.mxu0 0
    %6073 = vmatpush1.bf16.msra.mxu0 0
    %6074 = vmatprep.subr.bf16.mxu0 0
    %6075 = vmatpush1.bf16.msra.mxu0 0
    %6076 = vmatprep.subr.bf16.mxu0 0
    %6077 = vmatpush1.bf16.msra.mxu0 0
    %6078 = vmatprep.subr.bf16.mxu0 0
    %6079 = vmatpush1.bf16.msra.mxu0 %v6062
    %6080 = vmatprep.subr.bf16.mxu0 0
    %6081 = vmatpush2.bf16.msra.mxu0 0
    %6082 = vmatprep.subr.bf16.mxu0 0
    %6083 = vmatpush2.bf16.msra.mxu0 0
    %6084 = vmatprep.subr.bf16.mxu0 0
    %6085 = vmatpush2.bf16.msra.mxu0 0
    %6086 = vmatprep.subr.bf16.mxu0 0
    %6087 = vmatpush2.bf16.msra.mxu0 0
    %6088 = vmatprep.subr.bf16.mxu0 0
    %6089 = vmatpush2.bf16.msra.mxu0 0
    %6090 = vmatprep.subr.bf16.mxu0 0
    %6091 = vmatpush2.bf16.msra.mxu0 0
    %6092 = vmatprep.subr.bf16.mxu0 0
    %6093 = vmatpush2.bf16.msra.mxu0 0
    %6094 = vmatprep.subr.bf16.mxu0 0
    %6095 = vmatpush2.bf16.msra.mxu0 0
    %6096 = vmatprep.mubr.bf16.mxu0 0
    %6097 = vmatmul.mubr.bf16.gmra.mxu0 %v6059
    %v6098 = vpop.f32.mrf.mxu0
    %v6099 = vadd.f32 0.0, %v6098
    %v6100 = vpop.f32.mrf.mxu0
    %v6101 = vpop.f32.mrf.mxu0
    %v6102 = vpop.f32.mrf.mxu0
    %6103 = vdwg.mxu0
    %v6104 = vcombine.low %v5961, %v6053
    %v6105 = vcombine.high %v5961, %v6053
    %v6107 = vunpack.c.l.s4 1983009808
    %v6108 = vunpack.c.0.s8 %v6107
    %v6109 = vlaneseq
    %v6110 = vshrl.u32 %v6109, 7
    %v6111 = vsub.s32 %v6108, %v6110
    %v6112 = vrot.slane %v6104, %v6111
    %v6114 = vunpack.c.l.s4 1983009808
    %v6115 = vunpack.c.0.s8 %v6114
    %v6116 = vlaneseq
    %v6117 = vshrl.u32 %v6116, 7
    %v6118 = vsub.s32 %v6115, %v6117
    %v6119 = vrot.slane %v6105, %v6118
    %v6120 = vcombine.low %v6007, %v6099
    %v6121 = vcombine.high %v6007, %v6099
    %v6123 = vunpack.c.l.s4 1983009808
    %v6124 = vunpack.c.0.s8 %v6123
    %v6125 = vlaneseq
    %v6126 = vshrl.u32 %v6125, 7
    %v6127 = vsub.s32 %v6124, %v6126
    %v6128 = vrot.slane %v6120, %v6127
    %v6130 = vunpack.c.l.s4 1983009808
    %v6131 = vunpack.c.0.s8 %v6130
    %v6132 = vlaneseq
    %v6133 = vshrl.u32 %v6132, 7
    %v6134 = vsub.s32 %v6131, %v6133
    %v6135 = vrot.slane %v6121, %v6134
    %v6136 = vcombine.low %v6112, %v6128
    %v6137 = vcombine.high %v6112, %v6128
    %v6139 = vunpack.c.l.s4 1934713408
    %v6140 = vunpack.c.0.s8 %v6139
    %v6141 = vlaneseq
    %v6142 = vshrl.u32 %v6141, 7
    %v6143 = vsub.s32 %v6140, %v6142
    %v6144 = vrot.slane %v6136, %v6143
    %v6146 = vunpack.c.l.s4 1934713408
    %v6147 = vunpack.c.0.s8 %v6146
    %v6148 = vlaneseq
    %v6149 = vshrl.u32 %v6148, 7
    %v6150 = vsub.s32 %v6147, %v6149
    %v6151 = vrot.slane %v6137, %v6150
    %v6152 = vcombine.low %v6119, %v6135
    %v6153 = vcombine.high %v6119, %v6135
    %v6155 = vunpack.c.l.s4 1934713408
    %v6156 = vunpack.c.0.s8 %v6155
    %v6157 = vlaneseq
    %v6158 = vshrl.u32 %v6157, 7
    %v6159 = vsub.s32 %v6156, %v6158
    %v6160 = vrot.slane %v6152, %v6159
    %v6162 = vunpack.c.l.s4 1934713408
    %v6163 = vunpack.c.0.s8 %v6162
    %v6164 = vlaneseq
    %v6165 = vshrl.u32 %v6164, 7
    %v6166 = vsub.s32 %v6163, %v6165
    %v6167 = vrot.slane %v6153, %v6166
    %v6168 = vcombine.high %v6144, 0.0
    %v6169 = vcombine.high %v6151, 0.0
    %v6170 = vcombine.high %v6160, 0.0
    %v6171 = vcombine.high %v6167, 0.0
    %v6172 = vcombine.low %v6144, %v6151
    %v6174 = vunpack.c.l.s4 1983009808
    %v6175 = vunpack.c.0.s8 %v6174
    %v6176 = vlaneseq
    %v6177 = vshrl.u32 %v6176, 7
    %v6178 = vsub.s32 %v6175, %v6177
    %v6179 = vrot.slane %v6172, %v6178
    %v6180 = vcombine.low %v6168, %v6169
    %v6182 = vunpack.c.l.s4 1983009808
    %v6183 = vunpack.c.0.s8 %v6182
    %v6184 = vlaneseq
    %v6185 = vshrl.u32 %v6184, 7
    %v6186 = vsub.s32 %v6183, %v6185
    %v6187 = vrot.slane %v6180, %v6186
    %v6188 = vcombine.low %v6160, %v6167
    %v6190 = vunpack.c.l.s4 1983009808
    %v6191 = vunpack.c.0.s8 %v6190
    %v6192 = vlaneseq
    %v6193 = vshrl.u32 %v6192, 7
    %v6194 = vsub.s32 %v6191, %v6193
    %v6195 = vrot.slane %v6188, %v6194
    %v6196 = vcombine.low %v6170, %v6171
    %v6198 = vunpack.c.l.s4 1983009808
    %v6199 = vunpack.c.0.s8 %v6198
    %v6200 = vlaneseq
    %v6201 = vshrl.u32 %v6200, 7
    %v6202 = vsub.s32 %v6199, %v6201
    %v6203 = vrot.slane %v6196, %v6202
    %v6204 = vcombine.low %v6179, %v6187
    %v6205 = vcombine.high %v6179, %v6187
    %v6207 = vunpack.c.l.s4 1934713408
    %v6208 = vunpack.c.0.s8 %v6207
    %v6209 = vlaneseq
    %v6210 = vshrl.u32 %v6209, 7
    %v6211 = vsub.s32 %v6208, %v6210
    %v6212 = vrot.slane %v6204, %v6211
    %v6214 = vunpack.c.l.s4 1934713408
    %v6215 = vunpack.c.0.s8 %v6214
    %v6216 = vlaneseq
    %v6217 = vshrl.u32 %v6216, 7
    %v6218 = vsub.s32 %v6215, %v6217
    %v6219 = vrot.slane %v6205, %v6218
    %v6220 = vcombine.low %v6195, %v6203
    %v6221 = vcombine.high %v6195, %v6203
    %v6223 = vunpack.c.l.s4 1934713408
    %v6224 = vunpack.c.0.s8 %v6223
    %v6225 = vlaneseq
    %v6226 = vshrl.u32 %v6225, 7
    %v6227 = vsub.s32 %v6224, %v6226
    %v6228 = vrot.slane %v6220, %v6227
    %v6230 = vunpack.c.l.s4 1934713408
    %v6231 = vunpack.c.0.s8 %v6230
    %v6232 = vlaneseq
    %v6233 = vshrl.u32 %v6232, 7
    %v6234 = vsub.s32 %v6231, %v6233
    %v6235 = vrot.slane %v6221, %v6234
    %v6236 = vcombine.low %v6212, %v6228
    %v6237 = vcombine.high %v6212, %v6228
    %v6238 = vcombine.low %v6219, %v6235
    %v6239 = vcombine.high %v6219, %v6235
    %6241 = vrot.lane.b32.xlu0 %v6237, 8
    %v6242 = vpop.permute.xlu0 %6241
    %6245 = vrot.lane.b32.xlu0 %v6238, 16
    %v6246 = vpop.permute.xlu0 %6245
    %6249 = vrot.lane.b32.xlu0 %v6239, 24
    %v6250 = vpop.permute.xlu0 %6249
    %v6252 = vsel %vm796, %v6236, %v6242
    %v6253 = vsel %vm1373, %v6252, %v6246
    %v6254 = vsel %vm1375, %v6253, %v6250
    %6256 = vrot.lane.b32.xlu0 %v5117, 120
    %v6257 = vpop.permute.xlu0 %6256
    %6259 = vrot.lane.b32.xlu0 %v5117, 112
    %v6260 = vpop.permute.xlu0 %6259
    %6262 = vrot.lane.b32.xlu0 %v5117, 104
    %v6263 = vpop.permute.xlu0 %6262
    %v6265 = vcombine.low %v5117, %v6260
    %v6266 = vcombine.high %v5117, %v6260
    %v6268 = vunpack.c.l.s4 1983009808
    %v6269 = vunpack.c.0.s8 %v6268
    %v6270 = vlaneseq
    %v6271 = vshrl.u32 %v6270, 7
    %v6272 = vsub.s32 %v6269, %v6271
    %v6273 = vrot.slane %v6265, %v6272
    %v6275 = vunpack.c.l.s4 1983009808
    %v6276 = vunpack.c.0.s8 %v6275
    %v6277 = vlaneseq
    %v6278 = vshrl.u32 %v6277, 7
    %v6279 = vsub.s32 %v6276, %v6278
    %v6280 = vrot.slane %v6266, %v6279
    %v6281 = vcombine.low %v6257, %v6263
    %v6282 = vcombine.high %v6257, %v6263
    %v6284 = vunpack.c.l.s4 1983009808
    %v6285 = vunpack.c.0.s8 %v6284
    %v6286 = vlaneseq
    %v6287 = vshrl.u32 %v6286, 7
    %v6288 = vsub.s32 %v6285, %v6287
    %v6289 = vrot.slane %v6281, %v6288
    %v6291 = vunpack.c.l.s4 1983009808
    %v6292 = vunpack.c.0.s8 %v6291
    %v6293 = vlaneseq
    %v6294 = vshrl.u32 %v6293, 7
    %v6295 = vsub.s32 %v6292, %v6294
    %v6296 = vrot.slane %v6282, %v6295
    %v6297 = vcombine.low %v6273, %v6289
    %v6298 = vcombine.high %v6273, %v6289
    %v6300 = vunpack.c.l.s4 1934713408
    %v6301 = vunpack.c.0.s8 %v6300
    %v6302 = vlaneseq
    %v6303 = vshrl.u32 %v6302, 7
    %v6304 = vsub.s32 %v6301, %v6303
    %v6305 = vrot.slane %v6297, %v6304
    %v6307 = vunpack.c.l.s4 1934713408
    %v6308 = vunpack.c.0.s8 %v6307
    %v6309 = vlaneseq
    %v6310 = vshrl.u32 %v6309, 7
    %v6311 = vsub.s32 %v6308, %v6310
    %v6312 = vrot.slane %v6298, %v6311
    %v6313 = vcombine.low %v6280, %v6296
    %v6314 = vcombine.high %v6280, %v6296
    %v6316 = vunpack.c.l.s4 1934713408
    %v6317 = vunpack.c.0.s8 %v6316
    %v6318 = vlaneseq
    %v6319 = vshrl.u32 %v6318, 7
    %v6320 = vsub.s32 %v6317, %v6319
    %v6321 = vrot.slane %v6313, %v6320
    %v6323 = vunpack.c.l.s4 1934713408
    %v6324 = vunpack.c.0.s8 %v6323
    %v6325 = vlaneseq
    %v6326 = vshrl.u32 %v6325, 7
    %v6327 = vsub.s32 %v6324, %v6326
    %v6328 = vrot.slane %v6314, %v6327
    %v6329 = vcombine.high %v6305, 0.0
    %v6330 = vcombine.high %v6312, 0.0
    %v6331 = vcombine.high %v6321, 0.0
    %v6332 = vcombine.high %v6328, 0.0
    %v6333 = vcombine.low %v6305, %v6312
    %v6335 = vunpack.c.l.s4 1983009808
    %v6336 = vunpack.c.0.s8 %v6335
    %v6337 = vlaneseq
    %v6338 = vshrl.u32 %v6337, 7
    %v6339 = vsub.s32 %v6336, %v6338
    %v6340 = vrot.slane %v6333, %v6339
    %v6341 = vcombine.low %v6329, %v6330
    %v6343 = vunpack.c.l.s4 1983009808
    %v6344 = vunpack.c.0.s8 %v6343
    %v6345 = vlaneseq
    %v6346 = vshrl.u32 %v6345, 7
    %v6347 = vsub.s32 %v6344, %v6346
    %v6348 = vrot.slane %v6341, %v6347
    %v6349 = vcombine.low %v6321, %v6328
    %v6351 = vunpack.c.l.s4 1983009808
    %v6352 = vunpack.c.0.s8 %v6351
    %v6353 = vlaneseq
    %v6354 = vshrl.u32 %v6353, 7
    %v6355 = vsub.s32 %v6352, %v6354
    %v6356 = vrot.slane %v6349, %v6355
    %v6357 = vcombine.low %v6331, %v6332
    %v6359 = vunpack.c.l.s4 1983009808
    %v6360 = vunpack.c.0.s8 %v6359
    %v6361 = vlaneseq
    %v6362 = vshrl.u32 %v6361, 7
    %v6363 = vsub.s32 %v6360, %v6362
    %v6364 = vrot.slane %v6357, %v6363
    %v6365 = vcombine.low %v6340, %v6348
    %v6366 = vcombine.high %v6340, %v6348
    %v6368 = vunpack.c.l.s4 1934713408
    %v6369 = vunpack.c.0.s8 %v6368
    %v6370 = vlaneseq
    %v6371 = vshrl.u32 %v6370, 7
    %v6372 = vsub.s32 %v6369, %v6371
    %v6373 = vrot.slane %v6365, %v6372
    %v6375 = vunpack.c.l.s4 1934713408
    %v6376 = vunpack.c.0.s8 %v6375
    %v6377 = vlaneseq
    %v6378 = vshrl.u32 %v6377, 7
    %v6379 = vsub.s32 %v6376, %v6378
    %v6380 = vrot.slane %v6366, %v6379
    %v6381 = vcombine.low %v6356, %v6364
    %v6382 = vcombine.high %v6356, %v6364
    %v6384 = vunpack.c.l.s4 1934713408
    %v6385 = vunpack.c.0.s8 %v6384
    %v6386 = vlaneseq
    %v6387 = vshrl.u32 %v6386, 7
    %v6388 = vsub.s32 %v6385, %v6387
    %v6389 = vrot.slane %v6381, %v6388
    %v6391 = vunpack.c.l.s4 1934713408
    %v6392 = vunpack.c.0.s8 %v6391
    %v6393 = vlaneseq
    %v6394 = vshrl.u32 %v6393, 7
    %v6395 = vsub.s32 %v6392, %v6394
    %v6396 = vrot.slane %v6382, %v6395
    %v6397 = vcombine.low %v6373, %v6389
    %v6398 = vcombine.high %v6373, %v6389
    %v6399 = vcombine.low %v6380, %v6396
    %v6400 = vcombine.high %v6380, %v6396
    %v6401 = vpack.c.bf16 %v6397, %v6397
    %v6402 = vpack.c.bf16 %v6398, %v6398
    %v6403 = vpack.c.bf16 %v6399, %v6399
    %v6404 = vpack.c.bf16 %v6400, %v6400
    %6406 = vrot.lane.b32.xlu0 %v5178, 120
    %v6407 = vpop.permute.xlu0 %6406
    %6409 = vrot.lane.b32.xlu0 %v5178, 112
    %v6410 = vpop.permute.xlu0 %6409
    %6412 = vrot.lane.b32.xlu0 %v5178, 104
    %v6413 = vpop.permute.xlu0 %6412
    %v6415 = vcombine.low %v5178, %v6410
    %v6416 = vcombine.high %v5178, %v6410
    %v6418 = vunpack.c.l.s4 1983009808
    %v6419 = vunpack.c.0.s8 %v6418
    %v6420 = vlaneseq
    %v6421 = vshrl.u32 %v6420, 7
    %v6422 = vsub.s32 %v6419, %v6421
    %v6423 = vrot.slane %v6415, %v6422
    %v6425 = vunpack.c.l.s4 1983009808
    %v6426 = vunpack.c.0.s8 %v6425
    %v6427 = vlaneseq
    %v6428 = vshrl.u32 %v6427, 7
    %v6429 = vsub.s32 %v6426, %v6428
    %v6430 = vrot.slane %v6416, %v6429
    %v6431 = vcombine.low %v6407, %v6413
    %v6432 = vcombine.high %v6407, %v6413
    %v6434 = vunpack.c.l.s4 1983009808
    %v6435 = vunpack.c.0.s8 %v6434
    %v6436 = vlaneseq
    %v6437 = vshrl.u32 %v6436, 7
    %v6438 = vsub.s32 %v6435, %v6437
    %v6439 = vrot.slane %v6431, %v6438
    %v6441 = vunpack.c.l.s4 1983009808
    %v6442 = vunpack.c.0.s8 %v6441
    %v6443 = vlaneseq
    %v6444 = vshrl.u32 %v6443, 7
    %v6445 = vsub.s32 %v6442, %v6444
    %v6446 = vrot.slane %v6432, %v6445
    %v6447 = vcombine.low %v6423, %v6439
    %v6448 = vcombine.high %v6423, %v6439
    %v6450 = vunpack.c.l.s4 1934713408
    %v6451 = vunpack.c.0.s8 %v6450
    %v6452 = vlaneseq
    %v6453 = vshrl.u32 %v6452, 7
    %v6454 = vsub.s32 %v6451, %v6453
    %v6455 = vrot.slane %v6447, %v6454
    %v6457 = vunpack.c.l.s4 1934713408
    %v6458 = vunpack.c.0.s8 %v6457
    %v6459 = vlaneseq
    %v6460 = vshrl.u32 %v6459, 7
    %v6461 = vsub.s32 %v6458, %v6460
    %v6462 = vrot.slane %v6448, %v6461
    %v6463 = vcombine.low %v6430, %v6446
    %v6464 = vcombine.high %v6430, %v6446
    %v6466 = vunpack.c.l.s4 1934713408
    %v6467 = vunpack.c.0.s8 %v6466
    %v6468 = vlaneseq
    %v6469 = vshrl.u32 %v6468, 7
    %v6470 = vsub.s32 %v6467, %v6469
    %v6471 = vrot.slane %v6463, %v6470
    %v6473 = vunpack.c.l.s4 1934713408
    %v6474 = vunpack.c.0.s8 %v6473
    %v6475 = vlaneseq
    %v6476 = vshrl.u32 %v6475, 7
    %v6477 = vsub.s32 %v6474, %v6476
    %v6478 = vrot.slane %v6464, %v6477
    %v6479 = vcombine.high %v6455, 0.0
    %v6480 = vcombine.high %v6462, 0.0
    %v6481 = vcombine.high %v6471, 0.0
    %v6482 = vcombine.high %v6478, 0.0
    %v6483 = vcombine.low %v6455, %v6462
    %v6485 = vunpack.c.l.s4 1983009808
    %v6486 = vunpack.c.0.s8 %v6485
    %v6487 = vlaneseq
    %v6488 = vshrl.u32 %v6487, 7
    %v6489 = vsub.s32 %v6486, %v6488
    %v6490 = vrot.slane %v6483, %v6489
    %v6491 = vcombine.low %v6479, %v6480
    %v6493 = vunpack.c.l.s4 1983009808
    %v6494 = vunpack.c.0.s8 %v6493
    %v6495 = vlaneseq
    %v6496 = vshrl.u32 %v6495, 7
    %v6497 = vsub.s32 %v6494, %v6496
    %v6498 = vrot.slane %v6491, %v6497
    %v6499 = vcombine.low %v6471, %v6478
    %v6501 = vunpack.c.l.s4 1983009808
    %v6502 = vunpack.c.0.s8 %v6501
    %v6503 = vlaneseq
    %v6504 = vshrl.u32 %v6503, 7
    %v6505 = vsub.s32 %v6502, %v6504
    %v6506 = vrot.slane %v6499, %v6505
    %v6507 = vcombine.low %v6481, %v6482
    %v6509 = vunpack.c.l.s4 1983009808
    %v6510 = vunpack.c.0.s8 %v6509
    %v6511 = vlaneseq
    %v6512 = vshrl.u32 %v6511, 7
    %v6513 = vsub.s32 %v6510, %v6512
    %v6514 = vrot.slane %v6507, %v6513
    %v6515 = vcombine.low %v6490, %v6498
    %v6516 = vcombine.high %v6490, %v6498
    %v6518 = vunpack.c.l.s4 1934713408
    %v6519 = vunpack.c.0.s8 %v6518
    %v6520 = vlaneseq
    %v6521 = vshrl.u32 %v6520, 7
    %v6522 = vsub.s32 %v6519, %v6521
    %v6523 = vrot.slane %v6515, %v6522
    %v6525 = vunpack.c.l.s4 1934713408
    %v6526 = vunpack.c.0.s8 %v6525
    %v6527 = vlaneseq
    %v6528 = vshrl.u32 %v6527, 7
    %v6529 = vsub.s32 %v6526, %v6528
    %v6530 = vrot.slane %v6516, %v6529
    %v6531 = vcombine.low %v6506, %v6514
    %v6532 = vcombine.high %v6506, %v6514
    %v6534 = vunpack.c.l.s4 1934713408
    %v6535 = vunpack.c.0.s8 %v6534
    %v6536 = vlaneseq
    %v6537 = vshrl.u32 %v6536, 7
    %v6538 = vsub.s32 %v6535, %v6537
    %v6539 = vrot.slane %v6531, %v6538
    %v6541 = vunpack.c.l.s4 1934713408
    %v6542 = vunpack.c.0.s8 %v6541
    %v6543 = vlaneseq
    %v6544 = vshrl.u32 %v6543, 7
    %v6545 = vsub.s32 %v6542, %v6544
    %v6546 = vrot.slane %v6532, %v6545
    %v6547 = vcombine.low %v6523, %v6539
    %v6548 = vcombine.high %v6523, %v6539
    %v6549 = vcombine.low %v6530, %v6546
    %v6550 = vcombine.high %v6530, %v6546
    %v6551 = vpack.c.bf16 %v6547, %v6547
    %v6552 = vpack.c.bf16 %v6548, %v6548
    %v6553 = vpack.c.bf16 %v6549, %v6549
    %v6554 = vpack.c.bf16 %v6550, %v6550
    %6556 = vrot.lane.b32.xlu0 %v5235, 120
    %v6557 = vpop.permute.xlu0 %6556
    %6559 = vrot.lane.b32.xlu0 %v5235, 112
    %v6560 = vpop.permute.xlu0 %6559
    %6562 = vrot.lane.b32.xlu0 %v5235, 104
    %v6563 = vpop.permute.xlu0 %6562
    %v6565 = vcombine.low %v5235, %v6560
    %v6566 = vcombine.high %v5235, %v6560
    %v6568 = vunpack.c.l.s4 1983009808
    %v6569 = vunpack.c.0.s8 %v6568
    %v6570 = vlaneseq
    %v6571 = vshrl.u32 %v6570, 7
    %v6572 = vsub.s32 %v6569, %v6571
    %v6573 = vrot.slane %v6565, %v6572
    %v6575 = vunpack.c.l.s4 1983009808
    %v6576 = vunpack.c.0.s8 %v6575
    %v6577 = vlaneseq
    %v6578 = vshrl.u32 %v6577, 7
    %v6579 = vsub.s32 %v6576, %v6578
    %v6580 = vrot.slane %v6566, %v6579
    %v6581 = vcombine.low %v6557, %v6563
    %v6582 = vcombine.high %v6557, %v6563
    %v6584 = vunpack.c.l.s4 1983009808
    %v6585 = vunpack.c.0.s8 %v6584
    %v6586 = vlaneseq
    %v6587 = vshrl.u32 %v6586, 7
    %v6588 = vsub.s32 %v6585, %v6587
    %v6589 = vrot.slane %v6581, %v6588
    %v6591 = vunpack.c.l.s4 1983009808
    %v6592 = vunpack.c.0.s8 %v6591
    %v6593 = vlaneseq
    %v6594 = vshrl.u32 %v6593, 7
    %v6595 = vsub.s32 %v6592, %v6594
    %v6596 = vrot.slane %v6582, %v6595
    %v6597 = vcombine.low %v6573, %v6589
    %v6598 = vcombine.high %v6573, %v6589
    %v6600 = vunpack.c.l.s4 1934713408
    %v6601 = vunpack.c.0.s8 %v6600
    %v6602 = vlaneseq
    %v6603 = vshrl.u32 %v6602, 7
    %v6604 = vsub.s32 %v6601, %v6603
    %v6605 = vrot.slane %v6597, %v6604
    %v6607 = vunpack.c.l.s4 1934713408
    %v6608 = vunpack.c.0.s8 %v6607
    %v6609 = vlaneseq
    %v6610 = vshrl.u32 %v6609, 7
    %v6611 = vsub.s32 %v6608, %v6610
    %v6612 = vrot.slane %v6598, %v6611
    %v6613 = vcombine.low %v6580, %v6596
    %v6614 = vcombine.high %v6580, %v6596
    %v6616 = vunpack.c.l.s4 1934713408
    %v6617 = vunpack.c.0.s8 %v6616
    %v6618 = vlaneseq
    %v6619 = vshrl.u32 %v6618, 7
    %v6620 = vsub.s32 %v6617, %v6619
    %v6621 = vrot.slane %v6613, %v6620
    %v6623 = vunpack.c.l.s4 1934713408
    %v6624 = vunpack.c.0.s8 %v6623
    %v6625 = vlaneseq
    %v6626 = vshrl.u32 %v6625, 7
    %v6627 = vsub.s32 %v6624, %v6626
    %v6628 = vrot.slane %v6614, %v6627
    %v6629 = vcombine.high %v6605, 0.0
    %v6630 = vcombine.high %v6612, 0.0
    %v6631 = vcombine.high %v6621, 0.0
    %v6632 = vcombine.high %v6628, 0.0
    %v6633 = vcombine.low %v6605, %v6612
    %v6635 = vunpack.c.l.s4 1983009808
    %v6636 = vunpack.c.0.s8 %v6635
    %v6637 = vlaneseq
    %v6638 = vshrl.u32 %v6637, 7
    %v6639 = vsub.s32 %v6636, %v6638
    %v6640 = vrot.slane %v6633, %v6639
    %v6641 = vcombine.low %v6629, %v6630
    %v6643 = vunpack.c.l.s4 1983009808
    %v6644 = vunpack.c.0.s8 %v6643
    %v6645 = vlaneseq
    %v6646 = vshrl.u32 %v6645, 7
    %v6647 = vsub.s32 %v6644, %v6646
    %v6648 = vrot.slane %v6641, %v6647
    %v6649 = vcombine.low %v6621, %v6628
    %v6651 = vunpack.c.l.s4 1983009808
    %v6652 = vunpack.c.0.s8 %v6651
    %v6653 = vlaneseq
    %v6654 = vshrl.u32 %v6653, 7
    %v6655 = vsub.s32 %v6652, %v6654
    %v6656 = vrot.slane %v6649, %v6655
    %v6657 = vcombine.low %v6631, %v6632
    %v6659 = vunpack.c.l.s4 1983009808
    %v6660 = vunpack.c.0.s8 %v6659
    %v6661 = vlaneseq
    %v6662 = vshrl.u32 %v6661, 7
    %v6663 = vsub.s32 %v6660, %v6662
    %v6664 = vrot.slane %v6657, %v6663
    %v6665 = vcombine.low %v6640, %v6648
    %v6666 = vcombine.high %v6640, %v6648
    %v6668 = vunpack.c.l.s4 1934713408
    %v6669 = vunpack.c.0.s8 %v6668
    %v6670 = vlaneseq
    %v6671 = vshrl.u32 %v6670, 7
    %v6672 = vsub.s32 %v6669, %v6671
    %v6673 = vrot.slane %v6665, %v6672
    %v6675 = vunpack.c.l.s4 1934713408
    %v6676 = vunpack.c.0.s8 %v6675
    %v6677 = vlaneseq
    %v6678 = vshrl.u32 %v6677, 7
    %v6679 = vsub.s32 %v6676, %v6678
    %v6680 = vrot.slane %v6666, %v6679
    %v6681 = vcombine.low %v6656, %v6664
    %v6682 = vcombine.high %v6656, %v6664
    %v6684 = vunpack.c.l.s4 1934713408
    %v6685 = vunpack.c.0.s8 %v6684
    %v6686 = vlaneseq
    %v6687 = vshrl.u32 %v6686, 7
    %v6688 = vsub.s32 %v6685, %v6687
    %v6689 = vrot.slane %v6681, %v6688
    %v6691 = vunpack.c.l.s4 1934713408
    %v6692 = vunpack.c.0.s8 %v6691
    %v6693 = vlaneseq
    %v6694 = vshrl.u32 %v6693, 7
    %v6695 = vsub.s32 %v6692, %v6694
    %v6696 = vrot.slane %v6682, %v6695
    %v6697 = vcombine.low %v6673, %v6689
    %v6698 = vcombine.high %v6673, %v6689
    %v6699 = vcombine.low %v6680, %v6696
    %v6700 = vcombine.high %v6680, %v6696
    %v6701 = vpack.c.bf16 %v6697, %v6697
    %v6702 = vpack.c.bf16 %v6698, %v6698
    %v6703 = vpack.c.bf16 %v6699, %v6699
    %v6704 = vpack.c.bf16 %v6700, %v6700
    %v6706 = vsel %vm796, %v6401, 0
    %v6709 = vsel %vm796, %v6551, 0
    %6711 = vmatprep.subr.bf16.mxu0 0
    %6712 = vmatpush1.bf16.xpose.msra.mxu0 0
    %6713 = vmatprep.subr.bf16.mxu0 0
    %6714 = vmatpush1.bf16.xpose.msra.mxu0 0
    %6715 = vmatprep.subr.bf16.mxu0 0
    %6716 = vmatpush1.bf16.xpose.msra.mxu0 0
    %6717 = vmatprep.subr.bf16.mxu0 0
    %6718 = vmatpush1.bf16.xpose.msra.mxu0 0
    %6719 = vmatprep.subr.bf16.mxu0 0
    %6720 = vmatpush1.bf16.xpose.msra.mxu0 0
    %6721 = vmatprep.subr.bf16.mxu0 0
    %6722 = vmatpush1.bf16.xpose.msra.mxu0 0
    %6723 = vmatprep.subr.bf16.mxu0 0
    %6724 = vmatpush1.bf16.xpose.msra.mxu0 0
    %6725 = vmatprep.subr.bf16.mxu0 0
    %6726 = vmatpush1.bf16.xpose.msra.mxu0 %v6709
    %6727 = vmatprep.subr.bf16.mxu0 0
    %6728 = vmatpush2.bf16.xpose.msra.mxu0 0
    %6729 = vmatprep.subr.bf16.mxu0 0
    %6730 = vmatpush2.bf16.xpose.msra.mxu0 0
    %6731 = vmatprep.subr.bf16.mxu0 0
    %6732 = vmatpush2.bf16.xpose.msra.mxu0 0
    %6733 = vmatprep.subr.bf16.mxu0 0
    %6734 = vmatpush2.bf16.xpose.msra.mxu0 0
    %6735 = vmatprep.subr.bf16.mxu0 0
    %6736 = vmatpush2.bf16.xpose.msra.mxu0 0
    %6737 = vmatprep.subr.bf16.mxu0 0
    %6738 = vmatpush2.bf16.xpose.msra.mxu0 0
    %6739 = vmatprep.subr.bf16.mxu0 0
    %6740 = vmatpush2.bf16.xpose.msra.mxu0 0
    %6741 = vmatprep.subr.bf16.mxu0 0
    %6742 = vmatpush2.bf16.xpose.msra.mxu0 0
    %6743 = vmatprep.mubr.bf16.mxu0 0
    %6744 = vmatmul.mubr.bf16.gmra.mxu0 %v6706
    %v6745 = vpop.f32.mrf.mxu0
    %v6746 = vadd.f32 %v2015, %v6745
    %v6747 = vpop.f32.mrf.mxu0
    %v6748 = vpop.f32.mrf.mxu0
    %v6749 = vpop.f32.mrf.mxu0
    %6750 = vdwg.mxu0
    %v6752 = vsel %vm796, %v6402, 0
    %v6755 = vsel %vm796, %v6552, 0
    %6757 = vmatprep.subr.bf16.mxu0 0
    %6758 = vmatpush1.bf16.xpose.msra.mxu0 0
    %6759 = vmatprep.subr.bf16.mxu0 0
    %6760 = vmatpush1.bf16.xpose.msra.mxu0 0
    %6761 = vmatprep.subr.bf16.mxu0 0
    %6762 = vmatpush1.bf16.xpose.msra.mxu0 0
    %6763 = vmatprep.subr.bf16.mxu0 0
    %6764 = vmatpush1.bf16.xpose.msra.mxu0 0
    %6765 = vmatprep.subr.bf16.mxu0 0
    %6766 = vmatpush1.bf16.xpose.msra.mxu0 0
    %6767 = vmatprep.subr.bf16.mxu0 0
    %6768 = vmatpush1.bf16.xpose.msra.mxu0 0
    %6769 = vmatprep.subr.bf16.mxu0 0
    %6770 = vmatpush1.bf16.xpose.msra.mxu0 0
    %6771 = vmatprep.subr.bf16.mxu0 0
    %6772 = vmatpush1.bf16.xpose.msra.mxu0 %v6755
    %6773 = vmatprep.subr.bf16.mxu0 0
    %6774 = vmatpush2.bf16.xpose.msra.mxu0 0
    %6775 = vmatprep.subr.bf16.mxu0 0
    %6776 = vmatpush2.bf16.xpose.msra.mxu0 0
    %6777 = vmatprep.subr.bf16.mxu0 0
    %6778 = vmatpush2.bf16.xpose.msra.mxu0 0
    %6779 = vmatprep.subr.bf16.mxu0 0
    %6780 = vmatpush2.bf16.xpose.msra.mxu0 0
    %6781 = vmatprep.subr.bf16.mxu0 0
    %6782 = vmatpush2.bf16.xpose.msra.mxu0 0
    %6783 = vmatprep.subr.bf16.mxu0 0
    %6784 = vmatpush2.bf16.xpose.msra.mxu0 0
    %6785 = vmatprep.subr.bf16.mxu0 0
    %6786 = vmatpush2.bf16.xpose.msra.mxu0 0
    %6787 = vmatprep.subr.bf16.mxu0 0
    %6788 = vmatpush2.bf16.xpose.msra.mxu0 0
    %6789 = vmatprep.mubr.bf16.mxu0 0
    %6790 = vmatmul.mubr.bf16.gmra.mxu0 %v6752
    %v6791 = vpop.f32.mrf.mxu0
    %v6792 = vadd.f32 %v2015, %v6791
    %v6793 = vpop.f32.mrf.mxu0
    %v6794 = vpop.f32.mrf.mxu0
    %v6795 = vpop.f32.mrf.mxu0
    %6796 = vdwg.mxu0
    %v6798 = vsel %vm796, %v6403, 0
    %v6801 = vsel %vm796, %v6553, 0
    %6803 = vmatprep.subr.bf16.mxu0 0
    %6804 = vmatpush1.bf16.xpose.msra.mxu0 0
    %6805 = vmatprep.subr.bf16.mxu0 0
    %6806 = vmatpush1.bf16.xpose.msra.mxu0 0
    %6807 = vmatprep.subr.bf16.mxu0 0
    %6808 = vmatpush1.bf16.xpose.msra.mxu0 0
    %6809 = vmatprep.subr.bf16.mxu0 0
    %6810 = vmatpush1.bf16.xpose.msra.mxu0 0
    %6811 = vmatprep.subr.bf16.mxu0 0
    %6812 = vmatpush1.bf16.xpose.msra.mxu0 0
    %6813 = vmatprep.subr.bf16.mxu0 0
    %6814 = vmatpush1.bf16.xpose.msra.mxu0 0
    %6815 = vmatprep.subr.bf16.mxu0 0
    %6816 = vmatpush1.bf16.xpose.msra.mxu0 0
    %6817 = vmatprep.subr.bf16.mxu0 0
    %6818 = vmatpush1.bf16.xpose.msra.mxu0 %v6801
    %6819 = vmatprep.subr.bf16.mxu0 0
    %6820 = vmatpush2.bf16.xpose.msra.mxu0 0
    %6821 = vmatprep.subr.bf16.mxu0 0
    %6822 = vmatpush2.bf16.xpose.msra.mxu0 0
    %6823 = vmatprep.subr.bf16.mxu0 0
    %6824 = vmatpush2.bf16.xpose.msra.mxu0 0
    %6825 = vmatprep.subr.bf16.mxu0 0
    %6826 = vmatpush2.bf16.xpose.msra.mxu0 0
    %6827 = vmatprep.subr.bf16.mxu0 0
    %6828 = vmatpush2.bf16.xpose.msra.mxu0 0
    %6829 = vmatprep.subr.bf16.mxu0 0
    %6830 = vmatpush2.bf16.xpose.msra.mxu0 0
    %6831 = vmatprep.subr.bf16.mxu0 0
    %6832 = vmatpush2.bf16.xpose.msra.mxu0 0
    %6833 = vmatprep.subr.bf16.mxu0 0
    %6834 = vmatpush2.bf16.xpose.msra.mxu0 0
    %6835 = vmatprep.mubr.bf16.mxu0 0
    %6836 = vmatmul.mubr.bf16.gmra.mxu0 %v6798
    %v6837 = vpop.f32.mrf.mxu0
    %v6838 = vadd.f32 %v2015, %v6837
    %v6839 = vpop.f32.mrf.mxu0
    %v6840 = vpop.f32.mrf.mxu0
    %v6841 = vpop.f32.mrf.mxu0
    %6842 = vdwg.mxu0
    %v6844 = vsel %vm796, %v6404, 0
    %v6847 = vsel %vm796, %v6554, 0
    %6849 = vmatprep.subr.bf16.mxu0 0
    %6850 = vmatpush1.bf16.xpose.msra.mxu0 0
    %6851 = vmatprep.subr.bf16.mxu0 0
    %6852 = vmatpush1.bf16.xpose.msra.mxu0 0
    %6853 = vmatprep.subr.bf16.mxu0 0
    %6854 = vmatpush1.bf16.xpose.msra.mxu0 0
    %6855 = vmatprep.subr.bf16.mxu0 0
    %6856 = vmatpush1.bf16.xpose.msra.mxu0 0
    %6857 = vmatprep.subr.bf16.mxu0 0
    %6858 = vmatpush1.bf16.xpose.msra.mxu0 0
    %6859 = vmatprep.subr.bf16.mxu0 0
    %6860 = vmatpush1.bf16.xpose.msra.mxu0 0
    %6861 = vmatprep.subr.bf16.mxu0 0
    %6862 = vmatpush1.bf16.xpose.msra.mxu0 0
    %6863 = vmatprep.subr.bf16.mxu0 0
    %6864 = vmatpush1.bf16.xpose.msra.mxu0 %v6847
    %6865 = vmatprep.subr.bf16.mxu0 0
    %6866 = vmatpush2.bf16.xpose.msra.mxu0 0
    %6867 = vmatprep.subr.bf16.mxu0 0
    %6868 = vmatpush2.bf16.xpose.msra.mxu0 0
    %6869 = vmatprep.subr.bf16.mxu0 0
    %6870 = vmatpush2.bf16.xpose.msra.mxu0 0
    %6871 = vmatprep.subr.bf16.mxu0 0
    %6872 = vmatpush2.bf16.xpose.msra.mxu0 0
    %6873 = vmatprep.subr.bf16.mxu0 0
    %6874 = vmatpush2.bf16.xpose.msra.mxu0 0
    %6875 = vmatprep.subr.bf16.mxu0 0
    %6876 = vmatpush2.bf16.xpose.msra.mxu0 0
    %6877 = vmatprep.subr.bf16.mxu0 0
    %6878 = vmatpush2.bf16.xpose.msra.mxu0 0
    %6879 = vmatprep.subr.bf16.mxu0 0
    %6880 = vmatpush2.bf16.xpose.msra.mxu0 0
    %6881 = vmatprep.mubr.bf16.mxu0 0
    %6882 = vmatmul.mubr.bf16.gmra.mxu0 %v6844
    %v6883 = vpop.f32.mrf.mxu0
    %v6884 = vadd.f32 %v2015, %v6883
    %v6885 = vpop.f32.mrf.mxu0
    %v6886 = vpop.f32.mrf.mxu0
    %v6887 = vpop.f32.mrf.mxu0
    %6888 = vdwg.mxu0
    %v6889 = vsel %vm796, %v6746, -inf
    %6890 = vmax.xlane.f32.xlu0 %v6889
    %v6891 = vpop.xlane.xlu0 %6890
    %v6892 = vsel %vm796, %v6792, -inf
    %6893 = vmax.xlane.f32.xlu0 %v6892
    %v6894 = vpop.xlane.xlu0 %6893
    %v6895 = vsel %vm796, %v6838, -inf
    %6896 = vmax.xlane.f32.xlu0 %v6895
    %v6897 = vpop.xlane.xlu0 %6896
    %v6898 = vsel %vm796, %v6884, -inf
    %6899 = vmax.xlane.f32.xlu0 %v6898
    %v6900 = vpop.xlane.xlu0 %6899
    %v6901 = vsub.f32 %v6746, %v6891
    %v6902 = vsub.f32 %v6792, %v6894
    %v6903 = vsub.f32 %v6838, %v6897
    %v6904 = vsub.f32 %v6884, %v6900
    %v6905 = vmul.f32 %v6901, 1.442695
    %v6906 = vpow.pop %v6905
    %v6907 = vmul.f32 %v6902, 1.442695
    %v6908 = vpow.pop %v6907
    %v6909 = vmul.f32 %v6903, 1.442695
    %v6910 = vpow.pop %v6909
    %v6911 = vmul.f32 %v6904, 1.442695
    %v6912 = vpow.pop %v6911
    %v6913 = vsel %vm796, %v6906, 0.0
    %6914 = vadd.xlane.f32.xlu0 %v6913
    %v6915 = vpop.xlane.xlu0 %6914
    %v6916 = vsel %vm796, %v6908, 0.0
    %6917 = vadd.xlane.f32.xlu0 %v6916
    %v6918 = vpop.xlane.xlu0 %6917
    %v6919 = vsel %vm796, %v6910, 0.0
    %6920 = vadd.xlane.f32.xlu0 %v6919
    %v6921 = vpop.xlane.xlu0 %6920
    %v6922 = vsel %vm796, %v6912, 0.0
    %6923 = vadd.xlane.f32.xlu0 %v6922
    %v6924 = vpop.xlane.xlu0 %6923
    %v6925 = vrcp.pop %v6915
    %v6926 = vrcp.pop %v6918
    %v6927 = vrcp.pop %v6921
    %v6928 = vrcp.pop %v6924
    %v6929 = vmul.f32 %v6906, %v6925
    %v6930 = vmul.f32 %v6908, %v6926
    %v6931 = vmul.f32 %v6910, %v6927
    %v6932 = vmul.f32 %v6912, %v6928
    %v6933 = vpack.c.bf16 %v6929, %v6929
    %v6934 = vpack.c.bf16 %v6930, %v6930
    %v6935 = vpack.c.bf16 %v6931, %v6931
    %v6936 = vpack.c.bf16 %v6932, %v6932
    %v6938 = vsel %vm796, %v6933, 0
    %v6941 = vsel %vm1042, %v6701, 0
    %6943 = vmatprep.subr.bf16.mxu0 0
    %6944 = vmatpush1.bf16.msra.mxu0 0
    %6945 = vmatprep.subr.bf16.mxu0 0
    %6946 = vmatpush1.bf16.msra.mxu0 0
    %6947 = vmatprep.subr.bf16.mxu0 0
    %6948 = vmatpush1.bf16.msra.mxu0 0
    %6949 = vmatprep.subr.bf16.mxu0 0
    %6950 = vmatpush1.bf16.msra.mxu0 0
    %6951 = vmatprep.subr.bf16.mxu0 0
    %6952 = vmatpush1.bf16.msra.mxu0 0
    %6953 = vmatprep.subr.bf16.mxu0 0
    %6954 = vmatpush1.bf16.msra.mxu0 0
    %6955 = vmatprep.subr.bf16.mxu0 0
    %6956 = vmatpush1.bf16.msra.mxu0 0
    %6957 = vmatprep.subr.bf16.mxu0 0
    %6958 = vmatpush1.bf16.msra.mxu0 %v6941
    %6959 = vmatprep.subr.bf16.mxu0 0
    %6960 = vmatpush2.bf16.msra.mxu0 0
    %6961 = vmatprep.subr.bf16.mxu0 0
    %6962 = vmatpush2.bf16.msra.mxu0 0
    %6963 = vmatprep.subr.bf16.mxu0 0
    %6964 = vmatpush2.bf16.msra.mxu0 0
    %6965 = vmatprep.subr.bf16.mxu0 0
    %6966 = vmatpush2.bf16.msra.mxu0 0
    %6967 = vmatprep.subr.bf16.mxu0 0
    %6968 = vmatpush2.bf16.msra.mxu0 0
    %6969 = vmatprep.subr.bf16.mxu0 0
    %6970 = vmatpush2.bf16.msra.mxu0 0
    %6971 = vmatprep.subr.bf16.mxu0 0
    %6972 = vmatpush2.bf16.msra.mxu0 0
    %6973 = vmatprep.subr.bf16.mxu0 0
    %6974 = vmatpush2.bf16.msra.mxu0 0
    %6975 = vmatprep.mubr.bf16.mxu0 0
    %6976 = vmatmul.mubr.bf16.gmra.mxu0 %v6938
    %v6977 = vpop.f32.mrf.mxu0
    %v6978 = vadd.f32 0.0, %v6977
    %v6979 = vpop.f32.mrf.mxu0
    %v6980 = vpop.f32.mrf.mxu0
    %v6981 = vpop.f32.mrf.mxu0
    %6982 = vdwg.mxu0
    %v6984 = vsel %vm796, %v6934, 0
    %v6987 = vsel %vm1042, %v6702, 0
    %6989 = vmatprep.subr.bf16.mxu0 0
    %6990 = vmatpush1.bf16.msra.mxu0 0
    %6991 = vmatprep.subr.bf16.mxu0 0
    %6992 = vmatpush1.bf16.msra.mxu0 0
    %6993 = vmatprep.subr.bf16.mxu0 0
    %6994 = vmatpush1.bf16.msra.mxu0 0
    %6995 = vmatprep.subr.bf16.mxu0 0
    %6996 = vmatpush1.bf16.msra.mxu0 0
    %6997 = vmatprep.subr.bf16.mxu0 0
    %6998 = vmatpush1.bf16.msra.mxu0 0
    %6999 = vmatprep.subr.bf16.mxu0 0
    %7000 = vmatpush1.bf16.msra.mxu0 0
    %7001 = vmatprep.subr.bf16.mxu0 0
    %7002 = vmatpush1.bf16.msra.mxu0 0
    %7003 = vmatprep.subr.bf16.mxu0 0
    %7004 = vmatpush1.bf16.msra.mxu0 %v6987
    %7005 = vmatprep.subr.bf16.mxu0 0
    %7006 = vmatpush2.bf16.msra.mxu0 0
    %7007 = vmatprep.subr.bf16.mxu0 0
    %7008 = vmatpush2.bf16.msra.mxu0 0
    %7009 = vmatprep.subr.bf16.mxu0 0
    %7010 = vmatpush2.bf16.msra.mxu0 0
    %7011 = vmatprep.subr.bf16.mxu0 0
    %7012 = vmatpush2.bf16.msra.mxu0 0
    %7013 = vmatprep.subr.bf16.mxu0 0
    %7014 = vmatpush2.bf16.msra.mxu0 0
    %7015 = vmatprep.subr.bf16.mxu0 0
    %7016 = vmatpush2.bf16.msra.mxu0 0
    %7017 = vmatprep.subr.bf16.mxu0 0
    %7018 = vmatpush2.bf16.msra.mxu0 0
    %7019 = vmatprep.subr.bf16.mxu0 0
    %7020 = vmatpush2.bf16.msra.mxu0 0
    %7021 = vmatprep.mubr.bf16.mxu0 0
    %7022 = vmatmul.mubr.bf16.gmra.mxu0 %v6984
    %v7023 = vpop.f32.mrf.mxu0
    %v7024 = vadd.f32 0.0, %v7023
    %v7025 = vpop.f32.mrf.mxu0
    %v7026 = vpop.f32.mrf.mxu0
    %v7027 = vpop.f32.mrf.mxu0
    %7028 = vdwg.mxu0
    %v7030 = vsel %vm796, %v6935, 0
    %v7033 = vsel %vm1042, %v6703, 0
    %7035 = vmatprep.subr.bf16.mxu0 0
    %7036 = vmatpush1.bf16.msra.mxu0 0
    %7037 = vmatprep.subr.bf16.mxu0 0
    %7038 = vmatpush1.bf16.msra.mxu0 0
    %7039 = vmatprep.subr.bf16.mxu0 0
    %7040 = vmatpush1.bf16.msra.mxu0 0
    %7041 = vmatprep.subr.bf16.mxu0 0
    %7042 = vmatpush1.bf16.msra.mxu0 0
    %7043 = vmatprep.subr.bf16.mxu0 0
    %7044 = vmatpush1.bf16.msra.mxu0 0
    %7045 = vmatprep.subr.bf16.mxu0 0
    %7046 = vmatpush1.bf16.msra.mxu0 0
    %7047 = vmatprep.subr.bf16.mxu0 0
    %7048 = vmatpush1.bf16.msra.mxu0 0
    %7049 = vmatprep.subr.bf16.mxu0 0
    %7050 = vmatpush1.bf16.msra.mxu0 %v7033
    %7051 = vmatprep.subr.bf16.mxu0 0
    %7052 = vmatpush2.bf16.msra.mxu0 0
    %7053 = vmatprep.subr.bf16.mxu0 0
    %7054 = vmatpush2.bf16.msra.mxu0 0
    %7055 = vmatprep.subr.bf16.mxu0 0
    %7056 = vmatpush2.bf16.msra.mxu0 0
    %7057 = vmatprep.subr.bf16.mxu0 0
    %7058 = vmatpush2.bf16.msra.mxu0 0
    %7059 = vmatprep.subr.bf16.mxu0 0
    %7060 = vmatpush2.bf16.msra.mxu0 0
    %7061 = vmatprep.subr.bf16.mxu0 0
    %7062 = vmatpush2.bf16.msra.mxu0 0
    %7063 = vmatprep.subr.bf16.mxu0 0
    %7064 = vmatpush2.bf16.msra.mxu0 0
    %7065 = vmatprep.subr.bf16.mxu0 0
    %7066 = vmatpush2.bf16.msra.mxu0 0
    %7067 = vmatprep.mubr.bf16.mxu0 0
    %7068 = vmatmul.mubr.bf16.gmra.mxu0 %v7030
    %v7069 = vpop.f32.mrf.mxu0
    %v7070 = vadd.f32 0.0, %v7069
    %v7071 = vpop.f32.mrf.mxu0
    %v7072 = vpop.f32.mrf.mxu0
    %v7073 = vpop.f32.mrf.mxu0
    %7074 = vdwg.mxu0
    %v7076 = vsel %vm796, %v6936, 0
    %v7079 = vsel %vm1042, %v6704, 0
    %7081 = vmatprep.subr.bf16.mxu0 0
    %7082 = vmatpush1.bf16.msra.mxu0 0
    %7083 = vmatprep.subr.bf16.mxu0 0
    %7084 = vmatpush1.bf16.msra.mxu0 0
    %7085 = vmatprep.subr.bf16.mxu0 0
    %7086 = vmatpush1.bf16.msra.mxu0 0
    %7087 = vmatprep.subr.bf16.mxu0 0
    %7088 = vmatpush1.bf16.msra.mxu0 0
    %7089 = vmatprep.subr.bf16.mxu0 0
    %7090 = vmatpush1.bf16.msra.mxu0 0
    %7091 = vmatprep.subr.bf16.mxu0 0
    %7092 = vmatpush1.bf16.msra.mxu0 0
    %7093 = vmatprep.subr.bf16.mxu0 0
    %7094 = vmatpush1.bf16.msra.mxu0 0
    %7095 = vmatprep.subr.bf16.mxu0 0
    %7096 = vmatpush1.bf16.msra.mxu0 %v7079
    %7097 = vmatprep.subr.bf16.mxu0 0
    %7098 = vmatpush2.bf16.msra.mxu0 0
    %7099 = vmatprep.subr.bf16.mxu0 0
    %7100 = vmatpush2.bf16.msra.mxu0 0
    %7101 = vmatprep.subr.bf16.mxu0 0
    %7102 = vmatpush2.bf16.msra.mxu0 0
    %7103 = vmatprep.subr.bf16.mxu0 0
    %7104 = vmatpush2.bf16.msra.mxu0 0
    %7105 = vmatprep.subr.bf16.mxu0 0
    %7106 = vmatpush2.bf16.msra.mxu0 0
    %7107 = vmatprep.subr.bf16.mxu0 0
    %7108 = vmatpush2.bf16.msra.mxu0 0
    %7109 = vmatprep.subr.bf16.mxu0 0
    %7110 = vmatpush2.bf16.msra.mxu0 0
    %7111 = vmatprep.subr.bf16.mxu0 0
    %7112 = vmatpush2.bf16.msra.mxu0 0
    %7113 = vmatprep.mubr.bf16.mxu0 0
    %7114 = vmatmul.mubr.bf16.gmra.mxu0 %v7076
    %v7115 = vpop.f32.mrf.mxu0
    %v7116 = vadd.f32 0.0, %v7115
    %v7117 = vpop.f32.mrf.mxu0
    %v7118 = vpop.f32.mrf.mxu0
    %v7119 = vpop.f32.mrf.mxu0
    %7120 = vdwg.mxu0
    %v7121 = vcombine.low %v6978, %v7070
    %v7122 = vcombine.high %v6978, %v7070
    %v7124 = vunpack.c.l.s4 1983009808
    %v7125 = vunpack.c.0.s8 %v7124
    %v7126 = vlaneseq
    %v7127 = vshrl.u32 %v7126, 7
    %v7128 = vsub.s32 %v7125, %v7127
    %v7129 = vrot.slane %v7121, %v7128
    %v7131 = vunpack.c.l.s4 1983009808
    %v7132 = vunpack.c.0.s8 %v7131
    %v7133 = vlaneseq
    %v7134 = vshrl.u32 %v7133, 7
    %v7135 = vsub.s32 %v7132, %v7134
    %v7136 = vrot.slane %v7122, %v7135
    %v7137 = vcombine.low %v7024, %v7116
    %v7138 = vcombine.high %v7024, %v7116
    %v7140 = vunpack.c.l.s4 1983009808
    %v7141 = vunpack.c.0.s8 %v7140
    %v7142 = vlaneseq
    %v7143 = vshrl.u32 %v7142, 7
    %v7144 = vsub.s32 %v7141, %v7143
    %v7145 = vrot.slane %v7137, %v7144
    %v7147 = vunpack.c.l.s4 1983009808
    %v7148 = vunpack.c.0.s8 %v7147
    %v7149 = vlaneseq
    %v7150 = vshrl.u32 %v7149, 7
    %v7151 = vsub.s32 %v7148, %v7150
    %v7152 = vrot.slane %v7138, %v7151
    %v7153 = vcombine.low %v7129, %v7145
    %v7154 = vcombine.high %v7129, %v7145
    %v7156 = vunpack.c.l.s4 1934713408
    %v7157 = vunpack.c.0.s8 %v7156
    %v7158 = vlaneseq
    %v7159 = vshrl.u32 %v7158, 7
    %v7160 = vsub.s32 %v7157, %v7159
    %v7161 = vrot.slane %v7153, %v7160
    %v7163 = vunpack.c.l.s4 1934713408
    %v7164 = vunpack.c.0.s8 %v7163
    %v7165 = vlaneseq
    %v7166 = vshrl.u32 %v7165, 7
    %v7167 = vsub.s32 %v7164, %v7166
    %v7168 = vrot.slane %v7154, %v7167
    %v7169 = vcombine.low %v7136, %v7152
    %v7170 = vcombine.high %v7136, %v7152
    %v7172 = vunpack.c.l.s4 1934713408
    %v7173 = vunpack.c.0.s8 %v7172
    %v7174 = vlaneseq
    %v7175 = vshrl.u32 %v7174, 7
    %v7176 = vsub.s32 %v7173, %v7175
    %v7177 = vrot.slane %v7169, %v7176
    %v7179 = vunpack.c.l.s4 1934713408
    %v7180 = vunpack.c.0.s8 %v7179
    %v7181 = vlaneseq
    %v7182 = vshrl.u32 %v7181, 7
    %v7183 = vsub.s32 %v7180, %v7182
    %v7184 = vrot.slane %v7170, %v7183
    %v7185 = vcombine.high %v7161, 0.0
    %v7186 = vcombine.high %v7168, 0.0
    %v7187 = vcombine.high %v7177, 0.0
    %v7188 = vcombine.high %v7184, 0.0
    %v7189 = vcombine.low %v7161, %v7168
    %v7191 = vunpack.c.l.s4 1983009808
    %v7192 = vunpack.c.0.s8 %v7191
    %v7193 = vlaneseq
    %v7194 = vshrl.u32 %v7193, 7
    %v7195 = vsub.s32 %v7192, %v7194
    %v7196 = vrot.slane %v7189, %v7195
    %v7197 = vcombine.low %v7185, %v7186
    %v7199 = vunpack.c.l.s4 1983009808
    %v7200 = vunpack.c.0.s8 %v7199
    %v7201 = vlaneseq
    %v7202 = vshrl.u32 %v7201, 7
    %v7203 = vsub.s32 %v7200, %v7202
    %v7204 = vrot.slane %v7197, %v7203
    %v7205 = vcombine.low %v7177, %v7184
    %v7207 = vunpack.c.l.s4 1983009808
    %v7208 = vunpack.c.0.s8 %v7207
    %v7209 = vlaneseq
    %v7210 = vshrl.u32 %v7209, 7
    %v7211 = vsub.s32 %v7208, %v7210
    %v7212 = vrot.slane %v7205, %v7211
    %v7213 = vcombine.low %v7187, %v7188
    %v7215 = vunpack.c.l.s4 1983009808
    %v7216 = vunpack.c.0.s8 %v7215
    %v7217 = vlaneseq
    %v7218 = vshrl.u32 %v7217, 7
    %v7219 = vsub.s32 %v7216, %v7218
    %v7220 = vrot.slane %v7213, %v7219
    %v7221 = vcombine.low %v7196, %v7204
    %v7222 = vcombine.high %v7196, %v7204
    %v7224 = vunpack.c.l.s4 1934713408
    %v7225 = vunpack.c.0.s8 %v7224
    %v7226 = vlaneseq
    %v7227 = vshrl.u32 %v7226, 7
    %v7228 = vsub.s32 %v7225, %v7227
    %v7229 = vrot.slane %v7221, %v7228
    %v7231 = vunpack.c.l.s4 1934713408
    %v7232 = vunpack.c.0.s8 %v7231
    %v7233 = vlaneseq
    %v7234 = vshrl.u32 %v7233, 7
    %v7235 = vsub.s32 %v7232, %v7234
    %v7236 = vrot.slane %v7222, %v7235
    %v7237 = vcombine.low %v7212, %v7220
    %v7238 = vcombine.high %v7212, %v7220
    %v7240 = vunpack.c.l.s4 1934713408
    %v7241 = vunpack.c.0.s8 %v7240
    %v7242 = vlaneseq
    %v7243 = vshrl.u32 %v7242, 7
    %v7244 = vsub.s32 %v7241, %v7243
    %v7245 = vrot.slane %v7237, %v7244
    %v7247 = vunpack.c.l.s4 1934713408
    %v7248 = vunpack.c.0.s8 %v7247
    %v7249 = vlaneseq
    %v7250 = vshrl.u32 %v7249, 7
    %v7251 = vsub.s32 %v7248, %v7250
    %v7252 = vrot.slane %v7238, %v7251
    %v7253 = vcombine.low %v7229, %v7245
    %v7254 = vcombine.high %v7229, %v7245
    %v7255 = vcombine.low %v7236, %v7252
    %v7256 = vcombine.high %v7236, %v7252
    %7258 = vrot.lane.b32.xlu0 %v7254, 8
    %v7259 = vpop.permute.xlu0 %7258
    %7262 = vrot.lane.b32.xlu0 %v7255, 16
    %v7263 = vpop.permute.xlu0 %7262
    %7266 = vrot.lane.b32.xlu0 %v7256, 24
    %v7267 = vpop.permute.xlu0 %7266
    %v7269 = vsel %vm796, %v7253, %v7259
    %v7270 = vsel %vm1373, %v7269, %v7263
    %v7271 = vsel %vm1375, %v7270, %v7267
    %v7272 = vld [vmem:[%s49] sm:$0xf]
    %v7273 = vld [vmem:[%s49 + $0x4] sm:$0xf]
    %v7274 = vld [vmem:[%s49 + $0x8] sm:$0xf]
    %v7275 = vld [vmem:[%s49 + $0xc] sm:$0xf]
    %v7276 = vpack.c.bf16 %v7271, %v6254
    %v7281 = vunpack.c.l.b16 %v7272
    %v7282 = vunpack.c.l.b16 %v7273
    %v7283 = vunpack.c.l.b16 %v7274
    %v7284 = vunpack.c.l.b16 %v7275
    %v7285 = vpack.c.b16 %v7282, %v7281
    %v7286 = vpack.c.b16 %v7284, %v7283
    %v7290 = vsel %vm147, %v7276, 0
    %7292 = vmatprep.subr.bf16.mxu0 0
    %7293 = vmatpush1.bf16.msra.mxu0 0
    %7294 = vmatprep.subr.bf16.mxu0 0
    %7295 = vmatpush1.bf16.msra.mxu0 0
    %7296 = vmatprep.subr.bf16.mxu0 0
    %7297 = vmatpush1.bf16.msra.mxu0 0
    %7298 = vmatprep.subr.bf16.mxu0 0
    %7299 = vmatpush1.bf16.msra.mxu0 0
    %7300 = vmatprep.subr.bf16.mxu0 0
    %7301 = vmatpush1.bf16.msra.mxu0 0
    %7302 = vmatprep.subr.bf16.mxu0 0
    %7303 = vmatpush1.bf16.msra.mxu0 0
    %7304 = vmatprep.subr.bf16.mxu0 0
    %7305 = vmatpush1.bf16.msra.mxu0 %v7286
    %7306 = vmatprep.subr.bf16.mxu0 0
    %7307 = vmatpush1.bf16.msra.mxu0 %v7285
    %7308 = vmatprep.subr.bf16.mxu0 0
    %7309 = vmatpush2.bf16.msra.mxu0 0
    %7310 = vmatprep.subr.bf16.mxu0 0
    %7311 = vmatpush2.bf16.msra.mxu0 0
    %7312 = vmatprep.subr.bf16.mxu0 0
    %7313 = vmatpush2.bf16.msra.mxu0 0
    %7314 = vmatprep.subr.bf16.mxu0 0
    %7315 = vmatpush2.bf16.msra.mxu0 0
    %7316 = vmatprep.subr.bf16.mxu0 0
    %7317 = vmatpush2.bf16.msra.mxu0 0
    %7318 = vmatprep.subr.bf16.mxu0 0
    %7319 = vmatpush2.bf16.msra.mxu0 0
    %7320 = vmatprep.subr.bf16.mxu0 0
    %7321 = vmatpush2.bf16.msra.mxu0 0
    %7322 = vmatprep.subr.bf16.mxu0 0
    %7323 = vmatpush2.bf16.msra.mxu0 0
    %7324 = vmatprep.mubr.bf16.mxu0 0
    %7325 = vmatmul.mubr.bf16.gmra.mxu0 %v7290
    %v7326 = vpop.f32.mrf.mxu0
    %v7327 = vadd.f32 0.0, %v7326
    %v7328 = vpop.f32.mrf.mxu0
    %v7329 = vpop.f32.mrf.mxu0
    %v7330 = vadd.f32 0.0, %v7329
    %v7331 = vpop.f32.mrf.mxu0
    %7332 = vdwg.mxu0
    %v7333 = vadd.f32 %v5032, %v7327
    %v7334 = vadd.f32 %v5033, %v7330
    %v7335 = vld [vmem:[%s51] sm:$0x1]
    %v7336 = vmul.f32 %v7333, %v7333
    %v7337 = vmul.f32 %v7334, %v7334
    %v7338 = vsel %vm147, %v7336, 0.0
    %7339 = vadd.xlane.f32.xlu0 %v7338
    %v7340 = vpop.xlane.xlu0 %7339
    %v7341 = vsel %vm147, %v7337, 0.0
    %7342 = vadd.xlane.f32.xlu0 %v7341
    %v7343 = vpop.xlane.xlu0 %7342
    %v7344 = vmul.f32 %v7340, %v154
    %v7345 = vmul.f32 %v7343, %v154
    %v7346 = vadd.f32 %v7344, 1e-06
    %v7347 = vadd.f32 %v7345, 1e-06
    %v7348 = vrsqrt.pop %v7346
    %v7349 = vrsqrt.pop %v7347
    %v7350 = vmul.f32 %v7333, %v7348
    %v7351 = vmul.f32 %v7334, %v7349
    %v7353 = vlaneseq
    %v7354 = vshrl.u32 %v7353, 7
    %v7355 = vsub.s32 0, %v7354
    %v7356 = vrot.slane %v7335, %v7355
    %v7358 = vmul.f32 %v7350, %v7356
    %v7359 = vmul.f32 %v7351, %v7356
    %v7360 = vld [vmem:[%s53] sm:$0xf]
    %v7361 = vld [vmem:[%s53 + $0x4] sm:$0xf]
    %v7362 = vld [vmem:[%s53 + $0x8] sm:$0xf]
    %v7363 = vld [vmem:[%s53 + $0xc] sm:$0xf]
    %v7364 = vld [vmem:[%s55] sm:$0xf]
    %v7365 = vld [vmem:[%s55 + $0x4] sm:$0xf]
    %v7366 = vld [vmem:[%s55 + $0x8] sm:$0xf]
    %v7367 = vld [vmem:[%s55 + $0xc] sm:$0xf]
    %v7368 = vld [vmem:[%s57] sm:$0xf]
    %v7369 = vld [vmem:[%s57 + $0x4] sm:$0xf]
    %v7370 = vld [vmem:[%s57 + $0x8] sm:$0xf]
    %v7371 = vld [vmem:[%s57 + $0xc] sm:$0xf]
    %v7372 = vld [vmem:[%s57 + $0x10] sm:$0xf]
    %v7373 = vld [vmem:[%s57 + $0x14] sm:$0xf]
    %v7374 = vld [vmem:[%s57 + $0x18] sm:$0xf]
    %v7375 = vld [vmem:[%s57 + $0x1c] sm:$0xf]
    %v7376 = vpack.c.bf16 %v7359, %v7358
    %v7381 = vunpack.c.l.b16 %v7360
    %v7382 = vunpack.c.l.b16 %v7361
    %v7383 = vunpack.c.l.b16 %v7362
    %v7384 = vunpack.c.l.b16 %v7363
    %v7385 = vpack.c.b16 %v7382, %v7381
    %v7386 = vpack.c.b16 %v7384, %v7383
    %v7390 = vsel %vm147, %v7376, 0
    %7392 = vmatprep.subr.bf16.mxu0 0
    %7393 = vmatpush1.bf16.msra.mxu0 0
    %7394 = vmatprep.subr.bf16.mxu0 0
    %7395 = vmatpush1.bf16.msra.mxu0 0
    %7396 = vmatprep.subr.bf16.mxu0 0
    %7397 = vmatpush1.bf16.msra.mxu0 0
    %7398 = vmatprep.subr.bf16.mxu0 0
    %7399 = vmatpush1.bf16.msra.mxu0 0
    %7400 = vmatprep.subr.bf16.mxu0 0
    %7401 = vmatpush1.bf16.msra.mxu0 0
    %7402 = vmatprep.subr.bf16.mxu0 0
    %7403 = vmatpush1.bf16.msra.mxu0 0
    %7404 = vmatprep.subr.bf16.mxu0 0
    %7405 = vmatpush1.bf16.msra.mxu0 %v7386
    %7406 = vmatprep.subr.bf16.mxu0 0
    %7407 = vmatpush1.bf16.msra.mxu0 %v7385
    %7408 = vmatprep.subr.bf16.mxu0 0
    %7409 = vmatpush2.bf16.msra.mxu0 0
    %7410 = vmatprep.subr.bf16.mxu0 0
    %7411 = vmatpush2.bf16.msra.mxu0 0
    %7412 = vmatprep.subr.bf16.mxu0 0
    %7413 = vmatpush2.bf16.msra.mxu0 0
    %7414 = vmatprep.subr.bf16.mxu0 0
    %7415 = vmatpush2.bf16.msra.mxu0 0
    %7416 = vmatprep.subr.bf16.mxu0 0
    %7417 = vmatpush2.bf16.msra.mxu0 0
    %7418 = vmatprep.subr.bf16.mxu0 0
    %7419 = vmatpush2.bf16.msra.mxu0 0
    %7420 = vmatprep.subr.bf16.mxu0 0
    %7421 = vmatpush2.bf16.msra.mxu0 0
    %7422 = vmatprep.subr.bf16.mxu0 0
    %7423 = vmatpush2.bf16.msra.mxu0 0
    %7424 = vmatprep.mubr.bf16.mxu0 0
    %7425 = vmatmul.mubr.bf16.gmra.mxu0 %v7390
    %v7426 = vpop.f32.mrf.mxu0
    %v7427 = vadd.f32 0.0, %v7426
    %v7428 = vpop.f32.mrf.mxu0
    %v7429 = vpop.f32.mrf.mxu0
    %v7430 = vadd.f32 0.0, %v7429
    %v7431 = vpop.f32.mrf.mxu0
    %7432 = vdwg.mxu0
    %v7437 = vunpack.c.l.b16 %v7364
    %v7438 = vunpack.c.l.b16 %v7365
    %v7439 = vunpack.c.l.b16 %v7366
    %v7440 = vunpack.c.l.b16 %v7367
    %v7441 = vpack.c.b16 %v7438, %v7437
    %v7442 = vpack.c.b16 %v7440, %v7439
    %7445 = vmatprep.subr.bf16.mxu0 0
    %7446 = vmatpush1.bf16.msra.mxu0 0
    %7447 = vmatprep.subr.bf16.mxu0 0
    %7448 = vmatpush1.bf16.msra.mxu0 0
    %7449 = vmatprep.subr.bf16.mxu0 0
    %7450 = vmatpush1.bf16.msra.mxu0 0
    %7451 = vmatprep.subr.bf16.mxu0 0
    %7452 = vmatpush1.bf16.msra.mxu0 0
    %7453 = vmatprep.subr.bf16.mxu0 0
    %7454 = vmatpush1.bf16.msra.mxu0 0
    %7455 = vmatprep.subr.bf16.mxu0 0
    %7456 = vmatpush1.bf16.msra.mxu0 0
    %7457 = vmatprep.subr.bf16.mxu0 0
    %7458 = vmatpush1.bf16.msra.mxu0 %v7442
    %7459 = vmatprep.subr.bf16.mxu0 0
    %7460 = vmatpush1.bf16.msra.mxu0 %v7441
    %7461 = vmatprep.subr.bf16.mxu0 0
    %7462 = vmatpush2.bf16.msra.mxu0 0
    %7463 = vmatprep.subr.bf16.mxu0 0
    %7464 = vmatpush2.bf16.msra.mxu0 0
    %7465 = vmatprep.subr.bf16.mxu0 0
    %7466 = vmatpush2.bf16.msra.mxu0 0
    %7467 = vmatprep.subr.bf16.mxu0 0
    %7468 = vmatpush2.bf16.msra.mxu0 0
    %7469 = vmatprep.subr.bf16.mxu0 0
    %7470 = vmatpush2.bf16.msra.mxu0 0
    %7471 = vmatprep.subr.bf16.mxu0 0
    %7472 = vmatpush2.bf16.msra.mxu0 0
    %7473 = vmatprep.subr.bf16.mxu0 0
    %7474 = vmatpush2.bf16.msra.mxu0 0
    %7475 = vmatprep.subr.bf16.mxu0 0
    %7476 = vmatpush2.bf16.msra.mxu0 0
    %7477 = vmatprep.mubr.bf16.mxu0 0
    %7478 = vmatmul.mubr.bf16.gmra.mxu0 %v7390
    %v7479 = vpop.f32.mrf.mxu0
    %v7480 = vadd.f32 0.0, %v7479
    %v7481 = vpop.f32.mrf.mxu0
    %v7482 = vpop.f32.mrf.mxu0
    %v7483 = vadd.f32 0.0, %v7482
    %v7484 = vpop.f32.mrf.mxu0
    %7485 = vdwg.mxu0
    %v7486 = vmul.f32 %v7427, 0.5
    %v7487 = vmul.f32 %v7430, 0.5
    %v7488 = vmul.f32 %v7427, 0.044715
    %v7489 = vmul.f32 %v7430, 0.044715
    %v7490 = vmul.f32 %v7488, %v7427
    %v7491 = vmul.f32 %v7489, %v7430
    %v7492 = vmul.f32 %v7490, %v7427
    %v7493 = vmul.f32 %v7491, %v7430
    %v7494 = vadd.f32 %v7427, %v7492
    %v7495 = vadd.f32 %v7430, %v7493
    %v7496 = vmul.f32 %v7494, 0.7978846
    %v7497 = vmul.f32 %v7495, 0.7978846
    %v7498 = vtanh.pop %v7496
    %v7499 = vtanh.pop %v7497
    %v7500 = vadd.f32 %v7498, 1.0
    %v7501 = vadd.f32 %v7499, 1.0
    %v7502 = vmul.f32 %v7486, %v7500
    %v7503 = vmul.f32 %v7487, %v7501
    %v7504 = vmul.f32 %v7502, %v7480
    %v7505 = vmul.f32 %v7503, %v7483
    %v7506 = vpack.c.bf16 %v7505, %v7504
    %v7515 = vunpack.c.l.b16 %v7368
    %v7516 = vunpack.c.l.b16 %v7369
    %v7517 = vunpack.c.l.b16 %v7370
    %v7518 = vunpack.c.l.b16 %v7371
    %v7519 = vunpack.c.l.b16 %v7372
    %v7520 = vunpack.c.l.b16 %v7373
    %v7521 = vunpack.c.l.b16 %v7374
    %v7522 = vunpack.c.l.b16 %v7375
    %v7523 = vpack.c.b16 %v7516, %v7515
    %v7524 = vpack.c.b16 %v7518, %v7517
    %v7525 = vpack.c.b16 %v7520, %v7519
    %v7526 = vpack.c.b16 %v7522, %v7521
    %v7532 = vsel %vm2663, %v7506, 0
    %7534 = vmatprep.subr.bf16.mxu0 0
    %7535 = vmatpush1.bf16.msra.mxu0 0
    %7536 = vmatprep.subr.bf16.mxu0 0
    %7537 = vmatpush1.bf16.msra.mxu0 0
    %7538 = vmatprep.subr.bf16.mxu0 0
    %7539 = vmatpush1.bf16.msra.mxu0 0
    %7540 = vmatprep.subr.bf16.mxu0 0
    %7541 = vmatpush1.bf16.msra.mxu0 0
    %7542 = vmatprep.subr.bf16.mxu0 0
    %7543 = vmatpush1.bf16.msra.mxu0 %v7526
    %7544 = vmatprep.subr.bf16.mxu0 0
    %7545 = vmatpush1.bf16.msra.mxu0 %v7525
    %7546 = vmatprep.subr.bf16.mxu0 0
    %7547 = vmatpush1.bf16.msra.mxu0 %v7524
    %7548 = vmatprep.subr.bf16.mxu0 0
    %7549 = vmatpush1.bf16.msra.mxu0 %v7523
    %7550 = vmatprep.subr.bf16.mxu0 0
    %7551 = vmatpush2.bf16.msra.mxu0 0
    %7552 = vmatprep.subr.bf16.mxu0 0
    %7553 = vmatpush2.bf16.msra.mxu0 0
    %7554 = vmatprep.subr.bf16.mxu0 0
    %7555 = vmatpush2.bf16.msra.mxu0 0
    %7556 = vmatprep.subr.bf16.mxu0 0
    %7557 = vmatpush2.bf16.msra.mxu0 0
    %7558 = vmatprep.subr.bf16.mxu0 0
    %7559 = vmatpush2.bf16.msra.mxu0 0
    %7560 = vmatprep.subr.bf16.mxu0 0
    %7561 = vmatpush2.bf16.msra.mxu0 0
    %7562 = vmatprep.subr.bf16.mxu0 0
    %7563 = vmatpush2.bf16.msra.mxu0 0
    %7564 = vmatprep.subr.bf16.mxu0 0
    %7565 = vmatpush2.bf16.msra.mxu0 0
    %7566 = vmatprep.mubr.bf16.mxu0 0
    %7567 = vmatmul.mubr.bf16.gmra.mxu0 %v7532
    %v7568 = vpop.f32.mrf.mxu0
    %v7569 = vadd.f32 0.0, %v7568
    %v7570 = vpop.f32.mrf.mxu0
    %v7571 = vpop.f32.mrf.mxu0
    %v7572 = vadd.f32 0.0, %v7571
    %v7573 = vpop.f32.mrf.mxu0
    %7574 = vdwg.mxu0
    %v7575 = vadd.f32 %v7333, %v7569
    %v7576 = vadd.f32 %v7334, %v7572
    %v7577 = vld [vmem:[%s59] sm:$0x1]
    %v7578 = vmul.f32 %v7575, %v7575
    %v7579 = vmul.f32 %v7576, %v7576
    %v7580 = vsel %vm147, %v7578, 0.0
    %7581 = vadd.xlane.f32.xlu0 %v7580
    %v7582 = vpop.xlane.xlu0 %7581
    %v7583 = vsel %vm147, %v7579, 0.0
    %7584 = vadd.xlane.f32.xlu0 %v7583
    %v7585 = vpop.xlane.xlu0 %7584
    %v7586 = vmul.f32 %v7582, %v154
    %v7587 = vmul.f32 %v7585, %v154
    %v7588 = vadd.f32 %v7586, 1e-06
    %v7589 = vadd.f32 %v7587, 1e-06
    %v7590 = vrsqrt.pop %v7588
    %v7591 = vrsqrt.pop %v7589
    %v7592 = vmul.f32 %v7575, %v7590
    %v7593 = vmul.f32 %v7576, %v7591
    %v7595 = vlaneseq
    %v7596 = vshrl.u32 %v7595, 7
    %v7597 = vsub.s32 0, %v7596
    %v7598 = vrot.slane %v7577, %v7597
    %v7600 = vmul.f32 %v7592, %v7598
    %v7601 = vmul.f32 %v7593, %v7598
    %v7602 = vld [vmem:[%s61] sm:$0xf]
    %v7603 = vld [vmem:[%s61 + $0x4] sm:$0xf]
    %v7604 = vld [vmem:[%s61 + $0x8] sm:$0xf]
    %v7605 = vld [vmem:[%s61 + $0xc] sm:$0xf]
    %v7606 = vpack.c.bf16 %v7601, %v7600
    %v7611 = vunpack.c.l.b16 %v7602
    %v7612 = vunpack.c.l.b16 %v7603
    %v7613 = vunpack.c.l.b16 %v7604
    %v7614 = vunpack.c.l.b16 %v7605
    %v7615 = vpack.c.b16 %v7612, %v7611
    %v7616 = vpack.c.b16 %v7614, %v7613
    %v7620 = vsel %vm147, %v7606, 0
    %7622 = vmatprep.subr.bf16.mxu0 0
    %7623 = vmatpush1.bf16.msra.mxu0 0
    %7624 = vmatprep.subr.bf16.mxu0 0
    %7625 = vmatpush1.bf16.msra.mxu0 0
    %7626 = vmatprep.subr.bf16.mxu0 0
    %7627 = vmatpush1.bf16.msra.mxu0 0
    %7628 = vmatprep.subr.bf16.mxu0 0
    %7629 = vmatpush1.bf16.msra.mxu0 0
    %7630 = vmatprep.subr.bf16.mxu0 0
    %7631 = vmatpush1.bf16.msra.mxu0 0
    %7632 = vmatprep.subr.bf16.mxu0 0
    %7633 = vmatpush1.bf16.msra.mxu0 0
    %7634 = vmatprep.subr.bf16.mxu0 0
    %7635 = vmatpush1.bf16.msra.mxu0 %v7616
    %7636 = vmatprep.subr.bf16.mxu0 0
    %7637 = vmatpush1.bf16.msra.mxu0 %v7615
    %7638 = vmatprep.subr.bf16.mxu0 0
    %7639 = vmatpush2.bf16.msra.mxu0 0
    %7640 = vmatprep.subr.bf16.mxu0 0
    %7641 = vmatpush2.bf16.msra.mxu0 0
    %7642 = vmatprep.subr.bf16.mxu0 0
    %7643 = vmatpush2.bf16.msra.mxu0 0
    %7644 = vmatprep.subr.bf16.mxu0 0
    %7645 = vmatpush2.bf16.msra.mxu0 0
    %7646 = vmatprep.subr.bf16.mxu0 0
    %7647 = vmatpush2.bf16.msra.mxu0 0
    %7648 = vmatprep.subr.bf16.mxu0 0
    %7649 = vmatpush2.bf16.msra.mxu0 0
    %7650 = vmatprep.subr.bf16.mxu0 0
    %7651 = vmatpush2.bf16.msra.mxu0 0
    %7652 = vmatprep.subr.bf16.mxu0 0
    %7653 = vmatpush2.bf16.msra.mxu0 0
    %7654 = vmatprep.mubr.bf16.mxu0 0
    %7655 = vmatmul.mubr.bf16.gmra.mxu0 %v7620
    %v7656 = vpop.f32.mrf.mxu0
    %v7657 = vadd.f32 0.0, %v7656
    %v7658 = vpop.f32.mrf.mxu0
    %v7659 = vpop.f32.mrf.mxu0
    %v7660 = vadd.f32 0.0, %v7659
    %v7661 = vpop.f32.mrf.mxu0
    %7662 = vdwg.mxu0
    %7663 = vst [vmem:[#allocation2] sm:$0xff] %v7657
    %7664 = vst [vmem:[#allocation2 + $0x8] sm:$0xff] %v7660
    // Predicated region
    $region126: #{flan_t5_forward.1} parent=1 // pred_check
      _
    $region127: #{flan_t5_forward.1} parent=1 // pred_check_branch
      %7666 = sbr.rel (0) target = $region129
    $region128: #{flan_t5_forward.1} parent=1 // pred_region
      %s7668 = ssub.s32 256, 256
      %7669 = vsyncadd [#allocation3], %s7668
      %s7670 = sshll.u32 [#allocation2], 4
      %s7671 = int_to_ptr.vmem [resolvable:$true] %s7670
      %7676 = dma.vmem_to_hbm [thread:$0]  %s7671, 256, %s63, [#allocation3], 128, 128, 8
    $region129: #{flan_t5_forward.1} parent=1 // pred_fallthru
      _
    // Predicated region
    $region130: #{flan_t5_forward.1} parent=1 // pred_check
      _
    $region131: #{flan_t5_forward.1} parent=1 // pred_check_branch
      %7678 = sbr.rel (0) target = $region133
    $region132: #{flan_t5_forward.1} parent=1 // pred_region
      %7679 = dma.done [#allocation3], 256
    $region133: #{flan_t5_forward.1} parent=1 // pred_fallthru
      _
    %7680 = vsyncpa [#allocation3], 1

</llo_original>
